<compile_context>
chip_gen: v7x
topology: tpu7x:2x2x1
jax: 0.10.0
libtpu: 0.0.40
codegen_flags: <defaults>
</compile_context>

<pallas_src>
import jax
import jax.numpy as jnp
from jax import lax
from jax.experimental import pallas as pl
from jax.experimental.pallas import tpu as pltpu

H1, H2 = 108, 56          # real hidden sizes (lstm1 / lstm2)
HP = 128                  # padded hidden size (lane width)
G = 4 * HP                # 512 gate lanes (i,f,g,o each 128-lane aligned)
DIN_PAD = 16              # padded layer-1 input width (real = 5), 16 = bf16 sublane tile
BP_MIN = 8                # batch padded to sublane multiple
MXU_DTYPE = jnp.bfloat16  # matmul-operand dtype (state/gate math stays f32)

# ---- row offsets inside the single gate-weight slab (all multiples of 16) ----
R_W1F_IH = 0
R_W1B_IH = R_W1F_IH + DIN_PAD      # 16
R_W1F_HH = R_W1B_IH + DIN_PAD      # 32
R_W1B_HH = R_W1F_HH + HP           # 160
R_W2F_IH = R_W1B_HH + HP           # 288   (256 rows: l1-fwd part then l1-bwd part)
R_W2B_IH = R_W2F_IH + 2 * HP       # 544
R_W2F_HH = R_W2B_IH + 2 * HP       # 800
R_W2B_HH = R_W2F_HH + HP           # 928
W_ROWS = R_W2B_HH + HP             # 1056

# ---- row offsets inside the MLP weight slab ----
R_M1 = 0                           # 256 rows (h2f part 0:128, h2b part 128:256)
R_M2 = R_M1 + 2 * HP               # 256
R_M3 = R_M2 + HP                   # 384
WM_ROWS = R_M3 + HP                # 512


def _sigmoid(x):
    # tanh lowers to the EUP (its own bundle slot) instead of a VPU divide chain.
    return 0.5 * jnp.tanh(0.5 * x) + 0.5


def _lstm_step(gates, c):
    """gates: (Bp, 4*HP) f32 in PyTorch order i,f,g,o, each gate lane-aligned."""
    i_g = _sigmoid(gates[:, 0 * HP:1 * HP])
    f_g = _sigmoid(gates[:, 1 * HP:2 * HP])
    g_g = jnp.tanh(gates[:, 2 * HP:3 * HP])
    o_g = _sigmoid(gates[:, 3 * HP:4 * HP])
    c_new = f_g * c + i_g * g_g
    h_new = o_g * jnp.tanh(c_new)
    return h_new, c_new


def _dot(a, b):
    return jnp.dot(a, b, preferred_element_type=jnp.float32)


# --------------------------------------------------------------------------
# Fused kernel: lstm1 (fwd+bwd) -> [BN folded] -> lstm2 (fwd+bwd) -> MLP head
# --------------------------------------------------------------------------
def _make_kernel(T, Bp):
    def kernel(x_ref,                 # (T*Bp, DIN_PAD)  f32
               w_ref,                 # (W_ROWS, G)      bf16  gate-weight slab
               b_ref,                 # (4, G)           f32   gate-bias slab
               wm_ref,                # (WM_ROWS, HP)    bf16  MLP weight slab
               bm_ref,                # (3, HP)          f32   MLP bias slab
               logits_ref,            # (Bp, HP)         f32
               states_ref,            # (8, Bp, HP)      f32  h1f,c1f,h1b,c1b,h2f,c2f,h2b,c2b
               xp1f_sc, xp1b_sc,      # (T*Bp, G)  f32 scratch: layer-1 input proj
               out1_sc,               # (T*Bp, 2*HP) f32 scratch: layer-1 outputs (fwd|bwd lanes)
               xp2f_sc, xp2b_sc):     # (T*Bp, G)  f32 scratch: layer-2 input proj
        bf16 = MXU_DTYPE
        zeros = jnp.zeros((Bp, HP), jnp.float32)

        # ---- hoisted layer-1 input projections: one batched matmul / direction ----
        xb = x_ref[...].astype(bf16)                                  # (T*Bp, DIN_PAD)
        xp1f_sc[...] = _dot(xb, w_ref[R_W1F_IH:R_W1F_IH + DIN_PAD, :]) + b_ref[0:1, :]
        xp1b_sc[...] = _dot(xb, w_ref[R_W1B_IH:R_W1B_IH + DIN_PAD, :]) + b_ref[1:2, :]

        # ---- layer-1 recurrence: only h @ W_hh on the serial path ----
        w1f_hh = w_ref[R_W1F_HH:R_W1F_HH + HP, :]
        w1b_hh = w_ref[R_W1B_HH:R_W1B_HH + HP, :]
        hf, cf, hb, cb = zeros, zeros, zeros, zeros
        for t in range(T):
            gf = xp1f_sc[t * Bp:(t + 1) * Bp, :] + _dot(hf.astype(bf16), w1f_hh)
            hf, cf = _lstm_step(gf, cf)
            gb = xp1b_sc[(T - 1 - t) * Bp:(T - t) * Bp, :] + _dot(hb.astype(bf16), w1b_hh)
            hb, cb = _lstm_step(gb, cb)
            out1_sc[t * Bp:(t + 1) * Bp, 0:HP] = hf
            out1_sc[(T - 1 - t) * Bp:(T - t) * Bp, HP:2 * HP] = hb
        states_ref[0] = hf
        states_ref[1] = cf
        states_ref[2] = hb
        states_ref[3] = cb

        # ---- hoisted layer-2 input projections (BatchNorm folded, K=256) ----
        o1 = out1_sc[...].astype(bf16)                                # (T*Bp, 2*HP)
        xp2f_sc[...] = _dot(o1, w_ref[R_W2F_IH:R_W2F_IH + 2 * HP, :]) + b_ref[2:3, :]
        xp2b_sc[...] = _dot(o1, w_ref[R_W2B_IH:R_W2B_IH + 2 * HP, :]) + b_ref[3:4, :]

        # ---- layer-2 recurrence ----
        w2f_hh = w_ref[R_W2F_HH:R_W2F_HH + HP, :]
        w2b_hh = w_ref[R_W2B_HH:R_W2B_HH + HP, :]
        hf, cf, hb, cb = zeros, zeros, zeros, zeros
        h2b_last = zeros                         # backward output at sequence pos T-1
        for t in range(T):
            gf = xp2f_sc[t * Bp:(t + 1) * Bp, :] + _dot(hf.astype(bf16), w2f_hh)
            hf, cf = _lstm_step(gf, cf)
            gb = xp2b_sc[(T - 1 - t) * Bp:(T - t) * Bp, :] + _dot(hb.astype(bf16), w2b_hh)
            hb, cb = _lstm_step(gb, cb)
            if t == 0:
                h2b_last = hb
        states_ref[4] = hf
        states_ref[5] = cf
        states_ref[6] = hb
        states_ref[7] = cb

        # ---- MLP head on the last timestep, fused ----
        mlp_in = jnp.concatenate([hf, h2b_last], axis=1).astype(bf16)   # (Bp, 2*HP)
        h = _dot(mlp_in, wm_ref[R_M1:R_M1 + 2 * HP, :]) + bm_ref[0:1, :]
        h = jnp.maximum(h, 0.0)
        h = _dot(h.astype(bf16), wm_ref[R_M2:R_M2 + HP, :]) + bm_ref[1:2, :]
        h = jnp.maximum(h, 0.0)
        logits_ref[...] = _dot(h.astype(bf16), wm_ref[R_M3:R_M3 + HP, :]) + bm_ref[2:3, :]

    return kernel


# --------------------------------------------------------------------------
# Parameter initialization (PyTorch-style raw params).
# --------------------------------------------------------------------------
def init_raw_params(key, inputdim=5, outputdim=8):
    keys = iter(jax.random.split(key, 64))

    def uniform(shape, k):
        return jax.random.uniform(next(keys), shape, jnp.float32, -k, k)

    def lstm_dir(din, H):
        k = 1.0 / (H ** 0.5)
        return dict(w_ih=uniform((4 * H, din), k), w_hh=uniform((4 * H, H), k),
                    b_ih=uniform((4 * H,), k), b_hh=uniform((4 * H,), k))

    def linear(din, dout):
        k = 1.0 / (din ** 0.5)
        return uniform((dout, din), k), uniform((dout,), k)

    return {
        "emb": jax.random.normal(next(keys), (25, 1), jnp.float32),
        "l1f": lstm_dir(inputdim, H1), "l1b": lstm_dir(inputdim, H1),
        "l2f": lstm_dir(2 * H1, H2), "l2b": lstm_dir(2 * H1, H2),
        "bn_gamma": jnp.ones((2 * H1,), jnp.float32),
        "bn_beta": jnp.zeros((2 * H1,), jnp.float32),
        "bn_mean": jnp.zeros((2 * H1,), jnp.float32),
        "bn_var": jnp.ones((2 * H1,), jnp.float32),
        "mlp1": linear(2 * H2, 56), "mlp2": linear(56, 32),
        "mlp3": linear(32, outputdim),
    }


# --------------------------------------------------------------------------
# Host-side: padding, lane-aligned gate layout, BN folding, slab packing.
# --------------------------------------------------------------------------
def _pad_to(x, shape):
    return jnp.pad(x, [(0, s - d) for d, s in zip(x.shape, shape)])


def _gate_pad(wT, H):
    """(D, 4H) with gate order i,f,g,o -> (D, 4*HP), each gate lane-aligned."""
    D = wT.shape[0]
    return _pad_to(wT.reshape(D, 4, H), (D, 4, HP)).reshape(D, 4 * HP)


def prepare_kernel_params(raw):
    def lstm1_dir(p):
        w_ih = _pad_to(_gate_pad(p["w_ih"].T, H1), (DIN_PAD, G))
        w_hh = _pad_to(_gate_pad(p["w_hh"].T, H1), (HP, G))
        b = _gate_pad((p["b_ih"] + p["b_hh"]).reshape(1, 4 * H1), H1)      # (1, G)
        return w_ih, w_hh, b

    # eval-mode BatchNorm1d(216): y = scale*x + shift, folded into lstm2 W_ih / bias
    eps = jnp.float32(1e-5)
    bn_scale = raw["bn_gamma"] * lax.rsqrt(raw["bn_var"] + eps)            # (216,)
    bn_shift = raw["bn_beta"] - bn_scale * raw["bn_mean"]                  # (216,)

    def lstm2_dir(p):
        w_ih_T = p["w_ih"].T                                               # (216, 4*H2)
        b = p["b_ih"] + p["b_hh"] + bn_shift @ w_ih_T                      # fold BN shift
        w_ih_T = w_ih_T * bn_scale[:, None]                                # fold BN scale
        w_f = _pad_to(_gate_pad(w_ih_T[:H1], H2), (HP, G))                 # from l1 fwd
        w_b = _pad_to(_gate_pad(w_ih_T[H1:], H2), (HP, G))                 # from l1 bwd
        w_ih = jnp.concatenate([w_f, w_b], axis=0)                         # (2*HP, G), K-concat
        w_hh = _pad_to(_gate_pad(p["w_hh"].T, H2), (HP, G))
        bb = _gate_pad(b.reshape(1, 4 * H2), H2)                           # (1, G)
        return w_ih, w_hh, bb

    w1f_ih, w1f_hh, b1f = lstm1_dir(raw["l1f"])
    w1b_ih, w1b_hh, b1b = lstm1_dir(raw["l1b"])
    w2f_ih, w2f_hh, b2f = lstm2_dir(raw["l2f"])
    w2b_ih, w2b_hh, b2b = lstm2_dir(raw["l2b"])

    # one contiguous gate-weight slab (bf16 MXU operands)
    w_slab = jnp.concatenate(
        [w1f_ih, w1b_ih, w1f_hh, w1b_hh, w2f_ih, w2b_ih, w2f_hh, w2b_hh],
        axis=0).astype(MXU_DTYPE)
    assert w_slab.shape == (W_ROWS, G)

    b_slab = jnp.concatenate([b1f, b1b, b2f, b2b], axis=0)                 # (4, G) f32

    # MLP head slab: Linear(112,56) split into fwd/bwd halves, then Linear(56,32), Linear(32,out)
    w1, bias1 = raw["mlp1"]
    w1T = w1.T                                                             # (112, 56)
    wm1f = _pad_to(w1T[:H2], (HP, HP))
    wm1b = _pad_to(w1T[H2:], (HP, HP))
    w2m, bias2 = raw["mlp2"]
    wm2 = _pad_to(w2m.T, (HP, HP))
    w3m, bias3 = raw["mlp3"]
    wm3 = _pad_to(w3m.T, (HP, HP))
    wm_slab = jnp.concatenate([wm1f, wm1b, wm2, wm3], axis=0).astype(MXU_DTYPE)
    assert wm_slab.shape == (WM_ROWS, HP)

    bm_slab = jnp.concatenate([_pad_to(bias1.reshape(1, -1), (1, HP)),
                               _pad_to(bias2.reshape(1, -1), (1, HP)),
                               _pad_to(bias3.reshape(1, -1), (1, HP))], axis=0)  # (3, HP)

    return w_slab, b_slab, wm_slab, bm_slab


# --------------------------------------------------------------------------
# Full forward (mirrors BiLSTM.forward with h/c = zeros, eval-mode BN/dropout).
# --------------------------------------------------------------------------
def bilstm_forward(x, raw, kparams, outputdim):
    B, T, _ = x.shape
    Bp = max(BP_MIN, ((B + 7) // 8) * 8)
    w_slab, b_slab, wm_slab, bm_slab = kparams

    # embedding lookup + feature concat (glue, plain JAX gather outside the kernel)
    idx = x[:, :, 4].astype(jnp.int32)
    embed = raw["emb"][idx]                                       # (B, T, 1)
    feats = jnp.concatenate([embed, x[:, :, :4]], axis=2)         # (B, T, 5)
    feats = jnp.transpose(feats, (1, 0, 2))                       # (T, B, 5)
    feats = jnp.pad(feats, ((0, 0), (0, Bp - B), (0, DIN_PAD - feats.shape[2])))
    feats = feats.reshape(T * Bp, DIN_PAD)                        # (T*Bp, 16)

    kernel = _make_kernel(T, Bp)
    logits, states = pl.pallas_call(
        kernel,
        out_shape=(jax.ShapeDtypeStruct((Bp, HP), jnp.float32),
                   jax.ShapeDtypeStruct((8, Bp, HP), jnp.float32)),
        scratch_shapes=[pltpu.VMEM((T * Bp, G), jnp.float32),       # layer-1 fwd input proj
                        pltpu.VMEM((T * Bp, G), jnp.float32),       # layer-1 bwd input proj
                        pltpu.VMEM((T * Bp, 2 * HP), jnp.float32),  # layer-1 outputs (fwd|bwd)
                        pltpu.VMEM((T * Bp, G), jnp.float32),       # layer-2 fwd input proj
                        pltpu.VMEM((T * Bp, G), jnp.float32)],      # layer-2 bwd input proj
        compiler_params=pltpu.CompilerParams(vmem_limit_bytes=32 * 1024 * 1024),
    )(feats, w_slab, b_slab, wm_slab, bm_slab)

    out = logits[:B, :outputdim]
    h1 = jnp.stack([states[0, :B, :H1], states[2, :B, :H1]], axis=0)
    c1 = jnp.stack([states[1, :B, :H1], states[3, :B, :H1]], axis=0)
    h2 = jnp.stack([states[4, :B, :H2], states[6, :B, :H2]], axis=0)
    c2 = jnp.stack([states[5, :B, :H2], states[7, :B, :H2]], axis=0)
    return out, h1, c1, h2, c2


if __name__ == "__main__":
    key = jax.random.PRNGKey(0)
    pkey, xkey, ikey = jax.random.split(key, 3)

    LAYERDIM = 1
    OUTPUTDIM = 8
    B, T = 2, 8           # columns 0..3 real features, column 4 embedding id

    raw = init_raw_params(pkey, inputdim=5, outputdim=OUTPUTDIM)
    kparams = prepare_kernel_params(raw)

    x_feat = jax.random.normal(xkey, (B, T, 4), jnp.float32)
    x_idx = jax.random.randint(ikey, (B, T, 1), 0, 25).astype(jnp.float32)
    x = jnp.concatenate([x_feat, x_idx], axis=2)                  # (B, T, 5)

    out, h1, c1, h2, c2 = bilstm_forward(x, raw, kparams, OUTPUTDIM)
    jax.block_until_ready((out, h1, c1, h2, c2))

    assert out.shape == (B, OUTPUTDIM)
    assert h1.shape == (LAYERDIM * 2, B, 108) and c1.shape == (LAYERDIM * 2, B, 108)
    assert h2.shape == (LAYERDIM * 2, B, 56) and c2.shape == (LAYERDIM * 2, B, 56)
    assert bool(jnp.all(jnp.isfinite(out)))
    assert bool(jnp.all(jnp.isfinite(h1))) and bool(jnp.all(jnp.isfinite(h2)))
    print("KERNEL_OK")
</pallas_src>

<mosaic_0001>
module attributes {stable_mosaic.version = 11 : i64} {
  func.func @kernel(%arg0: memref<64x16xf32, #tpu.memory_space<vmem>>, %arg1: memref<1056x512xbf16, #tpu.memory_space<vmem>>, %arg2: memref<4x512xf32, #tpu.memory_space<vmem>>, %arg3: memref<512x128xbf16, #tpu.memory_space<vmem>>, %arg4: memref<3x128xf32, #tpu.memory_space<vmem>>, %arg5: memref<8x128xf32, #tpu.memory_space<vmem>>, %arg6: memref<8x8x128xf32, #tpu.memory_space<vmem>>, %arg7: memref<64x512xf32, #tpu.memory_space<vmem>>, %arg8: memref<64x512xf32, #tpu.memory_space<vmem>>, %arg9: memref<64x256xf32, #tpu.memory_space<vmem>>, %arg10: memref<64x512xf32, #tpu.memory_space<vmem>>, %arg11: memref<64x512xf32, #tpu.memory_space<vmem>>) attributes {dimension_semantics = [], scalar_prefetch = 0 : i64, scratch_operands = 5 : i64, tpu.core_type = #tpu.core_type<tc>} {
    %cst = arith.constant 0.000000e+00 : f32
    %0 = vector.broadcast %cst : f32 to vector<8x128xf32>
    %c0 = arith.constant 0 : index
    %c0_0 = arith.constant 0 : index
    %1 = vector.load %arg0[%c0, %c0_0] : memref<64x16xf32, #tpu.memory_space<vmem>>, vector<64x16xf32>
    %2 = arith.truncf %1 : vector<64x16xf32> to vector<64x16xbf16>
    %c0_1 = arith.constant 0 : index
    %c0_2 = arith.constant 0 : index
    %3 = vector.load %arg1[%c0_1, %c0_2] : memref<1056x512xbf16, #tpu.memory_space<vmem>>, vector<16x512xbf16>
    %cst_3 = arith.constant dense<0.000000e+00> : vector<64x512xf32>
    %4 = tpu.matmul %2, %3, %cst_3 {dimension_numbers = #tpu.dot_dimension_numbers<[1], [0], [0], [1], [0, 0, 1, 1], [], []>} : vector<64x16xbf16>, vector<16x512xbf16>, vector<64x512xf32> -> vector<64x512xf32>
    %c0_4 = arith.constant 0 : index
    %c0_5 = arith.constant 0 : index
    %5 = vector.load %arg2[%c0_4, %c0_5] : memref<4x512xf32, #tpu.memory_space<vmem>>, vector<1x512xf32>
    %6 = vector.broadcast %5 : vector<1x512xf32> to vector<64x512xf32>
    %7 = arith.addf %4, %6 : vector<64x512xf32>
    %c0_6 = arith.constant 0 : index
    %c0_7 = arith.constant 0 : index
    %8 = vector.load %arg7[%c0_6, %c0_7] : memref<64x512xf32, #tpu.memory_space<vmem>>, vector<64x512xf32>
    tpu.vector_store %arg7[%c0_6, %c0_7], %7 {strides = array<i32>} : memref<64x512xf32, #tpu.memory_space<vmem>>, vector<64x512xf32>,
    %c16 = arith.constant 16 : index
    %c0_8 = arith.constant 0 : index
    %9 = vector.load %arg1[%c16, %c0_8] : memref<1056x512xbf16, #tpu.memory_space<vmem>>, vector<16x512xbf16>
    %cst_9 = arith.constant dense<0.000000e+00> : vector<64x512xf32>
    %10 = tpu.matmul %2, %9, %cst_9 {dimension_numbers = #tpu.dot_dimension_numbers<[1], [0], [0], [1], [0, 0, 1, 1], [], []>} : vector<64x16xbf16>, vector<16x512xbf16>, vector<64x512xf32> -> vector<64x512xf32>
    %c1 = arith.constant 1 : index
    %c0_10 = arith.constant 0 : index
    %11 = vector.load %arg2[%c1, %c0_10] : memref<4x512xf32, #tpu.memory_space<vmem>>, vector<1x512xf32>
    %12 = vector.broadcast %11 : vector<1x512xf32> to vector<64x512xf32>
    %13 = arith.addf %10, %12 : vector<64x512xf32>
    %c0_11 = arith.constant 0 : index
    %c0_12 = arith.constant 0 : index
    %14 = vector.load %arg8[%c0_11, %c0_12] : memref<64x512xf32, #tpu.memory_space<vmem>>, vector<64x512xf32>
    tpu.vector_store %arg8[%c0_11, %c0_12], %13 {strides = array<i32>} : memref<64x512xf32, #tpu.memory_space<vmem>>, vector<64x512xf32>,
    %c32 = arith.constant 32 : index
    %c0_13 = arith.constant 0 : index
    %15 = vector.load %arg1[%c32, %c0_13] : memref<1056x512xbf16, #tpu.memory_space<vmem>>, vector<128x512xbf16>
    %c160 = arith.constant 160 : index
    %c0_14 = arith.constant 0 : index
    %16 = vector.load %arg1[%c160, %c0_14] : memref<1056x512xbf16, #tpu.memory_space<vmem>>, vector<128x512xbf16>
    %c0_15 = arith.constant 0 : index
    %c0_16 = arith.constant 0 : index
    %17 = vector.load %arg7[%c0_15, %c0_16] : memref<64x512xf32, #tpu.memory_space<vmem>>, vector<8x512xf32>
    %18 = arith.truncf %0 : vector<8x128xf32> to vector<8x128xbf16>
    %cst_17 = arith.constant dense<0.000000e+00> : vector<8x512xf32>
    %19 = tpu.matmul %18, %15, %cst_17 {dimension_numbers = #tpu.dot_dimension_numbers<[1], [0], [0], [1], [0, 0, 1, 1], [], []>} : vector<8x128xbf16>, vector<128x512xbf16>, vector<8x512xf32> -> vector<8x512xf32>
    %20 = arith.addf %17, %19 : vector<8x512xf32>
    %21 = vector.extract_strided_slice %20 {offsets = [0, 0], sizes = [8, 128], strides = [1, 1]} : vector<8x512xf32> to vector<8x128xf32>
    %cst_18 = arith.constant 5.000000e-01 : f32
    %22 = vector.broadcast %cst_18 : f32 to vector<8x128xf32>
    %23 = arith.mulf %22, %21 : vector<8x128xf32>
    %24 = math.tanh %23 : vector<8x128xf32>
    %cst_19 = arith.constant 5.000000e-01 : f32
    %25 = vector.broadcast %cst_19 : f32 to vector<8x128xf32>
    %26 = arith.mulf %25, %24 : vector<8x128xf32>
    %cst_20 = arith.constant 5.000000e-01 : f32
    %27 = vector.broadcast %cst_20 : f32 to vector<8x128xf32>
    %28 = arith.addf %26, %27 : vector<8x128xf32>
    %29 = vector.extract_strided_slice %20 {offsets = [0, 128], sizes = [8, 128], strides = [1, 1]} : vector<8x512xf32> to vector<8x128xf32>
    %cst_21 = arith.constant 5.000000e-01 : f32
    %30 = vector.broadcast %cst_21 : f32 to vector<8x128xf32>
    %31 = arith.mulf %30, %29 : vector<8x128xf32>
    %32 = math.tanh %31 : vector<8x128xf32>
    %cst_22 = arith.constant 5.000000e-01 : f32
    %33 = vector.broadcast %cst_22 : f32 to vector<8x128xf32>
    %34 = arith.mulf %33, %32 : vector<8x128xf32>
    %cst_23 = arith.constant 5.000000e-01 : f32
    %35 = vector.broadcast %cst_23 : f32 to vector<8x128xf32>
    %36 = arith.addf %34, %35 : vector<8x128xf32>
    %37 = vector.extract_strided_slice %20 {offsets = [0, 256], sizes = [8, 128], strides = [1, 1]} : vector<8x512xf32> to vector<8x128xf32>
    %38 = math.tanh %37 : vector<8x128xf32>
    %39 = vector.extract_strided_slice %20 {offsets = [0, 384], sizes = [8, 128], strides = [1, 1]} : vector<8x512xf32> to vector<8x128xf32>
    %cst_24 = arith.constant 5.000000e-01 : f32
    %40 = vector.broadcast %cst_24 : f32 to vector<8x128xf32>
    %41 = arith.mulf %40, %39 : vector<8x128xf32>
    %42 = math.tanh %41 : vector<8x128xf32>
    %cst_25 = arith.constant 5.000000e-01 : f32
    %43 = vector.broadcast %cst_25 : f32 to vector<8x128xf32>
    %44 = arith.mulf %43, %42 : vector<8x128xf32>
    %cst_26 = arith.constant 5.000000e-01 : f32
    %45 = vector.broadcast %cst_26 : f32 to vector<8x128xf32>
    %46 = arith.addf %44, %45 : vector<8x128xf32>
    %47 = arith.mulf %36, %0 : vector<8x128xf32>
    %48 = arith.mulf %28, %38 : vector<8x128xf32>
    %49 = arith.addf %47, %48 : vector<8x128xf32>
    %50 = math.tanh %49 : vector<8x128xf32>
    %51 = arith.mulf %46, %50 : vector<8x128xf32>
    %c56 = arith.constant 56 : index
    %c0_27 = arith.constant 0 : index
    %52 = vector.load %arg8[%c56, %c0_27] : memref<64x512xf32, #tpu.memory_space<vmem>>, vector<8x512xf32>
    %53 = arith.truncf %0 : vector<8x128xf32> to vector<8x128xbf16>
    %cst_28 = arith.constant dense<0.000000e+00> : vector<8x512xf32>
    %54 = tpu.matmul %53, %16, %cst_28 {dimension_numbers = #tpu.dot_dimension_numbers<[1], [0], [0], [1], [0, 0, 1, 1], [], []>} : vector<8x128xbf16>, vector<128x512xbf16>, vector<8x512xf32> -> vector<8x512xf32>
    %55 = arith.addf %52, %54 : vector<8x512xf32>
    %56 = vector.extract_strided_slice %55 {offsets = [0, 0], sizes = [8, 128], strides = [1, 1]} : vector<8x512xf32> to vector<8x128xf32>
    %cst_29 = arith.constant 5.000000e-01 : f32
    %57 = vector.broadcast %cst_29 : f32 to vector<8x128xf32>
    %58 = arith.mulf %57, %56 : vector<8x128xf32>
    %59 = math.tanh %58 : vector<8x128xf32>
    %cst_30 = arith.constant 5.000000e-01 : f32
    %60 = vector.broadcast %cst_30 : f32 to vector<8x128xf32>
    %61 = arith.mulf %60, %59 : vector<8x128xf32>
    %cst_31 = arith.constant 5.000000e-01 : f32
    %62 = vector.broadcast %cst_31 : f32 to vector<8x128xf32>
    %63 = arith.addf %61, %62 : vector<8x128xf32>
    %64 = vector.extract_strided_slice %55 {offsets = [0, 128], sizes = [8, 128], strides = [1, 1]} : vector<8x512xf32> to vector<8x128xf32>
    %cst_32 = arith.constant 5.000000e-01 : f32
    %65 = vector.broadcast %cst_32 : f32 to vector<8x128xf32>
    %66 = arith.mulf %65, %64 : vector<8x128xf32>
    %67 = math.tanh %66 : vector<8x128xf32>
    %cst_33 = arith.constant 5.000000e-01 : f32
    %68 = vector.broadcast %cst_33 : f32 to vector<8x128xf32>
    %69 = arith.mulf %68, %67 : vector<8x128xf32>
    %cst_34 = arith.constant 5.000000e-01 : f32
    %70 = vector.broadcast %cst_34 : f32 to vector<8x128xf32>
    %71 = arith.addf %69, %70 : vector<8x128xf32>
    %72 = vector.extract_strided_slice %55 {offsets = [0, 256], sizes = [8, 128], strides = [1, 1]} : vector<8x512xf32> to vector<8x128xf32>
    %73 = math.tanh %72 : vector<8x128xf32>
    %74 = vector.extract_strided_slice %55 {offsets = [0, 384], sizes = [8, 128], strides = [1, 1]} : vector<8x512xf32> to vector<8x128xf32>
    %cst_35 = arith.constant 5.000000e-01 : f32
    %75 = vector.broadcast %cst_35 : f32 to vector<8x128xf32>
    %76 = arith.mulf %75, %74 : vector<8x128xf32>
    %77 = math.tanh %76 : vector<8x128xf32>
    %cst_36 = arith.constant 5.000000e-01 : f32
    %78 = vector.broadcast %cst_36 : f32 to vector<8x128xf32>
    %79 = arith.mulf %78, %77 : vector<8x128xf32>
    %cst_37 = arith.constant 5.000000e-01 : f32
    %80 = vector.broadcast %cst_37 : f32 to vector<8x128xf32>
    %81 = arith.addf %79, %80 : vector<8x128xf32>
    %82 = arith.mulf %71, %0 : vector<8x128xf32>
    %83 = arith.mulf %63, %73 : vector<8x128xf32>
    %84 = arith.addf %82, %83 : vector<8x128xf32>
    %85 = math.tanh %84 : vector<8x128xf32>
    %86 = arith.mulf %81, %85 : vector<8x128xf32>
    %c0_38 = arith.constant 0 : index
    %c0_39 = arith.constant 0 : index
    %87 = vector.load %arg9[%c0_38, %c0_39] : memref<64x256xf32, #tpu.memory_space<vmem>>, vector<8x128xf32>
    tpu.vector_store %arg9[%c0_38, %c0_39], %51 {strides = array<i32>} : memref<64x256xf32, #tpu.memory_space<vmem>>, vector<8x128xf32>,
    %c56_40 = arith.constant 56 : index
    %c128 = arith.constant 128 : index
    %88 = vector.load %arg9[%c56_40, %c128] : memref<64x256xf32, #tpu.memory_space<vmem>>, vector<8x128xf32>
    tpu.vector_store %arg9[%c56_40, %c128], %86 {strides = array<i32>} : memref<64x256xf32, #tpu.memory_space<vmem>>, vector<8x128xf32>,
    %c8 = arith.constant 8 : index
    %c0_41 = arith.constant 0 : index
    %89 = vector.load %arg7[%c8, %c0_41] : memref<64x512xf32, #tpu.memory_space<vmem>>, vector<8x512xf32>
    %90 = arith.truncf %51 : vector<8x128xf32> to vector<8x128xbf16>
    %cst_42 = arith.constant dense<0.000000e+00> : vector<8x512xf32>
    %91 = tpu.matmul %90, %15, %cst_42 {dimension_numbers = #tpu.dot_dimension_numbers<[1], [0], [0], [1], [0, 0, 1, 1], [], []>} : vector<8x128xbf16>, vector<128x512xbf16>, vector<8x512xf32> -> vector<8x512xf32>
    %92 = arith.addf %89, %91 : vector<8x512xf32>
    %93 = vector.extract_strided_slice %92 {offsets = [0, 0], sizes = [8, 128], strides = [1, 1]} : vector<8x512xf32> to vector<8x128xf32>
    %cst_43 = arith.constant 5.000000e-01 : f32
    %94 = vector.broadcast %cst_43 : f32 to vector<8x128xf32>
    %95 = arith.mulf %94, %93 : vector<8x128xf32>
    %96 = math.tanh %95 : vector<8x128xf32>
    %cst_44 = arith.constant 5.000000e-01 : f32
    %97 = vector.broadcast %cst_44 : f32 to vector<8x128xf32>
    %98 = arith.mulf %97, %96 : vector<8x128xf32>
    %cst_45 = arith.constant 5.000000e-01 : f32
    %99 = vector.broadcast %cst_45 : f32 to vector<8x128xf32>
    %100 = arith.addf %98, %99 : vector<8x128xf32>
    %101 = vector.extract_strided_slice %92 {offsets = [0, 128], sizes = [8, 128], strides = [1, 1]} : vector<8x512xf32> to vector<8x128xf32>
    %cst_46 = arith.constant 5.000000e-01 : f32
    %102 = vector.broadcast %cst_46 : f32 to vector<8x128xf32>
    %103 = arith.mulf %102, %101 : vector<8x128xf32>
    %104 = math.tanh %103 : vector<8x128xf32>
    %cst_47 = arith.constant 5.000000e-01 : f32
    %105 = vector.broadcast %cst_47 : f32 to vector<8x128xf32>
    %106 = arith.mulf %105, %104 : vector<8x128xf32>
    %cst_48 = arith.constant 5.000000e-01 : f32
    %107 = vector.broadcast %cst_48 : f32 to vector<8x128xf32>
    %108 = arith.addf %106, %107 : vector<8x128xf32>
    %109 = vector.extract_strided_slice %92 {offsets = [0, 256], sizes = [8, 128], strides = [1, 1]} : vector<8x512xf32> to vector<8x128xf32>
    %110 = math.tanh %109 : vector<8x128xf32>
    %111 = vector.extract_strided_slice %92 {offsets = [0, 384], sizes = [8, 128], strides = [1, 1]} : vector<8x512xf32> to vector<8x128xf32>
    %cst_49 = arith.constant 5.000000e-01 : f32
    %112 = vector.broadcast %cst_49 : f32 to vector<8x128xf32>
    %113 = arith.mulf %112, %111 : vector<8x128xf32>
    %114 = math.tanh %113 : vector<8x128xf32>
    %cst_50 = arith.constant 5.000000e-01 : f32
    %115 = vector.broadcast %cst_50 : f32 to vector<8x128xf32>
    %116 = arith.mulf %115, %114 : vector<8x128xf32>
    %cst_51 = arith.constant 5.000000e-01 : f32
    %117 = vector.broadcast %cst_51 : f32 to vector<8x128xf32>
    %118 = arith.addf %116, %117 : vector<8x128xf32>
    %119 = arith.mulf %108, %49 : vector<8x128xf32>
    %120 = arith.mulf %100, %110 : vector<8x128xf32>
    %121 = arith.addf %119, %120 : vector<8x128xf32>
    %122 = math.tanh %121 : vector<8x128xf32>
    %123 = arith.mulf %118, %122 : vector<8x128xf32>
    %c48 = arith.constant 48 : index
    %c0_52 = arith.constant 0 : index
    %124 = vector.load %arg8[%c48, %c0_52] : memref<64x512xf32, #tpu.memory_space<vmem>>, vector<8x512xf32>
    %125 = arith.truncf %86 : vector<8x128xf32> to vector<8x128xbf16>
    %cst_53 = arith.constant dense<0.000000e+00> : vector<8x512xf32>
    %126 = tpu.matmul %125, %16, %cst_53 {dimension_numbers = #tpu.dot_dimension_numbers<[1], [0], [0], [1], [0, 0, 1, 1], [], []>} : vector<8x128xbf16>, vector<128x512xbf16>, vector<8x512xf32> -> vector<8x512xf32>
    %127 = arith.addf %124, %126 : vector<8x512xf32>
    %128 = vector.extract_strided_slice %127 {offsets = [0, 0], sizes = [8, 128], strides = [1, 1]} : vector<8x512xf32> to vector<8x128xf32>
    %cst_54 = arith.constant 5.000000e-01 : f32
    %129 = vector.broadcast %cst_54 : f32 to vector<8x128xf32>
    %130 = arith.mulf %129, %128 : vector<8x128xf32>
    %131 = math.tanh %130 : vector<8x128xf32>
    %cst_55 = arith.constant 5.000000e-01 : f32
    %132 = vector.broadcast %cst_55 : f32 to vector<8x128xf32>
    %133 = arith.mulf %132, %131 : vector<8x128xf32>
    %cst_56 = arith.constant 5.000000e-01 : f32
    %134 = vector.broadcast %cst_56 : f32 to vector<8x128xf32>
    %135 = arith.addf %133, %134 : vector<8x128xf32>
    %136 = vector.extract_strided_slice %127 {offsets = [0, 128], sizes = [8, 128], strides = [1, 1]} : vector<8x512xf32> to vector<8x128xf32>
    %cst_57 = arith.constant 5.000000e-01 : f32
    %137 = vector.broadcast %cst_57 : f32 to vector<8x128xf32>
    %138 = arith.mulf %137, %136 : vector<8x128xf32>
    %139 = math.tanh %138 : vector<8x128xf32>
    %cst_58 = arith.constant 5.000000e-01 : f32
    %140 = vector.broadcast %cst_58 : f32 to vector<8x128xf32>
    %141 = arith.mulf %140, %139 : vector<8x128xf32>
    %cst_59 = arith.constant 5.000000e-01 : f32
    %142 = vector.broadcast %cst_59 : f32 to vector<8x128xf32>
    %143 = arith.addf %141, %142 : vector<8x128xf32>
    %144 = vector.extract_strided_slice %127 {offsets = [0, 256], sizes = [8, 128], strides = [1, 1]} : vector<8x512xf32> to vector<8x128xf32>
    %145 = math.tanh %144 : vector<8x128xf32>
    %146 = vector.extract_strided_slice %127 {offsets = [0, 384], sizes = [8, 128], strides = [1, 1]} : vector<8x512xf32> to vector<8x128xf32>
    %cst_60 = arith.constant 5.000000e-01 : f32
    %147 = vector.broadcast %cst_60 : f32 to vector<8x128xf32>
    %148 = arith.mulf %147, %146 : vector<8x128xf32>
    %149 = math.tanh %148 : vector<8x128xf32>
    %cst_61 = arith.constant 5.000000e-01 : f32
    %150 = vector.broadcast %cst_61 : f32 to vector<8x128xf32>
    %151 = arith.mulf %150, %149 : vector<8x128xf32>
    %cst_62 = arith.constant 5.000000e-01 : f32
    %152 = vector.broadcast %cst_62 : f32 to vector<8x128xf32>
    %153 = arith.addf %151, %152 : vector<8x128xf32>
    %154 = arith.mulf %143, %84 : vector<8x128xf32>
    %155 = arith.mulf %135, %145 : vector<8x128xf32>
    %156 = arith.addf %154, %155 : vector<8x128xf32>
    %157 = math.tanh %156 : vector<8x128xf32>
    %158 = arith.mulf %153, %157 : vector<8x128xf32>
    %c8_63 = arith.constant 8 : index
    %c0_64 = arith.constant 0 : index
    %159 = vector.load %arg9[%c8_63, %c0_64] : memref<64x256xf32, #tpu.memory_space<vmem>>, vector<8x128xf32>
    tpu.vector_store %arg9[%c8_63, %c0_64], %123 {strides = array<i32>} : memref<64x256xf32, #tpu.memory_space<vmem>>, vector<8x128xf32>,
    %c48_65 = arith.constant 48 : index
    %c128_66 = arith.constant 128 : index
    %160 = vector.load %arg9[%c48_65, %c128_66] : memref<64x256xf32, #tpu.memory_space<vmem>>, vector<8x128xf32>
    tpu.vector_store %arg9[%c48_65, %c128_66], %158 {strides = array<i32>} : memref<64x256xf32, #tpu.memory_space<vmem>>, vector<8x128xf32>,
    %c16_67 = arith.constant 16 : index
    %c0_68 = arith.constant 0 : index
    %161 = vector.load %arg7[%c16_67, %c0_68] : memref<64x512xf32, #tpu.memory_space<vmem>>, vector<8x512xf32>
    %162 = arith.truncf %123 : vector<8x128xf32> to vector<8x128xbf16>
    %cst_69 = arith.constant dense<0.000000e+00> : vector<8x512xf32>
    %163 = tpu.matmul %162, %15, %cst_69 {dimension_numbers = #tpu.dot_dimension_numbers<[1], [0], [0], [1], [0, 0, 1, 1], [], []>} : vector<8x128xbf16>, vector<128x512xbf16>, vector<8x512xf32> -> vector<8x512xf32>
    %164 = arith.addf %161, %163 : vector<8x512xf32>
    %165 = vector.extract_strided_slice %164 {offsets = [0, 0], sizes = [8, 128], strides = [1, 1]} : vector<8x512xf32> to vector<8x128xf32>
    %cst_70 = arith.constant 5.000000e-01 : f32
    %166 = vector.broadcast %cst_70 : f32 to vector<8x128xf32>
    %167 = arith.mulf %166, %165 : vector<8x128xf32>
    %168 = math.tanh %167 : vector<8x128xf32>
    %cst_71 = arith.constant 5.000000e-01 : f32
    %169 = vector.broadcast %cst_71 : f32 to vector<8x128xf32>
    %170 = arith.mulf %169, %168 : vector<8x128xf32>
    %cst_72 = arith.constant 5.000000e-01 : f32
    %171 = vector.broadcast %cst_72 : f32 to vector<8x128xf32>
    %172 = arith.addf %170, %171 : vector<8x128xf32>
    %173 = vector.extract_strided_slice %164 {offsets = [0, 128], sizes = [8, 128], strides = [1, 1]} : vector<8x512xf32> to vector<8x128xf32>
    %cst_73 = arith.constant 5.000000e-01 : f32
    %174 = vector.broadcast %cst_73 : f32 to vector<8x128xf32>
    %175 = arith.mulf %174, %173 : vector<8x128xf32>
    %176 = math.tanh %175 : vector<8x128xf32>
    %cst_74 = arith.constant 5.000000e-01 : f32
    %177 = vector.broadcast %cst_74 : f32 to vector<8x128xf32>
    %178 = arith.mulf %177, %176 : vector<8x128xf32>
    %cst_75 = arith.constant 5.000000e-01 : f32
    %179 = vector.broadcast %cst_75 : f32 to vector<8x128xf32>
    %180 = arith.addf %178, %179 : vector<8x128xf32>
    %181 = vector.extract_strided_slice %164 {offsets = [0, 256], sizes = [8, 128], strides = [1, 1]} : vector<8x512xf32> to vector<8x128xf32>
    %182 = math.tanh %181 : vector<8x128xf32>
    %183 = vector.extract_strided_slice %164 {offsets = [0, 384], sizes = [8, 128], strides = [1, 1]} : vector<8x512xf32> to vector<8x128xf32>
    %cst_76 = arith.constant 5.000000e-01 : f32
    %184 = vector.broadcast %cst_76 : f32 to vector<8x128xf32>
    %185 = arith.mulf %184, %183 : vector<8x128xf32>
    %186 = math.tanh %185 : vector<8x128xf32>
    %cst_77 = arith.constant 5.000000e-01 : f32
    %187 = vector.broadcast %cst_77 : f32 to vector<8x128xf32>
    %188 = arith.mulf %187, %186 : vector<8x128xf32>
    %cst_78 = arith.constant 5.000000e-01 : f32
    %189 = vector.broadcast %cst_78 : f32 to vector<8x128xf32>
    %190 = arith.addf %188, %189 : vector<8x128xf32>
    %191 = arith.mulf %180, %121 : vector<8x128xf32>
    %192 = arith.mulf %172, %182 : vector<8x128xf32>
    %193 = arith.addf %191, %192 : vector<8x128xf32>
    %194 = math.tanh %193 : vector<8x128xf32>
    %195 = arith.mulf %190, %194 : vector<8x128xf32>
    %c40 = arith.constant 40 : index
    %c0_79 = arith.constant 0 : index
    %196 = vector.load %arg8[%c40, %c0_79] : memref<64x512xf32, #tpu.memory_space<vmem>>, vector<8x512xf32>
    %197 = arith.truncf %158 : vector<8x128xf32> to vector<8x128xbf16>
    %cst_80 = arith.constant dense<0.000000e+00> : vector<8x512xf32>
    %198 = tpu.matmul %197, %16, %cst_80 {dimension_numbers = #tpu.dot_dimension_numbers<[1], [0], [0], [1], [0, 0, 1, 1], [], []>} : vector<8x128xbf16>, vector<128x512xbf16>, vector<8x512xf32> -> vector<8x512xf32>
    %199 = arith.addf %196, %198 : vector<8x512xf32>
    %200 = vector.extract_strided_slice %199 {offsets = [0, 0], sizes = [8, 128], strides = [1, 1]} : vector<8x512xf32> to vector<8x128xf32>
    %cst_81 = arith.constant 5.000000e-01 : f32
    %201 = vector.broadcast %cst_81 : f32 to vector<8x128xf32>
    %202 = arith.mulf %201, %200 : vector<8x128xf32>
    %203 = math.tanh %202 : vector<8x128xf32>
    %cst_82 = arith.constant 5.000000e-01 : f32
    %204 = vector.broadcast %cst_82 : f32 to vector<8x128xf32>
    %205 = arith.mulf %204, %203 : vector<8x128xf32>
    %cst_83 = arith.constant 5.000000e-01 : f32
    %206 = vector.broadcast %cst_83 : f32 to vector<8x128xf32>
    %207 = arith.addf %205, %206 : vector<8x128xf32>
    %208 = vector.extract_strided_slice %199 {offsets = [0, 128], sizes = [8, 128], strides = [1, 1]} : vector<8x512xf32> to vector<8x128xf32>
    %cst_84 = arith.constant 5.000000e-01 : f32
    %209 = vector.broadcast %cst_84 : f32 to vector<8x128xf32>
    %210 = arith.mulf %209, %208 : vector<8x128xf32>
    %211 = math.tanh %210 : vector<8x128xf32>
    %cst_85 = arith.constant 5.000000e-01 : f32
    %212 = vector.broadcast %cst_85 : f32 to vector<8x128xf32>
    %213 = arith.mulf %212, %211 : vector<8x128xf32>
    %cst_86 = arith.constant 5.000000e-01 : f32
    %214 = vector.broadcast %cst_86 : f32 to vector<8x128xf32>
    %215 = arith.addf %213, %214 : vector<8x128xf32>
    %216 = vector.extract_strided_slice %199 {offsets = [0, 256], sizes = [8, 128], strides = [1, 1]} : vector<8x512xf32> to vector<8x128xf32>
    %217 = math.tanh %216 : vector<8x128xf32>
    %218 = vector.extract_strided_slice %199 {offsets = [0, 384], sizes = [8, 128], strides = [1, 1]} : vector<8x512xf32> to vector<8x128xf32>
    %cst_87 = arith.constant 5.000000e-01 : f32
    %219 = vector.broadcast %cst_87 : f32 to vector<8x128xf32>
    %220 = arith.mulf %219, %218 : vector<8x128xf32>
    %221 = math.tanh %220 : vector<8x128xf32>
    %cst_88 = arith.constant 5.000000e-01 : f32
    %222 = vector.broadcast %cst_88 : f32 to vector<8x128xf32>
    %223 = arith.mulf %222, %221 : vector<8x128xf32>
    %cst_89 = arith.constant 5.000000e-01 : f32
    %224 = vector.broadcast %cst_89 : f32 to vector<8x128xf32>
    %225 = arith.addf %223, %224 : vector<8x128xf32>
    %226 = arith.mulf %215, %156 : vector<8x128xf32>
    %227 = arith.mulf %207, %217 : vector<8x128xf32>
    %228 = arith.addf %226, %227 : vector<8x128xf32>
    %229 = math.tanh %228 : vector<8x128xf32>
    %230 = arith.mulf %225, %229 : vector<8x128xf32>
    %c16_90 = arith.constant 16 : index
    %c0_91 = arith.constant 0 : index
    %231 = vector.load %arg9[%c16_90, %c0_91] : memref<64x256xf32, #tpu.memory_space<vmem>>, vector<8x128xf32>
    tpu.vector_store %arg9[%c16_90, %c0_91], %195 {strides = array<i32>} : memref<64x256xf32, #tpu.memory_space<vmem>>, vector<8x128xf32>,
    %c40_92 = arith.constant 40 : index
    %c128_93 = arith.constant 128 : index
    %232 = vector.load %arg9[%c40_92, %c128_93] : memref<64x256xf32, #tpu.memory_space<vmem>>, vector<8x128xf32>
    tpu.vector_store %arg9[%c40_92, %c128_93], %230 {strides = array<i32>} : memref<64x256xf32, #tpu.memory_space<vmem>>, vector<8x128xf32>,
    %c24 = arith.constant 24 : index
    %c0_94 = arith.constant 0 : index
    %233 = vector.load %arg7[%c24, %c0_94] : memref<64x512xf32, #tpu.memory_space<vmem>>, vector<8x512xf32>
    %234 = arith.truncf %195 : vector<8x128xf32> to vector<8x128xbf16>
    %cst_95 = arith.constant dense<0.000000e+00> : vector<8x512xf32>
    %235 = tpu.matmul %234, %15, %cst_95 {dimension_numbers = #tpu.dot_dimension_numbers<[1], [0], [0], [1], [0, 0, 1, 1], [], []>} : vector<8x128xbf16>, vector<128x512xbf16>, vector<8x512xf32> -> vector<8x512xf32>
    %236 = arith.addf %233, %235 : vector<8x512xf32>
    %237 = vector.extract_strided_slice %236 {offsets = [0, 0], sizes = [8, 128], strides = [1, 1]} : vector<8x512xf32> to vector<8x128xf32>
    %cst_96 = arith.constant 5.000000e-01 : f32
    %238 = vector.broadcast %cst_96 : f32 to vector<8x128xf32>
    %239 = arith.mulf %238, %237 : vector<8x128xf32>
    %240 = math.tanh %239 : vector<8x128xf32>
    %cst_97 = arith.constant 5.000000e-01 : f32
    %241 = vector.broadcast %cst_97 : f32 to vector<8x128xf32>
    %242 = arith.mulf %241, %240 : vector<8x128xf32>
    %cst_98 = arith.constant 5.000000e-01 : f32
    %243 = vector.broadcast %cst_98 : f32 to vector<8x128xf32>
    %244 = arith.addf %242, %243 : vector<8x128xf32>
    %245 = vector.extract_strided_slice %236 {offsets = [0, 128], sizes = [8, 128], strides = [1, 1]} : vector<8x512xf32> to vector<8x128xf32>
    %cst_99 = arith.constant 5.000000e-01 : f32
    %246 = vector.broadcast %cst_99 : f32 to vector<8x128xf32>
    %247 = arith.mulf %246, %245 : vector<8x128xf32>
    %248 = math.tanh %247 : vector<8x128xf32>
    %cst_100 = arith.constant 5.000000e-01 : f32
    %249 = vector.broadcast %cst_100 : f32 to vector<8x128xf32>
    %250 = arith.mulf %249, %248 : vector<8x128xf32>
    %cst_101 = arith.constant 5.000000e-01 : f32
    %251 = vector.broadcast %cst_101 : f32 to vector<8x128xf32>
    %252 = arith.addf %250, %251 : vector<8x128xf32>
    %253 = vector.extract_strided_slice %236 {offsets = [0, 256], sizes = [8, 128], strides = [1, 1]} : vector<8x512xf32> to vector<8x128xf32>
    %254 = math.tanh %253 : vector<8x128xf32>
    %255 = vector.extract_strided_slice %236 {offsets = [0, 384], sizes = [8, 128], strides = [1, 1]} : vector<8x512xf32> to vector<8x128xf32>
    %cst_102 = arith.constant 5.000000e-01 : f32
    %256 = vector.broadcast %cst_102 : f32 to vector<8x128xf32>
    %257 = arith.mulf %256, %255 : vector<8x128xf32>
    %258 = math.tanh %257 : vector<8x128xf32>
    %cst_103 = arith.constant 5.000000e-01 : f32
    %259 = vector.broadcast %cst_103 : f32 to vector<8x128xf32>
    %260 = arith.mulf %259, %258 : vector<8x128xf32>
    %cst_104 = arith.constant 5.000000e-01 : f32
    %261 = vector.broadcast %cst_104 : f32 to vector<8x128xf32>
    %262 = arith.addf %260, %261 : vector<8x128xf32>
    %263 = arith.mulf %252, %193 : vector<8x128xf32>
    %264 = arith.mulf %244, %254 : vector<8x128xf32>
    %265 = arith.addf %263, %264 : vector<8x128xf32>
    %266 = math.tanh %265 : vector<8x128xf32>
    %267 = arith.mulf %262, %266 : vector<8x128xf32>
    %c32_105 = arith.constant 32 : index
    %c0_106 = arith.constant 0 : index
    %268 = vector.load %arg8[%c32_105, %c0_106] : memref<64x512xf32, #tpu.memory_space<vmem>>, vector<8x512xf32>
    %269 = arith.truncf %230 : vector<8x128xf32> to vector<8x128xbf16>
    %cst_107 = arith.constant dense<0.000000e+00> : vector<8x512xf32>
    %270 = tpu.matmul %269, %16, %cst_107 {dimension_numbers = #tpu.dot_dimension_numbers<[1], [0], [0], [1], [0, 0, 1, 1], [], []>} : vector<8x128xbf16>, vector<128x512xbf16>, vector<8x512xf32> -> vector<8x512xf32>
    %271 = arith.addf %268, %270 : vector<8x512xf32>
    %272 = vector.extract_strided_slice %271 {offsets = [0, 0], sizes = [8, 128], strides = [1, 1]} : vector<8x512xf32> to vector<8x128xf32>
    %cst_108 = arith.constant 5.000000e-01 : f32
    %273 = vector.broadcast %cst_108 : f32 to vector<8x128xf32>
    %274 = arith.mulf %273, %272 : vector<8x128xf32>
    %275 = math.tanh %274 : vector<8x128xf32>
    %cst_109 = arith.constant 5.000000e-01 : f32
    %276 = vector.broadcast %cst_109 : f32 to vector<8x128xf32>
    %277 = arith.mulf %276, %275 : vector<8x128xf32>
    %cst_110 = arith.constant 5.000000e-01 : f32
    %278 = vector.broadcast %cst_110 : f32 to vector<8x128xf32>
    %279 = arith.addf %277, %278 : vector<8x128xf32>
    %280 = vector.extract_strided_slice %271 {offsets = [0, 128], sizes = [8, 128], strides = [1, 1]} : vector<8x512xf32> to vector<8x128xf32>
    %cst_111 = arith.constant 5.000000e-01 : f32
    %281 = vector.broadcast %cst_111 : f32 to vector<8x128xf32>
    %282 = arith.mulf %281, %280 : vector<8x128xf32>
    %283 = math.tanh %282 : vector<8x128xf32>
    %cst_112 = arith.constant 5.000000e-01 : f32
    %284 = vector.broadcast %cst_112 : f32 to vector<8x128xf32>
    %285 = arith.mulf %284, %283 : vector<8x128xf32>
    %cst_113 = arith.constant 5.000000e-01 : f32
    %286 = vector.broadcast %cst_113 : f32 to vector<8x128xf32>
    %287 = arith.addf %285, %286 : vector<8x128xf32>
    %288 = vector.extract_strided_slice %271 {offsets = [0, 256], sizes = [8, 128], strides = [1, 1]} : vector<8x512xf32> to vector<8x128xf32>
    %289 = math.tanh %288 : vector<8x128xf32>
    %290 = vector.extract_strided_slice %271 {offsets = [0, 384], sizes = [8, 128], strides = [1, 1]} : vector<8x512xf32> to vector<8x128xf32>
    %cst_114 = arith.constant 5.000000e-01 : f32
    %291 = vector.broadcast %cst_114 : f32 to vector<8x128xf32>
    %292 = arith.mulf %291, %290 : vector<8x128xf32>
    %293 = math.tanh %292 : vector<8x128xf32>
    %cst_115 = arith.constant 5.000000e-01 : f32
    %294 = vector.broadcast %cst_115 : f32 to vector<8x128xf32>
    %295 = arith.mulf %294, %293 : vector<8x128xf32>
    %cst_116 = arith.constant 5.000000e-01 : f32
    %296 = vector.broadcast %cst_116 : f32 to vector<8x128xf32>
    %297 = arith.addf %295, %296 : vector<8x128xf32>
    %298 = arith.mulf %287, %228 : vector<8x128xf32>
    %299 = arith.mulf %279, %289 : vector<8x128xf32>
    %300 = arith.addf %298, %299 : vector<8x128xf32>
    %301 = math.tanh %300 : vector<8x128xf32>
    %302 = arith.mulf %297, %301 : vector<8x128xf32>
    %c24_117 = arith.constant 24 : index
    %c0_118 = arith.constant 0 : index
    %303 = vector.load %arg9[%c24_117, %c0_118] : memref<64x256xf32, #tpu.memory_space<vmem>>, vector<8x128xf32>
    tpu.vector_store %arg9[%c24_117, %c0_118], %267 {strides = array<i32>} : memref<64x256xf32, #tpu.memory_space<vmem>>, vector<8x128xf32>,
    %c32_119 = arith.constant 32 : index
    %c128_120 = arith.constant 128 : index
    %304 = vector.load %arg9[%c32_119, %c128_120] : memref<64x256xf32, #tpu.memory_space<vmem>>, vector<8x128xf32>
    tpu.vector_store %arg9[%c32_119, %c128_120], %302 {strides = array<i32>} : memref<64x256xf32, #tpu.memory_space<vmem>>, vector<8x128xf32>,
    %c32_121 = arith.constant 32 : index
    %c0_122 = arith.constant 0 : index
    %305 = vector.load %arg7[%c32_121, %c0_122] : memref<64x512xf32, #tpu.memory_space<vmem>>, vector<8x512xf32>
    %306 = arith.truncf %267 : vector<8x128xf32> to vector<8x128xbf16>
    %cst_123 = arith.constant dense<0.000000e+00> : vector<8x512xf32>
    %307 = tpu.matmul %306, %15, %cst_123 {dimension_numbers = #tpu.dot_dimension_numbers<[1], [0], [0], [1], [0, 0, 1, 1], [], []>} : vector<8x128xbf16>, vector<128x512xbf16>, vector<8x512xf32> -> vector<8x512xf32>
    %308 = arith.addf %305, %307 : vector<8x512xf32>
    %309 = vector.extract_strided_slice %308 {offsets = [0, 0], sizes = [8, 128], strides = [1, 1]} : vector<8x512xf32> to vector<8x128xf32>
    %cst_124 = arith.constant 5.000000e-01 : f32
    %310 = vector.broadcast %cst_124 : f32 to vector<8x128xf32>
    %311 = arith.mulf %310, %309 : vector<8x128xf32>
    %312 = math.tanh %311 : vector<8x128xf32>
    %cst_125 = arith.constant 5.000000e-01 : f32
    %313 = vector.broadcast %cst_125 : f32 to vector<8x128xf32>
    %314 = arith.mulf %313, %312 : vector<8x128xf32>
    %cst_126 = arith.constant 5.000000e-01 : f32
    %315 = vector.broadcast %cst_126 : f32 to vector<8x128xf32>
    %316 = arith.addf %314, %315 : vector<8x128xf32>
    %317 = vector.extract_strided_slice %308 {offsets = [0, 128], sizes = [8, 128], strides = [1, 1]} : vector<8x512xf32> to vector<8x128xf32>
    %cst_127 = arith.constant 5.000000e-01 : f32
    %318 = vector.broadcast %cst_127 : f32 to vector<8x128xf32>
    %319 = arith.mulf %318, %317 : vector<8x128xf32>
    %320 = math.tanh %319 : vector<8x128xf32>
    %cst_128 = arith.constant 5.000000e-01 : f32
    %321 = vector.broadcast %cst_128 : f32 to vector<8x128xf32>
    %322 = arith.mulf %321, %320 : vector<8x128xf32>
    %cst_129 = arith.constant 5.000000e-01 : f32
    %323 = vector.broadcast %cst_129 : f32 to vector<8x128xf32>
    %324 = arith.addf %322, %323 : vector<8x128xf32>
    %325 = vector.extract_strided_slice %308 {offsets = [0, 256], sizes = [8, 128], strides = [1, 1]} : vector<8x512xf32> to vector<8x128xf32>
    %326 = math.tanh %325 : vector<8x128xf32>
    %327 = vector.extract_strided_slice %308 {offsets = [0, 384], sizes = [8, 128], strides = [1, 1]} : vector<8x512xf32> to vector<8x128xf32>
    %cst_130 = arith.constant 5.000000e-01 : f32
    %328 = vector.broadcast %cst_130 : f32 to vector<8x128xf32>
    %329 = arith.mulf %328, %327 : vector<8x128xf32>
    %330 = math.tanh %329 : vector<8x128xf32>
    %cst_131 = arith.constant 5.000000e-01 : f32
    %331 = vector.broadcast %cst_131 : f32 to vector<8x128xf32>
    %332 = arith.mulf %331, %330 : vector<8x128xf32>
    %cst_132 = arith.constant 5.000000e-01 : f32
    %333 = vector.broadcast %cst_132 : f32 to vector<8x128xf32>
    %334 = arith.addf %332, %333 : vector<8x128xf32>
    %335 = arith.mulf %324, %265 : vector<8x128xf32>
    %336 = arith.mulf %316, %326 : vector<8x128xf32>
    %337 = arith.addf %335, %336 : vector<8x128xf32>
    %338 = math.tanh %337 : vector<8x128xf32>
    %339 = arith.mulf %334, %338 : vector<8x128xf32>
    %c24_133 = arith.constant 24 : index
    %c0_134 = arith.constant 0 : index
    %340 = vector.load %arg8[%c24_133, %c0_134] : memref<64x512xf32, #tpu.memory_space<vmem>>, vector<8x512xf32>
    %341 = arith.truncf %302 : vector<8x128xf32> to vector<8x128xbf16>
    %cst_135 = arith.constant dense<0.000000e+00> : vector<8x512xf32>
    %342 = tpu.matmul %341, %16, %cst_135 {dimension_numbers = #tpu.dot_dimension_numbers<[1], [0], [0], [1], [0, 0, 1, 1], [], []>} : vector<8x128xbf16>, vector<128x512xbf16>, vector<8x512xf32> -> vector<8x512xf32>
    %343 = arith.addf %340, %342 : vector<8x512xf32>
    %344 = vector.extract_strided_slice %343 {offsets = [0, 0], sizes = [8, 128], strides = [1, 1]} : vector<8x512xf32> to vector<8x128xf32>
    %cst_136 = arith.constant 5.000000e-01 : f32
    %345 = vector.broadcast %cst_136 : f32 to vector<8x128xf32>
    %346 = arith.mulf %345, %344 : vector<8x128xf32>
    %347 = math.tanh %346 : vector<8x128xf32>
    %cst_137 = arith.constant 5.000000e-01 : f32
    %348 = vector.broadcast %cst_137 : f32 to vector<8x128xf32>
    %349 = arith.mulf %348, %347 : vector<8x128xf32>
    %cst_138 = arith.constant 5.000000e-01 : f32
    %350 = vector.broadcast %cst_138 : f32 to vector<8x128xf32>
    %351 = arith.addf %349, %350 : vector<8x128xf32>
    %352 = vector.extract_strided_slice %343 {offsets = [0, 128], sizes = [8, 128], strides = [1, 1]} : vector<8x512xf32> to vector<8x128xf32>
    %cst_139 = arith.constant 5.000000e-01 : f32
    %353 = vector.broadcast %cst_139 : f32 to vector<8x128xf32>
    %354 = arith.mulf %353, %352 : vector<8x128xf32>
    %355 = math.tanh %354 : vector<8x128xf32>
    %cst_140 = arith.constant 5.000000e-01 : f32
    %356 = vector.broadcast %cst_140 : f32 to vector<8x128xf32>
    %357 = arith.mulf %356, %355 : vector<8x128xf32>
    %cst_141 = arith.constant 5.000000e-01 : f32
    %358 = vector.broadcast %cst_141 : f32 to vector<8x128xf32>
    %359 = arith.addf %357, %358 : vector<8x128xf32>
    %360 = vector.extract_strided_slice %343 {offsets = [0, 256], sizes = [8, 128], strides = [1, 1]} : vector<8x512xf32> to vector<8x128xf32>
    %361 = math.tanh %360 : vector<8x128xf32>
    %362 = vector.extract_strided_slice %343 {offsets = [0, 384], sizes = [8, 128], strides = [1, 1]} : vector<8x512xf32> to vector<8x128xf32>
    %cst_142 = arith.constant 5.000000e-01 : f32
    %363 = vector.broadcast %cst_142 : f32 to vector<8x128xf32>
    %364 = arith.mulf %363, %362 : vector<8x128xf32>
    %365 = math.tanh %364 : vector<8x128xf32>
    %cst_143 = arith.constant 5.000000e-01 : f32
    %366 = vector.broadcast %cst_143 : f32 to vector<8x128xf32>
    %367 = arith.mulf %366, %365 : vector<8x128xf32>
    %cst_144 = arith.constant 5.000000e-01 : f32
    %368 = vector.broadcast %cst_144 : f32 to vector<8x128xf32>
    %369 = arith.addf %367, %368 : vector<8x128xf32>
    %370 = arith.mulf %359, %300 : vector<8x128xf32>
    %371 = arith.mulf %351, %361 : vector<8x128xf32>
    %372 = arith.addf %370, %371 : vector<8x128xf32>
    %373 = math.tanh %372 : vector<8x128xf32>
    %374 = arith.mulf %369, %373 : vector<8x128xf32>
    %c32_145 = arith.constant 32 : index
    %c0_146 = arith.constant 0 : index
    %375 = vector.load %arg9[%c32_145, %c0_146] : memref<64x256xf32, #tpu.memory_space<vmem>>, vector<8x128xf32>
    tpu.vector_store %arg9[%c32_145, %c0_146], %339 {strides = array<i32>} : memref<64x256xf32, #tpu.memory_space<vmem>>, vector<8x128xf32>,
    %c24_147 = arith.constant 24 : index
    %c128_148 = arith.constant 128 : index
    %376 = vector.load %arg9[%c24_147, %c128_148] : memref<64x256xf32, #tpu.memory_space<vmem>>, vector<8x128xf32>
    tpu.vector_store %arg9[%c24_147, %c128_148], %374 {strides = array<i32>} : memref<64x256xf32, #tpu.memory_space<vmem>>, vector<8x128xf32>,
    %c40_149 = arith.constant 40 : index
    %c0_150 = arith.constant 0 : index
    %377 = vector.load %arg7[%c40_149, %c0_150] : memref<64x512xf32, #tpu.memory_space<vmem>>, vector<8x512xf32>
    %378 = arith.truncf %339 : vector<8x128xf32> to vector<8x128xbf16>
    %cst_151 = arith.constant dense<0.000000e+00> : vector<8x512xf32>
    %379 = tpu.matmul %378, %15, %cst_151 {dimension_numbers = #tpu.dot_dimension_numbers<[1], [0], [0], [1], [0, 0, 1, 1], [], []>} : vector<8x128xbf16>, vector<128x512xbf16>, vector<8x512xf32> -> vector<8x512xf32>
    %380 = arith.addf %377, %379 : vector<8x512xf32>
    %381 = vector.extract_strided_slice %380 {offsets = [0, 0], sizes = [8, 128], strides = [1, 1]} : vector<8x512xf32> to vector<8x128xf32>
    %cst_152 = arith.constant 5.000000e-01 : f32
    %382 = vector.broadcast %cst_152 : f32 to vector<8x128xf32>
    %383 = arith.mulf %382, %381 : vector<8x128xf32>
    %384 = math.tanh %383 : vector<8x128xf32>
    %cst_153 = arith.constant 5.000000e-01 : f32
    %385 = vector.broadcast %cst_153 : f32 to vector<8x128xf32>
    %386 = arith.mulf %385, %384 : vector<8x128xf32>
    %cst_154 = arith.constant 5.000000e-01 : f32
    %387 = vector.broadcast %cst_154 : f32 to vector<8x128xf32>
    %388 = arith.addf %386, %387 : vector<8x128xf32>
    %389 = vector.extract_strided_slice %380 {offsets = [0, 128], sizes = [8, 128], strides = [1, 1]} : vector<8x512xf32> to vector<8x128xf32>
    %cst_155 = arith.constant 5.000000e-01 : f32
    %390 = vector.broadcast %cst_155 : f32 to vector<8x128xf32>
    %391 = arith.mulf %390, %389 : vector<8x128xf32>
    %392 = math.tanh %391 : vector<8x128xf32>
    %cst_156 = arith.constant 5.000000e-01 : f32
    %393 = vector.broadcast %cst_156 : f32 to vector<8x128xf32>
    %394 = arith.mulf %393, %392 : vector<8x128xf32>
    %cst_157 = arith.constant 5.000000e-01 : f32
    %395 = vector.broadcast %cst_157 : f32 to vector<8x128xf32>
    %396 = arith.addf %394, %395 : vector<8x128xf32>
    %397 = vector.extract_strided_slice %380 {offsets = [0, 256], sizes = [8, 128], strides = [1, 1]} : vector<8x512xf32> to vector<8x128xf32>
    %398 = math.tanh %397 : vector<8x128xf32>
    %399 = vector.extract_strided_slice %380 {offsets = [0, 384], sizes = [8, 128], strides = [1, 1]} : vector<8x512xf32> to vector<8x128xf32>
    %cst_158 = arith.constant 5.000000e-01 : f32
    %400 = vector.broadcast %cst_158 : f32 to vector<8x128xf32>
    %401 = arith.mulf %400, %399 : vector<8x128xf32>
    %402 = math.tanh %401 : vector<8x128xf32>
    %cst_159 = arith.constant 5.000000e-01 : f32
    %403 = vector.broadcast %cst_159 : f32 to vector<8x128xf32>
    %404 = arith.mulf %403, %402 : vector<8x128xf32>
    %cst_160 = arith.constant 5.000000e-01 : f32
    %405 = vector.broadcast %cst_160 : f32 to vector<8x128xf32>
    %406 = arith.addf %404, %405 : vector<8x128xf32>
    %407 = arith.mulf %396, %337 : vector<8x128xf32>
    %408 = arith.mulf %388, %398 : vector<8x128xf32>
    %409 = arith.addf %407, %408 : vector<8x128xf32>
    %410 = math.tanh %409 : vector<8x128xf32>
    %411 = arith.mulf %406, %410 : vector<8x128xf32>
    %c16_161 = arith.constant 16 : index
    %c0_162 = arith.constant 0 : index
    %412 = vector.load %arg8[%c16_161, %c0_162] : memref<64x512xf32, #tpu.memory_space<vmem>>, vector<8x512xf32>
    %413 = arith.truncf %374 : vector<8x128xf32> to vector<8x128xbf16>
    %cst_163 = arith.constant dense<0.000000e+00> : vector<8x512xf32>
    %414 = tpu.matmul %413, %16, %cst_163 {dimension_numbers = #tpu.dot_dimension_numbers<[1], [0], [0], [1], [0, 0, 1, 1], [], []>} : vector<8x128xbf16>, vector<128x512xbf16>, vector<8x512xf32> -> vector<8x512xf32>
    %415 = arith.addf %412, %414 : vector<8x512xf32>
    %416 = vector.extract_strided_slice %415 {offsets = [0, 0], sizes = [8, 128], strides = [1, 1]} : vector<8x512xf32> to vector<8x128xf32>
    %cst_164 = arith.constant 5.000000e-01 : f32
    %417 = vector.broadcast %cst_164 : f32 to vector<8x128xf32>
    %418 = arith.mulf %417, %416 : vector<8x128xf32>
    %419 = math.tanh %418 : vector<8x128xf32>
    %cst_165 = arith.constant 5.000000e-01 : f32
    %420 = vector.broadcast %cst_165 : f32 to vector<8x128xf32>
    %421 = arith.mulf %420, %419 : vector<8x128xf32>
    %cst_166 = arith.constant 5.000000e-01 : f32
    %422 = vector.broadcast %cst_166 : f32 to vector<8x128xf32>
    %423 = arith.addf %421, %422 : vector<8x128xf32>
    %424 = vector.extract_strided_slice %415 {offsets = [0, 128], sizes = [8, 128], strides = [1, 1]} : vector<8x512xf32> to vector<8x128xf32>
    %cst_167 = arith.constant 5.000000e-01 : f32
    %425 = vector.broadcast %cst_167 : f32 to vector<8x128xf32>
    %426 = arith.mulf %425, %424 : vector<8x128xf32>
    %427 = math.tanh %426 : vector<8x128xf32>
    %cst_168 = arith.constant 5.000000e-01 : f32
    %428 = vector.broadcast %cst_168 : f32 to vector<8x128xf32>
    %429 = arith.mulf %428, %427 : vector<8x128xf32>
    %cst_169 = arith.constant 5.000000e-01 : f32
    %430 = vector.broadcast %cst_169 : f32 to vector<8x128xf32>
    %431 = arith.addf %429, %430 : vector<8x128xf32>
    %432 = vector.extract_strided_slice %415 {offsets = [0, 256], sizes = [8, 128], strides = [1, 1]} : vector<8x512xf32> to vector<8x128xf32>
    %433 = math.tanh %432 : vector<8x128xf32>
    %434 = vector.extract_strided_slice %415 {offsets = [0, 384], sizes = [8, 128], strides = [1, 1]} : vector<8x512xf32> to vector<8x128xf32>
    %cst_170 = arith.constant 5.000000e-01 : f32
    %435 = vector.broadcast %cst_170 : f32 to vector<8x128xf32>
    %436 = arith.mulf %435, %434 : vector<8x128xf32>
    %437 = math.tanh %436 : vector<8x128xf32>
    %cst_171 = arith.constant 5.000000e-01 : f32
    %438 = vector.broadcast %cst_171 : f32 to vector<8x128xf32>
    %439 = arith.mulf %438, %437 : vector<8x128xf32>
    %cst_172 = arith.constant 5.000000e-01 : f32
    %440 = vector.broadcast %cst_172 : f32 to vector<8x128xf32>
    %441 = arith.addf %439, %440 : vector<8x128xf32>
    %442 = arith.mulf %431, %372 : vector<8x128xf32>
    %443 = arith.mulf %423, %433 : vector<8x128xf32>
    %444 = arith.addf %442, %443 : vector<8x128xf32>
    %445 = math.tanh %444 : vector<8x128xf32>
    %446 = arith.mulf %441, %445 : vector<8x128xf32>
    %c40_173 = arith.constant 40 : index
    %c0_174 = arith.constant 0 : index
    %447 = vector.load %arg9[%c40_173, %c0_174] : memref<64x256xf32, #tpu.memory_space<vmem>>, vector<8x128xf32>
    tpu.vector_store %arg9[%c40_173, %c0_174], %411 {strides = array<i32>} : memref<64x256xf32, #tpu.memory_space<vmem>>, vector<8x128xf32>,
    %c16_175 = arith.constant 16 : index
    %c128_176 = arith.constant 128 : index
    %448 = vector.load %arg9[%c16_175, %c128_176] : memref<64x256xf32, #tpu.memory_space<vmem>>, vector<8x128xf32>
    tpu.vector_store %arg9[%c16_175, %c128_176], %446 {strides = array<i32>} : memref<64x256xf32, #tpu.memory_space<vmem>>, vector<8x128xf32>,
    %c48_177 = arith.constant 48 : index
    %c0_178 = arith.constant 0 : index
    %449 = vector.load %arg7[%c48_177, %c0_178] : memref<64x512xf32, #tpu.memory_space<vmem>>, vector<8x512xf32>
    %450 = arith.truncf %411 : vector<8x128xf32> to vector<8x128xbf16>
    %cst_179 = arith.constant dense<0.000000e+00> : vector<8x512xf32>
    %451 = tpu.matmul %450, %15, %cst_179 {dimension_numbers = #tpu.dot_dimension_numbers<[1], [0], [0], [1], [0, 0, 1, 1], [], []>} : vector<8x128xbf16>, vector<128x512xbf16>, vector<8x512xf32> -> vector<8x512xf32>
    %452 = arith.addf %449, %451 : vector<8x512xf32>
    %453 = vector.extract_strided_slice %452 {offsets = [0, 0], sizes = [8, 128], strides = [1, 1]} : vector<8x512xf32> to vector<8x128xf32>
    %cst_180 = arith.constant 5.000000e-01 : f32
    %454 = vector.broadcast %cst_180 : f32 to vector<8x128xf32>
    %455 = arith.mulf %454, %453 : vector<8x128xf32>
    %456 = math.tanh %455 : vector<8x128xf32>
    %cst_181 = arith.constant 5.000000e-01 : f32
    %457 = vector.broadcast %cst_181 : f32 to vector<8x128xf32>
    %458 = arith.mulf %457, %456 : vector<8x128xf32>
    %cst_182 = arith.constant 5.000000e-01 : f32
    %459 = vector.broadcast %cst_182 : f32 to vector<8x128xf32>
    %460 = arith.addf %458, %459 : vector<8x128xf32>
    %461 = vector.extract_strided_slice %452 {offsets = [0, 128], sizes = [8, 128], strides = [1, 1]} : vector<8x512xf32> to vector<8x128xf32>
    %cst_183 = arith.constant 5.000000e-01 : f32
    %462 = vector.broadcast %cst_183 : f32 to vector<8x128xf32>
    %463 = arith.mulf %462, %461 : vector<8x128xf32>
    %464 = math.tanh %463 : vector<8x128xf32>
    %cst_184 = arith.constant 5.000000e-01 : f32
    %465 = vector.broadcast %cst_184 : f32 to vector<8x128xf32>
    %466 = arith.mulf %465, %464 : vector<8x128xf32>
    %cst_185 = arith.constant 5.000000e-01 : f32
    %467 = vector.broadcast %cst_185 : f32 to vector<8x128xf32>
    %468 = arith.addf %466, %467 : vector<8x128xf32>
    %469 = vector.extract_strided_slice %452 {offsets = [0, 256], sizes = [8, 128], strides = [1, 1]} : vector<8x512xf32> to vector<8x128xf32>
    %470 = math.tanh %469 : vector<8x128xf32>
    %471 = vector.extract_strided_slice %452 {offsets = [0, 384], sizes = [8, 128], strides = [1, 1]} : vector<8x512xf32> to vector<8x128xf32>
    %cst_186 = arith.constant 5.000000e-01 : f32
    %472 = vector.broadcast %cst_186 : f32 to vector<8x128xf32>
    %473 = arith.mulf %472, %471 : vector<8x128xf32>
    %474 = math.tanh %473 : vector<8x128xf32>
    %cst_187 = arith.constant 5.000000e-01 : f32
    %475 = vector.broadcast %cst_187 : f32 to vector<8x128xf32>
    %476 = arith.mulf %475, %474 : vector<8x128xf32>
    %cst_188 = arith.constant 5.000000e-01 : f32
    %477 = vector.broadcast %cst_188 : f32 to vector<8x128xf32>
    %478 = arith.addf %476, %477 : vector<8x128xf32>
    %479 = arith.mulf %468, %409 : vector<8x128xf32>
    %480 = arith.mulf %460, %470 : vector<8x128xf32>
    %481 = arith.addf %479, %480 : vector<8x128xf32>
    %482 = math.tanh %481 : vector<8x128xf32>
    %483 = arith.mulf %478, %482 : vector<8x128xf32>
    %c8_189 = arith.constant 8 : index
    %c0_190 = arith.constant 0 : index
    %484 = vector.load %arg8[%c8_189, %c0_190] : memref<64x512xf32, #tpu.memory_space<vmem>>, vector<8x512xf32>
    %485 = arith.truncf %446 : vector<8x128xf32> to vector<8x128xbf16>
    %cst_191 = arith.constant dense<0.000000e+00> : vector<8x512xf32>
    %486 = tpu.matmul %485, %16, %cst_191 {dimension_numbers = #tpu.dot_dimension_numbers<[1], [0], [0], [1], [0, 0, 1, 1], [], []>} : vector<8x128xbf16>, vector<128x512xbf16>, vector<8x512xf32> -> vector<8x512xf32>
    %487 = arith.addf %484, %486 : vector<8x512xf32>
    %488 = vector.extract_strided_slice %487 {offsets = [0, 0], sizes = [8, 128], strides = [1, 1]} : vector<8x512xf32> to vector<8x128xf32>
    %cst_192 = arith.constant 5.000000e-01 : f32
    %489 = vector.broadcast %cst_192 : f32 to vector<8x128xf32>
    %490 = arith.mulf %489, %488 : vector<8x128xf32>
    %491 = math.tanh %490 : vector<8x128xf32>
    %cst_193 = arith.constant 5.000000e-01 : f32
    %492 = vector.broadcast %cst_193 : f32 to vector<8x128xf32>
    %493 = arith.mulf %492, %491 : vector<8x128xf32>
    %cst_194 = arith.constant 5.000000e-01 : f32
    %494 = vector.broadcast %cst_194 : f32 to vector<8x128xf32>
    %495 = arith.addf %493, %494 : vector<8x128xf32>
    %496 = vector.extract_strided_slice %487 {offsets = [0, 128], sizes = [8, 128], strides = [1, 1]} : vector<8x512xf32> to vector<8x128xf32>
    %cst_195 = arith.constant 5.000000e-01 : f32
    %497 = vector.broadcast %cst_195 : f32 to vector<8x128xf32>
    %498 = arith.mulf %497, %496 : vector<8x128xf32>
    %499 = math.tanh %498 : vector<8x128xf32>
    %cst_196 = arith.constant 5.000000e-01 : f32
    %500 = vector.broadcast %cst_196 : f32 to vector<8x128xf32>
    %501 = arith.mulf %500, %499 : vector<8x128xf32>
    %cst_197 = arith.constant 5.000000e-01 : f32
    %502 = vector.broadcast %cst_197 : f32 to vector<8x128xf32>
    %503 = arith.addf %501, %502 : vector<8x128xf32>
    %504 = vector.extract_strided_slice %487 {offsets = [0, 256], sizes = [8, 128], strides = [1, 1]} : vector<8x512xf32> to vector<8x128xf32>
    %505 = math.tanh %504 : vector<8x128xf32>
    %506 = vector.extract_strided_slice %487 {offsets = [0, 384], sizes = [8, 128], strides = [1, 1]} : vector<8x512xf32> to vector<8x128xf32>
    %cst_198 = arith.constant 5.000000e-01 : f32
    %507 = vector.broadcast %cst_198 : f32 to vector<8x128xf32>
    %508 = arith.mulf %507, %506 : vector<8x128xf32>
    %509 = math.tanh %508 : vector<8x128xf32>
    %cst_199 = arith.constant 5.000000e-01 : f32
    %510 = vector.broadcast %cst_199 : f32 to vector<8x128xf32>
    %511 = arith.mulf %510, %509 : vector<8x128xf32>
    %cst_200 = arith.constant 5.000000e-01 : f32
    %512 = vector.broadcast %cst_200 : f32 to vector<8x128xf32>
    %513 = arith.addf %511, %512 : vector<8x128xf32>
    %514 = arith.mulf %503, %444 : vector<8x128xf32>
    %515 = arith.mulf %495, %505 : vector<8x128xf32>
    %516 = arith.addf %514, %515 : vector<8x128xf32>
    %517 = math.tanh %516 : vector<8x128xf32>
    %518 = arith.mulf %513, %517 : vector<8x128xf32>
    %c48_201 = arith.constant 48 : index
    %c0_202 = arith.constant 0 : index
    %519 = vector.load %arg9[%c48_201, %c0_202] : memref<64x256xf32, #tpu.memory_space<vmem>>, vector<8x128xf32>
    tpu.vector_store %arg9[%c48_201, %c0_202], %483 {strides = array<i32>} : memref<64x256xf32, #tpu.memory_space<vmem>>, vector<8x128xf32>,
    %c8_203 = arith.constant 8 : index
    %c128_204 = arith.constant 128 : index
    %520 = vector.load %arg9[%c8_203, %c128_204] : memref<64x256xf32, #tpu.memory_space<vmem>>, vector<8x128xf32>
    tpu.vector_store %arg9[%c8_203, %c128_204], %518 {strides = array<i32>} : memref<64x256xf32, #tpu.memory_space<vmem>>, vector<8x128xf32>,
    %c56_205 = arith.constant 56 : index
    %c0_206 = arith.constant 0 : index
    %521 = vector.load %arg7[%c56_205, %c0_206] : memref<64x512xf32, #tpu.memory_space<vmem>>, vector<8x512xf32>
    %522 = arith.truncf %483 : vector<8x128xf32> to vector<8x128xbf16>
    %cst_207 = arith.constant dense<0.000000e+00> : vector<8x512xf32>
    %523 = tpu.matmul %522, %15, %cst_207 {dimension_numbers = #tpu.dot_dimension_numbers<[1], [0], [0], [1], [0, 0, 1, 1], [], []>} : vector<8x128xbf16>, vector<128x512xbf16>, vector<8x512xf32> -> vector<8x512xf32>
    %524 = arith.addf %521, %523 : vector<8x512xf32>
    %525 = vector.extract_strided_slice %524 {offsets = [0, 0], sizes = [8, 128], strides = [1, 1]} : vector<8x512xf32> to vector<8x128xf32>
    %cst_208 = arith.constant 5.000000e-01 : f32
    %526 = vector.broadcast %cst_208 : f32 to vector<8x128xf32>
    %527 = arith.mulf %526, %525 : vector<8x128xf32>
    %528 = math.tanh %527 : vector<8x128xf32>
    %cst_209 = arith.constant 5.000000e-01 : f32
    %529 = vector.broadcast %cst_209 : f32 to vector<8x128xf32>
    %530 = arith.mulf %529, %528 : vector<8x128xf32>
    %cst_210 = arith.constant 5.000000e-01 : f32
    %531 = vector.broadcast %cst_210 : f32 to vector<8x128xf32>
    %532 = arith.addf %530, %531 : vector<8x128xf32>
    %533 = vector.extract_strided_slice %524 {offsets = [0, 128], sizes = [8, 128], strides = [1, 1]} : vector<8x512xf32> to vector<8x128xf32>
    %cst_211 = arith.constant 5.000000e-01 : f32
    %534 = vector.broadcast %cst_211 : f32 to vector<8x128xf32>
    %535 = arith.mulf %534, %533 : vector<8x128xf32>
    %536 = math.tanh %535 : vector<8x128xf32>
    %cst_212 = arith.constant 5.000000e-01 : f32
    %537 = vector.broadcast %cst_212 : f32 to vector<8x128xf32>
    %538 = arith.mulf %537, %536 : vector<8x128xf32>
    %cst_213 = arith.constant 5.000000e-01 : f32
    %539 = vector.broadcast %cst_213 : f32 to vector<8x128xf32>
    %540 = arith.addf %538, %539 : vector<8x128xf32>
    %541 = vector.extract_strided_slice %524 {offsets = [0, 256], sizes = [8, 128], strides = [1, 1]} : vector<8x512xf32> to vector<8x128xf32>
    %542 = math.tanh %541 : vector<8x128xf32>
    %543 = vector.extract_strided_slice %524 {offsets = [0, 384], sizes = [8, 128], strides = [1, 1]} : vector<8x512xf32> to vector<8x128xf32>
    %cst_214 = arith.constant 5.000000e-01 : f32
    %544 = vector.broadcast %cst_214 : f32 to vector<8x128xf32>
    %545 = arith.mulf %544, %543 : vector<8x128xf32>
    %546 = math.tanh %545 : vector<8x128xf32>
    %cst_215 = arith.constant 5.000000e-01 : f32
    %547 = vector.broadcast %cst_215 : f32 to vector<8x128xf32>
    %548 = arith.mulf %547, %546 : vector<8x128xf32>
    %cst_216 = arith.constant 5.000000e-01 : f32
    %549 = vector.broadcast %cst_216 : f32 to vector<8x128xf32>
    %550 = arith.addf %548, %549 : vector<8x128xf32>
    %551 = arith.mulf %540, %481 : vector<8x128xf32>
    %552 = arith.mulf %532, %542 : vector<8x128xf32>
    %553 = arith.addf %551, %552 : vector<8x128xf32>
    %554 = math.tanh %553 : vector<8x128xf32>
    %555 = arith.mulf %550, %554 : vector<8x128xf32>
    %c0_217 = arith.constant 0 : index
    %c0_218 = arith.constant 0 : index
    %556 = vector.load %arg8[%c0_217, %c0_218] : memref<64x512xf32, #tpu.memory_space<vmem>>, vector<8x512xf32>
    %557 = arith.truncf %518 : vector<8x128xf32> to vector<8x128xbf16>
    %cst_219 = arith.constant dense<0.000000e+00> : vector<8x512xf32>
    %558 = tpu.matmul %557, %16, %cst_219 {dimension_numbers = #tpu.dot_dimension_numbers<[1], [0], [0], [1], [0, 0, 1, 1], [], []>} : vector<8x128xbf16>, vector<128x512xbf16>, vector<8x512xf32> -> vector<8x512xf32>
    %559 = arith.addf %556, %558 : vector<8x512xf32>
    %560 = vector.extract_strided_slice %559 {offsets = [0, 0], sizes = [8, 128], strides = [1, 1]} : vector<8x512xf32> to vector<8x128xf32>
    %cst_220 = arith.constant 5.000000e-01 : f32
    %561 = vector.broadcast %cst_220 : f32 to vector<8x128xf32>
    %562 = arith.mulf %561, %560 : vector<8x128xf32>
    %563 = math.tanh %562 : vector<8x128xf32>
    %cst_221 = arith.constant 5.000000e-01 : f32
    %564 = vector.broadcast %cst_221 : f32 to vector<8x128xf32>
    %565 = arith.mulf %564, %563 : vector<8x128xf32>
    %cst_222 = arith.constant 5.000000e-01 : f32
    %566 = vector.broadcast %cst_222 : f32 to vector<8x128xf32>
    %567 = arith.addf %565, %566 : vector<8x128xf32>
    %568 = vector.extract_strided_slice %559 {offsets = [0, 128], sizes = [8, 128], strides = [1, 1]} : vector<8x512xf32> to vector<8x128xf32>
    %cst_223 = arith.constant 5.000000e-01 : f32
    %569 = vector.broadcast %cst_223 : f32 to vector<8x128xf32>
    %570 = arith.mulf %569, %568 : vector<8x128xf32>
    %571 = math.tanh %570 : vector<8x128xf32>
    %cst_224 = arith.constant 5.000000e-01 : f32
    %572 = vector.broadcast %cst_224 : f32 to vector<8x128xf32>
    %573 = arith.mulf %572, %571 : vector<8x128xf32>
    %cst_225 = arith.constant 5.000000e-01 : f32
    %574 = vector.broadcast %cst_225 : f32 to vector<8x128xf32>
    %575 = arith.addf %573, %574 : vector<8x128xf32>
    %576 = vector.extract_strided_slice %559 {offsets = [0, 256], sizes = [8, 128], strides = [1, 1]} : vector<8x512xf32> to vector<8x128xf32>
    %577 = math.tanh %576 : vector<8x128xf32>
    %578 = vector.extract_strided_slice %559 {offsets = [0, 384], sizes = [8, 128], strides = [1, 1]} : vector<8x512xf32> to vector<8x128xf32>
    %cst_226 = arith.constant 5.000000e-01 : f32
    %579 = vector.broadcast %cst_226 : f32 to vector<8x128xf32>
    %580 = arith.mulf %579, %578 : vector<8x128xf32>
    %581 = math.tanh %580 : vector<8x128xf32>
    %cst_227 = arith.constant 5.000000e-01 : f32
    %582 = vector.broadcast %cst_227 : f32 to vector<8x128xf32>
    %583 = arith.mulf %582, %581 : vector<8x128xf32>
    %cst_228 = arith.constant 5.000000e-01 : f32
    %584 = vector.broadcast %cst_228 : f32 to vector<8x128xf32>
    %585 = arith.addf %583, %584 : vector<8x128xf32>
    %586 = arith.mulf %575, %516 : vector<8x128xf32>
    %587 = arith.mulf %567, %577 : vector<8x128xf32>
    %588 = arith.addf %586, %587 : vector<8x128xf32>
    %589 = math.tanh %588 : vector<8x128xf32>
    %590 = arith.mulf %585, %589 : vector<8x128xf32>
    %c56_229 = arith.constant 56 : index
    %c0_230 = arith.constant 0 : index
    %591 = vector.load %arg9[%c56_229, %c0_230] : memref<64x256xf32, #tpu.memory_space<vmem>>, vector<8x128xf32>
    tpu.vector_store %arg9[%c56_229, %c0_230], %555 {strides = array<i32>} : memref<64x256xf32, #tpu.memory_space<vmem>>, vector<8x128xf32>,
    %c0_231 = arith.constant 0 : index
    %c128_232 = arith.constant 128 : index
    %592 = vector.load %arg9[%c0_231, %c128_232] : memref<64x256xf32, #tpu.memory_space<vmem>>, vector<8x128xf32>
    tpu.vector_store %arg9[%c0_231, %c128_232], %590 {strides = array<i32>} : memref<64x256xf32, #tpu.memory_space<vmem>>, vector<8x128xf32>,
    %c0_233 = arith.constant 0 : index
    %c0_234 = arith.constant 0 : index
    %c0_235 = arith.constant 0 : index
    %593 = vector.load %arg6[%c0_233, %c0_234, %c0_235] : memref<8x8x128xf32, #tpu.memory_space<vmem>>, vector<1x8x128xf32>
    %594 = vector.shape_cast %593 : vector<1x8x128xf32> to vector<8x128xf32>
    %595 = vector.shape_cast %555 : vector<8x128xf32> to vector<1x8x128xf32>
    tpu.vector_store %arg6[%c0_233, %c0_234, %c0_235], %595 {strides = array<i32>} : memref<8x8x128xf32, #tpu.memory_space<vmem>>, vector<1x8x128xf32>,
    %c1_236 = arith.constant 1 : index
    %c0_237 = arith.constant 0 : index
    %c0_238 = arith.constant 0 : index
    %596 = vector.load %arg6[%c1_236, %c0_237, %c0_238] : memref<8x8x128xf32, #tpu.memory_space<vmem>>, vector<1x8x128xf32>
    %597 = vector.shape_cast %596 : vector<1x8x128xf32> to vector<8x128xf32>
    %598 = vector.shape_cast %553 : vector<8x128xf32> to vector<1x8x128xf32>
    tpu.vector_store %arg6[%c1_236, %c0_237, %c0_238], %598 {strides = array<i32>} : memref<8x8x128xf32, #tpu.memory_space<vmem>>, vector<1x8x128xf32>,
    %c2 = arith.constant 2 : index
    %c0_239 = arith.constant 0 : index
    %c0_240 = arith.constant 0 : index
    %599 = vector.load %arg6[%c2, %c0_239, %c0_240] : memref<8x8x128xf32, #tpu.memory_space<vmem>>, vector<1x8x128xf32>
    %600 = vector.shape_cast %599 : vector<1x8x128xf32> to vector<8x128xf32>
    %601 = vector.shape_cast %590 : vector<8x128xf32> to vector<1x8x128xf32>
    tpu.vector_store %arg6[%c2, %c0_239, %c0_240], %601 {strides = array<i32>} : memref<8x8x128xf32, #tpu.memory_space<vmem>>, vector<1x8x128xf32>,
    %c3 = arith.constant 3 : index
    %c0_241 = arith.constant 0 : index
    %c0_242 = arith.constant 0 : index
    %602 = vector.load %arg6[%c3, %c0_241, %c0_242] : memref<8x8x128xf32, #tpu.memory_space<vmem>>, vector<1x8x128xf32>
    %603 = vector.shape_cast %602 : vector<1x8x128xf32> to vector<8x128xf32>
    %604 = vector.shape_cast %588 : vector<8x128xf32> to vector<1x8x128xf32>
    tpu.vector_store %arg6[%c3, %c0_241, %c0_242], %604 {strides = array<i32>} : memref<8x8x128xf32, #tpu.memory_space<vmem>>, vector<1x8x128xf32>,
    %c0_243 = arith.constant 0 : index
    %c0_244 = arith.constant 0 : index
    %605 = vector.load %arg9[%c0_243, %c0_244] : memref<64x256xf32, #tpu.memory_space<vmem>>, vector<64x256xf32>
    %606 = arith.truncf %605 : vector<64x256xf32> to vector<64x256xbf16>
    %c288 = arith.constant 288 : index
    %c0_245 = arith.constant 0 : index
    %607 = vector.load %arg1[%c288, %c0_245] : memref<1056x512xbf16, #tpu.memory_space<vmem>>, vector<256x512xbf16>
    %cst_246 = arith.constant dense<0.000000e+00> : vector<64x512xf32>
    %608 = tpu.matmul %606, %607, %cst_246 {dimension_numbers = #tpu.dot_dimension_numbers<[1], [0], [0], [1], [0, 0, 1, 1], [], []>} : vector<64x256xbf16>, vector<256x512xbf16>, vector<64x512xf32> -> vector<64x512xf32>
    %c2_247 = arith.constant 2 : index
    %c0_248 = arith.constant 0 : index
    %609 = vector.load %arg2[%c2_247, %c0_248] : memref<4x512xf32, #tpu.memory_space<vmem>>, vector<1x512xf32>
    %610 = vector.broadcast %609 : vector<1x512xf32> to vector<64x512xf32>
    %611 = arith.addf %608, %610 : vector<64x512xf32>
    %c0_249 = arith.constant 0 : index
    %c0_250 = arith.constant 0 : index
    %612 = vector.load %arg10[%c0_249, %c0_250] : memref<64x512xf32, #tpu.memory_space<vmem>>, vector<64x512xf32>
    tpu.vector_store %arg10[%c0_249, %c0_250], %611 {strides = array<i32>} : memref<64x512xf32, #tpu.memory_space<vmem>>, vector<64x512xf32>,
    %c544 = arith.constant 544 : index
    %c0_251 = arith.constant 0 : index
    %613 = vector.load %arg1[%c544, %c0_251] : memref<1056x512xbf16, #tpu.memory_space<vmem>>, vector<256x512xbf16>
    %cst_252 = arith.constant dense<0.000000e+00> : vector<64x512xf32>
    %614 = tpu.matmul %606, %613, %cst_252 {dimension_numbers = #tpu.dot_dimension_numbers<[1], [0], [0], [1], [0, 0, 1, 1], [], []>} : vector<64x256xbf16>, vector<256x512xbf16>, vector<64x512xf32> -> vector<64x512xf32>
    %c3_253 = arith.constant 3 : index
    %c0_254 = arith.constant 0 : index
    %615 = vector.load %arg2[%c3_253, %c0_254] : memref<4x512xf32, #tpu.memory_space<vmem>>, vector<1x512xf32>
    %616 = vector.broadcast %615 : vector<1x512xf32> to vector<64x512xf32>
    %617 = arith.addf %614, %616 : vector<64x512xf32>
    %c0_255 = arith.constant 0 : index
    %c0_256 = arith.constant 0 : index
    %618 = vector.load %arg11[%c0_255, %c0_256] : memref<64x512xf32, #tpu.memory_space<vmem>>, vector<64x512xf32>
    tpu.vector_store %arg11[%c0_255, %c0_256], %617 {strides = array<i32>} : memref<64x512xf32, #tpu.memory_space<vmem>>, vector<64x512xf32>,
    %c800 = arith.constant 800 : index
    %c0_257 = arith.constant 0 : index
    %619 = vector.load %arg1[%c800, %c0_257] : memref<1056x512xbf16, #tpu.memory_space<vmem>>, vector<128x512xbf16>
    %c928 = arith.constant 928 : index
    %c0_258 = arith.constant 0 : index
    %620 = vector.load %arg1[%c928, %c0_258] : memref<1056x512xbf16, #tpu.memory_space<vmem>>, vector<128x512xbf16>
    %c0_259 = arith.constant 0 : index
    %c0_260 = arith.constant 0 : index
    %621 = vector.load %arg10[%c0_259, %c0_260] : memref<64x512xf32, #tpu.memory_space<vmem>>, vector<8x512xf32>
    %622 = arith.truncf %0 : vector<8x128xf32> to vector<8x128xbf16>
    %cst_261 = arith.constant dense<0.000000e+00> : vector<8x512xf32>
    %623 = tpu.matmul %622, %619, %cst_261 {dimension_numbers = #tpu.dot_dimension_numbers<[1], [0], [0], [1], [0, 0, 1, 1], [], []>} : vector<8x128xbf16>, vector<128x512xbf16>, vector<8x512xf32> -> vector<8x512xf32>
    %624 = arith.addf %621, %623 : vector<8x512xf32>
    %625 = vector.extract_strided_slice %624 {offsets = [0, 0], sizes = [8, 128], strides = [1, 1]} : vector<8x512xf32> to vector<8x128xf32>
    %cst_262 = arith.constant 5.000000e-01 : f32
    %626 = vector.broadcast %cst_262 : f32 to vector<8x128xf32>
    %627 = arith.mulf %626, %625 : vector<8x128xf32>
    %628 = math.tanh %627 : vector<8x128xf32>
    %cst_263 = arith.constant 5.000000e-01 : f32
    %629 = vector.broadcast %cst_263 : f32 to vector<8x128xf32>
    %630 = arith.mulf %629, %628 : vector<8x128xf32>
    %cst_264 = arith.constant 5.000000e-01 : f32
    %631 = vector.broadcast %cst_264 : f32 to vector<8x128xf32>
    %632 = arith.addf %630, %631 : vector<8x128xf32>
    %633 = vector.extract_strided_slice %624 {offsets = [0, 128], sizes = [8, 128], strides = [1, 1]} : vector<8x512xf32> to vector<8x128xf32>
    %cst_265 = arith.constant 5.000000e-01 : f32
    %634 = vector.broadcast %cst_265 : f32 to vector<8x128xf32>
    %635 = arith.mulf %634, %633 : vector<8x128xf32>
    %636 = math.tanh %635 : vector<8x128xf32>
    %cst_266 = arith.constant 5.000000e-01 : f32
    %637 = vector.broadcast %cst_266 : f32 to vector<8x128xf32>
    %638 = arith.mulf %637, %636 : vector<8x128xf32>
    %cst_267 = arith.constant 5.000000e-01 : f32
    %639 = vector.broadcast %cst_267 : f32 to vector<8x128xf32>
    %640 = arith.addf %638, %639 : vector<8x128xf32>
    %641 = vector.extract_strided_slice %624 {offsets = [0, 256], sizes = [8, 128], strides = [1, 1]} : vector<8x512xf32> to vector<8x128xf32>
    %642 = math.tanh %641 : vector<8x128xf32>
    %643 = vector.extract_strided_slice %624 {offsets = [0, 384], sizes = [8, 128], strides = [1, 1]} : vector<8x512xf32> to vector<8x128xf32>
    %cst_268 = arith.constant 5.000000e-01 : f32
    %644 = vector.broadcast %cst_268 : f32 to vector<8x128xf32>
    %645 = arith.mulf %644, %643 : vector<8x128xf32>
    %646 = math.tanh %645 : vector<8x128xf32>
    %cst_269 = arith.constant 5.000000e-01 : f32
    %647 = vector.broadcast %cst_269 : f32 to vector<8x128xf32>
    %648 = arith.mulf %647, %646 : vector<8x128xf32>
    %cst_270 = arith.constant 5.000000e-01 : f32
    %649 = vector.broadcast %cst_270 : f32 to vector<8x128xf32>
    %650 = arith.addf %648, %649 : vector<8x128xf32>
    %651 = arith.mulf %640, %0 : vector<8x128xf32>
    %652 = arith.mulf %632, %642 : vector<8x128xf32>
    %653 = arith.addf %651, %652 : vector<8x128xf32>
    %654 = math.tanh %653 : vector<8x128xf32>
    %655 = arith.mulf %650, %654 : vector<8x128xf32>
    %c56_271 = arith.constant 56 : index
    %c0_272 = arith.constant 0 : index
    %656 = vector.load %arg11[%c56_271, %c0_272] : memref<64x512xf32, #tpu.memory_space<vmem>>, vector<8x512xf32>
    %657 = arith.truncf %0 : vector<8x128xf32> to vector<8x128xbf16>
    %cst_273 = arith.constant dense<0.000000e+00> : vector<8x512xf32>
    %658 = tpu.matmul %657, %620, %cst_273 {dimension_numbers = #tpu.dot_dimension_numbers<[1], [0], [0], [1], [0, 0, 1, 1], [], []>} : vector<8x128xbf16>, vector<128x512xbf16>, vector<8x512xf32> -> vector<8x512xf32>
    %659 = arith.addf %656, %658 : vector<8x512xf32>
    %660 = vector.extract_strided_slice %659 {offsets = [0, 0], sizes = [8, 128], strides = [1, 1]} : vector<8x512xf32> to vector<8x128xf32>
    %cst_274 = arith.constant 5.000000e-01 : f32
    %661 = vector.broadcast %cst_274 : f32 to vector<8x128xf32>
    %662 = arith.mulf %661, %660 : vector<8x128xf32>
    %663 = math.tanh %662 : vector<8x128xf32>
    %cst_275 = arith.constant 5.000000e-01 : f32
    %664 = vector.broadcast %cst_275 : f32 to vector<8x128xf32>
    %665 = arith.mulf %664, %663 : vector<8x128xf32>
    %cst_276 = arith.constant 5.000000e-01 : f32
    %666 = vector.broadcast %cst_276 : f32 to vector<8x128xf32>
    %667 = arith.addf %665, %666 : vector<8x128xf32>
    %668 = vector.extract_strided_slice %659 {offsets = [0, 128], sizes = [8, 128], strides = [1, 1]} : vector<8x512xf32> to vector<8x128xf32>
    %cst_277 = arith.constant 5.000000e-01 : f32
    %669 = vector.broadcast %cst_277 : f32 to vector<8x128xf32>
    %670 = arith.mulf %669, %668 : vector<8x128xf32>
    %671 = math.tanh %670 : vector<8x128xf32>
    %cst_278 = arith.constant 5.000000e-01 : f32
    %672 = vector.broadcast %cst_278 : f32 to vector<8x128xf32>
    %673 = arith.mulf %672, %671 : vector<8x128xf32>
    %cst_279 = arith.constant 5.000000e-01 : f32
    %674 = vector.broadcast %cst_279 : f32 to vector<8x128xf32>
    %675 = arith.addf %673, %674 : vector<8x128xf32>
    %676 = vector.extract_strided_slice %659 {offsets = [0, 256], sizes = [8, 128], strides = [1, 1]} : vector<8x512xf32> to vector<8x128xf32>
    %677 = math.tanh %676 : vector<8x128xf32>
    %678 = vector.extract_strided_slice %659 {offsets = [0, 384], sizes = [8, 128], strides = [1, 1]} : vector<8x512xf32> to vector<8x128xf32>
    %cst_280 = arith.constant 5.000000e-01 : f32
    %679 = vector.broadcast %cst_280 : f32 to vector<8x128xf32>
    %680 = arith.mulf %679, %678 : vector<8x128xf32>
    %681 = math.tanh %680 : vector<8x128xf32>
    %cst_281 = arith.constant 5.000000e-01 : f32
    %682 = vector.broadcast %cst_281 : f32 to vector<8x128xf32>
    %683 = arith.mulf %682, %681 : vector<8x128xf32>
    %cst_282 = arith.constant 5.000000e-01 : f32
    %684 = vector.broadcast %cst_282 : f32 to vector<8x128xf32>
    %685 = arith.addf %683, %684 : vector<8x128xf32>
    %686 = arith.mulf %675, %0 : vector<8x128xf32>
    %687 = arith.mulf %667, %677 : vector<8x128xf32>
    %688 = arith.addf %686, %687 : vector<8x128xf32>
    %689 = math.tanh %688 : vector<8x128xf32>
    %690 = arith.mulf %685, %689 : vector<8x128xf32>
    %c8_283 = arith.constant 8 : index
    %c0_284 = arith.constant 0 : index
    %691 = vector.load %arg10[%c8_283, %c0_284] : memref<64x512xf32, #tpu.memory_space<vmem>>, vector<8x512xf32>
    %692 = arith.truncf %655 : vector<8x128xf32> to vector<8x128xbf16>
    %cst_285 = arith.constant dense<0.000000e+00> : vector<8x512xf32>
    %693 = tpu.matmul %692, %619, %cst_285 {dimension_numbers = #tpu.dot_dimension_numbers<[1], [0], [0], [1], [0, 0, 1, 1], [], []>} : vector<8x128xbf16>, vector<128x512xbf16>, vector<8x512xf32> -> vector<8x512xf32>
    %694 = arith.addf %691, %693 : vector<8x512xf32>
    %695 = vector.extract_strided_slice %694 {offsets = [0, 0], sizes = [8, 128], strides = [1, 1]} : vector<8x512xf32> to vector<8x128xf32>
    %cst_286 = arith.constant 5.000000e-01 : f32
    %696 = vector.broadcast %cst_286 : f32 to vector<8x128xf32>
    %697 = arith.mulf %696, %695 : vector<8x128xf32>
    %698 = math.tanh %697 : vector<8x128xf32>
    %cst_287 = arith.constant 5.000000e-01 : f32
    %699 = vector.broadcast %cst_287 : f32 to vector<8x128xf32>
    %700 = arith.mulf %699, %698 : vector<8x128xf32>
    %cst_288 = arith.constant 5.000000e-01 : f32
    %701 = vector.broadcast %cst_288 : f32 to vector<8x128xf32>
    %702 = arith.addf %700, %701 : vector<8x128xf32>
    %703 = vector.extract_strided_slice %694 {offsets = [0, 128], sizes = [8, 128], strides = [1, 1]} : vector<8x512xf32> to vector<8x128xf32>
    %cst_289 = arith.constant 5.000000e-01 : f32
    %704 = vector.broadcast %cst_289 : f32 to vector<8x128xf32>
    %705 = arith.mulf %704, %703 : vector<8x128xf32>
    %706 = math.tanh %705 : vector<8x128xf32>
    %cst_290 = arith.constant 5.000000e-01 : f32
    %707 = vector.broadcast %cst_290 : f32 to vector<8x128xf32>
    %708 = arith.mulf %707, %706 : vector<8x128xf32>
    %cst_291 = arith.constant 5.000000e-01 : f32
    %709 = vector.broadcast %cst_291 : f32 to vector<8x128xf32>
    %710 = arith.addf %708, %709 : vector<8x128xf32>
    %711 = vector.extract_strided_slice %694 {offsets = [0, 256], sizes = [8, 128], strides = [1, 1]} : vector<8x512xf32> to vector<8x128xf32>
    %712 = math.tanh %711 : vector<8x128xf32>
    %713 = vector.extract_strided_slice %694 {offsets = [0, 384], sizes = [8, 128], strides = [1, 1]} : vector<8x512xf32> to vector<8x128xf32>
    %cst_292 = arith.constant 5.000000e-01 : f32
    %714 = vector.broadcast %cst_292 : f32 to vector<8x128xf32>
    %715 = arith.mulf %714, %713 : vector<8x128xf32>
    %716 = math.tanh %715 : vector<8x128xf32>
    %cst_293 = arith.constant 5.000000e-01 : f32
    %717 = vector.broadcast %cst_293 : f32 to vector<8x128xf32>
    %718 = arith.mulf %717, %716 : vector<8x128xf32>
    %cst_294 = arith.constant 5.000000e-01 : f32
    %719 = vector.broadcast %cst_294 : f32 to vector<8x128xf32>
    %720 = arith.addf %718, %719 : vector<8x128xf32>
    %721 = arith.mulf %710, %653 : vector<8x128xf32>
    %722 = arith.mulf %702, %712 : vector<8x128xf32>
    %723 = arith.addf %721, %722 : vector<8x128xf32>
    %724 = math.tanh %723 : vector<8x128xf32>
    %725 = arith.mulf %720, %724 : vector<8x128xf32>
    %c48_295 = arith.constant 48 : index
    %c0_296 = arith.constant 0 : index
    %726 = vector.load %arg11[%c48_295, %c0_296] : memref<64x512xf32, #tpu.memory_space<vmem>>, vector<8x512xf32>
    %727 = arith.truncf %690 : vector<8x128xf32> to vector<8x128xbf16>
    %cst_297 = arith.constant dense<0.000000e+00> : vector<8x512xf32>
    %728 = tpu.matmul %727, %620, %cst_297 {dimension_numbers = #tpu.dot_dimension_numbers<[1], [0], [0], [1], [0, 0, 1, 1], [], []>} : vector<8x128xbf16>, vector<128x512xbf16>, vector<8x512xf32> -> vector<8x512xf32>
    %729 = arith.addf %726, %728 : vector<8x512xf32>
    %730 = vector.extract_strided_slice %729 {offsets = [0, 0], sizes = [8, 128], strides = [1, 1]} : vector<8x512xf32> to vector<8x128xf32>
    %cst_298 = arith.constant 5.000000e-01 : f32
    %731 = vector.broadcast %cst_298 : f32 to vector<8x128xf32>
    %732 = arith.mulf %731, %730 : vector<8x128xf32>
    %733 = math.tanh %732 : vector<8x128xf32>
    %cst_299 = arith.constant 5.000000e-01 : f32
    %734 = vector.broadcast %cst_299 : f32 to vector<8x128xf32>
    %735 = arith.mulf %734, %733 : vector<8x128xf32>
    %cst_300 = arith.constant 5.000000e-01 : f32
    %736 = vector.broadcast %cst_300 : f32 to vector<8x128xf32>
    %737 = arith.addf %735, %736 : vector<8x128xf32>
    %738 = vector.extract_strided_slice %729 {offsets = [0, 128], sizes = [8, 128], strides = [1, 1]} : vector<8x512xf32> to vector<8x128xf32>
    %cst_301 = arith.constant 5.000000e-01 : f32
    %739 = vector.broadcast %cst_301 : f32 to vector<8x128xf32>
    %740 = arith.mulf %739, %738 : vector<8x128xf32>
    %741 = math.tanh %740 : vector<8x128xf32>
    %cst_302 = arith.constant 5.000000e-01 : f32
    %742 = vector.broadcast %cst_302 : f32 to vector<8x128xf32>
    %743 = arith.mulf %742, %741 : vector<8x128xf32>
    %cst_303 = arith.constant 5.000000e-01 : f32
    %744 = vector.broadcast %cst_303 : f32 to vector<8x128xf32>
    %745 = arith.addf %743, %744 : vector<8x128xf32>
    %746 = vector.extract_strided_slice %729 {offsets = [0, 256], sizes = [8, 128], strides = [1, 1]} : vector<8x512xf32> to vector<8x128xf32>
    %747 = math.tanh %746 : vector<8x128xf32>
    %748 = vector.extract_strided_slice %729 {offsets = [0, 384], sizes = [8, 128], strides = [1, 1]} : vector<8x512xf32> to vector<8x128xf32>
    %cst_304 = arith.constant 5.000000e-01 : f32
    %749 = vector.broadcast %cst_304 : f32 to vector<8x128xf32>
    %750 = arith.mulf %749, %748 : vector<8x128xf32>
    %751 = math.tanh %750 : vector<8x128xf32>
    %cst_305 = arith.constant 5.000000e-01 : f32
    %752 = vector.broadcast %cst_305 : f32 to vector<8x128xf32>
    %753 = arith.mulf %752, %751 : vector<8x128xf32>
    %cst_306 = arith.constant 5.000000e-01 : f32
    %754 = vector.broadcast %cst_306 : f32 to vector<8x128xf32>
    %755 = arith.addf %753, %754 : vector<8x128xf32>
    %756 = arith.mulf %745, %688 : vector<8x128xf32>
    %757 = arith.mulf %737, %747 : vector<8x128xf32>
    %758 = arith.addf %756, %757 : vector<8x128xf32>
    %759 = math.tanh %758 : vector<8x128xf32>
    %760 = arith.mulf %755, %759 : vector<8x128xf32>
    %c16_307 = arith.constant 16 : index
    %c0_308 = arith.constant 0 : index
    %761 = vector.load %arg10[%c16_307, %c0_308] : memref<64x512xf32, #tpu.memory_space<vmem>>, vector<8x512xf32>
    %762 = arith.truncf %725 : vector<8x128xf32> to vector<8x128xbf16>
    %cst_309 = arith.constant dense<0.000000e+00> : vector<8x512xf32>
    %763 = tpu.matmul %762, %619, %cst_309 {dimension_numbers = #tpu.dot_dimension_numbers<[1], [0], [0], [1], [0, 0, 1, 1], [], []>} : vector<8x128xbf16>, vector<128x512xbf16>, vector<8x512xf32> -> vector<8x512xf32>
    %764 = arith.addf %761, %763 : vector<8x512xf32>
    %765 = vector.extract_strided_slice %764 {offsets = [0, 0], sizes = [8, 128], strides = [1, 1]} : vector<8x512xf32> to vector<8x128xf32>
    %cst_310 = arith.constant 5.000000e-01 : f32
    %766 = vector.broadcast %cst_310 : f32 to vector<8x128xf32>
    %767 = arith.mulf %766, %765 : vector<8x128xf32>
    %768 = math.tanh %767 : vector<8x128xf32>
    %cst_311 = arith.constant 5.000000e-01 : f32
    %769 = vector.broadcast %cst_311 : f32 to vector<8x128xf32>
    %770 = arith.mulf %769, %768 : vector<8x128xf32>
    %cst_312 = arith.constant 5.000000e-01 : f32
    %771 = vector.broadcast %cst_312 : f32 to vector<8x128xf32>
    %772 = arith.addf %770, %771 : vector<8x128xf32>
    %773 = vector.extract_strided_slice %764 {offsets = [0, 128], sizes = [8, 128], strides = [1, 1]} : vector<8x512xf32> to vector<8x128xf32>
    %cst_313 = arith.constant 5.000000e-01 : f32
    %774 = vector.broadcast %cst_313 : f32 to vector<8x128xf32>
    %775 = arith.mulf %774, %773 : vector<8x128xf32>
    %776 = math.tanh %775 : vector<8x128xf32>
    %cst_314 = arith.constant 5.000000e-01 : f32
    %777 = vector.broadcast %cst_314 : f32 to vector<8x128xf32>
    %778 = arith.mulf %777, %776 : vector<8x128xf32>
    %cst_315 = arith.constant 5.000000e-01 : f32
    %779 = vector.broadcast %cst_315 : f32 to vector<8x128xf32>
    %780 = arith.addf %778, %779 : vector<8x128xf32>
    %781 = vector.extract_strided_slice %764 {offsets = [0, 256], sizes = [8, 128], strides = [1, 1]} : vector<8x512xf32> to vector<8x128xf32>
    %782 = math.tanh %781 : vector<8x128xf32>
    %783 = vector.extract_strided_slice %764 {offsets = [0, 384], sizes = [8, 128], strides = [1, 1]} : vector<8x512xf32> to vector<8x128xf32>
    %cst_316 = arith.constant 5.000000e-01 : f32
    %784 = vector.broadcast %cst_316 : f32 to vector<8x128xf32>
    %785 = arith.mulf %784, %783 : vector<8x128xf32>
    %786 = math.tanh %785 : vector<8x128xf32>
    %cst_317 = arith.constant 5.000000e-01 : f32
    %787 = vector.broadcast %cst_317 : f32 to vector<8x128xf32>
    %788 = arith.mulf %787, %786 : vector<8x128xf32>
    %cst_318 = arith.constant 5.000000e-01 : f32
    %789 = vector.broadcast %cst_318 : f32 to vector<8x128xf32>
    %790 = arith.addf %788, %789 : vector<8x128xf32>
    %791 = arith.mulf %780, %723 : vector<8x128xf32>
    %792 = arith.mulf %772, %782 : vector<8x128xf32>
    %793 = arith.addf %791, %792 : vector<8x128xf32>
    %794 = math.tanh %793 : vector<8x128xf32>
    %795 = arith.mulf %790, %794 : vector<8x128xf32>
    %c40_319 = arith.constant 40 : index
    %c0_320 = arith.constant 0 : index
    %796 = vector.load %arg11[%c40_319, %c0_320] : memref<64x512xf32, #tpu.memory_space<vmem>>, vector<8x512xf32>
    %797 = arith.truncf %760 : vector<8x128xf32> to vector<8x128xbf16>
    %cst_321 = arith.constant dense<0.000000e+00> : vector<8x512xf32>
    %798 = tpu.matmul %797, %620, %cst_321 {dimension_numbers = #tpu.dot_dimension_numbers<[1], [0], [0], [1], [0, 0, 1, 1], [], []>} : vector<8x128xbf16>, vector<128x512xbf16>, vector<8x512xf32> -> vector<8x512xf32>
    %799 = arith.addf %796, %798 : vector<8x512xf32>
    %800 = vector.extract_strided_slice %799 {offsets = [0, 0], sizes = [8, 128], strides = [1, 1]} : vector<8x512xf32> to vector<8x128xf32>
    %cst_322 = arith.constant 5.000000e-01 : f32
    %801 = vector.broadcast %cst_322 : f32 to vector<8x128xf32>
    %802 = arith.mulf %801, %800 : vector<8x128xf32>
    %803 = math.tanh %802 : vector<8x128xf32>
    %cst_323 = arith.constant 5.000000e-01 : f32
    %804 = vector.broadcast %cst_323 : f32 to vector<8x128xf32>
    %805 = arith.mulf %804, %803 : vector<8x128xf32>
    %cst_324 = arith.constant 5.000000e-01 : f32
    %806 = vector.broadcast %cst_324 : f32 to vector<8x128xf32>
    %807 = arith.addf %805, %806 : vector<8x128xf32>
    %808 = vector.extract_strided_slice %799 {offsets = [0, 128], sizes = [8, 128], strides = [1, 1]} : vector<8x512xf32> to vector<8x128xf32>
    %cst_325 = arith.constant 5.000000e-01 : f32
    %809 = vector.broadcast %cst_325 : f32 to vector<8x128xf32>
    %810 = arith.mulf %809, %808 : vector<8x128xf32>
    %811 = math.tanh %810 : vector<8x128xf32>
    %cst_326 = arith.constant 5.000000e-01 : f32
    %812 = vector.broadcast %cst_326 : f32 to vector<8x128xf32>
    %813 = arith.mulf %812, %811 : vector<8x128xf32>
    %cst_327 = arith.constant 5.000000e-01 : f32
    %814 = vector.broadcast %cst_327 : f32 to vector<8x128xf32>
    %815 = arith.addf %813, %814 : vector<8x128xf32>
    %816 = vector.extract_strided_slice %799 {offsets = [0, 256], sizes = [8, 128], strides = [1, 1]} : vector<8x512xf32> to vector<8x128xf32>
    %817 = math.tanh %816 : vector<8x128xf32>
    %818 = vector.extract_strided_slice %799 {offsets = [0, 384], sizes = [8, 128], strides = [1, 1]} : vector<8x512xf32> to vector<8x128xf32>
    %cst_328 = arith.constant 5.000000e-01 : f32
    %819 = vector.broadcast %cst_328 : f32 to vector<8x128xf32>
    %820 = arith.mulf %819, %818 : vector<8x128xf32>
    %821 = math.tanh %820 : vector<8x128xf32>
    %cst_329 = arith.constant 5.000000e-01 : f32
    %822 = vector.broadcast %cst_329 : f32 to vector<8x128xf32>
    %823 = arith.mulf %822, %821 : vector<8x128xf32>
    %cst_330 = arith.constant 5.000000e-01 : f32
    %824 = vector.broadcast %cst_330 : f32 to vector<8x128xf32>
    %825 = arith.addf %823, %824 : vector<8x128xf32>
    %826 = arith.mulf %815, %758 : vector<8x128xf32>
    %827 = arith.mulf %807, %817 : vector<8x128xf32>
    %828 = arith.addf %826, %827 : vector<8x128xf32>
    %829 = math.tanh %828 : vector<8x128xf32>
    %830 = arith.mulf %825, %829 : vector<8x128xf32>
    %c24_331 = arith.constant 24 : index
    %c0_332 = arith.constant 0 : index
    %831 = vector.load %arg10[%c24_331, %c0_332] : memref<64x512xf32, #tpu.memory_space<vmem>>, vector<8x512xf32>
    %832 = arith.truncf %795 : vector<8x128xf32> to vector<8x128xbf16>
    %cst_333 = arith.constant dense<0.000000e+00> : vector<8x512xf32>
    %833 = tpu.matmul %832, %619, %cst_333 {dimension_numbers = #tpu.dot_dimension_numbers<[1], [0], [0], [1], [0, 0, 1, 1], [], []>} : vector<8x128xbf16>, vector<128x512xbf16>, vector<8x512xf32> -> vector<8x512xf32>
    %834 = arith.addf %831, %833 : vector<8x512xf32>
    %835 = vector.extract_strided_slice %834 {offsets = [0, 0], sizes = [8, 128], strides = [1, 1]} : vector<8x512xf32> to vector<8x128xf32>
    %cst_334 = arith.constant 5.000000e-01 : f32
    %836 = vector.broadcast %cst_334 : f32 to vector<8x128xf32>
    %837 = arith.mulf %836, %835 : vector<8x128xf32>
    %838 = math.tanh %837 : vector<8x128xf32>
    %cst_335 = arith.constant 5.000000e-01 : f32
    %839 = vector.broadcast %cst_335 : f32 to vector<8x128xf32>
    %840 = arith.mulf %839, %838 : vector<8x128xf32>
    %cst_336 = arith.constant 5.000000e-01 : f32
    %841 = vector.broadcast %cst_336 : f32 to vector<8x128xf32>
    %842 = arith.addf %840, %841 : vector<8x128xf32>
    %843 = vector.extract_strided_slice %834 {offsets = [0, 128], sizes = [8, 128], strides = [1, 1]} : vector<8x512xf32> to vector<8x128xf32>
    %cst_337 = arith.constant 5.000000e-01 : f32
    %844 = vector.broadcast %cst_337 : f32 to vector<8x128xf32>
    %845 = arith.mulf %844, %843 : vector<8x128xf32>
    %846 = math.tanh %845 : vector<8x128xf32>
    %cst_338 = arith.constant 5.000000e-01 : f32
    %847 = vector.broadcast %cst_338 : f32 to vector<8x128xf32>
    %848 = arith.mulf %847, %846 : vector<8x128xf32>
    %cst_339 = arith.constant 5.000000e-01 : f32
    %849 = vector.broadcast %cst_339 : f32 to vector<8x128xf32>
    %850 = arith.addf %848, %849 : vector<8x128xf32>
    %851 = vector.extract_strided_slice %834 {offsets = [0, 256], sizes = [8, 128], strides = [1, 1]} : vector<8x512xf32> to vector<8x128xf32>
    %852 = math.tanh %851 : vector<8x128xf32>
    %853 = vector.extract_strided_slice %834 {offsets = [0, 384], sizes = [8, 128], strides = [1, 1]} : vector<8x512xf32> to vector<8x128xf32>
    %cst_340 = arith.constant 5.000000e-01 : f32
    %854 = vector.broadcast %cst_340 : f32 to vector<8x128xf32>
    %855 = arith.mulf %854, %853 : vector<8x128xf32>
    %856 = math.tanh %855 : vector<8x128xf32>
    %cst_341 = arith.constant 5.000000e-01 : f32
    %857 = vector.broadcast %cst_341 : f32 to vector<8x128xf32>
    %858 = arith.mulf %857, %856 : vector<8x128xf32>
    %cst_342 = arith.constant 5.000000e-01 : f32
    %859 = vector.broadcast %cst_342 : f32 to vector<8x128xf32>
    %860 = arith.addf %858, %859 : vector<8x128xf32>
    %861 = arith.mulf %850, %793 : vector<8x128xf32>
    %862 = arith.mulf %842, %852 : vector<8x128xf32>
    %863 = arith.addf %861, %862 : vector<8x128xf32>
    %864 = math.tanh %863 : vector<8x128xf32>
    %865 = arith.mulf %860, %864 : vector<8x128xf32>
    %c32_343 = arith.constant 32 : index
    %c0_344 = arith.constant 0 : index
    %866 = vector.load %arg11[%c32_343, %c0_344] : memref<64x512xf32, #tpu.memory_space<vmem>>, vector<8x512xf32>
    %867 = arith.truncf %830 : vector<8x128xf32> to vector<8x128xbf16>
    %cst_345 = arith.constant dense<0.000000e+00> : vector<8x512xf32>
    %868 = tpu.matmul %867, %620, %cst_345 {dimension_numbers = #tpu.dot_dimension_numbers<[1], [0], [0], [1], [0, 0, 1, 1], [], []>} : vector<8x128xbf16>, vector<128x512xbf16>, vector<8x512xf32> -> vector<8x512xf32>
    %869 = arith.addf %866, %868 : vector<8x512xf32>
    %870 = vector.extract_strided_slice %869 {offsets = [0, 0], sizes = [8, 128], strides = [1, 1]} : vector<8x512xf32> to vector<8x128xf32>
    %cst_346 = arith.constant 5.000000e-01 : f32
    %871 = vector.broadcast %cst_346 : f32 to vector<8x128xf32>
    %872 = arith.mulf %871, %870 : vector<8x128xf32>
    %873 = math.tanh %872 : vector<8x128xf32>
    %cst_347 = arith.constant 5.000000e-01 : f32
    %874 = vector.broadcast %cst_347 : f32 to vector<8x128xf32>
    %875 = arith.mulf %874, %873 : vector<8x128xf32>
    %cst_348 = arith.constant 5.000000e-01 : f32
    %876 = vector.broadcast %cst_348 : f32 to vector<8x128xf32>
    %877 = arith.addf %875, %876 : vector<8x128xf32>
    %878 = vector.extract_strided_slice %869 {offsets = [0, 128], sizes = [8, 128], strides = [1, 1]} : vector<8x512xf32> to vector<8x128xf32>
    %cst_349 = arith.constant 5.000000e-01 : f32
    %879 = vector.broadcast %cst_349 : f32 to vector<8x128xf32>
    %880 = arith.mulf %879, %878 : vector<8x128xf32>
    %881 = math.tanh %880 : vector<8x128xf32>
    %cst_350 = arith.constant 5.000000e-01 : f32
    %882 = vector.broadcast %cst_350 : f32 to vector<8x128xf32>
    %883 = arith.mulf %882, %881 : vector<8x128xf32>
    %cst_351 = arith.constant 5.000000e-01 : f32
    %884 = vector.broadcast %cst_351 : f32 to vector<8x128xf32>
    %885 = arith.addf %883, %884 : vector<8x128xf32>
    %886 = vector.extract_strided_slice %869 {offsets = [0, 256], sizes = [8, 128], strides = [1, 1]} : vector<8x512xf32> to vector<8x128xf32>
    %887 = math.tanh %886 : vector<8x128xf32>
    %888 = vector.extract_strided_slice %869 {offsets = [0, 384], sizes = [8, 128], strides = [1, 1]} : vector<8x512xf32> to vector<8x128xf32>
    %cst_352 = arith.constant 5.000000e-01 : f32
    %889 = vector.broadcast %cst_352 : f32 to vector<8x128xf32>
    %890 = arith.mulf %889, %888 : vector<8x128xf32>
    %891 = math.tanh %890 : vector<8x128xf32>
    %cst_353 = arith.constant 5.000000e-01 : f32
    %892 = vector.broadcast %cst_353 : f32 to vector<8x128xf32>
    %893 = arith.mulf %892, %891 : vector<8x128xf32>
    %cst_354 = arith.constant 5.000000e-01 : f32
    %894 = vector.broadcast %cst_354 : f32 to vector<8x128xf32>
    %895 = arith.addf %893, %894 : vector<8x128xf32>
    %896 = arith.mulf %885, %828 : vector<8x128xf32>
    %897 = arith.mulf %877, %887 : vector<8x128xf32>
    %898 = arith.addf %896, %897 : vector<8x128xf32>
    %899 = math.tanh %898 : vector<8x128xf32>
    %900 = arith.mulf %895, %899 : vector<8x128xf32>
    %c32_355 = arith.constant 32 : index
    %c0_356 = arith.constant 0 : index
    %901 = vector.load %arg10[%c32_355, %c0_356] : memref<64x512xf32, #tpu.memory_space<vmem>>, vector<8x512xf32>
    %902 = arith.truncf %865 : vector<8x128xf32> to vector<8x128xbf16>
    %cst_357 = arith.constant dense<0.000000e+00> : vector<8x512xf32>
    %903 = tpu.matmul %902, %619, %cst_357 {dimension_numbers = #tpu.dot_dimension_numbers<[1], [0], [0], [1], [0, 0, 1, 1], [], []>} : vector<8x128xbf16>, vector<128x512xbf16>, vector<8x512xf32> -> vector<8x512xf32>
    %904 = arith.addf %901, %903 : vector<8x512xf32>
    %905 = vector.extract_strided_slice %904 {offsets = [0, 0], sizes = [8, 128], strides = [1, 1]} : vector<8x512xf32> to vector<8x128xf32>
    %cst_358 = arith.constant 5.000000e-01 : f32
    %906 = vector.broadcast %cst_358 : f32 to vector<8x128xf32>
    %907 = arith.mulf %906, %905 : vector<8x128xf32>
    %908 = math.tanh %907 : vector<8x128xf32>
    %cst_359 = arith.constant 5.000000e-01 : f32
    %909 = vector.broadcast %cst_359 : f32 to vector<8x128xf32>
    %910 = arith.mulf %909, %908 : vector<8x128xf32>
    %cst_360 = arith.constant 5.000000e-01 : f32
    %911 = vector.broadcast %cst_360 : f32 to vector<8x128xf32>
    %912 = arith.addf %910, %911 : vector<8x128xf32>
    %913 = vector.extract_strided_slice %904 {offsets = [0, 128], sizes = [8, 128], strides = [1, 1]} : vector<8x512xf32> to vector<8x128xf32>
    %cst_361 = arith.constant 5.000000e-01 : f32
    %914 = vector.broadcast %cst_361 : f32 to vector<8x128xf32>
    %915 = arith.mulf %914, %913 : vector<8x128xf32>
    %916 = math.tanh %915 : vector<8x128xf32>
    %cst_362 = arith.constant 5.000000e-01 : f32
    %917 = vector.broadcast %cst_362 : f32 to vector<8x128xf32>
    %918 = arith.mulf %917, %916 : vector<8x128xf32>
    %cst_363 = arith.constant 5.000000e-01 : f32
    %919 = vector.broadcast %cst_363 : f32 to vector<8x128xf32>
    %920 = arith.addf %918, %919 : vector<8x128xf32>
    %921 = vector.extract_strided_slice %904 {offsets = [0, 256], sizes = [8, 128], strides = [1, 1]} : vector<8x512xf32> to vector<8x128xf32>
    %922 = math.tanh %921 : vector<8x128xf32>
    %923 = vector.extract_strided_slice %904 {offsets = [0, 384], sizes = [8, 128], strides = [1, 1]} : vector<8x512xf32> to vector<8x128xf32>
    %cst_364 = arith.constant 5.000000e-01 : f32
    %924 = vector.broadcast %cst_364 : f32 to vector<8x128xf32>
    %925 = arith.mulf %924, %923 : vector<8x128xf32>
    %926 = math.tanh %925 : vector<8x128xf32>
    %cst_365 = arith.constant 5.000000e-01 : f32
    %927 = vector.broadcast %cst_365 : f32 to vector<8x128xf32>
    %928 = arith.mulf %927, %926 : vector<8x128xf32>
    %cst_366 = arith.constant 5.000000e-01 : f32
    %929 = vector.broadcast %cst_366 : f32 to vector<8x128xf32>
    %930 = arith.addf %928, %929 : vector<8x128xf32>
    %931 = arith.mulf %920, %863 : vector<8x128xf32>
    %932 = arith.mulf %912, %922 : vector<8x128xf32>
    %933 = arith.addf %931, %932 : vector<8x128xf32>
    %934 = math.tanh %933 : vector<8x128xf32>
    %935 = arith.mulf %930, %934 : vector<8x128xf32>
    %c24_367 = arith.constant 24 : index
    %c0_368 = arith.constant 0 : index
    %936 = vector.load %arg11[%c24_367, %c0_368] : memref<64x512xf32, #tpu.memory_space<vmem>>, vector<8x512xf32>
    %937 = arith.truncf %900 : vector<8x128xf32> to vector<8x128xbf16>
    %cst_369 = arith.constant dense<0.000000e+00> : vector<8x512xf32>
    %938 = tpu.matmul %937, %620, %cst_369 {dimension_numbers = #tpu.dot_dimension_numbers<[1], [0], [0], [1], [0, 0, 1, 1], [], []>} : vector<8x128xbf16>, vector<128x512xbf16>, vector<8x512xf32> -> vector<8x512xf32>
    %939 = arith.addf %936, %938 : vector<8x512xf32>
    %940 = vector.extract_strided_slice %939 {offsets = [0, 0], sizes = [8, 128], strides = [1, 1]} : vector<8x512xf32> to vector<8x128xf32>
    %cst_370 = arith.constant 5.000000e-01 : f32
    %941 = vector.broadcast %cst_370 : f32 to vector<8x128xf32>
    %942 = arith.mulf %941, %940 : vector<8x128xf32>
    %943 = math.tanh %942 : vector<8x128xf32>
    %cst_371 = arith.constant 5.000000e-01 : f32
    %944 = vector.broadcast %cst_371 : f32 to vector<8x128xf32>
    %945 = arith.mulf %944, %943 : vector<8x128xf32>
    %cst_372 = arith.constant 5.000000e-01 : f32
    %946 = vector.broadcast %cst_372 : f32 to vector<8x128xf32>
    %947 = arith.addf %945, %946 : vector<8x128xf32>
    %948 = vector.extract_strided_slice %939 {offsets = [0, 128], sizes = [8, 128], strides = [1, 1]} : vector<8x512xf32> to vector<8x128xf32>
    %cst_373 = arith.constant 5.000000e-01 : f32
    %949 = vector.broadcast %cst_373 : f32 to vector<8x128xf32>
    %950 = arith.mulf %949, %948 : vector<8x128xf32>
    %951 = math.tanh %950 : vector<8x128xf32>
    %cst_374 = arith.constant 5.000000e-01 : f32
    %952 = vector.broadcast %cst_374 : f32 to vector<8x128xf32>
    %953 = arith.mulf %952, %951 : vector<8x128xf32>
    %cst_375 = arith.constant 5.000000e-01 : f32
    %954 = vector.broadcast %cst_375 : f32 to vector<8x128xf32>
    %955 = arith.addf %953, %954 : vector<8x128xf32>
    %956 = vector.extract_strided_slice %939 {offsets = [0, 256], sizes = [8, 128], strides = [1, 1]} : vector<8x512xf32> to vector<8x128xf32>
    %957 = math.tanh %956 : vector<8x128xf32>
    %958 = vector.extract_strided_slice %939 {offsets = [0, 384], sizes = [8, 128], strides = [1, 1]} : vector<8x512xf32> to vector<8x128xf32>
    %cst_376 = arith.constant 5.000000e-01 : f32
    %959 = vector.broadcast %cst_376 : f32 to vector<8x128xf32>
    %960 = arith.mulf %959, %958 : vector<8x128xf32>
    %961 = math.tanh %960 : vector<8x128xf32>
    %cst_377 = arith.constant 5.000000e-01 : f32
    %962 = vector.broadcast %cst_377 : f32 to vector<8x128xf32>
    %963 = arith.mulf %962, %961 : vector<8x128xf32>
    %cst_378 = arith.constant 5.000000e-01 : f32
    %964 = vector.broadcast %cst_378 : f32 to vector<8x128xf32>
    %965 = arith.addf %963, %964 : vector<8x128xf32>
    %966 = arith.mulf %955, %898 : vector<8x128xf32>
    %967 = arith.mulf %947, %957 : vector<8x128xf32>
    %968 = arith.addf %966, %967 : vector<8x128xf32>
    %969 = math.tanh %968 : vector<8x128xf32>
    %970 = arith.mulf %965, %969 : vector<8x128xf32>
    %c40_379 = arith.constant 40 : index
    %c0_380 = arith.constant 0 : index
    %971 = vector.load %arg10[%c40_379, %c0_380] : memref<64x512xf32, #tpu.memory_space<vmem>>, vector<8x512xf32>
    %972 = arith.truncf %935 : vector<8x128xf32> to vector<8x128xbf16>
    %cst_381 = arith.constant dense<0.000000e+00> : vector<8x512xf32>
    %973 = tpu.matmul %972, %619, %cst_381 {dimension_numbers = #tpu.dot_dimension_numbers<[1], [0], [0], [1], [0, 0, 1, 1], [], []>} : vector<8x128xbf16>, vector<128x512xbf16>, vector<8x512xf32> -> vector<8x512xf32>
    %974 = arith.addf %971, %973 : vector<8x512xf32>
    %975 = vector.extract_strided_slice %974 {offsets = [0, 0], sizes = [8, 128], strides = [1, 1]} : vector<8x512xf32> to vector<8x128xf32>
    %cst_382 = arith.constant 5.000000e-01 : f32
    %976 = vector.broadcast %cst_382 : f32 to vector<8x128xf32>
    %977 = arith.mulf %976, %975 : vector<8x128xf32>
    %978 = math.tanh %977 : vector<8x128xf32>
    %cst_383 = arith.constant 5.000000e-01 : f32
    %979 = vector.broadcast %cst_383 : f32 to vector<8x128xf32>
    %980 = arith.mulf %979, %978 : vector<8x128xf32>
    %cst_384 = arith.constant 5.000000e-01 : f32
    %981 = vector.broadcast %cst_384 : f32 to vector<8x128xf32>
    %982 = arith.addf %980, %981 : vector<8x128xf32>
    %983 = vector.extract_strided_slice %974 {offsets = [0, 128], sizes = [8, 128], strides = [1, 1]} : vector<8x512xf32> to vector<8x128xf32>
    %cst_385 = arith.constant 5.000000e-01 : f32
    %984 = vector.broadcast %cst_385 : f32 to vector<8x128xf32>
    %985 = arith.mulf %984, %983 : vector<8x128xf32>
    %986 = math.tanh %985 : vector<8x128xf32>
    %cst_386 = arith.constant 5.000000e-01 : f32
    %987 = vector.broadcast %cst_386 : f32 to vector<8x128xf32>
    %988 = arith.mulf %987, %986 : vector<8x128xf32>
    %cst_387 = arith.constant 5.000000e-01 : f32
    %989 = vector.broadcast %cst_387 : f32 to vector<8x128xf32>
    %990 = arith.addf %988, %989 : vector<8x128xf32>
    %991 = vector.extract_strided_slice %974 {offsets = [0, 256], sizes = [8, 128], strides = [1, 1]} : vector<8x512xf32> to vector<8x128xf32>
    %992 = math.tanh %991 : vector<8x128xf32>
    %993 = vector.extract_strided_slice %974 {offsets = [0, 384], sizes = [8, 128], strides = [1, 1]} : vector<8x512xf32> to vector<8x128xf32>
    %cst_388 = arith.constant 5.000000e-01 : f32
    %994 = vector.broadcast %cst_388 : f32 to vector<8x128xf32>
    %995 = arith.mulf %994, %993 : vector<8x128xf32>
    %996 = math.tanh %995 : vector<8x128xf32>
    %cst_389 = arith.constant 5.000000e-01 : f32
    %997 = vector.broadcast %cst_389 : f32 to vector<8x128xf32>
    %998 = arith.mulf %997, %996 : vector<8x128xf32>
    %cst_390 = arith.constant 5.000000e-01 : f32
    %999 = vector.broadcast %cst_390 : f32 to vector<8x128xf32>
    %1000 = arith.addf %998, %999 : vector<8x128xf32>
    %1001 = arith.mulf %990, %933 : vector<8x128xf32>
    %1002 = arith.mulf %982, %992 : vector<8x128xf32>
    %1003 = arith.addf %1001, %1002 : vector<8x128xf32>
    %1004 = math.tanh %1003 : vector<8x128xf32>
    %1005 = arith.mulf %1000, %1004 : vector<8x128xf32>
    %c16_391 = arith.constant 16 : index
    %c0_392 = arith.constant 0 : index
    %1006 = vector.load %arg11[%c16_391, %c0_392] : memref<64x512xf32, #tpu.memory_space<vmem>>, vector<8x512xf32>
    %1007 = arith.truncf %970 : vector<8x128xf32> to vector<8x128xbf16>
    %cst_393 = arith.constant dense<0.000000e+00> : vector<8x512xf32>
    %1008 = tpu.matmul %1007, %620, %cst_393 {dimension_numbers = #tpu.dot_dimension_numbers<[1], [0], [0], [1], [0, 0, 1, 1], [], []>} : vector<8x128xbf16>, vector<128x512xbf16>, vector<8x512xf32> -> vector<8x512xf32>
    %1009 = arith.addf %1006, %1008 : vector<8x512xf32>
    %1010 = vector.extract_strided_slice %1009 {offsets = [0, 0], sizes = [8, 128], strides = [1, 1]} : vector<8x512xf32> to vector<8x128xf32>
    %cst_394 = arith.constant 5.000000e-01 : f32
    %1011 = vector.broadcast %cst_394 : f32 to vector<8x128xf32>
    %1012 = arith.mulf %1011, %1010 : vector<8x128xf32>
    %1013 = math.tanh %1012 : vector<8x128xf32>
    %cst_395 = arith.constant 5.000000e-01 : f32
    %1014 = vector.broadcast %cst_395 : f32 to vector<8x128xf32>
    %1015 = arith.mulf %1014, %1013 : vector<8x128xf32>
    %cst_396 = arith.constant 5.000000e-01 : f32
    %1016 = vector.broadcast %cst_396 : f32 to vector<8x128xf32>
    %1017 = arith.addf %1015, %1016 : vector<8x128xf32>
    %1018 = vector.extract_strided_slice %1009 {offsets = [0, 128], sizes = [8, 128], strides = [1, 1]} : vector<8x512xf32> to vector<8x128xf32>
    %cst_397 = arith.constant 5.000000e-01 : f32
    %1019 = vector.broadcast %cst_397 : f32 to vector<8x128xf32>
    %1020 = arith.mulf %1019, %1018 : vector<8x128xf32>
    %1021 = math.tanh %1020 : vector<8x128xf32>
    %cst_398 = arith.constant 5.000000e-01 : f32
    %1022 = vector.broadcast %cst_398 : f32 to vector<8x128xf32>
    %1023 = arith.mulf %1022, %1021 : vector<8x128xf32>
    %cst_399 = arith.constant 5.000000e-01 : f32
    %1024 = vector.broadcast %cst_399 : f32 to vector<8x128xf32>
    %1025 = arith.addf %1023, %1024 : vector<8x128xf32>
    %1026 = vector.extract_strided_slice %1009 {offsets = [0, 256], sizes = [8, 128], strides = [1, 1]} : vector<8x512xf32> to vector<8x128xf32>
    %1027 = math.tanh %1026 : vector<8x128xf32>
    %1028 = vector.extract_strided_slice %1009 {offsets = [0, 384], sizes = [8, 128], strides = [1, 1]} : vector<8x512xf32> to vector<8x128xf32>
    %cst_400 = arith.constant 5.000000e-01 : f32
    %1029 = vector.broadcast %cst_400 : f32 to vector<8x128xf32>
    %1030 = arith.mulf %1029, %1028 : vector<8x128xf32>
    %1031 = math.tanh %1030 : vector<8x128xf32>
    %cst_401 = arith.constant 5.000000e-01 : f32
    %1032 = vector.broadcast %cst_401 : f32 to vector<8x128xf32>
    %1033 = arith.mulf %1032, %1031 : vector<8x128xf32>
    %cst_402 = arith.constant 5.000000e-01 : f32
    %1034 = vector.broadcast %cst_402 : f32 to vector<8x128xf32>
    %1035 = arith.addf %1033, %1034 : vector<8x128xf32>
    %1036 = arith.mulf %1025, %968 : vector<8x128xf32>
    %1037 = arith.mulf %1017, %1027 : vector<8x128xf32>
    %1038 = arith.addf %1036, %1037 : vector<8x128xf32>
    %1039 = math.tanh %1038 : vector<8x128xf32>
    %1040 = arith.mulf %1035, %1039 : vector<8x128xf32>
    %c48_403 = arith.constant 48 : index
    %c0_404 = arith.constant 0 : index
    %1041 = vector.load %arg10[%c48_403, %c0_404] : memref<64x512xf32, #tpu.memory_space<vmem>>, vector<8x512xf32>
    %1042 = arith.truncf %1005 : vector<8x128xf32> to vector<8x128xbf16>
    %cst_405 = arith.constant dense<0.000000e+00> : vector<8x512xf32>
    %1043 = tpu.matmul %1042, %619, %cst_405 {dimension_numbers = #tpu.dot_dimension_numbers<[1], [0], [0], [1], [0, 0, 1, 1], [], []>} : vector<8x128xbf16>, vector<128x512xbf16>, vector<8x512xf32> -> vector<8x512xf32>
    %1044 = arith.addf %1041, %1043 : vector<8x512xf32>
    %1045 = vector.extract_strided_slice %1044 {offsets = [0, 0], sizes = [8, 128], strides = [1, 1]} : vector<8x512xf32> to vector<8x128xf32>
    %cst_406 = arith.constant 5.000000e-01 : f32
    %1046 = vector.broadcast %cst_406 : f32 to vector<8x128xf32>
    %1047 = arith.mulf %1046, %1045 : vector<8x128xf32>
    %1048 = math.tanh %1047 : vector<8x128xf32>
    %cst_407 = arith.constant 5.000000e-01 : f32
    %1049 = vector.broadcast %cst_407 : f32 to vector<8x128xf32>
    %1050 = arith.mulf %1049, %1048 : vector<8x128xf32>
    %cst_408 = arith.constant 5.000000e-01 : f32
    %1051 = vector.broadcast %cst_408 : f32 to vector<8x128xf32>
    %1052 = arith.addf %1050, %1051 : vector<8x128xf32>
    %1053 = vector.extract_strided_slice %1044 {offsets = [0, 128], sizes = [8, 128], strides = [1, 1]} : vector<8x512xf32> to vector<8x128xf32>
    %cst_409 = arith.constant 5.000000e-01 : f32
    %1054 = vector.broadcast %cst_409 : f32 to vector<8x128xf32>
    %1055 = arith.mulf %1054, %1053 : vector<8x128xf32>
    %1056 = math.tanh %1055 : vector<8x128xf32>
    %cst_410 = arith.constant 5.000000e-01 : f32
    %1057 = vector.broadcast %cst_410 : f32 to vector<8x128xf32>
    %1058 = arith.mulf %1057, %1056 : vector<8x128xf32>
    %cst_411 = arith.constant 5.000000e-01 : f32
    %1059 = vector.broadcast %cst_411 : f32 to vector<8x128xf32>
    %1060 = arith.addf %1058, %1059 : vector<8x128xf32>
    %1061 = vector.extract_strided_slice %1044 {offsets = [0, 256], sizes = [8, 128], strides = [1, 1]} : vector<8x512xf32> to vector<8x128xf32>
    %1062 = math.tanh %1061 : vector<8x128xf32>
    %1063 = vector.extract_strided_slice %1044 {offsets = [0, 384], sizes = [8, 128], strides = [1, 1]} : vector<8x512xf32> to vector<8x128xf32>
    %cst_412 = arith.constant 5.000000e-01 : f32
    %1064 = vector.broadcast %cst_412 : f32 to vector<8x128xf32>
    %1065 = arith.mulf %1064, %1063 : vector<8x128xf32>
    %1066 = math.tanh %1065 : vector<8x128xf32>
    %cst_413 = arith.constant 5.000000e-01 : f32
    %1067 = vector.broadcast %cst_413 : f32 to vector<8x128xf32>
    %1068 = arith.mulf %1067, %1066 : vector<8x128xf32>
    %cst_414 = arith.constant 5.000000e-01 : f32
    %1069 = vector.broadcast %cst_414 : f32 to vector<8x128xf32>
    %1070 = arith.addf %1068, %1069 : vector<8x128xf32>
    %1071 = arith.mulf %1060, %1003 : vector<8x128xf32>
    %1072 = arith.mulf %1052, %1062 : vector<8x128xf32>
    %1073 = arith.addf %1071, %1072 : vector<8x128xf32>
    %1074 = math.tanh %1073 : vector<8x128xf32>
    %1075 = arith.mulf %1070, %1074 : vector<8x128xf32>
    %c8_415 = arith.constant 8 : index
    %c0_416 = arith.constant 0 : index
    %1076 = vector.load %arg11[%c8_415, %c0_416] : memref<64x512xf32, #tpu.memory_space<vmem>>, vector<8x512xf32>
    %1077 = arith.truncf %1040 : vector<8x128xf32> to vector<8x128xbf16>
    %cst_417 = arith.constant dense<0.000000e+00> : vector<8x512xf32>
    %1078 = tpu.matmul %1077, %620, %cst_417 {dimension_numbers = #tpu.dot_dimension_numbers<[1], [0], [0], [1], [0, 0, 1, 1], [], []>} : vector<8x128xbf16>, vector<128x512xbf16>, vector<8x512xf32> -> vector<8x512xf32>
    %1079 = arith.addf %1076, %1078 : vector<8x512xf32>
    %1080 = vector.extract_strided_slice %1079 {offsets = [0, 0], sizes = [8, 128], strides = [1, 1]} : vector<8x512xf32> to vector<8x128xf32>
    %cst_418 = arith.constant 5.000000e-01 : f32
    %1081 = vector.broadcast %cst_418 : f32 to vector<8x128xf32>
    %1082 = arith.mulf %1081, %1080 : vector<8x128xf32>
    %1083 = math.tanh %1082 : vector<8x128xf32>
    %cst_419 = arith.constant 5.000000e-01 : f32
    %1084 = vector.broadcast %cst_419 : f32 to vector<8x128xf32>
    %1085 = arith.mulf %1084, %1083 : vector<8x128xf32>
    %cst_420 = arith.constant 5.000000e-01 : f32
    %1086 = vector.broadcast %cst_420 : f32 to vector<8x128xf32>
    %1087 = arith.addf %1085, %1086 : vector<8x128xf32>
    %1088 = vector.extract_strided_slice %1079 {offsets = [0, 128], sizes = [8, 128], strides = [1, 1]} : vector<8x512xf32> to vector<8x128xf32>
    %cst_421 = arith.constant 5.000000e-01 : f32
    %1089 = vector.broadcast %cst_421 : f32 to vector<8x128xf32>
    %1090 = arith.mulf %1089, %1088 : vector<8x128xf32>
    %1091 = math.tanh %1090 : vector<8x128xf32>
    %cst_422 = arith.constant 5.000000e-01 : f32
    %1092 = vector.broadcast %cst_422 : f32 to vector<8x128xf32>
    %1093 = arith.mulf %1092, %1091 : vector<8x128xf32>
    %cst_423 = arith.constant 5.000000e-01 : f32
    %1094 = vector.broadcast %cst_423 : f32 to vector<8x128xf32>
    %1095 = arith.addf %1093, %1094 : vector<8x128xf32>
    %1096 = vector.extract_strided_slice %1079 {offsets = [0, 256], sizes = [8, 128], strides = [1, 1]} : vector<8x512xf32> to vector<8x128xf32>
    %1097 = math.tanh %1096 : vector<8x128xf32>
    %1098 = vector.extract_strided_slice %1079 {offsets = [0, 384], sizes = [8, 128], strides = [1, 1]} : vector<8x512xf32> to vector<8x128xf32>
    %cst_424 = arith.constant 5.000000e-01 : f32
    %1099 = vector.broadcast %cst_424 : f32 to vector<8x128xf32>
    %1100 = arith.mulf %1099, %1098 : vector<8x128xf32>
    %1101 = math.tanh %1100 : vector<8x128xf32>
    %cst_425 = arith.constant 5.000000e-01 : f32
    %1102 = vector.broadcast %cst_425 : f32 to vector<8x128xf32>
    %1103 = arith.mulf %1102, %1101 : vector<8x128xf32>
    %cst_426 = arith.constant 5.000000e-01 : f32
    %1104 = vector.broadcast %cst_426 : f32 to vector<8x128xf32>
    %1105 = arith.addf %1103, %1104 : vector<8x128xf32>
    %1106 = arith.mulf %1095, %1038 : vector<8x128xf32>
    %1107 = arith.mulf %1087, %1097 : vector<8x128xf32>
    %1108 = arith.addf %1106, %1107 : vector<8x128xf32>
    %1109 = math.tanh %1108 : vector<8x128xf32>
    %1110 = arith.mulf %1105, %1109 : vector<8x128xf32>
    %c56_427 = arith.constant 56 : index
    %c0_428 = arith.constant 0 : index
    %1111 = vector.load %arg10[%c56_427, %c0_428] : memref<64x512xf32, #tpu.memory_space<vmem>>, vector<8x512xf32>
    %1112 = arith.truncf %1075 : vector<8x128xf32> to vector<8x128xbf16>
    %cst_429 = arith.constant dense<0.000000e+00> : vector<8x512xf32>
    %1113 = tpu.matmul %1112, %619, %cst_429 {dimension_numbers = #tpu.dot_dimension_numbers<[1], [0], [0], [1], [0, 0, 1, 1], [], []>} : vector<8x128xbf16>, vector<128x512xbf16>, vector<8x512xf32> -> vector<8x512xf32>
    %1114 = arith.addf %1111, %1113 : vector<8x512xf32>
    %1115 = vector.extract_strided_slice %1114 {offsets = [0, 0], sizes = [8, 128], strides = [1, 1]} : vector<8x512xf32> to vector<8x128xf32>
    %cst_430 = arith.constant 5.000000e-01 : f32
    %1116 = vector.broadcast %cst_430 : f32 to vector<8x128xf32>
    %1117 = arith.mulf %1116, %1115 : vector<8x128xf32>
    %1118 = math.tanh %1117 : vector<8x128xf32>
    %cst_431 = arith.constant 5.000000e-01 : f32
    %1119 = vector.broadcast %cst_431 : f32 to vector<8x128xf32>
    %1120 = arith.mulf %1119, %1118 : vector<8x128xf32>
    %cst_432 = arith.constant 5.000000e-01 : f32
    %1121 = vector.broadcast %cst_432 : f32 to vector<8x128xf32>
    %1122 = arith.addf %1120, %1121 : vector<8x128xf32>
    %1123 = vector.extract_strided_slice %1114 {offsets = [0, 128], sizes = [8, 128], strides = [1, 1]} : vector<8x512xf32> to vector<8x128xf32>
    %cst_433 = arith.constant 5.000000e-01 : f32
    %1124 = vector.broadcast %cst_433 : f32 to vector<8x128xf32>
    %1125 = arith.mulf %1124, %1123 : vector<8x128xf32>
    %1126 = math.tanh %1125 : vector<8x128xf32>
    %cst_434 = arith.constant 5.000000e-01 : f32
    %1127 = vector.broadcast %cst_434 : f32 to vector<8x128xf32>
    %1128 = arith.mulf %1127, %1126 : vector<8x128xf32>
    %cst_435 = arith.constant 5.000000e-01 : f32
    %1129 = vector.broadcast %cst_435 : f32 to vector<8x128xf32>
    %1130 = arith.addf %1128, %1129 : vector<8x128xf32>
    %1131 = vector.extract_strided_slice %1114 {offsets = [0, 256], sizes = [8, 128], strides = [1, 1]} : vector<8x512xf32> to vector<8x128xf32>
    %1132 = math.tanh %1131 : vector<8x128xf32>
    %1133 = vector.extract_strided_slice %1114 {offsets = [0, 384], sizes = [8, 128], strides = [1, 1]} : vector<8x512xf32> to vector<8x128xf32>
    %cst_436 = arith.constant 5.000000e-01 : f32
    %1134 = vector.broadcast %cst_436 : f32 to vector<8x128xf32>
    %1135 = arith.mulf %1134, %1133 : vector<8x128xf32>
    %1136 = math.tanh %1135 : vector<8x128xf32>
    %cst_437 = arith.constant 5.000000e-01 : f32
    %1137 = vector.broadcast %cst_437 : f32 to vector<8x128xf32>
    %1138 = arith.mulf %1137, %1136 : vector<8x128xf32>
    %cst_438 = arith.constant 5.000000e-01 : f32
    %1139 = vector.broadcast %cst_438 : f32 to vector<8x128xf32>
    %1140 = arith.addf %1138, %1139 : vector<8x128xf32>
    %1141 = arith.mulf %1130, %1073 : vector<8x128xf32>
    %1142 = arith.mulf %1122, %1132 : vector<8x128xf32>
    %1143 = arith.addf %1141, %1142 : vector<8x128xf32>
    %1144 = math.tanh %1143 : vector<8x128xf32>
    %1145 = arith.mulf %1140, %1144 : vector<8x128xf32>
    %c0_439 = arith.constant 0 : index
    %c0_440 = arith.constant 0 : index
    %1146 = vector.load %arg11[%c0_439, %c0_440] : memref<64x512xf32, #tpu.memory_space<vmem>>, vector<8x512xf32>
    %1147 = arith.truncf %1110 : vector<8x128xf32> to vector<8x128xbf16>
    %cst_441 = arith.constant dense<0.000000e+00> : vector<8x512xf32>
    %1148 = tpu.matmul %1147, %620, %cst_441 {dimension_numbers = #tpu.dot_dimension_numbers<[1], [0], [0], [1], [0, 0, 1, 1], [], []>} : vector<8x128xbf16>, vector<128x512xbf16>, vector<8x512xf32> -> vector<8x512xf32>
    %1149 = arith.addf %1146, %1148 : vector<8x512xf32>
    %1150 = vector.extract_strided_slice %1149 {offsets = [0, 0], sizes = [8, 128], strides = [1, 1]} : vector<8x512xf32> to vector<8x128xf32>
    %cst_442 = arith.constant 5.000000e-01 : f32
    %1151 = vector.broadcast %cst_442 : f32 to vector<8x128xf32>
    %1152 = arith.mulf %1151, %1150 : vector<8x128xf32>
    %1153 = math.tanh %1152 : vector<8x128xf32>
    %cst_443 = arith.constant 5.000000e-01 : f32
    %1154 = vector.broadcast %cst_443 : f32 to vector<8x128xf32>
    %1155 = arith.mulf %1154, %1153 : vector<8x128xf32>
    %cst_444 = arith.constant 5.000000e-01 : f32
    %1156 = vector.broadcast %cst_444 : f32 to vector<8x128xf32>
    %1157 = arith.addf %1155, %1156 : vector<8x128xf32>
    %1158 = vector.extract_strided_slice %1149 {offsets = [0, 128], sizes = [8, 128], strides = [1, 1]} : vector<8x512xf32> to vector<8x128xf32>
    %cst_445 = arith.constant 5.000000e-01 : f32
    %1159 = vector.broadcast %cst_445 : f32 to vector<8x128xf32>
    %1160 = arith.mulf %1159, %1158 : vector<8x128xf32>
    %1161 = math.tanh %1160 : vector<8x128xf32>
    %cst_446 = arith.constant 5.000000e-01 : f32
    %1162 = vector.broadcast %cst_446 : f32 to vector<8x128xf32>
    %1163 = arith.mulf %1162, %1161 : vector<8x128xf32>
    %cst_447 = arith.constant 5.000000e-01 : f32
    %1164 = vector.broadcast %cst_447 : f32 to vector<8x128xf32>
    %1165 = arith.addf %1163, %1164 : vector<8x128xf32>
    %1166 = vector.extract_strided_slice %1149 {offsets = [0, 256], sizes = [8, 128], strides = [1, 1]} : vector<8x512xf32> to vector<8x128xf32>
    %1167 = math.tanh %1166 : vector<8x128xf32>
    %1168 = vector.extract_strided_slice %1149 {offsets = [0, 384], sizes = [8, 128], strides = [1, 1]} : vector<8x512xf32> to vector<8x128xf32>
    %cst_448 = arith.constant 5.000000e-01 : f32
    %1169 = vector.broadcast %cst_448 : f32 to vector<8x128xf32>
    %1170 = arith.mulf %1169, %1168 : vector<8x128xf32>
    %1171 = math.tanh %1170 : vector<8x128xf32>
    %cst_449 = arith.constant 5.000000e-01 : f32
    %1172 = vector.broadcast %cst_449 : f32 to vector<8x128xf32>
    %1173 = arith.mulf %1172, %1171 : vector<8x128xf32>
    %cst_450 = arith.constant 5.000000e-01 : f32
    %1174 = vector.broadcast %cst_450 : f32 to vector<8x128xf32>
    %1175 = arith.addf %1173, %1174 : vector<8x128xf32>
    %1176 = arith.mulf %1165, %1108 : vector<8x128xf32>
    %1177 = arith.mulf %1157, %1167 : vector<8x128xf32>
    %1178 = arith.addf %1176, %1177 : vector<8x128xf32>
    %1179 = math.tanh %1178 : vector<8x128xf32>
    %1180 = arith.mulf %1175, %1179 : vector<8x128xf32>
    %c4 = arith.constant 4 : index
    %c0_451 = arith.constant 0 : index
    %c0_452 = arith.constant 0 : index
    %1181 = vector.load %arg6[%c4, %c0_451, %c0_452] : memref<8x8x128xf32, #tpu.memory_space<vmem>>, vector<1x8x128xf32>
    %1182 = vector.shape_cast %1181 : vector<1x8x128xf32> to vector<8x128xf32>
    %1183 = vector.shape_cast %1145 : vector<8x128xf32> to vector<1x8x128xf32>
    tpu.vector_store %arg6[%c4, %c0_451, %c0_452], %1183 {strides = array<i32>} : memref<8x8x128xf32, #tpu.memory_space<vmem>>, vector<1x8x128xf32>,
    %c5 = arith.constant 5 : index
    %c0_453 = arith.constant 0 : index
    %c0_454 = arith.constant 0 : index
    %1184 = vector.load %arg6[%c5, %c0_453, %c0_454] : memref<8x8x128xf32, #tpu.memory_space<vmem>>, vector<1x8x128xf32>
    %1185 = vector.shape_cast %1184 : vector<1x8x128xf32> to vector<8x128xf32>
    %1186 = vector.shape_cast %1143 : vector<8x128xf32> to vector<1x8x128xf32>
    tpu.vector_store %arg6[%c5, %c0_453, %c0_454], %1186 {strides = array<i32>} : memref<8x8x128xf32, #tpu.memory_space<vmem>>, vector<1x8x128xf32>,
    %c6 = arith.constant 6 : index
    %c0_455 = arith.constant 0 : index
    %c0_456 = arith.constant 0 : index
    %1187 = vector.load %arg6[%c6, %c0_455, %c0_456] : memref<8x8x128xf32, #tpu.memory_space<vmem>>, vector<1x8x128xf32>
    %1188 = vector.shape_cast %1187 : vector<1x8x128xf32> to vector<8x128xf32>
    %1189 = vector.shape_cast %1180 : vector<8x128xf32> to vector<1x8x128xf32>
    tpu.vector_store %arg6[%c6, %c0_455, %c0_456], %1189 {strides = array<i32>} : memref<8x8x128xf32, #tpu.memory_space<vmem>>, vector<1x8x128xf32>,
    %c7 = arith.constant 7 : index
    %c0_457 = arith.constant 0 : index
    %c0_458 = arith.constant 0 : index
    %1190 = vector.load %arg6[%c7, %c0_457, %c0_458] : memref<8x8x128xf32, #tpu.memory_space<vmem>>, vector<1x8x128xf32>
    %1191 = vector.shape_cast %1190 : vector<1x8x128xf32> to vector<8x128xf32>
    %1192 = vector.shape_cast %1178 : vector<8x128xf32> to vector<1x8x128xf32>
    tpu.vector_store %arg6[%c7, %c0_457, %c0_458], %1192 {strides = array<i32>} : memref<8x8x128xf32, #tpu.memory_space<vmem>>, vector<1x8x128xf32>,
    %1193 = tpu.concatenate %1145, %690 in 1 : vector<8x128xf32>, vector<8x128xf32> -> vector<8x256xf32>
    %1194 = arith.truncf %1193 : vector<8x256xf32> to vector<8x256xbf16>
    %c0_459 = arith.constant 0 : index
    %c0_460 = arith.constant 0 : index
    %1195 = vector.load %arg3[%c0_459, %c0_460] : memref<512x128xbf16, #tpu.memory_space<vmem>>, vector<256x128xbf16>
    %cst_461 = arith.constant dense<0.000000e+00> : vector<8x128xf32>
    %1196 = tpu.matmul %1194, %1195, %cst_461 {dimension_numbers = #tpu.dot_dimension_numbers<[1], [0], [0], [1], [0, 0, 1, 1], [], []>} : vector<8x256xbf16>, vector<256x128xbf16>, vector<8x128xf32> -> vector<8x128xf32>
    %c0_462 = arith.constant 0 : index
    %c0_463 = arith.constant 0 : index
    %1197 = vector.load %arg4[%c0_462, %c0_463] : memref<3x128xf32, #tpu.memory_space<vmem>>, vector<1x128xf32>
    %1198 = vector.broadcast %1197 : vector<1x128xf32> to vector<8x128xf32>
    %1199 = arith.addf %1196, %1198 : vector<8x128xf32>
    %cst_464 = arith.constant 0.000000e+00 : f32
    %1200 = vector.broadcast %cst_464 : f32 to vector<8x128xf32>
    %1201 = arith.maximumf %1199, %1200 : vector<8x128xf32>
    %1202 = arith.truncf %1201 : vector<8x128xf32> to vector<8x128xbf16>
    %c256 = arith.constant 256 : index
    %c0_465 = arith.constant 0 : index
    %1203 = vector.load %arg3[%c256, %c0_465] : memref<512x128xbf16, #tpu.memory_space<vmem>>, vector<128x128xbf16>
    %cst_466 = arith.constant dense<0.000000e+00> : vector<8x128xf32>
    %1204 = tpu.matmul %1202, %1203, %cst_466 {dimension_numbers = #tpu.dot_dimension_numbers<[1], [0], [0], [1], [0, 0, 1, 1], [], []>} : vector<8x128xbf16>, vector<128x128xbf16>, vector<8x128xf32> -> vector<8x128xf32>
    %c1_467 = arith.constant 1 : index
    %c0_468 = arith.constant 0 : index
    %1205 = vector.load %arg4[%c1_467, %c0_468] : memref<3x128xf32, #tpu.memory_space<vmem>>, vector<1x128xf32>
    %1206 = vector.broadcast %1205 : vector<1x128xf32> to vector<8x128xf32>
    %1207 = arith.addf %1204, %1206 : vector<8x128xf32>
    %cst_469 = arith.constant 0.000000e+00 : f32
    %1208 = vector.broadcast %cst_469 : f32 to vector<8x128xf32>
    %1209 = arith.maximumf %1207, %1208 : vector<8x128xf32>
    %1210 = arith.truncf %1209 : vector<8x128xf32> to vector<8x128xbf16>
    %c384 = arith.constant 384 : index
    %c0_470 = arith.constant 0 : index
    %1211 = vector.load %arg3[%c384, %c0_470] : memref<512x128xbf16, #tpu.memory_space<vmem>>, vector<128x128xbf16>
    %cst_471 = arith.constant dense<0.000000e+00> : vector<8x128xf32>
    %1212 = tpu.matmul %1210, %1211, %cst_471 {dimension_numbers = #tpu.dot_dimension_numbers<[1], [0], [0], [1], [0, 0, 1, 1], [], []>} : vector<8x128xbf16>, vector<128x128xbf16>, vector<8x128xf32> -> vector<8x128xf32>
    %c2_472 = arith.constant 2 : index
    %c0_473 = arith.constant 0 : index
    %1213 = vector.load %arg4[%c2_472, %c0_473] : memref<3x128xf32, #tpu.memory_space<vmem>>, vector<1x128xf32>
    %1214 = vector.broadcast %1213 : vector<1x128xf32> to vector<8x128xf32>
    %1215 = arith.addf %1212, %1214 : vector<8x128xf32>
    %c0_474 = arith.constant 0 : index
    %c0_475 = arith.constant 0 : index
    %1216 = vector.load %arg5[%c0_474, %c0_475] : memref<8x128xf32, #tpu.memory_space<vmem>>, vector<8x128xf32>
    tpu.vector_store %arg5[%c0_474, %c0_475], %1215 {strides = array<i32>} : memref<8x128xf32, #tpu.memory_space<vmem>>, vector<8x128xf32>,
    return
  }
}

</mosaic_0001>

<llo_original>
// kernel: tpu_custom_call.1
$region0: #{tpu_custom_call.1}
  #allocation0 [shape = 'u32[]', space=smem, size = 0x4, offset = 0x4, fixed_abs, tag = 'smem constant byte address 0x4 - core index']
  #allocation1 [shape = 'u32[144,128]{1,0:T(1,128)}', space=vmem, size = 0x12000, scoped, tag = 'internal scratch']
  #allocation2 [shape = 'f32[64,512]{1,0:T(8,128)}', space=vmem, size = 0x20000, scoped, tag = 'scratch operand']
  #allocation3 [shape = 'f32[64,512]{1,0:T(8,128)}', space=vmem, size = 0x20000, scoped, tag = 'scratch operand']
  #allocation4 [shape = 'f32[64,256]{1,0:T(8,128)}', space=vmem, size = 0x10000, scoped, tag = 'scratch operand']
  #allocation5 [shape = 'f32[64,512]{1,0:T(8,128)}', space=vmem, size = 0x20000, scoped, tag = 'scratch operand']
  #allocation6 [shape = 'f32[64,512]{1,0:T(8,128)}', space=vmem, size = 0x20000, scoped, tag = 'scratch operand']
  %s0 = inlined_call_operand.vmem [shape: f32[64,16], index: 0, kind: input, shape index: {}]
  %s1 = inlined_call_operand.hbm [shape: bf16[1056,512], index: 1, kind: input, shape index: {}]
  %s2 = inlined_call_operand.hbm [shape: f32[4,512], index: 2, kind: input, shape index: {}]
  %s3 = inlined_call_operand.hbm [shape: bf16[512,128], index: 3, kind: input, shape index: {}]
  %s4 = inlined_call_operand.hbm [shape: f32[3,128], index: 4, kind: input, shape index: {}]
  %s5 = inlined_call_operand.hbm [shape: f32[8,128], index: 5, kind: output, shape index: {0}]
  %s6 = inlined_call_operand.hbm [shape: f32[8,8,128], index: 6, kind: output, shape index: {1}]
  %7 = xla_tuple %s5, %s6
  %s8 = sld [smem:[#allocation0]]
  $region54: #{tpu_custom_call.1} parent=0
    _
  %s10 = ssub.s32 1, %s8
  %s11 = scalar_select 0, %s10, %s8
  $region1: #{tpu_custom_call.1} parent=0
    #allocation7 [shape = 'u8[1081344]{0}', space=vmem, size = 0x108000, scoped, tag = 'input window, operand 1, single buffered']
    #allocation8 [shape = 's32[1]{0}', space=sflag, size = 0x4, scoped, tag = 'scoped memory for tpu_custom_call.1']
    #allocation9 [shape = 's32[1]{0}', space=sflag, size = 0x4, scoped, tag = 'scoped memory for tpu_custom_call.1']
    #allocation10 [shape = 'u8[8192]{0}', space=vmem, size = 0x2000, scoped, tag = 'input window, operand 2, single buffered']
    #allocation11 [shape = 's32[1]{0}', space=sflag, size = 0x4, scoped, tag = 'scoped memory for tpu_custom_call.1']
    #allocation12 [shape = 'u8[131072]{0}', space=vmem, size = 0x20000, scoped, tag = 'input window, operand 3, single buffered']
    #allocation13 [shape = 'u8[2048]{0}', space=vmem, size = 0x800, scoped, tag = 'input window, operand 4, single buffered']
    #allocation14 [shape = 's32[1]{0}', space=sflag, size = 0x4, scoped, tag = 'scoped memory for tpu_custom_call.1']
    #allocation15 [shape = 'u8[4096]{0}', space=vmem, size = 0x1000, scoped, tag = 'output window, operand 0, single buffered']
    #allocation16 [shape = 'u8[32768]{0}', space=vmem, size = 0x8000, scoped, tag = 'output window, operand 1, single buffered']
    #allocation17 [shape = 's32[1]{0}', space=sflag, size = 0x4, scoped, tag = 'scoped memory for tpu_custom_call.1']
    %12 = vsyncpa [#allocation8], 0
    %13 = vsyncpa [#allocation11], 0
    %14 = vsyncpa [#allocation14], 0
    %15 = vsyncpa [#allocation9], 0
    %16 = vsyncpa [#allocation17], 0
    // Predicated region
    $region2: #{tpu_custom_call.1} parent=1 // pred_check
      _
    $region3: #{tpu_custom_call.1} parent=1 // pred_check_branch
      %18 = sbr.rel (0) target = $region5
    $region4: #{tpu_custom_call.1} parent=1 // pred_region
      _
    $region5: #{tpu_custom_call.1} parent=1 // pred_fallthru
      _
    // Predicated region
    $region6: #{tpu_custom_call.1} parent=1 // pred_check
      _
    $region7: #{tpu_custom_call.1} parent=1 // pred_check_branch
      %20 = sbr.rel (0) target = $region9
    $region8: #{tpu_custom_call.1} parent=1 // pred_region
      %s22 = ssub.s32 33792, 33792
      %23 = vsyncadd [#allocation8], %s22
      %s24 = sshll.u32 [#allocation7], 4
      %s25 = int_to_ptr.vmem [resolvable:$true] %s24
      %30 = dma.hbm_to_vmem [thread:$0]  %s1, 33792, %s25, [#allocation8], 256, 256, 16
    $region9: #{tpu_custom_call.1} parent=1 // pred_fallthru
      _
    // Predicated region
    $region10: #{tpu_custom_call.1} parent=1 // pred_check
      _
    $region11: #{tpu_custom_call.1} parent=1 // pred_check_branch
      %32 = sbr.rel (0) target = $region13
    $region12: #{tpu_custom_call.1} parent=1 // pred_region
      %s34 = ssub.s32 256, 256
      %35 = vsyncadd [#allocation11], %s34
      %s37 = sshll.u32 [#allocation10], 4
      %s38 = int_to_ptr.vmem [resolvable:$true] %s37
      %40 = dma.hbm_to_vmem [thread:$0]  %s2, 256, %s38, [#allocation11]
    $region13: #{tpu_custom_call.1} parent=1 // pred_fallthru
      _
    // Predicated region
    $region14: #{tpu_custom_call.1} parent=1 // pred_check
      _
    $region15: #{tpu_custom_call.1} parent=1 // pred_check_branch
      %42 = sbr.rel (0) target = $region17
    $region16: #{tpu_custom_call.1} parent=1 // pred_region
      %s44 = ssub.s32 4096, 4096
      %45 = vsyncadd [#allocation11], %s44
      %s46 = sshll.u32 [#allocation12], 4
      %s47 = int_to_ptr.vmem [resolvable:$true] %s46
      %52 = dma.hbm_to_vmem [thread:$0]  %s3, 4096, %s47, [#allocation11], 64, 64, 4
    $region17: #{tpu_custom_call.1} parent=1 // pred_fallthru
      _
    // Predicated region
    $region18: #{tpu_custom_call.1} parent=1 // pred_check
      _
    $region19: #{tpu_custom_call.1} parent=1 // pred_check_branch
      %54 = sbr.rel (0) target = $region21
    $region20: #{tpu_custom_call.1} parent=1 // pred_region
      %s56 = ssub.s32 64, 64
      %57 = vsyncadd [#allocation14], %s56
      %s59 = sshll.u32 [#allocation13], 4
      %s60 = int_to_ptr.vmem [resolvable:$true] %s59
      %62 = dma.hbm_to_vmem [thread:$0]  %s4, 64, %s60, [#allocation14]
    $region21: #{tpu_custom_call.1} parent=1 // pred_fallthru
      _
    // Predicated region
    $region22: #{tpu_custom_call.1} parent=1 // pred_check
      _
    $region23: #{tpu_custom_call.1} parent=1 // pred_check_branch
      %64 = sbr.rel (0) target = $region25
    $region24: #{tpu_custom_call.1} parent=1 // pred_region
      %65 = dma.done [#allocation8], 33792
    $region25: #{tpu_custom_call.1} parent=1 // pred_fallthru
      _
    // Predicated region
    $region26: #{tpu_custom_call.1} parent=1 // pred_check
      _
    $region27: #{tpu_custom_call.1} parent=1 // pred_check_branch
      %67 = sbr.rel (0) target = $region29
    $region28: #{tpu_custom_call.1} parent=1 // pred_region
      %68 = dma.done [#allocation11], 256
    $region29: #{tpu_custom_call.1} parent=1 // pred_fallthru
      _
    // Predicated region
    $region30: #{tpu_custom_call.1} parent=1 // pred_check
      _
    $region31: #{tpu_custom_call.1} parent=1 // pred_check_branch
      %70 = sbr.rel (0) target = $region33
    $region32: #{tpu_custom_call.1} parent=1 // pred_region
      %71 = dma.done [#allocation11], 4096
    $region33: #{tpu_custom_call.1} parent=1 // pred_fallthru
      _
    // Predicated region
    $region34: #{tpu_custom_call.1} parent=1 // pred_check
      _
    $region35: #{tpu_custom_call.1} parent=1 // pred_check_branch
      %73 = sbr.rel (0) target = $region37
    $region36: #{tpu_custom_call.1} parent=1 // pred_region
      %74 = dma.done [#allocation14], 64
    $region37: #{tpu_custom_call.1} parent=1 // pred_fallthru
      _
    %v76 = vld [vmem:[%s0] sm:$0xff]
    %v77 = vld [vmem:[%s0 + $0x8] sm:$0xff]
    %v78 = vld [vmem:[%s0 + $0x10] sm:$0xff]
    %v79 = vld [vmem:[%s0 + $0x18] sm:$0xff]
    %v80 = vld [vmem:[%s0 + $0x20] sm:$0xff]
    %v81 = vld [vmem:[%s0 + $0x28] sm:$0xff]
    %v82 = vld [vmem:[%s0 + $0x30] sm:$0xff]
    %v83 = vld [vmem:[%s0 + $0x38] sm:$0xff]
    %v84 = vpack.c.bf16 %v77, %v76
    %v85 = vpack.c.bf16 %v79, %v78
    %v86 = vpack.c.bf16 %v81, %v80
    %v87 = vpack.c.bf16 %v83, %v82
    %v88 = vld [vmem:[#allocation7] sm:$0xff]
    %v89 = vld [vmem:[#allocation7 + $0x8] sm:$0xff]
    %v90 = vld [vmem:[#allocation7 + $0x10] sm:$0xff]
    %v91 = vld [vmem:[#allocation7 + $0x18] sm:$0xff]
    %v92 = vld [vmem:[#allocation10] ss:$4 sm:$0xf]
    %v94 = vlaneseq
    %v95 = vshrl.u32 %v94, 7
    %v96 = vsub.s32 0, %v95
    %v97 = vrot.slane %v92, %v96
    %v98 = vlaneseq
    %v99 = vshrl.u32 %v98, 7
    %v100 = vsub.s32 1, %v99
    %v101 = vrot.slane %v92, %v100
    %v102 = vlaneseq
    %v103 = vshrl.u32 %v102, 7
    %v104 = vsub.s32 2, %v103
    %v105 = vrot.slane %v92, %v104
    %v106 = vlaneseq
    %v107 = vshrl.u32 %v106, 7
    %v108 = vsub.s32 3, %v107
    %v109 = vrot.slane %v92, %v108
    %v118 = vunpack.c.l.b16 %v88
    %v119 = vunpack.c.h.b16 %v88
    %v120 = vunpack.c.l.b16 %v89
    %v121 = vunpack.c.h.b16 %v89
    %v122 = vunpack.c.l.b16 %v90
    %v123 = vunpack.c.h.b16 %v90
    %v124 = vunpack.c.l.b16 %v91
    %v125 = vunpack.c.h.b16 %v91
    %v126 = vpack.c.b16 %v122, %v118
    %v127 = vpack.c.b16 %v123, %v119
    %v128 = vpack.c.b16 %v124, %v120
    %v129 = vpack.c.b16 %v125, %v121
    %vm134 = vcmask 130048
    %v136 = vsel %vm134, %v84, 0
    %v139 = vsel %vm134, %v85, 0
    %v142 = vsel %vm134, %v86, 0
    %v145 = vsel %vm134, %v87, 0
    %147 = vmatprep.subr.bf16.mxu0 %v127
    %148 = vmatpush1.bf16.msra.mxu0 %v126
    %149 = vmatprep.subr.bf16.mxu0 0
    %150 = vmatpush1.bf16.msra.mxu0 0
    %151 = vmatprep.subr.bf16.mxu0 0
    %152 = vmatpush1.bf16.msra.mxu0 0
    %153 = vmatprep.subr.bf16.mxu0 0
    %154 = vmatpush1.bf16.msra.mxu0 0
    %155 = vmatprep.subr.bf16.mxu0 0
    %156 = vmatpush1.bf16.msra.mxu0 0
    %157 = vmatprep.subr.bf16.mxu0 0
    %158 = vmatpush1.bf16.msra.mxu0 0
    %159 = vmatprep.subr.bf16.mxu0 0
    %160 = vmatpush1.bf16.msra.mxu0 0
    %161 = vmatprep.subr.bf16.mxu0 0
    %162 = vmatpush1.bf16.msra.mxu0 0
    %163 = vmatprep.subr.bf16.mxu0 0
    %164 = vmatpush1.bf16.msra.mxu0 0
    %165 = vmatprep.subr.bf16.mxu0 0
    %166 = vmatpush1.bf16.msra.mxu0 0
    %167 = vmatprep.subr.bf16.mxu0 0
    %168 = vmatpush1.bf16.msra.mxu0 0
    %169 = vmatprep.subr.bf16.mxu0 0
    %170 = vmatpush1.bf16.msra.mxu0 0
    %171 = vmatprep.subr.bf16.mxu0 0
    %172 = vmatpush1.bf16.msra.mxu0 0
    %173 = vmatprep.subr.bf16.mxu0 0
    %174 = vmatpush1.bf16.msra.mxu0 0
    %175 = vmatprep.subr.bf16.mxu0 0
    %176 = vmatpush1.bf16.msra.mxu0 0
    %177 = vmatprep.subr.bf16.mxu0 0
    %178 = vmatpush1.bf16.msra.mxu0 0
    %179 = vmatprep.mubr.bf16.mxu0 0
    %180 = vmatmul.mubr.bf16.gmra.mrb[0].mxu0 %v136
    %v181 = vpop.f32.mrb[0].mxu0
    %v182 = vadd.f32 %v97, %v181
    %v183 = vpop.f32.mrb[0].mxu0
    %v184 = vadd.f32 %v101, %v183
    %v185 = vpop.f32.mrb[0].mxu0
    %v186 = vadd.f32 %v97, %v185
    %v187 = vpop.f32.mrb[0].mxu0
    %v188 = vadd.f32 %v101, %v187
    %189 = vmatprep.mubr.bf16.mxu0 0
    %190 = vmatmul.mubr.bf16.gmra.mrb[0].mxu0 %v139
    %v191 = vpop.f32.mrb[0].mxu0
    %v192 = vadd.f32 %v97, %v191
    %v193 = vpop.f32.mrb[0].mxu0
    %v194 = vadd.f32 %v101, %v193
    %v195 = vpop.f32.mrb[0].mxu0
    %v196 = vadd.f32 %v97, %v195
    %v197 = vpop.f32.mrb[0].mxu0
    %v198 = vadd.f32 %v101, %v197
    %199 = vmatprep.mubr.bf16.mxu0 0
    %200 = vmatmul.mubr.bf16.gmra.mrb[0].mxu0 %v142
    %v201 = vpop.f32.mrb[0].mxu0
    %v202 = vadd.f32 %v97, %v201
    %v203 = vpop.f32.mrb[0].mxu0
    %v204 = vadd.f32 %v101, %v203
    %v205 = vpop.f32.mrb[0].mxu0
    %v206 = vadd.f32 %v97, %v205
    %v207 = vpop.f32.mrb[0].mxu0
    %v208 = vadd.f32 %v101, %v207
    %209 = vmatprep.mubr.bf16.mxu0 0
    %210 = vmatmul.mubr.bf16.gmra.mrb[0].mxu0 %v145
    %v211 = vpop.f32.mrb[0].mxu0
    %v212 = vadd.f32 %v97, %v211
    %v213 = vpop.f32.mrb[0].mxu0
    %v214 = vadd.f32 %v101, %v213
    %v215 = vpop.f32.mrb[0].mxu0
    %v216 = vadd.f32 %v97, %v215
    %v217 = vpop.f32.mrb[0].mxu0
    %v218 = vadd.f32 %v101, %v217
    %219 = vdwg.mxu0
    %220 = vmatprep.subr.bf16.mxu0 %v129
    %221 = vmatpush1.bf16.msra.mxu0 %v128
    %222 = vmatprep.subr.bf16.mxu0 0
    %223 = vmatpush1.bf16.msra.mxu0 0
    %224 = vmatprep.subr.bf16.mxu0 0
    %225 = vmatpush1.bf16.msra.mxu0 0
    %226 = vmatprep.subr.bf16.mxu0 0
    %227 = vmatpush1.bf16.msra.mxu0 0
    %228 = vmatprep.subr.bf16.mxu0 0
    %229 = vmatpush1.bf16.msra.mxu0 0
    %230 = vmatprep.subr.bf16.mxu0 0
    %231 = vmatpush1.bf16.msra.mxu0 0
    %232 = vmatprep.subr.bf16.mxu0 0
    %233 = vmatpush1.bf16.msra.mxu0 0
    %234 = vmatprep.subr.bf16.mxu0 0
    %235 = vmatpush1.bf16.msra.mxu0 0
    %236 = vmatprep.subr.bf16.mxu0 0
    %237 = vmatpush1.bf16.msra.mxu0 0
    %238 = vmatprep.subr.bf16.mxu0 0
    %239 = vmatpush1.bf16.msra.mxu0 0
    %240 = vmatprep.subr.bf16.mxu0 0
    %241 = vmatpush1.bf16.msra.mxu0 0
    %242 = vmatprep.subr.bf16.mxu0 0
    %243 = vmatpush1.bf16.msra.mxu0 0
    %244 = vmatprep.subr.bf16.mxu0 0
    %245 = vmatpush1.bf16.msra.mxu0 0
    %246 = vmatprep.subr.bf16.mxu0 0
    %247 = vmatpush1.bf16.msra.mxu0 0
    %248 = vmatprep.subr.bf16.mxu0 0
    %249 = vmatpush1.bf16.msra.mxu0 0
    %250 = vmatprep.subr.bf16.mxu0 0
    %251 = vmatpush1.bf16.msra.mxu0 0
    %252 = vmatprep.mubr.bf16.mxu0 0
    %253 = vmatmul.mubr.bf16.gmra.mrb[0].mxu0 %v136
    %v254 = vpop.f32.mrb[0].mxu0
    %v255 = vadd.f32 %v105, %v254
    %v256 = vpop.f32.mrb[0].mxu0
    %v257 = vadd.f32 %v109, %v256
    %v258 = vpop.f32.mrb[0].mxu0
    %v259 = vadd.f32 %v105, %v258
    %v260 = vpop.f32.mrb[0].mxu0
    %v261 = vadd.f32 %v109, %v260
    %262 = vmatprep.mubr.bf16.mxu0 0
    %263 = vmatmul.mubr.bf16.gmra.mrb[0].mxu0 %v139
    %v264 = vpop.f32.mrb[0].mxu0
    %v265 = vadd.f32 %v105, %v264
    %v266 = vpop.f32.mrb[0].mxu0
    %v267 = vadd.f32 %v109, %v266
    %v268 = vpop.f32.mrb[0].mxu0
    %v269 = vadd.f32 %v105, %v268
    %v270 = vpop.f32.mrb[0].mxu0
    %v271 = vadd.f32 %v109, %v270
    %272 = vmatprep.mubr.bf16.mxu0 0
    %273 = vmatmul.mubr.bf16.gmra.mrb[0].mxu0 %v142
    %v274 = vpop.f32.mrb[0].mxu0
    %v275 = vadd.f32 %v105, %v274
    %v276 = vpop.f32.mrb[0].mxu0
    %v277 = vadd.f32 %v109, %v276
    %v278 = vpop.f32.mrb[0].mxu0
    %v279 = vadd.f32 %v105, %v278
    %v280 = vpop.f32.mrb[0].mxu0
    %v281 = vadd.f32 %v109, %v280
    %282 = vmatprep.mubr.bf16.mxu0 0
    %283 = vmatmul.mubr.bf16.gmra.mrb[0].mxu0 %v145
    %v284 = vpop.f32.mrb[0].mxu0
    %v285 = vadd.f32 %v105, %v284
    %v286 = vpop.f32.mrb[0].mxu0
    %v287 = vadd.f32 %v109, %v286
    %v288 = vpop.f32.mrb[0].mxu0
    %v289 = vadd.f32 %v105, %v288
    %v290 = vpop.f32.mrb[0].mxu0
    %v291 = vadd.f32 %v109, %v290
    %292 = vdwg.mxu0
    %293 = vst [vmem:[#allocation2] sm:$0xff] %v182
    %294 = vst [vmem:[#allocation2 + $0x8] sm:$0xff] %v184
    %295 = vst [vmem:[#allocation2 + $0x10] sm:$0xff] %v255
    %296 = vst [vmem:[#allocation2 + $0x18] sm:$0xff] %v257
    %297 = vst [vmem:[#allocation2 + $0x20] sm:$0xff] %v186
    %298 = vst [vmem:[#allocation2 + $0x28] sm:$0xff] %v188
    %299 = vst [vmem:[#allocation2 + $0x30] sm:$0xff] %v259
    %300 = vst [vmem:[#allocation2 + $0x38] sm:$0xff] %v261
    %301 = vst [vmem:[#allocation2 + $0x40] sm:$0xff] %v192
    %302 = vst [vmem:[#allocation2 + $0x48] sm:$0xff] %v194
    %303 = vst [vmem:[#allocation2 + $0x50] sm:$0xff] %v265
    %304 = vst [vmem:[#allocation2 + $0x58] sm:$0xff] %v267
    %305 = vst [vmem:[#allocation2 + $0x60] sm:$0xff] %v196
    %306 = vst [vmem:[#allocation2 + $0x68] sm:$0xff] %v198
    %307 = vst [vmem:[#allocation2 + $0x70] sm:$0xff] %v269
    %308 = vst [vmem:[#allocation2 + $0x78] sm:$0xff] %v271
    %309 = vst [vmem:[#allocation2 + $0x80] sm:$0xff] %v202
    %310 = vst [vmem:[#allocation2 + $0x88] sm:$0xff] %v204
    %311 = vst [vmem:[#allocation2 + $0x90] sm:$0xff] %v275
    %312 = vst [vmem:[#allocation2 + $0x98] sm:$0xff] %v277
    %313 = vst [vmem:[#allocation2 + $0xa0] sm:$0xff] %v206
    %314 = vst [vmem:[#allocation2 + $0xa8] sm:$0xff] %v208
    %315 = vst [vmem:[#allocation2 + $0xb0] sm:$0xff] %v279
    %316 = vst [vmem:[#allocation2 + $0xb8] sm:$0xff] %v281
    %317 = vst [vmem:[#allocation2 + $0xc0] sm:$0xff] %v212
    %318 = vst [vmem:[#allocation2 + $0xc8] sm:$0xff] %v214
    %319 = vst [vmem:[#allocation2 + $0xd0] sm:$0xff] %v285
    %320 = vst [vmem:[#allocation2 + $0xd8] sm:$0xff] %v287
    %321 = vst [vmem:[#allocation2 + $0xe0] sm:$0xff] %v216
    %322 = vst [vmem:[#allocation2 + $0xe8] sm:$0xff] %v218
    %323 = vst [vmem:[#allocation2 + $0xf0] sm:$0xff] %v289
    %324 = vst [vmem:[#allocation2 + $0xf8] sm:$0xff] %v291
    %v325 = vld [vmem:[#allocation7 + $0x20] sm:$0xff]
    %v326 = vld [vmem:[#allocation7 + $0x28] sm:$0xff]
    %v327 = vld [vmem:[#allocation7 + $0x30] sm:$0xff]
    %v328 = vld [vmem:[#allocation7 + $0x38] sm:$0xff]
    %s329 = scalar_lea.vmem [#allocation10], 1
    %v330 = vld [vmem:[%s329] ss:$4 sm:$0xf]
    %v332 = vlaneseq
    %v333 = vshrl.u32 %v332, 7
    %v334 = vsub.s32 0, %v333
    %v335 = vrot.slane %v330, %v334
    %v336 = vlaneseq
    %v337 = vshrl.u32 %v336, 7
    %v338 = vsub.s32 1, %v337
    %v339 = vrot.slane %v330, %v338
    %v340 = vlaneseq
    %v341 = vshrl.u32 %v340, 7
    %v342 = vsub.s32 2, %v341
    %v343 = vrot.slane %v330, %v342
    %v344 = vlaneseq
    %v345 = vshrl.u32 %v344, 7
    %v346 = vsub.s32 3, %v345
    %v347 = vrot.slane %v330, %v346
    %v356 = vunpack.c.l.b16 %v325
    %v357 = vunpack.c.h.b16 %v325
    %v358 = vunpack.c.l.b16 %v326
    %v359 = vunpack.c.h.b16 %v326
    %v360 = vunpack.c.l.b16 %v327
    %v361 = vunpack.c.h.b16 %v327
    %v362 = vunpack.c.l.b16 %v328
    %v363 = vunpack.c.h.b16 %v328
    %v364 = vpack.c.b16 %v360, %v356
    %v365 = vpack.c.b16 %v361, %v357
    %v366 = vpack.c.b16 %v362, %v358
    %v367 = vpack.c.b16 %v363, %v359
    %372 = vmatprep.subr.bf16.mxu0 %v365
    %373 = vmatpush1.bf16.msra.mxu0 %v364
    %374 = vmatprep.subr.bf16.mxu0 0
    %375 = vmatpush1.bf16.msra.mxu0 0
    %376 = vmatprep.subr.bf16.mxu0 0
    %377 = vmatpush1.bf16.msra.mxu0 0
    %378 = vmatprep.subr.bf16.mxu0 0
    %379 = vmatpush1.bf16.msra.mxu0 0
    %380 = vmatprep.subr.bf16.mxu0 0
    %381 = vmatpush1.bf16.msra.mxu0 0
    %382 = vmatprep.subr.bf16.mxu0 0
    %383 = vmatpush1.bf16.msra.mxu0 0
    %384 = vmatprep.subr.bf16.mxu0 0
    %385 = vmatpush1.bf16.msra.mxu0 0
    %386 = vmatprep.subr.bf16.mxu0 0
    %387 = vmatpush1.bf16.msra.mxu0 0
    %388 = vmatprep.subr.bf16.mxu0 0
    %389 = vmatpush1.bf16.msra.mxu0 0
    %390 = vmatprep.subr.bf16.mxu0 0
    %391 = vmatpush1.bf16.msra.mxu0 0
    %392 = vmatprep.subr.bf16.mxu0 0
    %393 = vmatpush1.bf16.msra.mxu0 0
    %394 = vmatprep.subr.bf16.mxu0 0
    %395 = vmatpush1.bf16.msra.mxu0 0
    %396 = vmatprep.subr.bf16.mxu0 0
    %397 = vmatpush1.bf16.msra.mxu0 0
    %398 = vmatprep.subr.bf16.mxu0 0
    %399 = vmatpush1.bf16.msra.mxu0 0
    %400 = vmatprep.subr.bf16.mxu0 0
    %401 = vmatpush1.bf16.msra.mxu0 0
    %402 = vmatprep.subr.bf16.mxu0 0
    %403 = vmatpush1.bf16.msra.mxu0 0
    %404 = vmatprep.mubr.bf16.mxu0 0
    %405 = vmatmul.mubr.bf16.gmra.mrb[0].mxu0 %v136
    %v406 = vpop.f32.mrb[0].mxu0
    %v407 = vadd.f32 %v335, %v406
    %v408 = vpop.f32.mrb[0].mxu0
    %v409 = vadd.f32 %v339, %v408
    %v410 = vpop.f32.mrb[0].mxu0
    %v411 = vadd.f32 %v335, %v410
    %v412 = vpop.f32.mrb[0].mxu0
    %v413 = vadd.f32 %v339, %v412
    %414 = vmatprep.mubr.bf16.mxu0 0
    %415 = vmatmul.mubr.bf16.gmra.mrb[0].mxu0 %v139
    %v416 = vpop.f32.mrb[0].mxu0
    %v417 = vadd.f32 %v335, %v416
    %v418 = vpop.f32.mrb[0].mxu0
    %v419 = vadd.f32 %v339, %v418
    %v420 = vpop.f32.mrb[0].mxu0
    %v421 = vadd.f32 %v335, %v420
    %v422 = vpop.f32.mrb[0].mxu0
    %v423 = vadd.f32 %v339, %v422
    %424 = vmatprep.mubr.bf16.mxu0 0
    %425 = vmatmul.mubr.bf16.gmra.mrb[0].mxu0 %v142
    %v426 = vpop.f32.mrb[0].mxu0
    %v427 = vadd.f32 %v335, %v426
    %v428 = vpop.f32.mrb[0].mxu0
    %v429 = vadd.f32 %v339, %v428
    %v430 = vpop.f32.mrb[0].mxu0
    %v431 = vadd.f32 %v335, %v430
    %v432 = vpop.f32.mrb[0].mxu0
    %v433 = vadd.f32 %v339, %v432
    %434 = vmatprep.mubr.bf16.mxu0 0
    %435 = vmatmul.mubr.bf16.gmra.mrb[0].mxu0 %v145
    %v436 = vpop.f32.mrb[0].mxu0
    %v437 = vadd.f32 %v335, %v436
    %v438 = vpop.f32.mrb[0].mxu0
    %v439 = vadd.f32 %v339, %v438
    %v440 = vpop.f32.mrb[0].mxu0
    %v441 = vadd.f32 %v335, %v440
    %v442 = vpop.f32.mrb[0].mxu0
    %v443 = vadd.f32 %v339, %v442
    %444 = vdwg.mxu0
    %445 = vmatprep.subr.bf16.mxu0 %v367
    %446 = vmatpush1.bf16.msra.mxu0 %v366
    %447 = vmatprep.subr.bf16.mxu0 0
    %448 = vmatpush1.bf16.msra.mxu0 0
    %449 = vmatprep.subr.bf16.mxu0 0
    %450 = vmatpush1.bf16.msra.mxu0 0
    %451 = vmatprep.subr.bf16.mxu0 0
    %452 = vmatpush1.bf16.msra.mxu0 0
    %453 = vmatprep.subr.bf16.mxu0 0
    %454 = vmatpush1.bf16.msra.mxu0 0
    %455 = vmatprep.subr.bf16.mxu0 0
    %456 = vmatpush1.bf16.msra.mxu0 0
    %457 = vmatprep.subr.bf16.mxu0 0
    %458 = vmatpush1.bf16.msra.mxu0 0
    %459 = vmatprep.subr.bf16.mxu0 0
    %460 = vmatpush1.bf16.msra.mxu0 0
    %461 = vmatprep.subr.bf16.mxu0 0
    %462 = vmatpush1.bf16.msra.mxu0 0
    %463 = vmatprep.subr.bf16.mxu0 0
    %464 = vmatpush1.bf16.msra.mxu0 0
    %465 = vmatprep.subr.bf16.mxu0 0
    %466 = vmatpush1.bf16.msra.mxu0 0
    %467 = vmatprep.subr.bf16.mxu0 0
    %468 = vmatpush1.bf16.msra.mxu0 0
    %469 = vmatprep.subr.bf16.mxu0 0
    %470 = vmatpush1.bf16.msra.mxu0 0
    %471 = vmatprep.subr.bf16.mxu0 0
    %472 = vmatpush1.bf16.msra.mxu0 0
    %473 = vmatprep.subr.bf16.mxu0 0
    %474 = vmatpush1.bf16.msra.mxu0 0
    %475 = vmatprep.subr.bf16.mxu0 0
    %476 = vmatpush1.bf16.msra.mxu0 0
    %477 = vmatprep.mubr.bf16.mxu0 0
    %478 = vmatmul.mubr.bf16.gmra.mrb[0].mxu0 %v136
    %v479 = vpop.f32.mrb[0].mxu0
    %v480 = vadd.f32 %v343, %v479
    %v481 = vpop.f32.mrb[0].mxu0
    %v482 = vadd.f32 %v347, %v481
    %v483 = vpop.f32.mrb[0].mxu0
    %v484 = vadd.f32 %v343, %v483
    %v485 = vpop.f32.mrb[0].mxu0
    %v486 = vadd.f32 %v347, %v485
    %487 = vmatprep.mubr.bf16.mxu0 0
    %488 = vmatmul.mubr.bf16.gmra.mrb[0].mxu0 %v139
    %v489 = vpop.f32.mrb[0].mxu0
    %v490 = vadd.f32 %v343, %v489
    %v491 = vpop.f32.mrb[0].mxu0
    %v492 = vadd.f32 %v347, %v491
    %v493 = vpop.f32.mrb[0].mxu0
    %v494 = vadd.f32 %v343, %v493
    %v495 = vpop.f32.mrb[0].mxu0
    %v496 = vadd.f32 %v347, %v495
    %497 = vmatprep.mubr.bf16.mxu0 0
    %498 = vmatmul.mubr.bf16.gmra.mrb[0].mxu0 %v142
    %v499 = vpop.f32.mrb[0].mxu0
    %v500 = vadd.f32 %v343, %v499
    %v501 = vpop.f32.mrb[0].mxu0
    %v502 = vadd.f32 %v347, %v501
    %v503 = vpop.f32.mrb[0].mxu0
    %v504 = vadd.f32 %v343, %v503
    %v505 = vpop.f32.mrb[0].mxu0
    %v506 = vadd.f32 %v347, %v505
    %507 = vmatprep.mubr.bf16.mxu0 0
    %508 = vmatmul.mubr.bf16.gmra.mrb[0].mxu0 %v145
    %v509 = vpop.f32.mrb[0].mxu0
    %v510 = vadd.f32 %v343, %v509
    %v511 = vpop.f32.mrb[0].mxu0
    %v512 = vadd.f32 %v347, %v511
    %v513 = vpop.f32.mrb[0].mxu0
    %v514 = vadd.f32 %v343, %v513
    %v515 = vpop.f32.mrb[0].mxu0
    %v516 = vadd.f32 %v347, %v515
    %517 = vdwg.mxu0
    %518 = vst [vmem:[#allocation3] sm:$0xff] %v407
    %519 = vst [vmem:[#allocation3 + $0x8] sm:$0xff] %v409
    %520 = vst [vmem:[#allocation3 + $0x10] sm:$0xff] %v480
    %521 = vst [vmem:[#allocation3 + $0x18] sm:$0xff] %v482
    %522 = vst [vmem:[#allocation3 + $0x20] sm:$0xff] %v411
    %523 = vst [vmem:[#allocation3 + $0x28] sm:$0xff] %v413
    %524 = vst [vmem:[#allocation3 + $0x30] sm:$0xff] %v484
    %525 = vst [vmem:[#allocation3 + $0x38] sm:$0xff] %v486
    %526 = vst [vmem:[#allocation3 + $0x40] sm:$0xff] %v417
    %527 = vst [vmem:[#allocation3 + $0x48] sm:$0xff] %v419
    %528 = vst [vmem:[#allocation3 + $0x50] sm:$0xff] %v490
    %529 = vst [vmem:[#allocation3 + $0x58] sm:$0xff] %v492
    %530 = vst [vmem:[#allocation3 + $0x60] sm:$0xff] %v421
    %531 = vst [vmem:[#allocation3 + $0x68] sm:$0xff] %v423
    %532 = vst [vmem:[#allocation3 + $0x70] sm:$0xff] %v494
    %533 = vst [vmem:[#allocation3 + $0x78] sm:$0xff] %v496
    %534 = vst [vmem:[#allocation3 + $0x80] sm:$0xff] %v427
    %535 = vst [vmem:[#allocation3 + $0x88] sm:$0xff] %v429
    %536 = vst [vmem:[#allocation3 + $0x90] sm:$0xff] %v500
    %537 = vst [vmem:[#allocation3 + $0x98] sm:$0xff] %v502
    %538 = vst [vmem:[#allocation3 + $0xa0] sm:$0xff] %v431
    %539 = vst [vmem:[#allocation3 + $0xa8] sm:$0xff] %v433
    %540 = vst [vmem:[#allocation3 + $0xb0] sm:$0xff] %v504
    %541 = vst [vmem:[#allocation3 + $0xb8] sm:$0xff] %v506
    %542 = vst [vmem:[#allocation3 + $0xc0] sm:$0xff] %v437
    %543 = vst [vmem:[#allocation3 + $0xc8] sm:$0xff] %v439
    %544 = vst [vmem:[#allocation3 + $0xd0] sm:$0xff] %v510
    %545 = vst [vmem:[#allocation3 + $0xd8] sm:$0xff] %v512
    %546 = vst [vmem:[#allocation3 + $0xe0] sm:$0xff] %v441
    %547 = vst [vmem:[#allocation3 + $0xe8] sm:$0xff] %v443
    %548 = vst [vmem:[#allocation3 + $0xf0] sm:$0xff] %v514
    %549 = vst [vmem:[#allocation3 + $0xf8] sm:$0xff] %v516
    %v550 = vld [vmem:[#allocation7 + $0x40] sm:$0xff]
    %v551 = vld [vmem:[#allocation7 + $0x48] sm:$0xff]
    %v552 = vld [vmem:[#allocation7 + $0x50] sm:$0xff]
    %v553 = vld [vmem:[#allocation7 + $0x58] sm:$0xff]
    %v554 = vld [vmem:[#allocation7 + $0x60] sm:$0xff]
    %v555 = vld [vmem:[#allocation7 + $0x68] sm:$0xff]
    %v556 = vld [vmem:[#allocation7 + $0x70] sm:$0xff]
    %v557 = vld [vmem:[#allocation7 + $0x78] sm:$0xff]
    %v558 = vld [vmem:[#allocation7 + $0x80] sm:$0xff]
    %v559 = vld [vmem:[#allocation7 + $0x88] sm:$0xff]
    %v560 = vld [vmem:[#allocation7 + $0x90] sm:$0xff]
    %v561 = vld [vmem:[#allocation7 + $0x98] sm:$0xff]
    %v562 = vld [vmem:[#allocation7 + $0xa0] sm:$0xff]
    %v563 = vld [vmem:[#allocation7 + $0xa8] sm:$0xff]
    %v564 = vld [vmem:[#allocation7 + $0xb0] sm:$0xff]
    %v565 = vld [vmem:[#allocation7 + $0xb8] sm:$0xff]
    %v566 = vld [vmem:[#allocation7 + $0xc0] sm:$0xff]
    %v567 = vld [vmem:[#allocation7 + $0xc8] sm:$0xff]
    %v568 = vld [vmem:[#allocation7 + $0xd0] sm:$0xff]
    %v569 = vld [vmem:[#allocation7 + $0xd8] sm:$0xff]
    %v570 = vld [vmem:[#allocation7 + $0xe0] sm:$0xff]
    %v571 = vld [vmem:[#allocation7 + $0xe8] sm:$0xff]
    %v572 = vld [vmem:[#allocation7 + $0xf0] sm:$0xff]
    %v573 = vld [vmem:[#allocation7 + $0xf8] sm:$0xff]
    %v574 = vld [vmem:[#allocation7 + $0x100] sm:$0xff]
    %v575 = vld [vmem:[#allocation7 + $0x108] sm:$0xff]
    %v576 = vld [vmem:[#allocation7 + $0x110] sm:$0xff]
    %v577 = vld [vmem:[#allocation7 + $0x118] sm:$0xff]
    %v578 = vld [vmem:[#allocation7 + $0x120] sm:$0xff]
    %v579 = vld [vmem:[#allocation7 + $0x128] sm:$0xff]
    %v580 = vld [vmem:[#allocation7 + $0x130] sm:$0xff]
    %v581 = vld [vmem:[#allocation7 + $0x138] sm:$0xff]
    %v582 = vld [vmem:[#allocation7 + $0x140] sm:$0xff]
    %v583 = vld [vmem:[#allocation7 + $0x148] sm:$0xff]
    %v584 = vld [vmem:[#allocation7 + $0x150] sm:$0xff]
    %v585 = vld [vmem:[#allocation7 + $0x158] sm:$0xff]
    %v586 = vld [vmem:[#allocation7 + $0x160] sm:$0xff]
    %v587 = vld [vmem:[#allocation7 + $0x168] sm:$0xff]
    %v588 = vld [vmem:[#allocation7 + $0x170] sm:$0xff]
    %v589 = vld [vmem:[#allocation7 + $0x178] sm:$0xff]
    %v590 = vld [vmem:[#allocation7 + $0x180] sm:$0xff]
    %v591 = vld [vmem:[#allocation7 + $0x188] sm:$0xff]
    %v592 = vld [vmem:[#allocation7 + $0x190] sm:$0xff]
    %v593 = vld [vmem:[#allocation7 + $0x198] sm:$0xff]
    %v594 = vld [vmem:[#allocation7 + $0x1a0] sm:$0xff]
    %v595 = vld [vmem:[#allocation7 + $0x1a8] sm:$0xff]
    %v596 = vld [vmem:[#allocation7 + $0x1b0] sm:$0xff]
    %v597 = vld [vmem:[#allocation7 + $0x1b8] sm:$0xff]
    %v598 = vld [vmem:[#allocation7 + $0x1c0] sm:$0xff]
    %v599 = vld [vmem:[#allocation7 + $0x1c8] sm:$0xff]
    %v600 = vld [vmem:[#allocation7 + $0x1d0] sm:$0xff]
    %v601 = vld [vmem:[#allocation7 + $0x1d8] sm:$0xff]
    %v602 = vld [vmem:[#allocation7 + $0x1e0] sm:$0xff]
    %v603 = vld [vmem:[#allocation7 + $0x1e8] sm:$0xff]
    %v604 = vld [vmem:[#allocation7 + $0x1f0] sm:$0xff]
    %v605 = vld [vmem:[#allocation7 + $0x1f8] sm:$0xff]
    %v606 = vld [vmem:[#allocation7 + $0x200] sm:$0xff]
    %v607 = vld [vmem:[#allocation7 + $0x208] sm:$0xff]
    %v608 = vld [vmem:[#allocation7 + $0x210] sm:$0xff]
    %v609 = vld [vmem:[#allocation7 + $0x218] sm:$0xff]
    %v610 = vld [vmem:[#allocation7 + $0x220] sm:$0xff]
    %v611 = vld [vmem:[#allocation7 + $0x228] sm:$0xff]
    %v612 = vld [vmem:[#allocation7 + $0x230] sm:$0xff]
    %v613 = vld [vmem:[#allocation7 + $0x238] sm:$0xff]
    %v614 = vld [vmem:[#allocation2] sm:$0xff]
    %v615 = vld [vmem:[#allocation2 + $0x8] sm:$0xff]
    %v616 = vld [vmem:[#allocation2 + $0x10] sm:$0xff]
    %v617 = vld [vmem:[#allocation2 + $0x18] sm:$0xff]
    %v650 = vunpack.c.l.b16 %v550
    %v651 = vunpack.c.h.b16 %v550
    %v652 = vunpack.c.l.b16 %v551
    %v653 = vunpack.c.h.b16 %v551
    %v654 = vunpack.c.l.b16 %v552
    %v655 = vunpack.c.h.b16 %v552
    %v656 = vunpack.c.l.b16 %v553
    %v657 = vunpack.c.h.b16 %v553
    %v658 = vunpack.c.l.b16 %v554
    %v659 = vunpack.c.h.b16 %v554
    %v660 = vunpack.c.l.b16 %v555
    %v661 = vunpack.c.h.b16 %v555
    %v662 = vunpack.c.l.b16 %v556
    %v663 = vunpack.c.h.b16 %v556
    %v664 = vunpack.c.l.b16 %v557
    %v665 = vunpack.c.h.b16 %v557
    %v666 = vunpack.c.l.b16 %v558
    %v667 = vunpack.c.h.b16 %v558
    %v668 = vunpack.c.l.b16 %v559
    %v669 = vunpack.c.h.b16 %v559
    %v670 = vunpack.c.l.b16 %v560
    %v671 = vunpack.c.h.b16 %v560
    %v672 = vunpack.c.l.b16 %v561
    %v673 = vunpack.c.h.b16 %v561
    %v674 = vunpack.c.l.b16 %v562
    %v675 = vunpack.c.h.b16 %v562
    %v676 = vunpack.c.l.b16 %v563
    %v677 = vunpack.c.h.b16 %v563
    %v678 = vunpack.c.l.b16 %v564
    %v679 = vunpack.c.h.b16 %v564
    %v680 = vunpack.c.l.b16 %v565
    %v681 = vunpack.c.h.b16 %v565
    %v682 = vunpack.c.l.b16 %v566
    %v683 = vunpack.c.h.b16 %v566
    %v684 = vunpack.c.l.b16 %v567
    %v685 = vunpack.c.h.b16 %v567
    %v686 = vunpack.c.l.b16 %v568
    %v687 = vunpack.c.h.b16 %v568
    %v688 = vunpack.c.l.b16 %v569
    %v689 = vunpack.c.h.b16 %v569
    %v690 = vunpack.c.l.b16 %v570
    %v691 = vunpack.c.h.b16 %v570
    %v692 = vunpack.c.l.b16 %v571
    %v693 = vunpack.c.h.b16 %v571
    %v694 = vunpack.c.l.b16 %v572
    %v695 = vunpack.c.h.b16 %v572
    %v696 = vunpack.c.l.b16 %v573
    %v697 = vunpack.c.h.b16 %v573
    %v698 = vunpack.c.l.b16 %v574
    %v699 = vunpack.c.h.b16 %v574
    %v700 = vunpack.c.l.b16 %v575
    %v701 = vunpack.c.h.b16 %v575
    %v702 = vunpack.c.l.b16 %v576
    %v703 = vunpack.c.h.b16 %v576
    %v704 = vunpack.c.l.b16 %v577
    %v705 = vunpack.c.h.b16 %v577
    %v706 = vunpack.c.l.b16 %v578
    %v707 = vunpack.c.h.b16 %v578
    %v708 = vunpack.c.l.b16 %v579
    %v709 = vunpack.c.h.b16 %v579
    %v710 = vunpack.c.l.b16 %v580
    %v711 = vunpack.c.h.b16 %v580
    %v712 = vunpack.c.l.b16 %v581
    %v713 = vunpack.c.h.b16 %v581
    %v714 = vpack.c.b16 %v654, %v650
    %v715 = vpack.c.b16 %v655, %v651
    %v716 = vpack.c.b16 %v656, %v652
    %v717 = vpack.c.b16 %v657, %v653
    %v718 = vpack.c.b16 %v662, %v658
    %v719 = vpack.c.b16 %v663, %v659
    %v720 = vpack.c.b16 %v664, %v660
    %v721 = vpack.c.b16 %v665, %v661
    %v722 = vpack.c.b16 %v670, %v666
    %v723 = vpack.c.b16 %v671, %v667
    %v724 = vpack.c.b16 %v672, %v668
    %v725 = vpack.c.b16 %v673, %v669
    %v726 = vpack.c.b16 %v678, %v674
    %v727 = vpack.c.b16 %v679, %v675
    %v728 = vpack.c.b16 %v680, %v676
    %v729 = vpack.c.b16 %v681, %v677
    %v730 = vpack.c.b16 %v686, %v682
    %v731 = vpack.c.b16 %v687, %v683
    %v732 = vpack.c.b16 %v688, %v684
    %v733 = vpack.c.b16 %v689, %v685
    %v734 = vpack.c.b16 %v694, %v690
    %v735 = vpack.c.b16 %v695, %v691
    %v736 = vpack.c.b16 %v696, %v692
    %v737 = vpack.c.b16 %v697, %v693
    %v738 = vpack.c.b16 %v702, %v698
    %v739 = vpack.c.b16 %v703, %v699
    %v740 = vpack.c.b16 %v704, %v700
    %v741 = vpack.c.b16 %v705, %v701
    %v742 = vpack.c.b16 %v710, %v706
    %v743 = vpack.c.b16 %v711, %v707
    %v744 = vpack.c.b16 %v712, %v708
    %v745 = vpack.c.b16 %v713, %v709
    %778 = vmatprep.subr.bf16.mxu0 %v715
    %779 = vmatpush1.bf16.msra.mxu0 %v714
    %780 = vmatprep.subr.bf16.mxu0 %v719
    %781 = vmatpush1.bf16.msra.mxu0 %v718
    %782 = vmatprep.subr.bf16.mxu0 %v723
    %783 = vmatpush1.bf16.msra.mxu0 %v722
    %784 = vmatprep.subr.bf16.mxu0 %v727
    %785 = vmatpush1.bf16.msra.mxu0 %v726
    %786 = vmatprep.subr.bf16.mxu0 %v731
    %787 = vmatpush1.bf16.msra.mxu0 %v730
    %788 = vmatprep.subr.bf16.mxu0 %v735
    %789 = vmatpush1.bf16.msra.mxu0 %v734
    %790 = vmatprep.subr.bf16.mxu0 %v739
    %791 = vmatpush1.bf16.msra.mxu0 %v738
    %792 = vmatprep.subr.bf16.mxu0 %v743
    %793 = vmatpush1.bf16.msra.mxu0 %v742
    %794 = vmatprep.subr.bf16.mxu0 0
    %795 = vmatpush1.bf16.msra.mxu0 0
    %796 = vmatprep.subr.bf16.mxu0 0
    %797 = vmatpush1.bf16.msra.mxu0 0
    %798 = vmatprep.subr.bf16.mxu0 0
    %799 = vmatpush1.bf16.msra.mxu0 0
    %800 = vmatprep.subr.bf16.mxu0 0
    %801 = vmatpush1.bf16.msra.mxu0 0
    %802 = vmatprep.subr.bf16.mxu0 0
    %803 = vmatpush1.bf16.msra.mxu0 0
    %804 = vmatprep.subr.bf16.mxu0 0
    %805 = vmatpush1.bf16.msra.mxu0 0
    %806 = vmatprep.subr.bf16.mxu0 0
    %807 = vmatpush1.bf16.msra.mxu0 0
    %808 = vmatprep.subr.bf16.mxu0 0
    %809 = vmatpush1.bf16.msra.mxu0 0
    %810 = vmatprep.mubr.bf16.mxu0 0
    %811 = vmatmul.mubr.bf16.gmra.mrb[0].mxu0 0
    %v812 = vpop.f32.mrb[0].mxu0
    %v813 = vadd.f32 0.0, %v812
    %v814 = vpop.f32.mrb[0].mxu0
    %v815 = vadd.f32 0.0, %v814
    %v816 = vpop.f32.mrb[0].mxu0
    %v817 = vpop.f32.mrb[0].mxu0
    %818 = vdwg.mxu0
    %819 = vmatprep.subr.bf16.mxu0 %v717
    %820 = vmatpush1.bf16.msra.mxu0 %v716
    %821 = vmatprep.subr.bf16.mxu0 %v721
    %822 = vmatpush1.bf16.msra.mxu0 %v720
    %823 = vmatprep.subr.bf16.mxu0 %v725
    %824 = vmatpush1.bf16.msra.mxu0 %v724
    %825 = vmatprep.subr.bf16.mxu0 %v729
    %826 = vmatpush1.bf16.msra.mxu0 %v728
    %827 = vmatprep.subr.bf16.mxu0 %v733
    %828 = vmatpush1.bf16.msra.mxu0 %v732
    %829 = vmatprep.subr.bf16.mxu0 %v737
    %830 = vmatpush1.bf16.msra.mxu0 %v736
    %831 = vmatprep.subr.bf16.mxu0 %v741
    %832 = vmatpush1.bf16.msra.mxu0 %v740
    %833 = vmatprep.subr.bf16.mxu0 %v745
    %834 = vmatpush1.bf16.msra.mxu0 %v744
    %835 = vmatprep.subr.bf16.mxu0 0
    %836 = vmatpush1.bf16.msra.mxu0 0
    %837 = vmatprep.subr.bf16.mxu0 0
    %838 = vmatpush1.bf16.msra.mxu0 0
    %839 = vmatprep.subr.bf16.mxu0 0
    %840 = vmatpush1.bf16.msra.mxu0 0
    %841 = vmatprep.subr.bf16.mxu0 0
    %842 = vmatpush1.bf16.msra.mxu0 0
    %843 = vmatprep.subr.bf16.mxu0 0
    %844 = vmatpush1.bf16.msra.mxu0 0
    %845 = vmatprep.subr.bf16.mxu0 0
    %846 = vmatpush1.bf16.msra.mxu0 0
    %847 = vmatprep.subr.bf16.mxu0 0
    %848 = vmatpush1.bf16.msra.mxu0 0
    %849 = vmatprep.subr.bf16.mxu0 0
    %850 = vmatpush1.bf16.msra.mxu0 0
    %851 = vmatprep.mubr.bf16.mxu0 0
    %852 = vmatmul.mubr.bf16.gmra.mrb[0].mxu0 0
    %v853 = vpop.f32.mrb[0].mxu0
    %v854 = vadd.f32 0.0, %v853
    %v855 = vpop.f32.mrb[0].mxu0
    %v856 = vadd.f32 0.0, %v855
    %v857 = vpop.f32.mrb[0].mxu0
    %v858 = vpop.f32.mrb[0].mxu0
    %859 = vdwg.mxu0
    %v860 = vadd.f32 %v614, %v813
    %v861 = vadd.f32 %v615, %v815
    %v862 = vadd.f32 %v616, %v854
    %v863 = vadd.f32 %v617, %v856
    %v864 = vmul.f32 %v860, 0.5
    %v865 = vtanh.pop %v864
    %v866 = vmul.f32 %v865, 0.5
    %v867 = vadd.f32 %v866, 0.5
    %v868 = vmul.f32 %v861, 0.5
    %v869 = vtanh.pop %v868
    %v870 = vmul.f32 %v869, 0.5
    %v871 = vadd.f32 %v870, 0.5
    %v872 = vtanh.pop %v862
    %v873 = vmul.f32 %v863, 0.5
    %v874 = vtanh.pop %v873
    %v875 = vmul.f32 %v874, 0.5
    %v876 = vadd.f32 %v875, 0.5
    %v877 = vmul.f32 %v871, 0.0
    %v878 = vmul.f32 %v867, %v872
    %v879 = vadd.f32 %v877, %v878
    %v880 = vtanh.pop %v879
    %v881 = vmul.f32 %v876, %v880
    %v882 = vld [vmem:[#allocation3 + $0xe0] sm:$0xff]
    %v883 = vld [vmem:[#allocation3 + $0xe8] sm:$0xff]
    %v884 = vld [vmem:[#allocation3 + $0xf0] sm:$0xff]
    %v885 = vld [vmem:[#allocation3 + $0xf8] sm:$0xff]
    %v918 = vunpack.c.l.b16 %v582
    %v919 = vunpack.c.h.b16 %v582
    %v920 = vunpack.c.l.b16 %v583
    %v921 = vunpack.c.h.b16 %v583
    %v922 = vunpack.c.l.b16 %v584
    %v923 = vunpack.c.h.b16 %v584
    %v924 = vunpack.c.l.b16 %v585
    %v925 = vunpack.c.h.b16 %v585
    %v926 = vunpack.c.l.b16 %v586
    %v927 = vunpack.c.h.b16 %v586
    %v928 = vunpack.c.l.b16 %v587
    %v929 = vunpack.c.h.b16 %v587
    %v930 = vunpack.c.l.b16 %v588
    %v931 = vunpack.c.h.b16 %v588
    %v932 = vunpack.c.l.b16 %v589
    %v933 = vunpack.c.h.b16 %v589
    %v934 = vunpack.c.l.b16 %v590
    %v935 = vunpack.c.h.b16 %v590
    %v936 = vunpack.c.l.b16 %v591
    %v937 = vunpack.c.h.b16 %v591
    %v938 = vunpack.c.l.b16 %v592
    %v939 = vunpack.c.h.b16 %v592
    %v940 = vunpack.c.l.b16 %v593
    %v941 = vunpack.c.h.b16 %v593
    %v942 = vunpack.c.l.b16 %v594
    %v943 = vunpack.c.h.b16 %v594
    %v944 = vunpack.c.l.b16 %v595
    %v945 = vunpack.c.h.b16 %v595
    %v946 = vunpack.c.l.b16 %v596
    %v947 = vunpack.c.h.b16 %v596
    %v948 = vunpack.c.l.b16 %v597
    %v949 = vunpack.c.h.b16 %v597
    %v950 = vunpack.c.l.b16 %v598
    %v951 = vunpack.c.h.b16 %v598
    %v952 = vunpack.c.l.b16 %v599
    %v953 = vunpack.c.h.b16 %v599
    %v954 = vunpack.c.l.b16 %v600
    %v955 = vunpack.c.h.b16 %v600
    %v956 = vunpack.c.l.b16 %v601
    %v957 = vunpack.c.h.b16 %v601
    %v958 = vunpack.c.l.b16 %v602
    %v959 = vunpack.c.h.b16 %v602
    %v960 = vunpack.c.l.b16 %v603
    %v961 = vunpack.c.h.b16 %v603
    %v962 = vunpack.c.l.b16 %v604
    %v963 = vunpack.c.h.b16 %v604
    %v964 = vunpack.c.l.b16 %v605
    %v965 = vunpack.c.h.b16 %v605
    %v966 = vunpack.c.l.b16 %v606
    %v967 = vunpack.c.h.b16 %v606
    %v968 = vunpack.c.l.b16 %v607
    %v969 = vunpack.c.h.b16 %v607
    %v970 = vunpack.c.l.b16 %v608
    %v971 = vunpack.c.h.b16 %v608
    %v972 = vunpack.c.l.b16 %v609
    %v973 = vunpack.c.h.b16 %v609
    %v974 = vunpack.c.l.b16 %v610
    %v975 = vunpack.c.h.b16 %v610
    %v976 = vunpack.c.l.b16 %v611
    %v977 = vunpack.c.h.b16 %v611
    %v978 = vunpack.c.l.b16 %v612
    %v979 = vunpack.c.h.b16 %v612
    %v980 = vunpack.c.l.b16 %v613
    %v981 = vunpack.c.h.b16 %v613
    %v982 = vpack.c.b16 %v922, %v918
    %v983 = vpack.c.b16 %v923, %v919
    %v984 = vpack.c.b16 %v924, %v920
    %v985 = vpack.c.b16 %v925, %v921
    %v986 = vpack.c.b16 %v930, %v926
    %v987 = vpack.c.b16 %v931, %v927
    %v988 = vpack.c.b16 %v932, %v928
    %v989 = vpack.c.b16 %v933, %v929
    %v990 = vpack.c.b16 %v938, %v934
    %v991 = vpack.c.b16 %v939, %v935
    %v992 = vpack.c.b16 %v940, %v936
    %v993 = vpack.c.b16 %v941, %v937
    %v994 = vpack.c.b16 %v946, %v942
    %v995 = vpack.c.b16 %v947, %v943
    %v996 = vpack.c.b16 %v948, %v944
    %v997 = vpack.c.b16 %v949, %v945
    %v998 = vpack.c.b16 %v954, %v950
    %v999 = vpack.c.b16 %v955, %v951
    %v1000 = vpack.c.b16 %v956, %v952
    %v1001 = vpack.c.b16 %v957, %v953
    %v1002 = vpack.c.b16 %v962, %v958
    %v1003 = vpack.c.b16 %v963, %v959
    %v1004 = vpack.c.b16 %v964, %v960
    %v1005 = vpack.c.b16 %v965, %v961
    %v1006 = vpack.c.b16 %v970, %v966
    %v1007 = vpack.c.b16 %v971, %v967
    %v1008 = vpack.c.b16 %v972, %v968
    %v1009 = vpack.c.b16 %v973, %v969
    %v1010 = vpack.c.b16 %v978, %v974
    %v1011 = vpack.c.b16 %v979, %v975
    %v1012 = vpack.c.b16 %v980, %v976
    %v1013 = vpack.c.b16 %v981, %v977
    %1046 = vmatprep.subr.bf16.mxu0 %v983
    %1047 = vmatpush1.bf16.msra.mxu0 %v982
    %1048 = vmatprep.subr.bf16.mxu0 %v987
    %1049 = vmatpush1.bf16.msra.mxu0 %v986
    %1050 = vmatprep.subr.bf16.mxu0 %v991
    %1051 = vmatpush1.bf16.msra.mxu0 %v990
    %1052 = vmatprep.subr.bf16.mxu0 %v995
    %1053 = vmatpush1.bf16.msra.mxu0 %v994
    %1054 = vmatprep.subr.bf16.mxu0 %v999
    %1055 = vmatpush1.bf16.msra.mxu0 %v998
    %1056 = vmatprep.subr.bf16.mxu0 %v1003
    %1057 = vmatpush1.bf16.msra.mxu0 %v1002
    %1058 = vmatprep.subr.bf16.mxu0 %v1007
    %1059 = vmatpush1.bf16.msra.mxu0 %v1006
    %1060 = vmatprep.subr.bf16.mxu0 %v1011
    %1061 = vmatpush1.bf16.msra.mxu0 %v1010
    %1062 = vmatprep.subr.bf16.mxu0 0
    %1063 = vmatpush1.bf16.msra.mxu0 0
    %1064 = vmatprep.subr.bf16.mxu0 0
    %1065 = vmatpush1.bf16.msra.mxu0 0
    %1066 = vmatprep.subr.bf16.mxu0 0
    %1067 = vmatpush1.bf16.msra.mxu0 0
    %1068 = vmatprep.subr.bf16.mxu0 0
    %1069 = vmatpush1.bf16.msra.mxu0 0
    %1070 = vmatprep.subr.bf16.mxu0 0
    %1071 = vmatpush1.bf16.msra.mxu0 0
    %1072 = vmatprep.subr.bf16.mxu0 0
    %1073 = vmatpush1.bf16.msra.mxu0 0
    %1074 = vmatprep.subr.bf16.mxu0 0
    %1075 = vmatpush1.bf16.msra.mxu0 0
    %1076 = vmatprep.subr.bf16.mxu0 0
    %1077 = vmatpush1.bf16.msra.mxu0 0
    %1078 = vmatprep.mubr.bf16.mxu0 0
    %1079 = vmatmul.mubr.bf16.gmra.mrb[0].mxu0 0
    %v1080 = vpop.f32.mrb[0].mxu0
    %v1081 = vadd.f32 0.0, %v1080
    %v1082 = vpop.f32.mrb[0].mxu0
    %v1083 = vadd.f32 0.0, %v1082
    %v1084 = vpop.f32.mrb[0].mxu0
    %v1085 = vpop.f32.mrb[0].mxu0
    %1086 = vdwg.mxu0
    %1087 = vmatprep.subr.bf16.mxu0 %v985
    %1088 = vmatpush1.bf16.msra.mxu0 %v984
    %1089 = vmatprep.subr.bf16.mxu0 %v989
    %1090 = vmatpush1.bf16.msra.mxu0 %v988
    %1091 = vmatprep.subr.bf16.mxu0 %v993
    %1092 = vmatpush1.bf16.msra.mxu0 %v992
    %1093 = vmatprep.subr.bf16.mxu0 %v997
    %1094 = vmatpush1.bf16.msra.mxu0 %v996
    %1095 = vmatprep.subr.bf16.mxu0 %v1001
    %1096 = vmatpush1.bf16.msra.mxu0 %v1000
    %1097 = vmatprep.subr.bf16.mxu0 %v1005
    %1098 = vmatpush1.bf16.msra.mxu0 %v1004
    %1099 = vmatprep.subr.bf16.mxu0 %v1009
    %1100 = vmatpush1.bf16.msra.mxu0 %v1008
    %1101 = vmatprep.subr.bf16.mxu0 %v1013
    %1102 = vmatpush1.bf16.msra.mxu0 %v1012
    %1103 = vmatprep.subr.bf16.mxu0 0
    %1104 = vmatpush1.bf16.msra.mxu0 0
    %1105 = vmatprep.subr.bf16.mxu0 0
    %1106 = vmatpush1.bf16.msra.mxu0 0
    %1107 = vmatprep.subr.bf16.mxu0 0
    %1108 = vmatpush1.bf16.msra.mxu0 0
    %1109 = vmatprep.subr.bf16.mxu0 0
    %1110 = vmatpush1.bf16.msra.mxu0 0
    %1111 = vmatprep.subr.bf16.mxu0 0
    %1112 = vmatpush1.bf16.msra.mxu0 0
    %1113 = vmatprep.subr.bf16.mxu0 0
    %1114 = vmatpush1.bf16.msra.mxu0 0
    %1115 = vmatprep.subr.bf16.mxu0 0
    %1116 = vmatpush1.bf16.msra.mxu0 0
    %1117 = vmatprep.subr.bf16.mxu0 0
    %1118 = vmatpush1.bf16.msra.mxu0 0
    %1119 = vmatprep.mubr.bf16.mxu0 0
    %1120 = vmatmul.mubr.bf16.gmra.mrb[0].mxu0 0
    %v1121 = vpop.f32.mrb[0].mxu0
    %v1122 = vadd.f32 0.0, %v1121
    %v1123 = vpop.f32.mrb[0].mxu0
    %v1124 = vadd.f32 0.0, %v1123
    %v1125 = vpop.f32.mrb[0].mxu0
    %v1126 = vpop.f32.mrb[0].mxu0
    %1127 = vdwg.mxu0
    %v1128 = vadd.f32 %v882, %v1081
    %v1129 = vadd.f32 %v883, %v1083
    %v1130 = vadd.f32 %v884, %v1122
    %v1131 = vadd.f32 %v885, %v1124
    %v1132 = vmul.f32 %v1128, 0.5
    %v1133 = vtanh.pop %v1132
    %v1134 = vmul.f32 %v1133, 0.5
    %v1135 = vadd.f32 %v1134, 0.5
    %v1136 = vmul.f32 %v1129, 0.5
    %v1137 = vtanh.pop %v1136
    %v1138 = vmul.f32 %v1137, 0.5
    %v1139 = vadd.f32 %v1138, 0.5
    %v1140 = vtanh.pop %v1130
    %v1141 = vmul.f32 %v1131, 0.5
    %v1142 = vtanh.pop %v1141
    %v1143 = vmul.f32 %v1142, 0.5
    %v1144 = vadd.f32 %v1143, 0.5
    %v1145 = vmul.f32 %v1139, 0.0
    %v1146 = vmul.f32 %v1135, %v1140
    %v1147 = vadd.f32 %v1145, %v1146
    %v1148 = vtanh.pop %v1147
    %v1149 = vmul.f32 %v1144, %v1148
    %1150 = vst [vmem:[#allocation4] sm:$0xff] %v881
    %1151 = vst [vmem:[#allocation4 + $0x78] sm:$0xff] %v1149
    %v1152 = vld [vmem:[#allocation2 + $0x20] sm:$0xff]
    %v1153 = vld [vmem:[#allocation2 + $0x28] sm:$0xff]
    %v1154 = vld [vmem:[#allocation2 + $0x30] sm:$0xff]
    %v1155 = vld [vmem:[#allocation2 + $0x38] sm:$0xff]
    %v1156 = vpack.c.bf16 %v881, %v881
    %1157 = vmatprep.subr.bf16.mxu0 %v715
    %1158 = vmatpush1.bf16.msra.mxu0 %v714
    %1159 = vmatprep.subr.bf16.mxu0 %v719
    %1160 = vmatpush1.bf16.msra.mxu0 %v718
    %1161 = vmatprep.subr.bf16.mxu0 %v723
    %1162 = vmatpush1.bf16.msra.mxu0 %v722
    %1163 = vmatprep.subr.bf16.mxu0 %v727
    %1164 = vmatpush1.bf16.msra.mxu0 %v726
    %1165 = vmatprep.subr.bf16.mxu0 %v731
    %1166 = vmatpush1.bf16.msra.mxu0 %v730
    %1167 = vmatprep.subr.bf16.mxu0 %v735
    %1168 = vmatpush1.bf16.msra.mxu0 %v734
    %1169 = vmatprep.subr.bf16.mxu0 %v739
    %1170 = vmatpush1.bf16.msra.mxu0 %v738
    %1171 = vmatprep.subr.bf16.mxu0 %v743
    %1172 = vmatpush1.bf16.msra.mxu0 %v742
    %1173 = vmatprep.subr.bf16.mxu0 0
    %1174 = vmatpush1.bf16.msra.mxu0 0
    %1175 = vmatprep.subr.bf16.mxu0 0
    %1176 = vmatpush1.bf16.msra.mxu0 0
    %1177 = vmatprep.subr.bf16.mxu0 0
    %1178 = vmatpush1.bf16.msra.mxu0 0
    %1179 = vmatprep.subr.bf16.mxu0 0
    %1180 = vmatpush1.bf16.msra.mxu0 0
    %1181 = vmatprep.subr.bf16.mxu0 0
    %1182 = vmatpush1.bf16.msra.mxu0 0
    %1183 = vmatprep.subr.bf16.mxu0 0
    %1184 = vmatpush1.bf16.msra.mxu0 0
    %1185 = vmatprep.subr.bf16.mxu0 0
    %1186 = vmatpush1.bf16.msra.mxu0 0
    %1187 = vmatprep.subr.bf16.mxu0 0
    %1188 = vmatpush1.bf16.msra.mxu0 0
    %1189 = vmatprep.mubr.bf16.mxu0 0
    %1190 = vmatmul.mubr.bf16.gmra.mrb[0].mxu0 %v1156
    %v1191 = vpop.f32.mrb[0].mxu0
    %v1192 = vadd.f32 0.0, %v1191
    %v1193 = vpop.f32.mrb[0].mxu0
    %v1194 = vadd.f32 0.0, %v1193
    %v1195 = vpop.f32.mrb[0].mxu0
    %v1196 = vpop.f32.mrb[0].mxu0
    %1197 = vdwg.mxu0
    %1198 = vmatprep.subr.bf16.mxu0 %v717
    %1199 = vmatpush1.bf16.msra.mxu0 %v716
    %1200 = vmatprep.subr.bf16.mxu0 %v721
    %1201 = vmatpush1.bf16.msra.mxu0 %v720
    %1202 = vmatprep.subr.bf16.mxu0 %v725
    %1203 = vmatpush1.bf16.msra.mxu0 %v724
    %1204 = vmatprep.subr.bf16.mxu0 %v729
    %1205 = vmatpush1.bf16.msra.mxu0 %v728
    %1206 = vmatprep.subr.bf16.mxu0 %v733
    %1207 = vmatpush1.bf16.msra.mxu0 %v732
    %1208 = vmatprep.subr.bf16.mxu0 %v737
    %1209 = vmatpush1.bf16.msra.mxu0 %v736
    %1210 = vmatprep.subr.bf16.mxu0 %v741
    %1211 = vmatpush1.bf16.msra.mxu0 %v740
    %1212 = vmatprep.subr.bf16.mxu0 %v745
    %1213 = vmatpush1.bf16.msra.mxu0 %v744
    %1214 = vmatprep.subr.bf16.mxu0 0
    %1215 = vmatpush1.bf16.msra.mxu0 0
    %1216 = vmatprep.subr.bf16.mxu0 0
    %1217 = vmatpush1.bf16.msra.mxu0 0
    %1218 = vmatprep.subr.bf16.mxu0 0
    %1219 = vmatpush1.bf16.msra.mxu0 0
    %1220 = vmatprep.subr.bf16.mxu0 0
    %1221 = vmatpush1.bf16.msra.mxu0 0
    %1222 = vmatprep.subr.bf16.mxu0 0
    %1223 = vmatpush1.bf16.msra.mxu0 0
    %1224 = vmatprep.subr.bf16.mxu0 0
    %1225 = vmatpush1.bf16.msra.mxu0 0
    %1226 = vmatprep.subr.bf16.mxu0 0
    %1227 = vmatpush1.bf16.msra.mxu0 0
    %1228 = vmatprep.subr.bf16.mxu0 0
    %1229 = vmatpush1.bf16.msra.mxu0 0
    %1230 = vmatprep.mubr.bf16.mxu0 0
    %1231 = vmatmul.mubr.bf16.gmra.mrb[0].mxu0 %v1156
    %v1232 = vpop.f32.mrb[0].mxu0
    %v1233 = vadd.f32 0.0, %v1232
    %v1234 = vpop.f32.mrb[0].mxu0
    %v1235 = vadd.f32 0.0, %v1234
    %v1236 = vpop.f32.mrb[0].mxu0
    %v1237 = vpop.f32.mrb[0].mxu0
    %1238 = vdwg.mxu0
    %v1239 = vadd.f32 %v1152, %v1192
    %v1240 = vadd.f32 %v1153, %v1194
    %v1241 = vadd.f32 %v1154, %v1233
    %v1242 = vadd.f32 %v1155, %v1235
    %v1243 = vmul.f32 %v1239, 0.5
    %v1244 = vtanh.pop %v1243
    %v1245 = vmul.f32 %v1244, 0.5
    %v1246 = vadd.f32 %v1245, 0.5
    %v1247 = vmul.f32 %v1240, 0.5
    %v1248 = vtanh.pop %v1247
    %v1249 = vmul.f32 %v1248, 0.5
    %v1250 = vadd.f32 %v1249, 0.5
    %v1251 = vtanh.pop %v1241
    %v1252 = vmul.f32 %v1242, 0.5
    %v1253 = vtanh.pop %v1252
    %v1254 = vmul.f32 %v1253, 0.5
    %v1255 = vadd.f32 %v1254, 0.5
    %v1256 = vmul.f32 %v1250, %v879
    %v1257 = vmul.f32 %v1246, %v1251
    %v1258 = vadd.f32 %v1256, %v1257
    %v1259 = vtanh.pop %v1258
    %v1260 = vmul.f32 %v1255, %v1259
    %v1261 = vld [vmem:[#allocation3 + $0xc0] sm:$0xff]
    %v1262 = vld [vmem:[#allocation3 + $0xc8] sm:$0xff]
    %v1263 = vld [vmem:[#allocation3 + $0xd0] sm:$0xff]
    %v1264 = vld [vmem:[#allocation3 + $0xd8] sm:$0xff]
    %v1265 = vpack.c.bf16 %v1149, %v1149
    %1266 = vmatprep.subr.bf16.mxu0 %v983
    %1267 = vmatpush1.bf16.msra.mxu0 %v982
    %1268 = vmatprep.subr.bf16.mxu0 %v987
    %1269 = vmatpush1.bf16.msra.mxu0 %v986
    %1270 = vmatprep.subr.bf16.mxu0 %v991
    %1271 = vmatpush1.bf16.msra.mxu0 %v990
    %1272 = vmatprep.subr.bf16.mxu0 %v995
    %1273 = vmatpush1.bf16.msra.mxu0 %v994
    %1274 = vmatprep.subr.bf16.mxu0 %v999
    %1275 = vmatpush1.bf16.msra.mxu0 %v998
    %1276 = vmatprep.subr.bf16.mxu0 %v1003
    %1277 = vmatpush1.bf16.msra.mxu0 %v1002
    %1278 = vmatprep.subr.bf16.mxu0 %v1007
    %1279 = vmatpush1.bf16.msra.mxu0 %v1006
    %1280 = vmatprep.subr.bf16.mxu0 %v1011
    %1281 = vmatpush1.bf16.msra.mxu0 %v1010
    %1282 = vmatprep.subr.bf16.mxu0 0
    %1283 = vmatpush1.bf16.msra.mxu0 0
    %1284 = vmatprep.subr.bf16.mxu0 0
    %1285 = vmatpush1.bf16.msra.mxu0 0
    %1286 = vmatprep.subr.bf16.mxu0 0
    %1287 = vmatpush1.bf16.msra.mxu0 0
    %1288 = vmatprep.subr.bf16.mxu0 0
    %1289 = vmatpush1.bf16.msra.mxu0 0
    %1290 = vmatprep.subr.bf16.mxu0 0
    %1291 = vmatpush1.bf16.msra.mxu0 0
    %1292 = vmatprep.subr.bf16.mxu0 0
    %1293 = vmatpush1.bf16.msra.mxu0 0
    %1294 = vmatprep.subr.bf16.mxu0 0
    %1295 = vmatpush1.bf16.msra.mxu0 0
    %1296 = vmatprep.subr.bf16.mxu0 0
    %1297 = vmatpush1.bf16.msra.mxu0 0
    %1298 = vmatprep.mubr.bf16.mxu0 0
    %1299 = vmatmul.mubr.bf16.gmra.mrb[0].mxu0 %v1265
    %v1300 = vpop.f32.mrb[0].mxu0
    %v1301 = vadd.f32 0.0, %v1300
    %v1302 = vpop.f32.mrb[0].mxu0
    %v1303 = vadd.f32 0.0, %v1302
    %v1304 = vpop.f32.mrb[0].mxu0
    %v1305 = vpop.f32.mrb[0].mxu0
    %1306 = vdwg.mxu0
    %1307 = vmatprep.subr.bf16.mxu0 %v985
    %1308 = vmatpush1.bf16.msra.mxu0 %v984
    %1309 = vmatprep.subr.bf16.mxu0 %v989
    %1310 = vmatpush1.bf16.msra.mxu0 %v988
    %1311 = vmatprep.subr.bf16.mxu0 %v993
    %1312 = vmatpush1.bf16.msra.mxu0 %v992
    %1313 = vmatprep.subr.bf16.mxu0 %v997
    %1314 = vmatpush1.bf16.msra.mxu0 %v996
    %1315 = vmatprep.subr.bf16.mxu0 %v1001
    %1316 = vmatpush1.bf16.msra.mxu0 %v1000
    %1317 = vmatprep.subr.bf16.mxu0 %v1005
    %1318 = vmatpush1.bf16.msra.mxu0 %v1004
    %1319 = vmatprep.subr.bf16.mxu0 %v1009
    %1320 = vmatpush1.bf16.msra.mxu0 %v1008
    %1321 = vmatprep.subr.bf16.mxu0 %v1013
    %1322 = vmatpush1.bf16.msra.mxu0 %v1012
    %1323 = vmatprep.subr.bf16.mxu0 0
    %1324 = vmatpush1.bf16.msra.mxu0 0
    %1325 = vmatprep.subr.bf16.mxu0 0
    %1326 = vmatpush1.bf16.msra.mxu0 0
    %1327 = vmatprep.subr.bf16.mxu0 0
    %1328 = vmatpush1.bf16.msra.mxu0 0
    %1329 = vmatprep.subr.bf16.mxu0 0
    %1330 = vmatpush1.bf16.msra.mxu0 0
    %1331 = vmatprep.subr.bf16.mxu0 0
    %1332 = vmatpush1.bf16.msra.mxu0 0
    %1333 = vmatprep.subr.bf16.mxu0 0
    %1334 = vmatpush1.bf16.msra.mxu0 0
    %1335 = vmatprep.subr.bf16.mxu0 0
    %1336 = vmatpush1.bf16.msra.mxu0 0
    %1337 = vmatprep.subr.bf16.mxu0 0
    %1338 = vmatpush1.bf16.msra.mxu0 0
    %1339 = vmatprep.mubr.bf16.mxu0 0
    %1340 = vmatmul.mubr.bf16.gmra.mrb[0].mxu0 %v1265
    %v1341 = vpop.f32.mrb[0].mxu0
    %v1342 = vadd.f32 0.0, %v1341
    %v1343 = vpop.f32.mrb[0].mxu0
    %v1344 = vadd.f32 0.0, %v1343
    %v1345 = vpop.f32.mrb[0].mxu0
    %v1346 = vpop.f32.mrb[0].mxu0
    %1347 = vdwg.mxu0
    %v1348 = vadd.f32 %v1261, %v1301
    %v1349 = vadd.f32 %v1262, %v1303
    %v1350 = vadd.f32 %v1263, %v1342
    %v1351 = vadd.f32 %v1264, %v1344
    %v1352 = vmul.f32 %v1348, 0.5
    %v1353 = vtanh.pop %v1352
    %v1354 = vmul.f32 %v1353, 0.5
    %v1355 = vadd.f32 %v1354, 0.5
    %v1356 = vmul.f32 %v1349, 0.5
    %v1357 = vtanh.pop %v1356
    %v1358 = vmul.f32 %v1357, 0.5
    %v1359 = vadd.f32 %v1358, 0.5
    %v1360 = vtanh.pop %v1350
    %v1361 = vmul.f32 %v1351, 0.5
    %v1362 = vtanh.pop %v1361
    %v1363 = vmul.f32 %v1362, 0.5
    %v1364 = vadd.f32 %v1363, 0.5
    %v1365 = vmul.f32 %v1359, %v1147
    %v1366 = vmul.f32 %v1355, %v1360
    %v1367 = vadd.f32 %v1365, %v1366
    %v1368 = vtanh.pop %v1367
    %v1369 = vmul.f32 %v1364, %v1368
    %1370 = vst [vmem:[#allocation4 + $0x10] sm:$0xff] %v1260
    %1371 = vst [vmem:[#allocation4 + $0x68] sm:$0xff] %v1369
    %v1372 = vld [vmem:[#allocation2 + $0x40] sm:$0xff]
    %v1373 = vld [vmem:[#allocation2 + $0x48] sm:$0xff]
    %v1374 = vld [vmem:[#allocation2 + $0x50] sm:$0xff]
    %v1375 = vld [vmem:[#allocation2 + $0x58] sm:$0xff]
    %v1376 = vpack.c.bf16 %v1260, %v1260
    %1377 = vmatprep.subr.bf16.mxu0 %v715
    %1378 = vmatpush1.bf16.msra.mxu0 %v714
    %1379 = vmatprep.subr.bf16.mxu0 %v719
    %1380 = vmatpush1.bf16.msra.mxu0 %v718
    %1381 = vmatprep.subr.bf16.mxu0 %v723
    %1382 = vmatpush1.bf16.msra.mxu0 %v722
    %1383 = vmatprep.subr.bf16.mxu0 %v727
    %1384 = vmatpush1.bf16.msra.mxu0 %v726
    %1385 = vmatprep.subr.bf16.mxu0 %v731
    %1386 = vmatpush1.bf16.msra.mxu0 %v730
    %1387 = vmatprep.subr.bf16.mxu0 %v735
    %1388 = vmatpush1.bf16.msra.mxu0 %v734
    %1389 = vmatprep.subr.bf16.mxu0 %v739
    %1390 = vmatpush1.bf16.msra.mxu0 %v738
    %1391 = vmatprep.subr.bf16.mxu0 %v743
    %1392 = vmatpush1.bf16.msra.mxu0 %v742
    %1393 = vmatprep.subr.bf16.mxu0 0
    %1394 = vmatpush1.bf16.msra.mxu0 0
    %1395 = vmatprep.subr.bf16.mxu0 0
    %1396 = vmatpush1.bf16.msra.mxu0 0
    %1397 = vmatprep.subr.bf16.mxu0 0
    %1398 = vmatpush1.bf16.msra.mxu0 0
    %1399 = vmatprep.subr.bf16.mxu0 0
    %1400 = vmatpush1.bf16.msra.mxu0 0
    %1401 = vmatprep.subr.bf16.mxu0 0
    %1402 = vmatpush1.bf16.msra.mxu0 0
    %1403 = vmatprep.subr.bf16.mxu0 0
    %1404 = vmatpush1.bf16.msra.mxu0 0
    %1405 = vmatprep.subr.bf16.mxu0 0
    %1406 = vmatpush1.bf16.msra.mxu0 0
    %1407 = vmatprep.subr.bf16.mxu0 0
    %1408 = vmatpush1.bf16.msra.mxu0 0
    %1409 = vmatprep.mubr.bf16.mxu0 0
    %1410 = vmatmul.mubr.bf16.gmra.mrb[0].mxu0 %v1376
    %v1411 = vpop.f32.mrb[0].mxu0
    %v1412 = vadd.f32 0.0, %v1411
    %v1413 = vpop.f32.mrb[0].mxu0
    %v1414 = vadd.f32 0.0, %v1413
    %v1415 = vpop.f32.mrb[0].mxu0
    %v1416 = vpop.f32.mrb[0].mxu0
    %1417 = vdwg.mxu0
    %1418 = vmatprep.subr.bf16.mxu0 %v717
    %1419 = vmatpush1.bf16.msra.mxu0 %v716
    %1420 = vmatprep.subr.bf16.mxu0 %v721
    %1421 = vmatpush1.bf16.msra.mxu0 %v720
    %1422 = vmatprep.subr.bf16.mxu0 %v725
    %1423 = vmatpush1.bf16.msra.mxu0 %v724
    %1424 = vmatprep.subr.bf16.mxu0 %v729
    %1425 = vmatpush1.bf16.msra.mxu0 %v728
    %1426 = vmatprep.subr.bf16.mxu0 %v733
    %1427 = vmatpush1.bf16.msra.mxu0 %v732
    %1428 = vmatprep.subr.bf16.mxu0 %v737
    %1429 = vmatpush1.bf16.msra.mxu0 %v736
    %1430 = vmatprep.subr.bf16.mxu0 %v741
    %1431 = vmatpush1.bf16.msra.mxu0 %v740
    %1432 = vmatprep.subr.bf16.mxu0 %v745
    %1433 = vmatpush1.bf16.msra.mxu0 %v744
    %1434 = vmatprep.subr.bf16.mxu0 0
    %1435 = vmatpush1.bf16.msra.mxu0 0
    %1436 = vmatprep.subr.bf16.mxu0 0
    %1437 = vmatpush1.bf16.msra.mxu0 0
    %1438 = vmatprep.subr.bf16.mxu0 0
    %1439 = vmatpush1.bf16.msra.mxu0 0
    %1440 = vmatprep.subr.bf16.mxu0 0
    %1441 = vmatpush1.bf16.msra.mxu0 0
    %1442 = vmatprep.subr.bf16.mxu0 0
    %1443 = vmatpush1.bf16.msra.mxu0 0
    %1444 = vmatprep.subr.bf16.mxu0 0
    %1445 = vmatpush1.bf16.msra.mxu0 0
    %1446 = vmatprep.subr.bf16.mxu0 0
    %1447 = vmatpush1.bf16.msra.mxu0 0
    %1448 = vmatprep.subr.bf16.mxu0 0
    %1449 = vmatpush1.bf16.msra.mxu0 0
    %1450 = vmatprep.mubr.bf16.mxu0 0
    %1451 = vmatmul.mubr.bf16.gmra.mrb[0].mxu0 %v1376
    %v1452 = vpop.f32.mrb[0].mxu0
    %v1453 = vadd.f32 0.0, %v1452
    %v1454 = vpop.f32.mrb[0].mxu0
    %v1455 = vadd.f32 0.0, %v1454
    %v1456 = vpop.f32.mrb[0].mxu0
    %v1457 = vpop.f32.mrb[0].mxu0
    %1458 = vdwg.mxu0
    %v1459 = vadd.f32 %v1372, %v1412
    %v1460 = vadd.f32 %v1373, %v1414
    %v1461 = vadd.f32 %v1374, %v1453
    %v1462 = vadd.f32 %v1375, %v1455
    %v1463 = vmul.f32 %v1459, 0.5
    %v1464 = vtanh.pop %v1463
    %v1465 = vmul.f32 %v1464, 0.5
    %v1466 = vadd.f32 %v1465, 0.5
    %v1467 = vmul.f32 %v1460, 0.5
    %v1468 = vtanh.pop %v1467
    %v1469 = vmul.f32 %v1468, 0.5
    %v1470 = vadd.f32 %v1469, 0.5
    %v1471 = vtanh.pop %v1461
    %v1472 = vmul.f32 %v1462, 0.5
    %v1473 = vtanh.pop %v1472
    %v1474 = vmul.f32 %v1473, 0.5
    %v1475 = vadd.f32 %v1474, 0.5
    %v1476 = vmul.f32 %v1470, %v1258
    %v1477 = vmul.f32 %v1466, %v1471
    %v1478 = vadd.f32 %v1476, %v1477
    %v1479 = vtanh.pop %v1478
    %v1480 = vmul.f32 %v1475, %v1479
    %v1481 = vld [vmem:[#allocation3 + $0xa0] sm:$0xff]
    %v1482 = vld [vmem:[#allocation3 + $0xa8] sm:$0xff]
    %v1483 = vld [vmem:[#allocation3 + $0xb0] sm:$0xff]
    %v1484 = vld [vmem:[#allocation3 + $0xb8] sm:$0xff]
    %v1485 = vpack.c.bf16 %v1369, %v1369
    %1486 = vmatprep.subr.bf16.mxu0 %v983
    %1487 = vmatpush1.bf16.msra.mxu0 %v982
    %1488 = vmatprep.subr.bf16.mxu0 %v987
    %1489 = vmatpush1.bf16.msra.mxu0 %v986
    %1490 = vmatprep.subr.bf16.mxu0 %v991
    %1491 = vmatpush1.bf16.msra.mxu0 %v990
    %1492 = vmatprep.subr.bf16.mxu0 %v995
    %1493 = vmatpush1.bf16.msra.mxu0 %v994
    %1494 = vmatprep.subr.bf16.mxu0 %v999
    %1495 = vmatpush1.bf16.msra.mxu0 %v998
    %1496 = vmatprep.subr.bf16.mxu0 %v1003
    %1497 = vmatpush1.bf16.msra.mxu0 %v1002
    %1498 = vmatprep.subr.bf16.mxu0 %v1007
    %1499 = vmatpush1.bf16.msra.mxu0 %v1006
    %1500 = vmatprep.subr.bf16.mxu0 %v1011
    %1501 = vmatpush1.bf16.msra.mxu0 %v1010
    %1502 = vmatprep.subr.bf16.mxu0 0
    %1503 = vmatpush1.bf16.msra.mxu0 0
    %1504 = vmatprep.subr.bf16.mxu0 0
    %1505 = vmatpush1.bf16.msra.mxu0 0
    %1506 = vmatprep.subr.bf16.mxu0 0
    %1507 = vmatpush1.bf16.msra.mxu0 0
    %1508 = vmatprep.subr.bf16.mxu0 0
    %1509 = vmatpush1.bf16.msra.mxu0 0
    %1510 = vmatprep.subr.bf16.mxu0 0
    %1511 = vmatpush1.bf16.msra.mxu0 0
    %1512 = vmatprep.subr.bf16.mxu0 0
    %1513 = vmatpush1.bf16.msra.mxu0 0
    %1514 = vmatprep.subr.bf16.mxu0 0
    %1515 = vmatpush1.bf16.msra.mxu0 0
    %1516 = vmatprep.subr.bf16.mxu0 0
    %1517 = vmatpush1.bf16.msra.mxu0 0
    %1518 = vmatprep.mubr.bf16.mxu0 0
    %1519 = vmatmul.mubr.bf16.gmra.mrb[0].mxu0 %v1485
    %v1520 = vpop.f32.mrb[0].mxu0
    %v1521 = vadd.f32 0.0, %v1520
    %v1522 = vpop.f32.mrb[0].mxu0
    %v1523 = vadd.f32 0.0, %v1522
    %v1524 = vpop.f32.mrb[0].mxu0
    %v1525 = vpop.f32.mrb[0].mxu0
    %1526 = vdwg.mxu0
    %1527 = vmatprep.subr.bf16.mxu0 %v985
    %1528 = vmatpush1.bf16.msra.mxu0 %v984
    %1529 = vmatprep.subr.bf16.mxu0 %v989
    %1530 = vmatpush1.bf16.msra.mxu0 %v988
    %1531 = vmatprep.subr.bf16.mxu0 %v993
    %1532 = vmatpush1.bf16.msra.mxu0 %v992
    %1533 = vmatprep.subr.bf16.mxu0 %v997
    %1534 = vmatpush1.bf16.msra.mxu0 %v996
    %1535 = vmatprep.subr.bf16.mxu0 %v1001
    %1536 = vmatpush1.bf16.msra.mxu0 %v1000
    %1537 = vmatprep.subr.bf16.mxu0 %v1005
    %1538 = vmatpush1.bf16.msra.mxu0 %v1004
    %1539 = vmatprep.subr.bf16.mxu0 %v1009
    %1540 = vmatpush1.bf16.msra.mxu0 %v1008
    %1541 = vmatprep.subr.bf16.mxu0 %v1013
    %1542 = vmatpush1.bf16.msra.mxu0 %v1012
    %1543 = vmatprep.subr.bf16.mxu0 0
    %1544 = vmatpush1.bf16.msra.mxu0 0
    %1545 = vmatprep.subr.bf16.mxu0 0
    %1546 = vmatpush1.bf16.msra.mxu0 0
    %1547 = vmatprep.subr.bf16.mxu0 0
    %1548 = vmatpush1.bf16.msra.mxu0 0
    %1549 = vmatprep.subr.bf16.mxu0 0
    %1550 = vmatpush1.bf16.msra.mxu0 0
    %1551 = vmatprep.subr.bf16.mxu0 0
    %1552 = vmatpush1.bf16.msra.mxu0 0
    %1553 = vmatprep.subr.bf16.mxu0 0
    %1554 = vmatpush1.bf16.msra.mxu0 0
    %1555 = vmatprep.subr.bf16.mxu0 0
    %1556 = vmatpush1.bf16.msra.mxu0 0
    %1557 = vmatprep.subr.bf16.mxu0 0
    %1558 = vmatpush1.bf16.msra.mxu0 0
    %1559 = vmatprep.mubr.bf16.mxu0 0
    %1560 = vmatmul.mubr.bf16.gmra.mrb[0].mxu0 %v1485
    %v1561 = vpop.f32.mrb[0].mxu0
    %v1562 = vadd.f32 0.0, %v1561
    %v1563 = vpop.f32.mrb[0].mxu0
    %v1564 = vadd.f32 0.0, %v1563
    %v1565 = vpop.f32.mrb[0].mxu0
    %v1566 = vpop.f32.mrb[0].mxu0
    %1567 = vdwg.mxu0
    %v1568 = vadd.f32 %v1481, %v1521
    %v1569 = vadd.f32 %v1482, %v1523
    %v1570 = vadd.f32 %v1483, %v1562
    %v1571 = vadd.f32 %v1484, %v1564
    %v1572 = vmul.f32 %v1568, 0.5
    %v1573 = vtanh.pop %v1572
    %v1574 = vmul.f32 %v1573, 0.5
    %v1575 = vadd.f32 %v1574, 0.5
    %v1576 = vmul.f32 %v1569, 0.5
    %v1577 = vtanh.pop %v1576
    %v1578 = vmul.f32 %v1577, 0.5
    %v1579 = vadd.f32 %v1578, 0.5
    %v1580 = vtanh.pop %v1570
    %v1581 = vmul.f32 %v1571, 0.5
    %v1582 = vtanh.pop %v1581
    %v1583 = vmul.f32 %v1582, 0.5
    %v1584 = vadd.f32 %v1583, 0.5
    %v1585 = vmul.f32 %v1579, %v1367
    %v1586 = vmul.f32 %v1575, %v1580
    %v1587 = vadd.f32 %v1585, %v1586
    %v1588 = vtanh.pop %v1587
    %v1589 = vmul.f32 %v1584, %v1588
    %1590 = vst [vmem:[#allocation4 + $0x20] sm:$0xff] %v1480
    %1591 = vst [vmem:[#allocation4 + $0x58] sm:$0xff] %v1589
    %v1592 = vld [vmem:[#allocation2 + $0x60] sm:$0xff]
    %v1593 = vld [vmem:[#allocation2 + $0x68] sm:$0xff]
    %v1594 = vld [vmem:[#allocation2 + $0x70] sm:$0xff]
    %v1595 = vld [vmem:[#allocation2 + $0x78] sm:$0xff]
    %v1596 = vpack.c.bf16 %v1480, %v1480
    %1597 = vmatprep.subr.bf16.mxu0 %v715
    %1598 = vmatpush1.bf16.msra.mxu0 %v714
    %1599 = vmatprep.subr.bf16.mxu0 %v719
    %1600 = vmatpush1.bf16.msra.mxu0 %v718
    %1601 = vmatprep.subr.bf16.mxu0 %v723
    %1602 = vmatpush1.bf16.msra.mxu0 %v722
    %1603 = vmatprep.subr.bf16.mxu0 %v727
    %1604 = vmatpush1.bf16.msra.mxu0 %v726
    %1605 = vmatprep.subr.bf16.mxu0 %v731
    %1606 = vmatpush1.bf16.msra.mxu0 %v730
    %1607 = vmatprep.subr.bf16.mxu0 %v735
    %1608 = vmatpush1.bf16.msra.mxu0 %v734
    %1609 = vmatprep.subr.bf16.mxu0 %v739
    %1610 = vmatpush1.bf16.msra.mxu0 %v738
    %1611 = vmatprep.subr.bf16.mxu0 %v743
    %1612 = vmatpush1.bf16.msra.mxu0 %v742
    %1613 = vmatprep.subr.bf16.mxu0 0
    %1614 = vmatpush1.bf16.msra.mxu0 0
    %1615 = vmatprep.subr.bf16.mxu0 0
    %1616 = vmatpush1.bf16.msra.mxu0 0
    %1617 = vmatprep.subr.bf16.mxu0 0
    %1618 = vmatpush1.bf16.msra.mxu0 0
    %1619 = vmatprep.subr.bf16.mxu0 0
    %1620 = vmatpush1.bf16.msra.mxu0 0
    %1621 = vmatprep.subr.bf16.mxu0 0
    %1622 = vmatpush1.bf16.msra.mxu0 0
    %1623 = vmatprep.subr.bf16.mxu0 0
    %1624 = vmatpush1.bf16.msra.mxu0 0
    %1625 = vmatprep.subr.bf16.mxu0 0
    %1626 = vmatpush1.bf16.msra.mxu0 0
    %1627 = vmatprep.subr.bf16.mxu0 0
    %1628 = vmatpush1.bf16.msra.mxu0 0
    %1629 = vmatprep.mubr.bf16.mxu0 0
    %1630 = vmatmul.mubr.bf16.gmra.mrb[0].mxu0 %v1596
    %v1631 = vpop.f32.mrb[0].mxu0
    %v1632 = vadd.f32 0.0, %v1631
    %v1633 = vpop.f32.mrb[0].mxu0
    %v1634 = vadd.f32 0.0, %v1633
    %v1635 = vpop.f32.mrb[0].mxu0
    %v1636 = vpop.f32.mrb[0].mxu0
    %1637 = vdwg.mxu0
    %1638 = vmatprep.subr.bf16.mxu0 %v717
    %1639 = vmatpush1.bf16.msra.mxu0 %v716
    %1640 = vmatprep.subr.bf16.mxu0 %v721
    %1641 = vmatpush1.bf16.msra.mxu0 %v720
    %1642 = vmatprep.subr.bf16.mxu0 %v725
    %1643 = vmatpush1.bf16.msra.mxu0 %v724
    %1644 = vmatprep.subr.bf16.mxu0 %v729
    %1645 = vmatpush1.bf16.msra.mxu0 %v728
    %1646 = vmatprep.subr.bf16.mxu0 %v733
    %1647 = vmatpush1.bf16.msra.mxu0 %v732
    %1648 = vmatprep.subr.bf16.mxu0 %v737
    %1649 = vmatpush1.bf16.msra.mxu0 %v736
    %1650 = vmatprep.subr.bf16.mxu0 %v741
    %1651 = vmatpush1.bf16.msra.mxu0 %v740
    %1652 = vmatprep.subr.bf16.mxu0 %v745
    %1653 = vmatpush1.bf16.msra.mxu0 %v744
    %1654 = vmatprep.subr.bf16.mxu0 0
    %1655 = vmatpush1.bf16.msra.mxu0 0
    %1656 = vmatprep.subr.bf16.mxu0 0
    %1657 = vmatpush1.bf16.msra.mxu0 0
    %1658 = vmatprep.subr.bf16.mxu0 0
    %1659 = vmatpush1.bf16.msra.mxu0 0
    %1660 = vmatprep.subr.bf16.mxu0 0
    %1661 = vmatpush1.bf16.msra.mxu0 0
    %1662 = vmatprep.subr.bf16.mxu0 0
    %1663 = vmatpush1.bf16.msra.mxu0 0
    %1664 = vmatprep.subr.bf16.mxu0 0
    %1665 = vmatpush1.bf16.msra.mxu0 0
    %1666 = vmatprep.subr.bf16.mxu0 0
    %1667 = vmatpush1.bf16.msra.mxu0 0
    %1668 = vmatprep.subr.bf16.mxu0 0
    %1669 = vmatpush1.bf16.msra.mxu0 0
    %1670 = vmatprep.mubr.bf16.mxu0 0
    %1671 = vmatmul.mubr.bf16.gmra.mrb[0].mxu0 %v1596
    %v1672 = vpop.f32.mrb[0].mxu0
    %v1673 = vadd.f32 0.0, %v1672
    %v1674 = vpop.f32.mrb[0].mxu0
    %v1675 = vadd.f32 0.0, %v1674
    %v1676 = vpop.f32.mrb[0].mxu0
    %v1677 = vpop.f32.mrb[0].mxu0
    %1678 = vdwg.mxu0
    %v1679 = vadd.f32 %v1592, %v1632
    %v1680 = vadd.f32 %v1593, %v1634
    %v1681 = vadd.f32 %v1594, %v1673
    %v1682 = vadd.f32 %v1595, %v1675
    %v1683 = vmul.f32 %v1679, 0.5
    %v1684 = vtanh.pop %v1683
    %v1685 = vmul.f32 %v1684, 0.5
    %v1686 = vadd.f32 %v1685, 0.5
    %v1687 = vmul.f32 %v1680, 0.5
    %v1688 = vtanh.pop %v1687
    %v1689 = vmul.f32 %v1688, 0.5
    %v1690 = vadd.f32 %v1689, 0.5
    %v1691 = vtanh.pop %v1681
    %v1692 = vmul.f32 %v1682, 0.5
    %v1693 = vtanh.pop %v1692
    %v1694 = vmul.f32 %v1693, 0.5
    %v1695 = vadd.f32 %v1694, 0.5
    %v1696 = vmul.f32 %v1690, %v1478
    %v1697 = vmul.f32 %v1686, %v1691
    %v1698 = vadd.f32 %v1696, %v1697
    %v1699 = vtanh.pop %v1698
    %v1700 = vmul.f32 %v1695, %v1699
    %v1701 = vld [vmem:[#allocation3 + $0x80] sm:$0xff]
    %v1702 = vld [vmem:[#allocation3 + $0x88] sm:$0xff]
    %v1703 = vld [vmem:[#allocation3 + $0x90] sm:$0xff]
    %v1704 = vld [vmem:[#allocation3 + $0x98] sm:$0xff]
    %v1705 = vpack.c.bf16 %v1589, %v1589
    %1706 = vmatprep.subr.bf16.mxu0 %v983
    %1707 = vmatpush1.bf16.msra.mxu0 %v982
    %1708 = vmatprep.subr.bf16.mxu0 %v987
    %1709 = vmatpush1.bf16.msra.mxu0 %v986
    %1710 = vmatprep.subr.bf16.mxu0 %v991
    %1711 = vmatpush1.bf16.msra.mxu0 %v990
    %1712 = vmatprep.subr.bf16.mxu0 %v995
    %1713 = vmatpush1.bf16.msra.mxu0 %v994
    %1714 = vmatprep.subr.bf16.mxu0 %v999
    %1715 = vmatpush1.bf16.msra.mxu0 %v998
    %1716 = vmatprep.subr.bf16.mxu0 %v1003
    %1717 = vmatpush1.bf16.msra.mxu0 %v1002
    %1718 = vmatprep.subr.bf16.mxu0 %v1007
    %1719 = vmatpush1.bf16.msra.mxu0 %v1006
    %1720 = vmatprep.subr.bf16.mxu0 %v1011
    %1721 = vmatpush1.bf16.msra.mxu0 %v1010
    %1722 = vmatprep.subr.bf16.mxu0 0
    %1723 = vmatpush1.bf16.msra.mxu0 0
    %1724 = vmatprep.subr.bf16.mxu0 0
    %1725 = vmatpush1.bf16.msra.mxu0 0
    %1726 = vmatprep.subr.bf16.mxu0 0
    %1727 = vmatpush1.bf16.msra.mxu0 0
    %1728 = vmatprep.subr.bf16.mxu0 0
    %1729 = vmatpush1.bf16.msra.mxu0 0
    %1730 = vmatprep.subr.bf16.mxu0 0
    %1731 = vmatpush1.bf16.msra.mxu0 0
    %1732 = vmatprep.subr.bf16.mxu0 0
    %1733 = vmatpush1.bf16.msra.mxu0 0
    %1734 = vmatprep.subr.bf16.mxu0 0
    %1735 = vmatpush1.bf16.msra.mxu0 0
    %1736 = vmatprep.subr.bf16.mxu0 0
    %1737 = vmatpush1.bf16.msra.mxu0 0
    %1738 = vmatprep.mubr.bf16.mxu0 0
    %1739 = vmatmul.mubr.bf16.gmra.mrb[0].mxu0 %v1705
    %v1740 = vpop.f32.mrb[0].mxu0
    %v1741 = vadd.f32 0.0, %v1740
    %v1742 = vpop.f32.mrb[0].mxu0
    %v1743 = vadd.f32 0.0, %v1742
    %v1744 = vpop.f32.mrb[0].mxu0
    %v1745 = vpop.f32.mrb[0].mxu0
    %1746 = vdwg.mxu0
    %1747 = vmatprep.subr.bf16.mxu0 %v985
    %1748 = vmatpush1.bf16.msra.mxu0 %v984
    %1749 = vmatprep.subr.bf16.mxu0 %v989
    %1750 = vmatpush1.bf16.msra.mxu0 %v988
    %1751 = vmatprep.subr.bf16.mxu0 %v993
    %1752 = vmatpush1.bf16.msra.mxu0 %v992
    %1753 = vmatprep.subr.bf16.mxu0 %v997
    %1754 = vmatpush1.bf16.msra.mxu0 %v996
    %1755 = vmatprep.subr.bf16.mxu0 %v1001
    %1756 = vmatpush1.bf16.msra.mxu0 %v1000
    %1757 = vmatprep.subr.bf16.mxu0 %v1005
    %1758 = vmatpush1.bf16.msra.mxu0 %v1004
    %1759 = vmatprep.subr.bf16.mxu0 %v1009
    %1760 = vmatpush1.bf16.msra.mxu0 %v1008
    %1761 = vmatprep.subr.bf16.mxu0 %v1013
    %1762 = vmatpush1.bf16.msra.mxu0 %v1012
    %1763 = vmatprep.subr.bf16.mxu0 0
    %1764 = vmatpush1.bf16.msra.mxu0 0
    %1765 = vmatprep.subr.bf16.mxu0 0
    %1766 = vmatpush1.bf16.msra.mxu0 0
    %1767 = vmatprep.subr.bf16.mxu0 0
    %1768 = vmatpush1.bf16.msra.mxu0 0
    %1769 = vmatprep.subr.bf16.mxu0 0
    %1770 = vmatpush1.bf16.msra.mxu0 0
    %1771 = vmatprep.subr.bf16.mxu0 0
    %1772 = vmatpush1.bf16.msra.mxu0 0
    %1773 = vmatprep.subr.bf16.mxu0 0
    %1774 = vmatpush1.bf16.msra.mxu0 0
    %1775 = vmatprep.subr.bf16.mxu0 0
    %1776 = vmatpush1.bf16.msra.mxu0 0
    %1777 = vmatprep.subr.bf16.mxu0 0
    %1778 = vmatpush1.bf16.msra.mxu0 0
    %1779 = vmatprep.mubr.bf16.mxu0 0
    %1780 = vmatmul.mubr.bf16.gmra.mrb[0].mxu0 %v1705
    %v1781 = vpop.f32.mrb[0].mxu0
    %v1782 = vadd.f32 0.0, %v1781
    %v1783 = vpop.f32.mrb[0].mxu0
    %v1784 = vadd.f32 0.0, %v1783
    %v1785 = vpop.f32.mrb[0].mxu0
    %v1786 = vpop.f32.mrb[0].mxu0
    %1787 = vdwg.mxu0
    %v1788 = vadd.f32 %v1701, %v1741
    %v1789 = vadd.f32 %v1702, %v1743
    %v1790 = vadd.f32 %v1703, %v1782
    %v1791 = vadd.f32 %v1704, %v1784
    %v1792 = vmul.f32 %v1788, 0.5
    %v1793 = vtanh.pop %v1792
    %v1794 = vmul.f32 %v1793, 0.5
    %v1795 = vadd.f32 %v1794, 0.5
    %v1796 = vmul.f32 %v1789, 0.5
    %v1797 = vtanh.pop %v1796
    %v1798 = vmul.f32 %v1797, 0.5
    %v1799 = vadd.f32 %v1798, 0.5
    %v1800 = vtanh.pop %v1790
    %v1801 = vmul.f32 %v1791, 0.5
    %v1802 = vtanh.pop %v1801
    %v1803 = vmul.f32 %v1802, 0.5
    %v1804 = vadd.f32 %v1803, 0.5
    %v1805 = vmul.f32 %v1799, %v1587
    %v1806 = vmul.f32 %v1795, %v1800
    %v1807 = vadd.f32 %v1805, %v1806
    %v1808 = vtanh.pop %v1807
    %v1809 = vmul.f32 %v1804, %v1808
    %1810 = vst [vmem:[#allocation4 + $0x30] sm:$0xff] %v1700
    %1811 = vst [vmem:[#allocation4 + $0x48] sm:$0xff] %v1809
    %v1812 = vld [vmem:[#allocation2 + $0x80] sm:$0xff]
    %v1813 = vld [vmem:[#allocation2 + $0x88] sm:$0xff]
    %v1814 = vld [vmem:[#allocation2 + $0x90] sm:$0xff]
    %v1815 = vld [vmem:[#allocation2 + $0x98] sm:$0xff]
    %v1816 = vpack.c.bf16 %v1700, %v1700
    %1817 = vmatprep.subr.bf16.mxu0 %v715
    %1818 = vmatpush1.bf16.msra.mxu0 %v714
    %1819 = vmatprep.subr.bf16.mxu0 %v719
    %1820 = vmatpush1.bf16.msra.mxu0 %v718
    %1821 = vmatprep.subr.bf16.mxu0 %v723
    %1822 = vmatpush1.bf16.msra.mxu0 %v722
    %1823 = vmatprep.subr.bf16.mxu0 %v727
    %1824 = vmatpush1.bf16.msra.mxu0 %v726
    %1825 = vmatprep.subr.bf16.mxu0 %v731
    %1826 = vmatpush1.bf16.msra.mxu0 %v730
    %1827 = vmatprep.subr.bf16.mxu0 %v735
    %1828 = vmatpush1.bf16.msra.mxu0 %v734
    %1829 = vmatprep.subr.bf16.mxu0 %v739
    %1830 = vmatpush1.bf16.msra.mxu0 %v738
    %1831 = vmatprep.subr.bf16.mxu0 %v743
    %1832 = vmatpush1.bf16.msra.mxu0 %v742
    %1833 = vmatprep.subr.bf16.mxu0 0
    %1834 = vmatpush1.bf16.msra.mxu0 0
    %1835 = vmatprep.subr.bf16.mxu0 0
    %1836 = vmatpush1.bf16.msra.mxu0 0
    %1837 = vmatprep.subr.bf16.mxu0 0
    %1838 = vmatpush1.bf16.msra.mxu0 0
    %1839 = vmatprep.subr.bf16.mxu0 0
    %1840 = vmatpush1.bf16.msra.mxu0 0
    %1841 = vmatprep.subr.bf16.mxu0 0
    %1842 = vmatpush1.bf16.msra.mxu0 0
    %1843 = vmatprep.subr.bf16.mxu0 0
    %1844 = vmatpush1.bf16.msra.mxu0 0
    %1845 = vmatprep.subr.bf16.mxu0 0
    %1846 = vmatpush1.bf16.msra.mxu0 0
    %1847 = vmatprep.subr.bf16.mxu0 0
    %1848 = vmatpush1.bf16.msra.mxu0 0
    %1849 = vmatprep.mubr.bf16.mxu0 0
    %1850 = vmatmul.mubr.bf16.gmra.mrb[0].mxu0 %v1816
    %v1851 = vpop.f32.mrb[0].mxu0
    %v1852 = vadd.f32 0.0, %v1851
    %v1853 = vpop.f32.mrb[0].mxu0
    %v1854 = vadd.f32 0.0, %v1853
    %v1855 = vpop.f32.mrb[0].mxu0
    %v1856 = vpop.f32.mrb[0].mxu0
    %1857 = vdwg.mxu0
    %1858 = vmatprep.subr.bf16.mxu0 %v717
    %1859 = vmatpush1.bf16.msra.mxu0 %v716
    %1860 = vmatprep.subr.bf16.mxu0 %v721
    %1861 = vmatpush1.bf16.msra.mxu0 %v720
    %1862 = vmatprep.subr.bf16.mxu0 %v725
    %1863 = vmatpush1.bf16.msra.mxu0 %v724
    %1864 = vmatprep.subr.bf16.mxu0 %v729
    %1865 = vmatpush1.bf16.msra.mxu0 %v728
    %1866 = vmatprep.subr.bf16.mxu0 %v733
    %1867 = vmatpush1.bf16.msra.mxu0 %v732
    %1868 = vmatprep.subr.bf16.mxu0 %v737
    %1869 = vmatpush1.bf16.msra.mxu0 %v736
    %1870 = vmatprep.subr.bf16.mxu0 %v741
    %1871 = vmatpush1.bf16.msra.mxu0 %v740
    %1872 = vmatprep.subr.bf16.mxu0 %v745
    %1873 = vmatpush1.bf16.msra.mxu0 %v744
    %1874 = vmatprep.subr.bf16.mxu0 0
    %1875 = vmatpush1.bf16.msra.mxu0 0
    %1876 = vmatprep.subr.bf16.mxu0 0
    %1877 = vmatpush1.bf16.msra.mxu0 0
    %1878 = vmatprep.subr.bf16.mxu0 0
    %1879 = vmatpush1.bf16.msra.mxu0 0
    %1880 = vmatprep.subr.bf16.mxu0 0
    %1881 = vmatpush1.bf16.msra.mxu0 0
    %1882 = vmatprep.subr.bf16.mxu0 0
    %1883 = vmatpush1.bf16.msra.mxu0 0
    %1884 = vmatprep.subr.bf16.mxu0 0
    %1885 = vmatpush1.bf16.msra.mxu0 0
    %1886 = vmatprep.subr.bf16.mxu0 0
    %1887 = vmatpush1.bf16.msra.mxu0 0
    %1888 = vmatprep.subr.bf16.mxu0 0
    %1889 = vmatpush1.bf16.msra.mxu0 0
    %1890 = vmatprep.mubr.bf16.mxu0 0
    %1891 = vmatmul.mubr.bf16.gmra.mrb[0].mxu0 %v1816
    %v1892 = vpop.f32.mrb[0].mxu0
    %v1893 = vadd.f32 0.0, %v1892
    %v1894 = vpop.f32.mrb[0].mxu0
    %v1895 = vadd.f32 0.0, %v1894
    %v1896 = vpop.f32.mrb[0].mxu0
    %v1897 = vpop.f32.mrb[0].mxu0
    %1898 = vdwg.mxu0
    %v1899 = vadd.f32 %v1812, %v1852
    %v1900 = vadd.f32 %v1813, %v1854
    %v1901 = vadd.f32 %v1814, %v1893
    %v1902 = vadd.f32 %v1815, %v1895
    %v1903 = vmul.f32 %v1899, 0.5
    %v1904 = vtanh.pop %v1903
    %v1905 = vmul.f32 %v1904, 0.5
    %v1906 = vadd.f32 %v1905, 0.5
    %v1907 = vmul.f32 %v1900, 0.5
    %v1908 = vtanh.pop %v1907
    %v1909 = vmul.f32 %v1908, 0.5
    %v1910 = vadd.f32 %v1909, 0.5
    %v1911 = vtanh.pop %v1901
    %v1912 = vmul.f32 %v1902, 0.5
    %v1913 = vtanh.pop %v1912
    %v1914 = vmul.f32 %v1913, 0.5
    %v1915 = vadd.f32 %v1914, 0.5
    %v1916 = vmul.f32 %v1910, %v1698
    %v1917 = vmul.f32 %v1906, %v1911
    %v1918 = vadd.f32 %v1916, %v1917
    %v1919 = vtanh.pop %v1918
    %v1920 = vmul.f32 %v1915, %v1919
    %v1921 = vld [vmem:[#allocation3 + $0x60] sm:$0xff]
    %v1922 = vld [vmem:[#allocation3 + $0x68] sm:$0xff]
    %v1923 = vld [vmem:[#allocation3 + $0x70] sm:$0xff]
    %v1924 = vld [vmem:[#allocation3 + $0x78] sm:$0xff]
    %v1925 = vpack.c.bf16 %v1809, %v1809
    %1926 = vmatprep.subr.bf16.mxu0 %v983
    %1927 = vmatpush1.bf16.msra.mxu0 %v982
    %1928 = vmatprep.subr.bf16.mxu0 %v987
    %1929 = vmatpush1.bf16.msra.mxu0 %v986
    %1930 = vmatprep.subr.bf16.mxu0 %v991
    %1931 = vmatpush1.bf16.msra.mxu0 %v990
    %1932 = vmatprep.subr.bf16.mxu0 %v995
    %1933 = vmatpush1.bf16.msra.mxu0 %v994
    %1934 = vmatprep.subr.bf16.mxu0 %v999
    %1935 = vmatpush1.bf16.msra.mxu0 %v998
    %1936 = vmatprep.subr.bf16.mxu0 %v1003
    %1937 = vmatpush1.bf16.msra.mxu0 %v1002
    %1938 = vmatprep.subr.bf16.mxu0 %v1007
    %1939 = vmatpush1.bf16.msra.mxu0 %v1006
    %1940 = vmatprep.subr.bf16.mxu0 %v1011
    %1941 = vmatpush1.bf16.msra.mxu0 %v1010
    %1942 = vmatprep.subr.bf16.mxu0 0
    %1943 = vmatpush1.bf16.msra.mxu0 0
    %1944 = vmatprep.subr.bf16.mxu0 0
    %1945 = vmatpush1.bf16.msra.mxu0 0
    %1946 = vmatprep.subr.bf16.mxu0 0
    %1947 = vmatpush1.bf16.msra.mxu0 0
    %1948 = vmatprep.subr.bf16.mxu0 0
    %1949 = vmatpush1.bf16.msra.mxu0 0
    %1950 = vmatprep.subr.bf16.mxu0 0
    %1951 = vmatpush1.bf16.msra.mxu0 0
    %1952 = vmatprep.subr.bf16.mxu0 0
    %1953 = vmatpush1.bf16.msra.mxu0 0
    %1954 = vmatprep.subr.bf16.mxu0 0
    %1955 = vmatpush1.bf16.msra.mxu0 0
    %1956 = vmatprep.subr.bf16.mxu0 0
    %1957 = vmatpush1.bf16.msra.mxu0 0
    %1958 = vmatprep.mubr.bf16.mxu0 0
    %1959 = vmatmul.mubr.bf16.gmra.mrb[0].mxu0 %v1925
    %v1960 = vpop.f32.mrb[0].mxu0
    %v1961 = vadd.f32 0.0, %v1960
    %v1962 = vpop.f32.mrb[0].mxu0
    %v1963 = vadd.f32 0.0, %v1962
    %v1964 = vpop.f32.mrb[0].mxu0
    %v1965 = vpop.f32.mrb[0].mxu0
    %1966 = vdwg.mxu0
    %1967 = vmatprep.subr.bf16.mxu0 %v985
    %1968 = vmatpush1.bf16.msra.mxu0 %v984
    %1969 = vmatprep.subr.bf16.mxu0 %v989
    %1970 = vmatpush1.bf16.msra.mxu0 %v988
    %1971 = vmatprep.subr.bf16.mxu0 %v993
    %1972 = vmatpush1.bf16.msra.mxu0 %v992
    %1973 = vmatprep.subr.bf16.mxu0 %v997
    %1974 = vmatpush1.bf16.msra.mxu0 %v996
    %1975 = vmatprep.subr.bf16.mxu0 %v1001
    %1976 = vmatpush1.bf16.msra.mxu0 %v1000
    %1977 = vmatprep.subr.bf16.mxu0 %v1005
    %1978 = vmatpush1.bf16.msra.mxu0 %v1004
    %1979 = vmatprep.subr.bf16.mxu0 %v1009
    %1980 = vmatpush1.bf16.msra.mxu0 %v1008
    %1981 = vmatprep.subr.bf16.mxu0 %v1013
    %1982 = vmatpush1.bf16.msra.mxu0 %v1012
    %1983 = vmatprep.subr.bf16.mxu0 0
    %1984 = vmatpush1.bf16.msra.mxu0 0
    %1985 = vmatprep.subr.bf16.mxu0 0
    %1986 = vmatpush1.bf16.msra.mxu0 0
    %1987 = vmatprep.subr.bf16.mxu0 0
    %1988 = vmatpush1.bf16.msra.mxu0 0
    %1989 = vmatprep.subr.bf16.mxu0 0
    %1990 = vmatpush1.bf16.msra.mxu0 0
    %1991 = vmatprep.subr.bf16.mxu0 0
    %1992 = vmatpush1.bf16.msra.mxu0 0
    %1993 = vmatprep.subr.bf16.mxu0 0
    %1994 = vmatpush1.bf16.msra.mxu0 0
    %1995 = vmatprep.subr.bf16.mxu0 0
    %1996 = vmatpush1.bf16.msra.mxu0 0
    %1997 = vmatprep.subr.bf16.mxu0 0
    %1998 = vmatpush1.bf16.msra.mxu0 0
    %1999 = vmatprep.mubr.bf16.mxu0 0
    %2000 = vmatmul.mubr.bf16.gmra.mrb[0].mxu0 %v1925
    %v2001 = vpop.f32.mrb[0].mxu0
    %v2002 = vadd.f32 0.0, %v2001
    %v2003 = vpop.f32.mrb[0].mxu0
    %v2004 = vadd.f32 0.0, %v2003
    %v2005 = vpop.f32.mrb[0].mxu0
    %v2006 = vpop.f32.mrb[0].mxu0
    %2007 = vdwg.mxu0
    %v2008 = vadd.f32 %v1921, %v1961
    %v2009 = vadd.f32 %v1922, %v1963
    %v2010 = vadd.f32 %v1923, %v2002
    %v2011 = vadd.f32 %v1924, %v2004
    %v2012 = vmul.f32 %v2008, 0.5
    %v2013 = vtanh.pop %v2012
    %v2014 = vmul.f32 %v2013, 0.5
    %v2015 = vadd.f32 %v2014, 0.5
    %v2016 = vmul.f32 %v2009, 0.5
    %v2017 = vtanh.pop %v2016
    %v2018 = vmul.f32 %v2017, 0.5
    %v2019 = vadd.f32 %v2018, 0.5
    %v2020 = vtanh.pop %v2010
    %v2021 = vmul.f32 %v2011, 0.5
    %v2022 = vtanh.pop %v2021
    %v2023 = vmul.f32 %v2022, 0.5
    %v2024 = vadd.f32 %v2023, 0.5
    %v2025 = vmul.f32 %v2019, %v1807
    %v2026 = vmul.f32 %v2015, %v2020
    %v2027 = vadd.f32 %v2025, %v2026
    %v2028 = vtanh.pop %v2027
    %v2029 = vmul.f32 %v2024, %v2028
    %2030 = vst [vmem:[#allocation4 + $0x40] sm:$0xff] %v1920
    %2031 = vst [vmem:[#allocation4 + $0x38] sm:$0xff] %v2029
    %v2032 = vld [vmem:[#allocation2 + $0xa0] sm:$0xff]
    %v2033 = vld [vmem:[#allocation2 + $0xa8] sm:$0xff]
    %v2034 = vld [vmem:[#allocation2 + $0xb0] sm:$0xff]
    %v2035 = vld [vmem:[#allocation2 + $0xb8] sm:$0xff]
    %v2036 = vpack.c.bf16 %v1920, %v1920
    %2037 = vmatprep.subr.bf16.mxu0 %v715
    %2038 = vmatpush1.bf16.msra.mxu0 %v714
    %2039 = vmatprep.subr.bf16.mxu0 %v719
    %2040 = vmatpush1.bf16.msra.mxu0 %v718
    %2041 = vmatprep.subr.bf16.mxu0 %v723
    %2042 = vmatpush1.bf16.msra.mxu0 %v722
    %2043 = vmatprep.subr.bf16.mxu0 %v727
    %2044 = vmatpush1.bf16.msra.mxu0 %v726
    %2045 = vmatprep.subr.bf16.mxu0 %v731
    %2046 = vmatpush1.bf16.msra.mxu0 %v730
    %2047 = vmatprep.subr.bf16.mxu0 %v735
    %2048 = vmatpush1.bf16.msra.mxu0 %v734
    %2049 = vmatprep.subr.bf16.mxu0 %v739
    %2050 = vmatpush1.bf16.msra.mxu0 %v738
    %2051 = vmatprep.subr.bf16.mxu0 %v743
    %2052 = vmatpush1.bf16.msra.mxu0 %v742
    %2053 = vmatprep.subr.bf16.mxu0 0
    %2054 = vmatpush1.bf16.msra.mxu0 0
    %2055 = vmatprep.subr.bf16.mxu0 0
    %2056 = vmatpush1.bf16.msra.mxu0 0
    %2057 = vmatprep.subr.bf16.mxu0 0
    %2058 = vmatpush1.bf16.msra.mxu0 0
    %2059 = vmatprep.subr.bf16.mxu0 0
    %2060 = vmatpush1.bf16.msra.mxu0 0
    %2061 = vmatprep.subr.bf16.mxu0 0
    %2062 = vmatpush1.bf16.msra.mxu0 0
    %2063 = vmatprep.subr.bf16.mxu0 0
    %2064 = vmatpush1.bf16.msra.mxu0 0
    %2065 = vmatprep.subr.bf16.mxu0 0
    %2066 = vmatpush1.bf16.msra.mxu0 0
    %2067 = vmatprep.subr.bf16.mxu0 0
    %2068 = vmatpush1.bf16.msra.mxu0 0
    %2069 = vmatprep.mubr.bf16.mxu0 0
    %2070 = vmatmul.mubr.bf16.gmra.mrb[0].mxu0 %v2036
    %v2071 = vpop.f32.mrb[0].mxu0
    %v2072 = vadd.f32 0.0, %v2071
    %v2073 = vpop.f32.mrb[0].mxu0
    %v2074 = vadd.f32 0.0, %v2073
    %v2075 = vpop.f32.mrb[0].mxu0
    %v2076 = vpop.f32.mrb[0].mxu0
    %2077 = vdwg.mxu0
    %2078 = vmatprep.subr.bf16.mxu0 %v717
    %2079 = vmatpush1.bf16.msra.mxu0 %v716
    %2080 = vmatprep.subr.bf16.mxu0 %v721
    %2081 = vmatpush1.bf16.msra.mxu0 %v720
    %2082 = vmatprep.subr.bf16.mxu0 %v725
    %2083 = vmatpush1.bf16.msra.mxu0 %v724
    %2084 = vmatprep.subr.bf16.mxu0 %v729
    %2085 = vmatpush1.bf16.msra.mxu0 %v728
    %2086 = vmatprep.subr.bf16.mxu0 %v733
    %2087 = vmatpush1.bf16.msra.mxu0 %v732
    %2088 = vmatprep.subr.bf16.mxu0 %v737
    %2089 = vmatpush1.bf16.msra.mxu0 %v736
    %2090 = vmatprep.subr.bf16.mxu0 %v741
    %2091 = vmatpush1.bf16.msra.mxu0 %v740
    %2092 = vmatprep.subr.bf16.mxu0 %v745
    %2093 = vmatpush1.bf16.msra.mxu0 %v744
    %2094 = vmatprep.subr.bf16.mxu0 0
    %2095 = vmatpush1.bf16.msra.mxu0 0
    %2096 = vmatprep.subr.bf16.mxu0 0
    %2097 = vmatpush1.bf16.msra.mxu0 0
    %2098 = vmatprep.subr.bf16.mxu0 0
    %2099 = vmatpush1.bf16.msra.mxu0 0
    %2100 = vmatprep.subr.bf16.mxu0 0
    %2101 = vmatpush1.bf16.msra.mxu0 0
    %2102 = vmatprep.subr.bf16.mxu0 0
    %2103 = vmatpush1.bf16.msra.mxu0 0
    %2104 = vmatprep.subr.bf16.mxu0 0
    %2105 = vmatpush1.bf16.msra.mxu0 0
    %2106 = vmatprep.subr.bf16.mxu0 0
    %2107 = vmatpush1.bf16.msra.mxu0 0
    %2108 = vmatprep.subr.bf16.mxu0 0
    %2109 = vmatpush1.bf16.msra.mxu0 0
    %2110 = vmatprep.mubr.bf16.mxu0 0
    %2111 = vmatmul.mubr.bf16.gmra.mrb[0].mxu0 %v2036
    %v2112 = vpop.f32.mrb[0].mxu0
    %v2113 = vadd.f32 0.0, %v2112
    %v2114 = vpop.f32.mrb[0].mxu0
    %v2115 = vadd.f32 0.0, %v2114
    %v2116 = vpop.f32.mrb[0].mxu0
    %v2117 = vpop.f32.mrb[0].mxu0
    %2118 = vdwg.mxu0
    %v2119 = vadd.f32 %v2032, %v2072
    %v2120 = vadd.f32 %v2033, %v2074
    %v2121 = vadd.f32 %v2034, %v2113
    %v2122 = vadd.f32 %v2035, %v2115
    %v2123 = vmul.f32 %v2119, 0.5
    %v2124 = vtanh.pop %v2123
    %v2125 = vmul.f32 %v2124, 0.5
    %v2126 = vadd.f32 %v2125, 0.5
    %v2127 = vmul.f32 %v2120, 0.5
    %v2128 = vtanh.pop %v2127
    %v2129 = vmul.f32 %v2128, 0.5
    %v2130 = vadd.f32 %v2129, 0.5
    %v2131 = vtanh.pop %v2121
    %v2132 = vmul.f32 %v2122, 0.5
    %v2133 = vtanh.pop %v2132
    %v2134 = vmul.f32 %v2133, 0.5
    %v2135 = vadd.f32 %v2134, 0.5
    %v2136 = vmul.f32 %v2130, %v1918
    %v2137 = vmul.f32 %v2126, %v2131
    %v2138 = vadd.f32 %v2136, %v2137
    %v2139 = vtanh.pop %v2138
    %v2140 = vmul.f32 %v2135, %v2139
    %v2141 = vld [vmem:[#allocation3 + $0x40] sm:$0xff]
    %v2142 = vld [vmem:[#allocation3 + $0x48] sm:$0xff]
    %v2143 = vld [vmem:[#allocation3 + $0x50] sm:$0xff]
    %v2144 = vld [vmem:[#allocation3 + $0x58] sm:$0xff]
    %v2145 = vpack.c.bf16 %v2029, %v2029
    %2146 = vmatprep.subr.bf16.mxu0 %v983
    %2147 = vmatpush1.bf16.msra.mxu0 %v982
    %2148 = vmatprep.subr.bf16.mxu0 %v987
    %2149 = vmatpush1.bf16.msra.mxu0 %v986
    %2150 = vmatprep.subr.bf16.mxu0 %v991
    %2151 = vmatpush1.bf16.msra.mxu0 %v990
    %2152 = vmatprep.subr.bf16.mxu0 %v995
    %2153 = vmatpush1.bf16.msra.mxu0 %v994
    %2154 = vmatprep.subr.bf16.mxu0 %v999
    %2155 = vmatpush1.bf16.msra.mxu0 %v998
    %2156 = vmatprep.subr.bf16.mxu0 %v1003
    %2157 = vmatpush1.bf16.msra.mxu0 %v1002
    %2158 = vmatprep.subr.bf16.mxu0 %v1007
    %2159 = vmatpush1.bf16.msra.mxu0 %v1006
    %2160 = vmatprep.subr.bf16.mxu0 %v1011
    %2161 = vmatpush1.bf16.msra.mxu0 %v1010
    %2162 = vmatprep.subr.bf16.mxu0 0
    %2163 = vmatpush1.bf16.msra.mxu0 0
    %2164 = vmatprep.subr.bf16.mxu0 0
    %2165 = vmatpush1.bf16.msra.mxu0 0
    %2166 = vmatprep.subr.bf16.mxu0 0
    %2167 = vmatpush1.bf16.msra.mxu0 0
    %2168 = vmatprep.subr.bf16.mxu0 0
    %2169 = vmatpush1.bf16.msra.mxu0 0
    %2170 = vmatprep.subr.bf16.mxu0 0
    %2171 = vmatpush1.bf16.msra.mxu0 0
    %2172 = vmatprep.subr.bf16.mxu0 0
    %2173 = vmatpush1.bf16.msra.mxu0 0
    %2174 = vmatprep.subr.bf16.mxu0 0
    %2175 = vmatpush1.bf16.msra.mxu0 0
    %2176 = vmatprep.subr.bf16.mxu0 0
    %2177 = vmatpush1.bf16.msra.mxu0 0
    %2178 = vmatprep.mubr.bf16.mxu0 0
    %2179 = vmatmul.mubr.bf16.gmra.mrb[0].mxu0 %v2145
    %v2180 = vpop.f32.mrb[0].mxu0
    %v2181 = vadd.f32 0.0, %v2180
    %v2182 = vpop.f32.mrb[0].mxu0
    %v2183 = vadd.f32 0.0, %v2182
    %v2184 = vpop.f32.mrb[0].mxu0
    %v2185 = vpop.f32.mrb[0].mxu0
    %2186 = vdwg.mxu0
    %2187 = vmatprep.subr.bf16.mxu0 %v985
    %2188 = vmatpush1.bf16.msra.mxu0 %v984
    %2189 = vmatprep.subr.bf16.mxu0 %v989
    %2190 = vmatpush1.bf16.msra.mxu0 %v988
    %2191 = vmatprep.subr.bf16.mxu0 %v993
    %2192 = vmatpush1.bf16.msra.mxu0 %v992
    %2193 = vmatprep.subr.bf16.mxu0 %v997
    %2194 = vmatpush1.bf16.msra.mxu0 %v996
    %2195 = vmatprep.subr.bf16.mxu0 %v1001
    %2196 = vmatpush1.bf16.msra.mxu0 %v1000
    %2197 = vmatprep.subr.bf16.mxu0 %v1005
    %2198 = vmatpush1.bf16.msra.mxu0 %v1004
    %2199 = vmatprep.subr.bf16.mxu0 %v1009
    %2200 = vmatpush1.bf16.msra.mxu0 %v1008
    %2201 = vmatprep.subr.bf16.mxu0 %v1013
    %2202 = vmatpush1.bf16.msra.mxu0 %v1012
    %2203 = vmatprep.subr.bf16.mxu0 0
    %2204 = vmatpush1.bf16.msra.mxu0 0
    %2205 = vmatprep.subr.bf16.mxu0 0
    %2206 = vmatpush1.bf16.msra.mxu0 0
    %2207 = vmatprep.subr.bf16.mxu0 0
    %2208 = vmatpush1.bf16.msra.mxu0 0
    %2209 = vmatprep.subr.bf16.mxu0 0
    %2210 = vmatpush1.bf16.msra.mxu0 0
    %2211 = vmatprep.subr.bf16.mxu0 0
    %2212 = vmatpush1.bf16.msra.mxu0 0
    %2213 = vmatprep.subr.bf16.mxu0 0
    %2214 = vmatpush1.bf16.msra.mxu0 0
    %2215 = vmatprep.subr.bf16.mxu0 0
    %2216 = vmatpush1.bf16.msra.mxu0 0
    %2217 = vmatprep.subr.bf16.mxu0 0
    %2218 = vmatpush1.bf16.msra.mxu0 0
    %2219 = vmatprep.mubr.bf16.mxu0 0
    %2220 = vmatmul.mubr.bf16.gmra.mrb[0].mxu0 %v2145
    %v2221 = vpop.f32.mrb[0].mxu0
    %v2222 = vadd.f32 0.0, %v2221
    %v2223 = vpop.f32.mrb[0].mxu0
    %v2224 = vadd.f32 0.0, %v2223
    %v2225 = vpop.f32.mrb[0].mxu0
    %v2226 = vpop.f32.mrb[0].mxu0
    %2227 = vdwg.mxu0
    %v2228 = vadd.f32 %v2141, %v2181
    %v2229 = vadd.f32 %v2142, %v2183
    %v2230 = vadd.f32 %v2143, %v2222
    %v2231 = vadd.f32 %v2144, %v2224
    %v2232 = vmul.f32 %v2228, 0.5
    %v2233 = vtanh.pop %v2232
    %v2234 = vmul.f32 %v2233, 0.5
    %v2235 = vadd.f32 %v2234, 0.5
    %v2236 = vmul.f32 %v2229, 0.5
    %v2237 = vtanh.pop %v2236
    %v2238 = vmul.f32 %v2237, 0.5
    %v2239 = vadd.f32 %v2238, 0.5
    %v2240 = vtanh.pop %v2230
    %v2241 = vmul.f32 %v2231, 0.5
    %v2242 = vtanh.pop %v2241
    %v2243 = vmul.f32 %v2242, 0.5
    %v2244 = vadd.f32 %v2243, 0.5
    %v2245 = vmul.f32 %v2239, %v2027
    %v2246 = vmul.f32 %v2235, %v2240
    %v2247 = vadd.f32 %v2245, %v2246
    %v2248 = vtanh.pop %v2247
    %v2249 = vmul.f32 %v2244, %v2248
    %2250 = vst [vmem:[#allocation4 + $0x50] sm:$0xff] %v2140
    %2251 = vst [vmem:[#allocation4 + $0x28] sm:$0xff] %v2249
    %v2252 = vld [vmem:[#allocation2 + $0xc0] sm:$0xff]
    %v2253 = vld [vmem:[#allocation2 + $0xc8] sm:$0xff]
    %v2254 = vld [vmem:[#allocation2 + $0xd0] sm:$0xff]
    %v2255 = vld [vmem:[#allocation2 + $0xd8] sm:$0xff]
    %v2256 = vpack.c.bf16 %v2140, %v2140
    %2257 = vmatprep.subr.bf16.mxu0 %v715
    %2258 = vmatpush1.bf16.msra.mxu0 %v714
    %2259 = vmatprep.subr.bf16.mxu0 %v719
    %2260 = vmatpush1.bf16.msra.mxu0 %v718
    %2261 = vmatprep.subr.bf16.mxu0 %v723
    %2262 = vmatpush1.bf16.msra.mxu0 %v722
    %2263 = vmatprep.subr.bf16.mxu0 %v727
    %2264 = vmatpush1.bf16.msra.mxu0 %v726
    %2265 = vmatprep.subr.bf16.mxu0 %v731
    %2266 = vmatpush1.bf16.msra.mxu0 %v730
    %2267 = vmatprep.subr.bf16.mxu0 %v735
    %2268 = vmatpush1.bf16.msra.mxu0 %v734
    %2269 = vmatprep.subr.bf16.mxu0 %v739
    %2270 = vmatpush1.bf16.msra.mxu0 %v738
    %2271 = vmatprep.subr.bf16.mxu0 %v743
    %2272 = vmatpush1.bf16.msra.mxu0 %v742
    %2273 = vmatprep.subr.bf16.mxu0 0
    %2274 = vmatpush1.bf16.msra.mxu0 0
    %2275 = vmatprep.subr.bf16.mxu0 0
    %2276 = vmatpush1.bf16.msra.mxu0 0
    %2277 = vmatprep.subr.bf16.mxu0 0
    %2278 = vmatpush1.bf16.msra.mxu0 0
    %2279 = vmatprep.subr.bf16.mxu0 0
    %2280 = vmatpush1.bf16.msra.mxu0 0
    %2281 = vmatprep.subr.bf16.mxu0 0
    %2282 = vmatpush1.bf16.msra.mxu0 0
    %2283 = vmatprep.subr.bf16.mxu0 0
    %2284 = vmatpush1.bf16.msra.mxu0 0
    %2285 = vmatprep.subr.bf16.mxu0 0
    %2286 = vmatpush1.bf16.msra.mxu0 0
    %2287 = vmatprep.subr.bf16.mxu0 0
    %2288 = vmatpush1.bf16.msra.mxu0 0
    %2289 = vmatprep.mubr.bf16.mxu0 0
    %2290 = vmatmul.mubr.bf16.gmra.mrb[0].mxu0 %v2256
    %v2291 = vpop.f32.mrb[0].mxu0
    %v2292 = vadd.f32 0.0, %v2291
    %v2293 = vpop.f32.mrb[0].mxu0
    %v2294 = vadd.f32 0.0, %v2293
    %v2295 = vpop.f32.mrb[0].mxu0
    %v2296 = vpop.f32.mrb[0].mxu0
    %2297 = vdwg.mxu0
    %2298 = vmatprep.subr.bf16.mxu0 %v717
    %2299 = vmatpush1.bf16.msra.mxu0 %v716
    %2300 = vmatprep.subr.bf16.mxu0 %v721
    %2301 = vmatpush1.bf16.msra.mxu0 %v720
    %2302 = vmatprep.subr.bf16.mxu0 %v725
    %2303 = vmatpush1.bf16.msra.mxu0 %v724
    %2304 = vmatprep.subr.bf16.mxu0 %v729
    %2305 = vmatpush1.bf16.msra.mxu0 %v728
    %2306 = vmatprep.subr.bf16.mxu0 %v733
    %2307 = vmatpush1.bf16.msra.mxu0 %v732
    %2308 = vmatprep.subr.bf16.mxu0 %v737
    %2309 = vmatpush1.bf16.msra.mxu0 %v736
    %2310 = vmatprep.subr.bf16.mxu0 %v741
    %2311 = vmatpush1.bf16.msra.mxu0 %v740
    %2312 = vmatprep.subr.bf16.mxu0 %v745
    %2313 = vmatpush1.bf16.msra.mxu0 %v744
    %2314 = vmatprep.subr.bf16.mxu0 0
    %2315 = vmatpush1.bf16.msra.mxu0 0
    %2316 = vmatprep.subr.bf16.mxu0 0
    %2317 = vmatpush1.bf16.msra.mxu0 0
    %2318 = vmatprep.subr.bf16.mxu0 0
    %2319 = vmatpush1.bf16.msra.mxu0 0
    %2320 = vmatprep.subr.bf16.mxu0 0
    %2321 = vmatpush1.bf16.msra.mxu0 0
    %2322 = vmatprep.subr.bf16.mxu0 0
    %2323 = vmatpush1.bf16.msra.mxu0 0
    %2324 = vmatprep.subr.bf16.mxu0 0
    %2325 = vmatpush1.bf16.msra.mxu0 0
    %2326 = vmatprep.subr.bf16.mxu0 0
    %2327 = vmatpush1.bf16.msra.mxu0 0
    %2328 = vmatprep.subr.bf16.mxu0 0
    %2329 = vmatpush1.bf16.msra.mxu0 0
    %2330 = vmatprep.mubr.bf16.mxu0 0
    %2331 = vmatmul.mubr.bf16.gmra.mrb[0].mxu0 %v2256
    %v2332 = vpop.f32.mrb[0].mxu0
    %v2333 = vadd.f32 0.0, %v2332
    %v2334 = vpop.f32.mrb[0].mxu0
    %v2335 = vadd.f32 0.0, %v2334
    %v2336 = vpop.f32.mrb[0].mxu0
    %v2337 = vpop.f32.mrb[0].mxu0
    %2338 = vdwg.mxu0
    %v2339 = vadd.f32 %v2252, %v2292
    %v2340 = vadd.f32 %v2253, %v2294
    %v2341 = vadd.f32 %v2254, %v2333
    %v2342 = vadd.f32 %v2255, %v2335
    %v2343 = vmul.f32 %v2339, 0.5
    %v2344 = vtanh.pop %v2343
    %v2345 = vmul.f32 %v2344, 0.5
    %v2346 = vadd.f32 %v2345, 0.5
    %v2347 = vmul.f32 %v2340, 0.5
    %v2348 = vtanh.pop %v2347
    %v2349 = vmul.f32 %v2348, 0.5
    %v2350 = vadd.f32 %v2349, 0.5
    %v2351 = vtanh.pop %v2341
    %v2352 = vmul.f32 %v2342, 0.5
    %v2353 = vtanh.pop %v2352
    %v2354 = vmul.f32 %v2353, 0.5
    %v2355 = vadd.f32 %v2354, 0.5
    %v2356 = vmul.f32 %v2350, %v2138
    %v2357 = vmul.f32 %v2346, %v2351
    %v2358 = vadd.f32 %v2356, %v2357
    %v2359 = vtanh.pop %v2358
    %v2360 = vmul.f32 %v2355, %v2359
    %v2361 = vld [vmem:[#allocation3 + $0x20] sm:$0xff]
    %v2362 = vld [vmem:[#allocation3 + $0x28] sm:$0xff]
    %v2363 = vld [vmem:[#allocation3 + $0x30] sm:$0xff]
    %v2364 = vld [vmem:[#allocation3 + $0x38] sm:$0xff]
    %v2365 = vpack.c.bf16 %v2249, %v2249
    %2366 = vmatprep.subr.bf16.mxu0 %v983
    %2367 = vmatpush1.bf16.msra.mxu0 %v982
    %2368 = vmatprep.subr.bf16.mxu0 %v987
    %2369 = vmatpush1.bf16.msra.mxu0 %v986
    %2370 = vmatprep.subr.bf16.mxu0 %v991
    %2371 = vmatpush1.bf16.msra.mxu0 %v990
    %2372 = vmatprep.subr.bf16.mxu0 %v995
    %2373 = vmatpush1.bf16.msra.mxu0 %v994
    %2374 = vmatprep.subr.bf16.mxu0 %v999
    %2375 = vmatpush1.bf16.msra.mxu0 %v998
    %2376 = vmatprep.subr.bf16.mxu0 %v1003
    %2377 = vmatpush1.bf16.msra.mxu0 %v1002
    %2378 = vmatprep.subr.bf16.mxu0 %v1007
    %2379 = vmatpush1.bf16.msra.mxu0 %v1006
    %2380 = vmatprep.subr.bf16.mxu0 %v1011
    %2381 = vmatpush1.bf16.msra.mxu0 %v1010
    %2382 = vmatprep.subr.bf16.mxu0 0
    %2383 = vmatpush1.bf16.msra.mxu0 0
    %2384 = vmatprep.subr.bf16.mxu0 0
    %2385 = vmatpush1.bf16.msra.mxu0 0
    %2386 = vmatprep.subr.bf16.mxu0 0
    %2387 = vmatpush1.bf16.msra.mxu0 0
    %2388 = vmatprep.subr.bf16.mxu0 0
    %2389 = vmatpush1.bf16.msra.mxu0 0
    %2390 = vmatprep.subr.bf16.mxu0 0
    %2391 = vmatpush1.bf16.msra.mxu0 0
    %2392 = vmatprep.subr.bf16.mxu0 0
    %2393 = vmatpush1.bf16.msra.mxu0 0
    %2394 = vmatprep.subr.bf16.mxu0 0
    %2395 = vmatpush1.bf16.msra.mxu0 0
    %2396 = vmatprep.subr.bf16.mxu0 0
    %2397 = vmatpush1.bf16.msra.mxu0 0
    %2398 = vmatprep.mubr.bf16.mxu0 0
    %2399 = vmatmul.mubr.bf16.gmra.mrb[0].mxu0 %v2365
    %v2400 = vpop.f32.mrb[0].mxu0
    %v2401 = vadd.f32 0.0, %v2400
    %v2402 = vpop.f32.mrb[0].mxu0
    %v2403 = vadd.f32 0.0, %v2402
    %v2404 = vpop.f32.mrb[0].mxu0
    %v2405 = vpop.f32.mrb[0].mxu0
    %2406 = vdwg.mxu0
    %2407 = vmatprep.subr.bf16.mxu0 %v985
    %2408 = vmatpush1.bf16.msra.mxu0 %v984
    %2409 = vmatprep.subr.bf16.mxu0 %v989
    %2410 = vmatpush1.bf16.msra.mxu0 %v988
    %2411 = vmatprep.subr.bf16.mxu0 %v993
    %2412 = vmatpush1.bf16.msra.mxu0 %v992
    %2413 = vmatprep.subr.bf16.mxu0 %v997
    %2414 = vmatpush1.bf16.msra.mxu0 %v996
    %2415 = vmatprep.subr.bf16.mxu0 %v1001
    %2416 = vmatpush1.bf16.msra.mxu0 %v1000
    %2417 = vmatprep.subr.bf16.mxu0 %v1005
    %2418 = vmatpush1.bf16.msra.mxu0 %v1004
    %2419 = vmatprep.subr.bf16.mxu0 %v1009
    %2420 = vmatpush1.bf16.msra.mxu0 %v1008
    %2421 = vmatprep.subr.bf16.mxu0 %v1013
    %2422 = vmatpush1.bf16.msra.mxu0 %v1012
    %2423 = vmatprep.subr.bf16.mxu0 0
    %2424 = vmatpush1.bf16.msra.mxu0 0
    %2425 = vmatprep.subr.bf16.mxu0 0
    %2426 = vmatpush1.bf16.msra.mxu0 0
    %2427 = vmatprep.subr.bf16.mxu0 0
    %2428 = vmatpush1.bf16.msra.mxu0 0
    %2429 = vmatprep.subr.bf16.mxu0 0
    %2430 = vmatpush1.bf16.msra.mxu0 0
    %2431 = vmatprep.subr.bf16.mxu0 0
    %2432 = vmatpush1.bf16.msra.mxu0 0
    %2433 = vmatprep.subr.bf16.mxu0 0
    %2434 = vmatpush1.bf16.msra.mxu0 0
    %2435 = vmatprep.subr.bf16.mxu0 0
    %2436 = vmatpush1.bf16.msra.mxu0 0
    %2437 = vmatprep.subr.bf16.mxu0 0
    %2438 = vmatpush1.bf16.msra.mxu0 0
    %2439 = vmatprep.mubr.bf16.mxu0 0
    %2440 = vmatmul.mubr.bf16.gmra.mrb[0].mxu0 %v2365
    %v2441 = vpop.f32.mrb[0].mxu0
    %v2442 = vadd.f32 0.0, %v2441
    %v2443 = vpop.f32.mrb[0].mxu0
    %v2444 = vadd.f32 0.0, %v2443
    %v2445 = vpop.f32.mrb[0].mxu0
    %v2446 = vpop.f32.mrb[0].mxu0
    %2447 = vdwg.mxu0
    %v2448 = vadd.f32 %v2361, %v2401
    %v2449 = vadd.f32 %v2362, %v2403
    %v2450 = vadd.f32 %v2363, %v2442
    %v2451 = vadd.f32 %v2364, %v2444
    %v2452 = vmul.f32 %v2448, 0.5
    %v2453 = vtanh.pop %v2452
    %v2454 = vmul.f32 %v2453, 0.5
    %v2455 = vadd.f32 %v2454, 0.5
    %v2456 = vmul.f32 %v2449, 0.5
    %v2457 = vtanh.pop %v2456
    %v2458 = vmul.f32 %v2457, 0.5
    %v2459 = vadd.f32 %v2458, 0.5
    %v2460 = vtanh.pop %v2450
    %v2461 = vmul.f32 %v2451, 0.5
    %v2462 = vtanh.pop %v2461
    %v2463 = vmul.f32 %v2462, 0.5
    %v2464 = vadd.f32 %v2463, 0.5
    %v2465 = vmul.f32 %v2459, %v2247
    %v2466 = vmul.f32 %v2455, %v2460
    %v2467 = vadd.f32 %v2465, %v2466
    %v2468 = vtanh.pop %v2467
    %v2469 = vmul.f32 %v2464, %v2468
    %2470 = vst [vmem:[#allocation4 + $0x60] sm:$0xff] %v2360
    %2471 = vst [vmem:[#allocation4 + $0x18] sm:$0xff] %v2469
    %v2472 = vld [vmem:[#allocation2 + $0xe0] sm:$0xff]
    %v2473 = vld [vmem:[#allocation2 + $0xe8] sm:$0xff]
    %v2474 = vld [vmem:[#allocation2 + $0xf0] sm:$0xff]
    %v2475 = vld [vmem:[#allocation2 + $0xf8] sm:$0xff]
    %v2476 = vpack.c.bf16 %v2360, %v2360
    %2477 = vmatprep.subr.bf16.mxu0 %v715
    %2478 = vmatpush1.bf16.msra.mxu0 %v714
    %2479 = vmatprep.subr.bf16.mxu0 %v719
    %2480 = vmatpush1.bf16.msra.mxu0 %v718
    %2481 = vmatprep.subr.bf16.mxu0 %v723
    %2482 = vmatpush1.bf16.msra.mxu0 %v722
    %2483 = vmatprep.subr.bf16.mxu0 %v727
    %2484 = vmatpush1.bf16.msra.mxu0 %v726
    %2485 = vmatprep.subr.bf16.mxu0 %v731
    %2486 = vmatpush1.bf16.msra.mxu0 %v730
    %2487 = vmatprep.subr.bf16.mxu0 %v735
    %2488 = vmatpush1.bf16.msra.mxu0 %v734
    %2489 = vmatprep.subr.bf16.mxu0 %v739
    %2490 = vmatpush1.bf16.msra.mxu0 %v738
    %2491 = vmatprep.subr.bf16.mxu0 %v743
    %2492 = vmatpush1.bf16.msra.mxu0 %v742
    %2493 = vmatprep.subr.bf16.mxu0 0
    %2494 = vmatpush1.bf16.msra.mxu0 0
    %2495 = vmatprep.subr.bf16.mxu0 0
    %2496 = vmatpush1.bf16.msra.mxu0 0
    %2497 = vmatprep.subr.bf16.mxu0 0
    %2498 = vmatpush1.bf16.msra.mxu0 0
    %2499 = vmatprep.subr.bf16.mxu0 0
    %2500 = vmatpush1.bf16.msra.mxu0 0
    %2501 = vmatprep.subr.bf16.mxu0 0
    %2502 = vmatpush1.bf16.msra.mxu0 0
    %2503 = vmatprep.subr.bf16.mxu0 0
    %2504 = vmatpush1.bf16.msra.mxu0 0
    %2505 = vmatprep.subr.bf16.mxu0 0
    %2506 = vmatpush1.bf16.msra.mxu0 0
    %2507 = vmatprep.subr.bf16.mxu0 0
    %2508 = vmatpush1.bf16.msra.mxu0 0
    %2509 = vmatprep.mubr.bf16.mxu0 0
    %2510 = vmatmul.mubr.bf16.gmra.mrb[0].mxu0 %v2476
    %v2511 = vpop.f32.mrb[0].mxu0
    %v2512 = vadd.f32 0.0, %v2511
    %v2513 = vpop.f32.mrb[0].mxu0
    %v2514 = vadd.f32 0.0, %v2513
    %v2515 = vpop.f32.mrb[0].mxu0
    %v2516 = vpop.f32.mrb[0].mxu0
    %2517 = vdwg.mxu0
    %2518 = vmatprep.subr.bf16.mxu0 %v717
    %2519 = vmatpush1.bf16.msra.mxu0 %v716
    %2520 = vmatprep.subr.bf16.mxu0 %v721
    %2521 = vmatpush1.bf16.msra.mxu0 %v720
    %2522 = vmatprep.subr.bf16.mxu0 %v725
    %2523 = vmatpush1.bf16.msra.mxu0 %v724
    %2524 = vmatprep.subr.bf16.mxu0 %v729
    %2525 = vmatpush1.bf16.msra.mxu0 %v728
    %2526 = vmatprep.subr.bf16.mxu0 %v733
    %2527 = vmatpush1.bf16.msra.mxu0 %v732
    %2528 = vmatprep.subr.bf16.mxu0 %v737
    %2529 = vmatpush1.bf16.msra.mxu0 %v736
    %2530 = vmatprep.subr.bf16.mxu0 %v741
    %2531 = vmatpush1.bf16.msra.mxu0 %v740
    %2532 = vmatprep.subr.bf16.mxu0 %v745
    %2533 = vmatpush1.bf16.msra.mxu0 %v744
    %2534 = vmatprep.subr.bf16.mxu0 0
    %2535 = vmatpush1.bf16.msra.mxu0 0
    %2536 = vmatprep.subr.bf16.mxu0 0
    %2537 = vmatpush1.bf16.msra.mxu0 0
    %2538 = vmatprep.subr.bf16.mxu0 0
    %2539 = vmatpush1.bf16.msra.mxu0 0
    %2540 = vmatprep.subr.bf16.mxu0 0
    %2541 = vmatpush1.bf16.msra.mxu0 0
    %2542 = vmatprep.subr.bf16.mxu0 0
    %2543 = vmatpush1.bf16.msra.mxu0 0
    %2544 = vmatprep.subr.bf16.mxu0 0
    %2545 = vmatpush1.bf16.msra.mxu0 0
    %2546 = vmatprep.subr.bf16.mxu0 0
    %2547 = vmatpush1.bf16.msra.mxu0 0
    %2548 = vmatprep.subr.bf16.mxu0 0
    %2549 = vmatpush1.bf16.msra.mxu0 0
    %2550 = vmatprep.mubr.bf16.mxu0 0
    %2551 = vmatmul.mubr.bf16.gmra.mrb[0].mxu0 %v2476
    %v2552 = vpop.f32.mrb[0].mxu0
    %v2553 = vadd.f32 0.0, %v2552
    %v2554 = vpop.f32.mrb[0].mxu0
    %v2555 = vadd.f32 0.0, %v2554
    %v2556 = vpop.f32.mrb[0].mxu0
    %v2557 = vpop.f32.mrb[0].mxu0
    %2558 = vdwg.mxu0
    %v2559 = vadd.f32 %v2472, %v2512
    %v2560 = vadd.f32 %v2473, %v2514
    %v2561 = vadd.f32 %v2474, %v2553
    %v2562 = vadd.f32 %v2475, %v2555
    %v2563 = vmul.f32 %v2559, 0.5
    %v2564 = vtanh.pop %v2563
    %v2565 = vmul.f32 %v2564, 0.5
    %v2566 = vadd.f32 %v2565, 0.5
    %v2567 = vmul.f32 %v2560, 0.5
    %v2568 = vtanh.pop %v2567
    %v2569 = vmul.f32 %v2568, 0.5
    %v2570 = vadd.f32 %v2569, 0.5
    %v2571 = vtanh.pop %v2561
    %v2572 = vmul.f32 %v2562, 0.5
    %v2573 = vtanh.pop %v2572
    %v2574 = vmul.f32 %v2573, 0.5
    %v2575 = vadd.f32 %v2574, 0.5
    %v2576 = vmul.f32 %v2570, %v2358
    %v2577 = vmul.f32 %v2566, %v2571
    %v2578 = vadd.f32 %v2576, %v2577
    %v2579 = vtanh.pop %v2578
    %v2580 = vmul.f32 %v2575, %v2579
    %v2581 = vld [vmem:[#allocation3] sm:$0xff]
    %v2582 = vld [vmem:[#allocation3 + $0x8] sm:$0xff]
    %v2583 = vld [vmem:[#allocation3 + $0x10] sm:$0xff]
    %v2584 = vld [vmem:[#allocation3 + $0x18] sm:$0xff]
    %v2585 = vpack.c.bf16 %v2469, %v2469
    %2586 = vmatprep.subr.bf16.mxu0 %v983
    %2587 = vmatpush1.bf16.msra.mxu0 %v982
    %2588 = vmatprep.subr.bf16.mxu0 %v987
    %2589 = vmatpush1.bf16.msra.mxu0 %v986
    %2590 = vmatprep.subr.bf16.mxu0 %v991
    %2591 = vmatpush1.bf16.msra.mxu0 %v990
    %2592 = vmatprep.subr.bf16.mxu0 %v995
    %2593 = vmatpush1.bf16.msra.mxu0 %v994
    %2594 = vmatprep.subr.bf16.mxu0 %v999
    %2595 = vmatpush1.bf16.msra.mxu0 %v998
    %2596 = vmatprep.subr.bf16.mxu0 %v1003
    %2597 = vmatpush1.bf16.msra.mxu0 %v1002
    %2598 = vmatprep.subr.bf16.mxu0 %v1007
    %2599 = vmatpush1.bf16.msra.mxu0 %v1006
    %2600 = vmatprep.subr.bf16.mxu0 %v1011
    %2601 = vmatpush1.bf16.msra.mxu0 %v1010
    %2602 = vmatprep.subr.bf16.mxu0 0
    %2603 = vmatpush1.bf16.msra.mxu0 0
    %2604 = vmatprep.subr.bf16.mxu0 0
    %2605 = vmatpush1.bf16.msra.mxu0 0
    %2606 = vmatprep.subr.bf16.mxu0 0
    %2607 = vmatpush1.bf16.msra.mxu0 0
    %2608 = vmatprep.subr.bf16.mxu0 0
    %2609 = vmatpush1.bf16.msra.mxu0 0
    %2610 = vmatprep.subr.bf16.mxu0 0
    %2611 = vmatpush1.bf16.msra.mxu0 0
    %2612 = vmatprep.subr.bf16.mxu0 0
    %2613 = vmatpush1.bf16.msra.mxu0 0
    %2614 = vmatprep.subr.bf16.mxu0 0
    %2615 = vmatpush1.bf16.msra.mxu0 0
    %2616 = vmatprep.subr.bf16.mxu0 0
    %2617 = vmatpush1.bf16.msra.mxu0 0
    %2618 = vmatprep.mubr.bf16.mxu0 0
    %2619 = vmatmul.mubr.bf16.gmra.mrb[0].mxu0 %v2585
    %v2620 = vpop.f32.mrb[0].mxu0
    %v2621 = vadd.f32 0.0, %v2620
    %v2622 = vpop.f32.mrb[0].mxu0
    %v2623 = vadd.f32 0.0, %v2622
    %v2624 = vpop.f32.mrb[0].mxu0
    %v2625 = vpop.f32.mrb[0].mxu0
    %2626 = vdwg.mxu0
    %2627 = vmatprep.subr.bf16.mxu0 %v985
    %2628 = vmatpush1.bf16.msra.mxu0 %v984
    %2629 = vmatprep.subr.bf16.mxu0 %v989
    %2630 = vmatpush1.bf16.msra.mxu0 %v988
    %2631 = vmatprep.subr.bf16.mxu0 %v993
    %2632 = vmatpush1.bf16.msra.mxu0 %v992
    %2633 = vmatprep.subr.bf16.mxu0 %v997
    %2634 = vmatpush1.bf16.msra.mxu0 %v996
    %2635 = vmatprep.subr.bf16.mxu0 %v1001
    %2636 = vmatpush1.bf16.msra.mxu0 %v1000
    %2637 = vmatprep.subr.bf16.mxu0 %v1005
    %2638 = vmatpush1.bf16.msra.mxu0 %v1004
    %2639 = vmatprep.subr.bf16.mxu0 %v1009
    %2640 = vmatpush1.bf16.msra.mxu0 %v1008
    %2641 = vmatprep.subr.bf16.mxu0 %v1013
    %2642 = vmatpush1.bf16.msra.mxu0 %v1012
    %2643 = vmatprep.subr.bf16.mxu0 0
    %2644 = vmatpush1.bf16.msra.mxu0 0
    %2645 = vmatprep.subr.bf16.mxu0 0
    %2646 = vmatpush1.bf16.msra.mxu0 0
    %2647 = vmatprep.subr.bf16.mxu0 0
    %2648 = vmatpush1.bf16.msra.mxu0 0
    %2649 = vmatprep.subr.bf16.mxu0 0
    %2650 = vmatpush1.bf16.msra.mxu0 0
    %2651 = vmatprep.subr.bf16.mxu0 0
    %2652 = vmatpush1.bf16.msra.mxu0 0
    %2653 = vmatprep.subr.bf16.mxu0 0
    %2654 = vmatpush1.bf16.msra.mxu0 0
    %2655 = vmatprep.subr.bf16.mxu0 0
    %2656 = vmatpush1.bf16.msra.mxu0 0
    %2657 = vmatprep.subr.bf16.mxu0 0
    %2658 = vmatpush1.bf16.msra.mxu0 0
    %2659 = vmatprep.mubr.bf16.mxu0 0
    %2660 = vmatmul.mubr.bf16.gmra.mrb[0].mxu0 %v2585
    %v2661 = vpop.f32.mrb[0].mxu0
    %v2662 = vadd.f32 0.0, %v2661
    %v2663 = vpop.f32.mrb[0].mxu0
    %v2664 = vadd.f32 0.0, %v2663
    %v2665 = vpop.f32.mrb[0].mxu0
    %v2666 = vpop.f32.mrb[0].mxu0
    %2667 = vdwg.mxu0
    %v2668 = vadd.f32 %v2581, %v2621
    %v2669 = vadd.f32 %v2582, %v2623
    %v2670 = vadd.f32 %v2583, %v2662
    %v2671 = vadd.f32 %v2584, %v2664
    %v2672 = vmul.f32 %v2668, 0.5
    %v2673 = vtanh.pop %v2672
    %v2674 = vmul.f32 %v2673, 0.5
    %v2675 = vadd.f32 %v2674, 0.5
    %v2676 = vmul.f32 %v2669, 0.5
    %v2677 = vtanh.pop %v2676
    %v2678 = vmul.f32 %v2677, 0.5
    %v2679 = vadd.f32 %v2678, 0.5
    %v2680 = vtanh.pop %v2670
    %v2681 = vmul.f32 %v2671, 0.5
    %v2682 = vtanh.pop %v2681
    %v2683 = vmul.f32 %v2682, 0.5
    %v2684 = vadd.f32 %v2683, 0.5
    %v2685 = vmul.f32 %v2679, %v2467
    %v2686 = vmul.f32 %v2675, %v2680
    %v2687 = vadd.f32 %v2685, %v2686
    %v2688 = vtanh.pop %v2687
    %v2689 = vmul.f32 %v2684, %v2688
    %2690 = vst [vmem:[#allocation4 + $0x70] sm:$0xff] %v2580
    %2691 = vst [vmem:[#allocation4 + $0x8] sm:$0xff] %v2689
    %2692 = vst [vmem:[#allocation16] sm:$0xff] %v2580
    %s2693 = scalar_lea.vmem [#allocation16], 8
    %2694 = vst [vmem:[%s2693] sm:$0xff] %v2578
    %s2695 = scalar_lea.vmem [#allocation16], 16
    %2696 = vst [vmem:[%s2695] sm:$0xff] %v2689
    %s2697 = scalar_lea.vmem [#allocation16], 24
    %2698 = vst [vmem:[%s2697] sm:$0xff] %v2687
    %v2699 = vld [vmem:[#allocation4] sm:$0xff]
    %v2700 = vld [vmem:[#allocation4 + $0x8] sm:$0xff]
    %v2701 = vld [vmem:[#allocation4 + $0x10] sm:$0xff]
    %v2702 = vld [vmem:[#allocation4 + $0x18] sm:$0xff]
    %v2703 = vld [vmem:[#allocation4 + $0x20] sm:$0xff]
    %v2704 = vld [vmem:[#allocation4 + $0x28] sm:$0xff]
    %v2705 = vld [vmem:[#allocation4 + $0x30] sm:$0xff]
    %v2706 = vld [vmem:[#allocation4 + $0x38] sm:$0xff]
    %v2707 = vld [vmem:[#allocation4 + $0x40] sm:$0xff]
    %v2708 = vld [vmem:[#allocation4 + $0x48] sm:$0xff]
    %v2709 = vld [vmem:[#allocation4 + $0x50] sm:$0xff]
    %v2710 = vld [vmem:[#allocation4 + $0x58] sm:$0xff]
    %v2711 = vld [vmem:[#allocation4 + $0x60] sm:$0xff]
    %v2712 = vld [vmem:[#allocation4 + $0x68] sm:$0xff]
    %v2713 = vld [vmem:[#allocation4 + $0x70] sm:$0xff]
    %v2714 = vld [vmem:[#allocation4 + $0x78] sm:$0xff]
    %v2715 = vpack.c.bf16 %v2701, %v2699
    %v2716 = vpack.c.bf16 %v2702, %v2700
    %v2717 = vpack.c.bf16 %v2705, %v2703
    %v2718 = vpack.c.bf16 %v2706, %v2704
    %v2719 = vpack.c.bf16 %v2709, %v2707
    %v2720 = vpack.c.bf16 %v2710, %v2708
    %v2721 = vpack.c.bf16 %v2713, %v2711
    %v2722 = vpack.c.bf16 %v2714, %v2712
    %v2723 = vld [vmem:[#allocation7 + $0x240] sm:$0xff]
    %v2724 = vld [vmem:[#allocation7 + $0x248] sm:$0xff]
    %v2725 = vld [vmem:[#allocation7 + $0x250] sm:$0xff]
    %v2726 = vld [vmem:[#allocation7 + $0x258] sm:$0xff]
    %v2727 = vld [vmem:[#allocation7 + $0x260] sm:$0xff]
    %v2728 = vld [vmem:[#allocation7 + $0x268] sm:$0xff]
    %v2729 = vld [vmem:[#allocation7 + $0x270] sm:$0xff]
    %v2730 = vld [vmem:[#allocation7 + $0x278] sm:$0xff]
    %v2731 = vld [vmem:[#allocation7 + $0x280] sm:$0xff]
    %v2732 = vld [vmem:[#allocation7 + $0x288] sm:$0xff]
    %v2733 = vld [vmem:[#allocation7 + $0x290] sm:$0xff]
    %v2734 = vld [vmem:[#allocation7 + $0x298] sm:$0xff]
    %v2735 = vld [vmem:[#allocation7 + $0x2a0] sm:$0xff]
    %v2736 = vld [vmem:[#allocation7 + $0x2a8] sm:$0xff]
    %v2737 = vld [vmem:[#allocation7 + $0x2b0] sm:$0xff]
    %v2738 = vld [vmem:[#allocation7 + $0x2b8] sm:$0xff]
    %v2739 = vld [vmem:[#allocation7 + $0x2c0] sm:$0xff]
    %v2740 = vld [vmem:[#allocation7 + $0x2c8] sm:$0xff]
    %v2741 = vld [vmem:[#allocation7 + $0x2d0] sm:$0xff]
    %v2742 = vld [vmem:[#allocation7 + $0x2d8] sm:$0xff]
    %v2743 = vld [vmem:[#allocation7 + $0x2e0] sm:$0xff]
    %v2744 = vld [vmem:[#allocation7 + $0x2e8] sm:$0xff]
    %v2745 = vld [vmem:[#allocation7 + $0x2f0] sm:$0xff]
    %v2746 = vld [vmem:[#allocation7 + $0x2f8] sm:$0xff]
    %v2747 = vld [vmem:[#allocation7 + $0x300] sm:$0xff]
    %v2748 = vld [vmem:[#allocation7 + $0x308] sm:$0xff]
    %v2749 = vld [vmem:[#allocation7 + $0x310] sm:$0xff]
    %v2750 = vld [vmem:[#allocation7 + $0x318] sm:$0xff]
    %v2751 = vld [vmem:[#allocation7 + $0x320] sm:$0xff]
    %v2752 = vld [vmem:[#allocation7 + $0x328] sm:$0xff]
    %v2753 = vld [vmem:[#allocation7 + $0x330] sm:$0xff]
    %v2754 = vld [vmem:[#allocation7 + $0x338] sm:$0xff]
    %v2755 = vld [vmem:[#allocation7 + $0x340] sm:$0xff]
    %v2756 = vld [vmem:[#allocation7 + $0x348] sm:$0xff]
    %v2757 = vld [vmem:[#allocation7 + $0x350] sm:$0xff]
    %v2758 = vld [vmem:[#allocation7 + $0x358] sm:$0xff]
    %v2759 = vld [vmem:[#allocation7 + $0x360] sm:$0xff]
    %v2760 = vld [vmem:[#allocation7 + $0x368] sm:$0xff]
    %v2761 = vld [vmem:[#allocation7 + $0x370] sm:$0xff]
    %v2762 = vld [vmem:[#allocation7 + $0x378] sm:$0xff]
    %v2763 = vld [vmem:[#allocation7 + $0x380] sm:$0xff]
    %v2764 = vld [vmem:[#allocation7 + $0x388] sm:$0xff]
    %v2765 = vld [vmem:[#allocation7 + $0x390] sm:$0xff]
    %v2766 = vld [vmem:[#allocation7 + $0x398] sm:$0xff]
    %v2767 = vld [vmem:[#allocation7 + $0x3a0] sm:$0xff]
    %v2768 = vld [vmem:[#allocation7 + $0x3a8] sm:$0xff]
    %v2769 = vld [vmem:[#allocation7 + $0x3b0] sm:$0xff]
    %v2770 = vld [vmem:[#allocation7 + $0x3b8] sm:$0xff]
    %v2771 = vld [vmem:[#allocation7 + $0x3c0] sm:$0xff]
    %v2772 = vld [vmem:[#allocation7 + $0x3c8] sm:$0xff]
    %v2773 = vld [vmem:[#allocation7 + $0x3d0] sm:$0xff]
    %v2774 = vld [vmem:[#allocation7 + $0x3d8] sm:$0xff]
    %v2775 = vld [vmem:[#allocation7 + $0x3e0] sm:$0xff]
    %v2776 = vld [vmem:[#allocation7 + $0x3e8] sm:$0xff]
    %v2777 = vld [vmem:[#allocation7 + $0x3f0] sm:$0xff]
    %v2778 = vld [vmem:[#allocation7 + $0x3f8] sm:$0xff]
    %v2779 = vld [vmem:[#allocation7 + $0x400] sm:$0xff]
    %v2780 = vld [vmem:[#allocation7 + $0x408] sm:$0xff]
    %v2781 = vld [vmem:[#allocation7 + $0x410] sm:$0xff]
    %v2782 = vld [vmem:[#allocation7 + $0x418] sm:$0xff]
    %v2783 = vld [vmem:[#allocation7 + $0x420] sm:$0xff]
    %v2784 = vld [vmem:[#allocation7 + $0x428] sm:$0xff]
    %v2785 = vld [vmem:[#allocation7 + $0x430] sm:$0xff]
    %v2786 = vld [vmem:[#allocation7 + $0x438] sm:$0xff]
    %s2787 = scalar_lea.vmem [#allocation10], 2
    %v2788 = vld [vmem:[%s2787] ss:$4 sm:$0xf]
    %v2790 = vlaneseq
    %v2791 = vshrl.u32 %v2790, 7
    %v2792 = vsub.s32 0, %v2791
    %v2793 = vrot.slane %v2788, %v2792
    %v2794 = vlaneseq
    %v2795 = vshrl.u32 %v2794, 7
    %v2796 = vsub.s32 1, %v2795
    %v2797 = vrot.slane %v2788, %v2796
    %v2798 = vlaneseq
    %v2799 = vshrl.u32 %v2798, 7
    %v2800 = vsub.s32 2, %v2799
    %v2801 = vrot.slane %v2788, %v2800
    %v2802 = vlaneseq
    %v2803 = vshrl.u32 %v2802, 7
    %v2804 = vsub.s32 3, %v2803
    %v2805 = vrot.slane %v2788, %v2804
    %v2874 = vunpack.c.l.b16 %v2723
    %v2875 = vunpack.c.h.b16 %v2723
    %v2876 = vunpack.c.l.b16 %v2724
    %v2877 = vunpack.c.h.b16 %v2724
    %v2878 = vunpack.c.l.b16 %v2725
    %v2879 = vunpack.c.h.b16 %v2725
    %v2880 = vunpack.c.l.b16 %v2726
    %v2881 = vunpack.c.h.b16 %v2726
    %v2882 = vunpack.c.l.b16 %v2727
    %v2883 = vunpack.c.h.b16 %v2727
    %v2884 = vunpack.c.l.b16 %v2728
    %v2885 = vunpack.c.h.b16 %v2728
    %v2886 = vunpack.c.l.b16 %v2729
    %v2887 = vunpack.c.h.b16 %v2729
    %v2888 = vunpack.c.l.b16 %v2730
    %v2889 = vunpack.c.h.b16 %v2730
    %v2890 = vunpack.c.l.b16 %v2731
    %v2891 = vunpack.c.h.b16 %v2731
    %v2892 = vunpack.c.l.b16 %v2732
    %v2893 = vunpack.c.h.b16 %v2732
    %v2894 = vunpack.c.l.b16 %v2733
    %v2895 = vunpack.c.h.b16 %v2733
    %v2896 = vunpack.c.l.b16 %v2734
    %v2897 = vunpack.c.h.b16 %v2734
    %v2898 = vunpack.c.l.b16 %v2735
    %v2899 = vunpack.c.h.b16 %v2735
    %v2900 = vunpack.c.l.b16 %v2736
    %v2901 = vunpack.c.h.b16 %v2736
    %v2902 = vunpack.c.l.b16 %v2737
    %v2903 = vunpack.c.h.b16 %v2737
    %v2904 = vunpack.c.l.b16 %v2738
    %v2905 = vunpack.c.h.b16 %v2738
    %v2906 = vunpack.c.l.b16 %v2739
    %v2907 = vunpack.c.h.b16 %v2739
    %v2908 = vunpack.c.l.b16 %v2740
    %v2909 = vunpack.c.h.b16 %v2740
    %v2910 = vunpack.c.l.b16 %v2741
    %v2911 = vunpack.c.h.b16 %v2741
    %v2912 = vunpack.c.l.b16 %v2742
    %v2913 = vunpack.c.h.b16 %v2742
    %v2914 = vunpack.c.l.b16 %v2743
    %v2915 = vunpack.c.h.b16 %v2743
    %v2916 = vunpack.c.l.b16 %v2744
    %v2917 = vunpack.c.h.b16 %v2744
    %v2918 = vunpack.c.l.b16 %v2745
    %v2919 = vunpack.c.h.b16 %v2745
    %v2920 = vunpack.c.l.b16 %v2746
    %v2921 = vunpack.c.h.b16 %v2746
    %v2922 = vunpack.c.l.b16 %v2747
    %v2923 = vunpack.c.h.b16 %v2747
    %v2924 = vunpack.c.l.b16 %v2748
    %v2925 = vunpack.c.h.b16 %v2748
    %v2926 = vunpack.c.l.b16 %v2749
    %v2927 = vunpack.c.h.b16 %v2749
    %v2928 = vunpack.c.l.b16 %v2750
    %v2929 = vunpack.c.h.b16 %v2750
    %v2930 = vunpack.c.l.b16 %v2751
    %v2931 = vunpack.c.h.b16 %v2751
    %v2932 = vunpack.c.l.b16 %v2752
    %v2933 = vunpack.c.h.b16 %v2752
    %v2934 = vunpack.c.l.b16 %v2753
    %v2935 = vunpack.c.h.b16 %v2753
    %v2936 = vunpack.c.l.b16 %v2754
    %v2937 = vunpack.c.h.b16 %v2754
    %v2938 = vunpack.c.l.b16 %v2755
    %v2939 = vunpack.c.h.b16 %v2755
    %v2940 = vunpack.c.l.b16 %v2756
    %v2941 = vunpack.c.h.b16 %v2756
    %v2942 = vunpack.c.l.b16 %v2757
    %v2943 = vunpack.c.h.b16 %v2757
    %v2944 = vunpack.c.l.b16 %v2758
    %v2945 = vunpack.c.h.b16 %v2758
    %v2946 = vunpack.c.l.b16 %v2759
    %v2947 = vunpack.c.h.b16 %v2759
    %v2948 = vunpack.c.l.b16 %v2760
    %v2949 = vunpack.c.h.b16 %v2760
    %v2950 = vunpack.c.l.b16 %v2761
    %v2951 = vunpack.c.h.b16 %v2761
    %v2952 = vunpack.c.l.b16 %v2762
    %v2953 = vunpack.c.h.b16 %v2762
    %v2954 = vunpack.c.l.b16 %v2763
    %v2955 = vunpack.c.h.b16 %v2763
    %v2956 = vunpack.c.l.b16 %v2764
    %v2957 = vunpack.c.h.b16 %v2764
    %v2958 = vunpack.c.l.b16 %v2765
    %v2959 = vunpack.c.h.b16 %v2765
    %v2960 = vunpack.c.l.b16 %v2766
    %v2961 = vunpack.c.h.b16 %v2766
    %v2962 = vunpack.c.l.b16 %v2767
    %v2963 = vunpack.c.h.b16 %v2767
    %v2964 = vunpack.c.l.b16 %v2768
    %v2965 = vunpack.c.h.b16 %v2768
    %v2966 = vunpack.c.l.b16 %v2769
    %v2967 = vunpack.c.h.b16 %v2769
    %v2968 = vunpack.c.l.b16 %v2770
    %v2969 = vunpack.c.h.b16 %v2770
    %v2970 = vunpack.c.l.b16 %v2771
    %v2971 = vunpack.c.h.b16 %v2771
    %v2972 = vunpack.c.l.b16 %v2772
    %v2973 = vunpack.c.h.b16 %v2772
    %v2974 = vunpack.c.l.b16 %v2773
    %v2975 = vunpack.c.h.b16 %v2773
    %v2976 = vunpack.c.l.b16 %v2774
    %v2977 = vunpack.c.h.b16 %v2774
    %v2978 = vunpack.c.l.b16 %v2775
    %v2979 = vunpack.c.h.b16 %v2775
    %v2980 = vunpack.c.l.b16 %v2776
    %v2981 = vunpack.c.h.b16 %v2776
    %v2982 = vunpack.c.l.b16 %v2777
    %v2983 = vunpack.c.h.b16 %v2777
    %v2984 = vunpack.c.l.b16 %v2778
    %v2985 = vunpack.c.h.b16 %v2778
    %v2986 = vunpack.c.l.b16 %v2779
    %v2987 = vunpack.c.h.b16 %v2779
    %v2988 = vunpack.c.l.b16 %v2780
    %v2989 = vunpack.c.h.b16 %v2780
    %v2990 = vunpack.c.l.b16 %v2781
    %v2991 = vunpack.c.h.b16 %v2781
    %v2992 = vunpack.c.l.b16 %v2782
    %v2993 = vunpack.c.h.b16 %v2782
    %v2994 = vunpack.c.l.b16 %v2783
    %v2995 = vunpack.c.h.b16 %v2783
    %v2996 = vunpack.c.l.b16 %v2784
    %v2997 = vunpack.c.h.b16 %v2784
    %v2998 = vunpack.c.l.b16 %v2785
    %v2999 = vunpack.c.h.b16 %v2785
    %v3000 = vunpack.c.l.b16 %v2786
    %v3001 = vunpack.c.h.b16 %v2786
    %v3002 = vpack.c.b16 %v2878, %v2874
    %v3003 = vpack.c.b16 %v2879, %v2875
    %v3004 = vpack.c.b16 %v2880, %v2876
    %v3005 = vpack.c.b16 %v2881, %v2877
    %v3006 = vpack.c.b16 %v2886, %v2882
    %v3007 = vpack.c.b16 %v2887, %v2883
    %v3008 = vpack.c.b16 %v2888, %v2884
    %v3009 = vpack.c.b16 %v2889, %v2885
    %v3010 = vpack.c.b16 %v2894, %v2890
    %v3011 = vpack.c.b16 %v2895, %v2891
    %v3012 = vpack.c.b16 %v2896, %v2892
    %v3013 = vpack.c.b16 %v2897, %v2893
    %v3014 = vpack.c.b16 %v2902, %v2898
    %v3015 = vpack.c.b16 %v2903, %v2899
    %v3016 = vpack.c.b16 %v2904, %v2900
    %v3017 = vpack.c.b16 %v2905, %v2901
    %v3018 = vpack.c.b16 %v2910, %v2906
    %v3019 = vpack.c.b16 %v2911, %v2907
    %v3020 = vpack.c.b16 %v2912, %v2908
    %v3021 = vpack.c.b16 %v2913, %v2909
    %v3022 = vpack.c.b16 %v2918, %v2914
    %v3023 = vpack.c.b16 %v2919, %v2915
    %v3024 = vpack.c.b16 %v2920, %v2916
    %v3025 = vpack.c.b16 %v2921, %v2917
    %v3026 = vpack.c.b16 %v2926, %v2922
    %v3027 = vpack.c.b16 %v2927, %v2923
    %v3028 = vpack.c.b16 %v2928, %v2924
    %v3029 = vpack.c.b16 %v2929, %v2925
    %v3030 = vpack.c.b16 %v2934, %v2930
    %v3031 = vpack.c.b16 %v2935, %v2931
    %v3032 = vpack.c.b16 %v2936, %v2932
    %v3033 = vpack.c.b16 %v2937, %v2933
    %v3034 = vpack.c.b16 %v2942, %v2938
    %v3035 = vpack.c.b16 %v2943, %v2939
    %v3036 = vpack.c.b16 %v2944, %v2940
    %v3037 = vpack.c.b16 %v2945, %v2941
    %v3038 = vpack.c.b16 %v2950, %v2946
    %v3039 = vpack.c.b16 %v2951, %v2947
    %v3040 = vpack.c.b16 %v2952, %v2948
    %v3041 = vpack.c.b16 %v2953, %v2949
    %v3042 = vpack.c.b16 %v2958, %v2954
    %v3043 = vpack.c.b16 %v2959, %v2955
    %v3044 = vpack.c.b16 %v2960, %v2956
    %v3045 = vpack.c.b16 %v2961, %v2957
    %v3046 = vpack.c.b16 %v2966, %v2962
    %v3047 = vpack.c.b16 %v2967, %v2963
    %v3048 = vpack.c.b16 %v2968, %v2964
    %v3049 = vpack.c.b16 %v2969, %v2965
    %v3050 = vpack.c.b16 %v2974, %v2970
    %v3051 = vpack.c.b16 %v2975, %v2971
    %v3052 = vpack.c.b16 %v2976, %v2972
    %v3053 = vpack.c.b16 %v2977, %v2973
    %v3054 = vpack.c.b16 %v2982, %v2978
    %v3055 = vpack.c.b16 %v2983, %v2979
    %v3056 = vpack.c.b16 %v2984, %v2980
    %v3057 = vpack.c.b16 %v2985, %v2981
    %v3058 = vpack.c.b16 %v2990, %v2986
    %v3059 = vpack.c.b16 %v2991, %v2987
    %v3060 = vpack.c.b16 %v2992, %v2988
    %v3061 = vpack.c.b16 %v2993, %v2989
    %v3062 = vpack.c.b16 %v2998, %v2994
    %v3063 = vpack.c.b16 %v2999, %v2995
    %v3064 = vpack.c.b16 %v3000, %v2996
    %v3065 = vpack.c.b16 %v3001, %v2997
    %3130 = vmatprep.subr.bf16.mxu0 %v3003
    %3131 = vmatpush1.bf16.msra.mxu0 %v3002
    %3132 = vmatprep.subr.bf16.mxu0 %v3007
    %3133 = vmatpush1.bf16.msra.mxu0 %v3006
    %3134 = vmatprep.subr.bf16.mxu0 %v3011
    %3135 = vmatpush1.bf16.msra.mxu0 %v3010
    %3136 = vmatprep.subr.bf16.mxu0 %v3015
    %3137 = vmatpush1.bf16.msra.mxu0 %v3014
    %3138 = vmatprep.subr.bf16.mxu0 %v3019
    %3139 = vmatpush1.bf16.msra.mxu0 %v3018
    %3140 = vmatprep.subr.bf16.mxu0 %v3023
    %3141 = vmatpush1.bf16.msra.mxu0 %v3022
    %3142 = vmatprep.subr.bf16.mxu0 %v3027
    %3143 = vmatpush1.bf16.msra.mxu0 %v3026
    %3144 = vmatprep.subr.bf16.mxu0 %v3031
    %3145 = vmatpush1.bf16.msra.mxu0 %v3030
    %3146 = vmatprep.subr.bf16.mxu0 %v3035
    %3147 = vmatpush1.bf16.msra.mxu0 %v3034
    %3148 = vmatprep.subr.bf16.mxu0 %v3039
    %3149 = vmatpush1.bf16.msra.mxu0 %v3038
    %3150 = vmatprep.subr.bf16.mxu0 %v3043
    %3151 = vmatpush1.bf16.msra.mxu0 %v3042
    %3152 = vmatprep.subr.bf16.mxu0 %v3047
    %3153 = vmatpush1.bf16.msra.mxu0 %v3046
    %3154 = vmatprep.subr.bf16.mxu0 %v3051
    %3155 = vmatpush1.bf16.msra.mxu0 %v3050
    %3156 = vmatprep.subr.bf16.mxu0 %v3055
    %3157 = vmatpush1.bf16.msra.mxu0 %v3054
    %3158 = vmatprep.subr.bf16.mxu0 %v3059
    %3159 = vmatpush1.bf16.msra.mxu0 %v3058
    %3160 = vmatprep.subr.bf16.mxu0 %v3063
    %3161 = vmatpush1.bf16.msra.mxu0 %v3062
    %3162 = vmatprep.mubr.bf16.mxu0 %v2716
    %3163 = vmatmul.mubr.bf16.gmra.mrb[0].mxu0 %v2715
    %v3164 = vpop.f32.mrb[0].mxu0
    %v3165 = vadd.f32 %v2793, %v3164
    %v3166 = vpop.f32.mrb[0].mxu0
    %v3167 = vadd.f32 %v2797, %v3166
    %v3168 = vpop.f32.mrb[0].mxu0
    %v3169 = vadd.f32 %v2793, %v3168
    %v3170 = vpop.f32.mrb[0].mxu0
    %v3171 = vadd.f32 %v2797, %v3170
    %3172 = vmatprep.mubr.bf16.mxu0 %v2718
    %3173 = vmatmul.mubr.bf16.gmra.mrb[0].mxu0 %v2717
    %v3174 = vpop.f32.mrb[0].mxu0
    %v3175 = vadd.f32 %v2793, %v3174
    %v3176 = vpop.f32.mrb[0].mxu0
    %v3177 = vadd.f32 %v2797, %v3176
    %v3178 = vpop.f32.mrb[0].mxu0
    %v3179 = vadd.f32 %v2793, %v3178
    %v3180 = vpop.f32.mrb[0].mxu0
    %v3181 = vadd.f32 %v2797, %v3180
    %3182 = vmatprep.mubr.bf16.mxu0 %v2720
    %3183 = vmatmul.mubr.bf16.gmra.mrb[0].mxu0 %v2719
    %v3184 = vpop.f32.mrb[0].mxu0
    %v3185 = vadd.f32 %v2793, %v3184
    %v3186 = vpop.f32.mrb[0].mxu0
    %v3187 = vadd.f32 %v2797, %v3186
    %v3188 = vpop.f32.mrb[0].mxu0
    %v3189 = vadd.f32 %v2793, %v3188
    %v3190 = vpop.f32.mrb[0].mxu0
    %v3191 = vadd.f32 %v2797, %v3190
    %3192 = vmatprep.mubr.bf16.mxu0 %v2722
    %3193 = vmatmul.mubr.bf16.gmra.mrb[0].mxu0 %v2721
    %v3194 = vpop.f32.mrb[0].mxu0
    %v3195 = vadd.f32 %v2793, %v3194
    %v3196 = vpop.f32.mrb[0].mxu0
    %v3197 = vadd.f32 %v2797, %v3196
    %v3198 = vpop.f32.mrb[0].mxu0
    %v3199 = vadd.f32 %v2793, %v3198
    %v3200 = vpop.f32.mrb[0].mxu0
    %v3201 = vadd.f32 %v2797, %v3200
    %3202 = vdwg.mxu0
    %3203 = vmatprep.subr.bf16.mxu0 %v3005
    %3204 = vmatpush1.bf16.msra.mxu0 %v3004
    %3205 = vmatprep.subr.bf16.mxu0 %v3009
    %3206 = vmatpush1.bf16.msra.mxu0 %v3008
    %3207 = vmatprep.subr.bf16.mxu0 %v3013
    %3208 = vmatpush1.bf16.msra.mxu0 %v3012
    %3209 = vmatprep.subr.bf16.mxu0 %v3017
    %3210 = vmatpush1.bf16.msra.mxu0 %v3016
    %3211 = vmatprep.subr.bf16.mxu0 %v3021
    %3212 = vmatpush1.bf16.msra.mxu0 %v3020
    %3213 = vmatprep.subr.bf16.mxu0 %v3025
    %3214 = vmatpush1.bf16.msra.mxu0 %v3024
    %3215 = vmatprep.subr.bf16.mxu0 %v3029
    %3216 = vmatpush1.bf16.msra.mxu0 %v3028
    %3217 = vmatprep.subr.bf16.mxu0 %v3033
    %3218 = vmatpush1.bf16.msra.mxu0 %v3032
    %3219 = vmatprep.subr.bf16.mxu0 %v3037
    %3220 = vmatpush1.bf16.msra.mxu0 %v3036
    %3221 = vmatprep.subr.bf16.mxu0 %v3041
    %3222 = vmatpush1.bf16.msra.mxu0 %v3040
    %3223 = vmatprep.subr.bf16.mxu0 %v3045
    %3224 = vmatpush1.bf16.msra.mxu0 %v3044
    %3225 = vmatprep.subr.bf16.mxu0 %v3049
    %3226 = vmatpush1.bf16.msra.mxu0 %v3048
    %3227 = vmatprep.subr.bf16.mxu0 %v3053
    %3228 = vmatpush1.bf16.msra.mxu0 %v3052
    %3229 = vmatprep.subr.bf16.mxu0 %v3057
    %3230 = vmatpush1.bf16.msra.mxu0 %v3056
    %3231 = vmatprep.subr.bf16.mxu0 %v3061
    %3232 = vmatpush1.bf16.msra.mxu0 %v3060
    %3233 = vmatprep.subr.bf16.mxu0 %v3065
    %3234 = vmatpush1.bf16.msra.mxu0 %v3064
    %3235 = vmatprep.mubr.bf16.mxu0 %v2716
    %3236 = vmatmul.mubr.bf16.gmra.mrb[0].mxu0 %v2715
    %v3237 = vpop.f32.mrb[0].mxu0
    %v3238 = vadd.f32 %v2801, %v3237
    %v3239 = vpop.f32.mrb[0].mxu0
    %v3240 = vadd.f32 %v2805, %v3239
    %v3241 = vpop.f32.mrb[0].mxu0
    %v3242 = vadd.f32 %v2801, %v3241
    %v3243 = vpop.f32.mrb[0].mxu0
    %v3244 = vadd.f32 %v2805, %v3243
    %3245 = vmatprep.mubr.bf16.mxu0 %v2718
    %3246 = vmatmul.mubr.bf16.gmra.mrb[0].mxu0 %v2717
    %v3247 = vpop.f32.mrb[0].mxu0
    %v3248 = vadd.f32 %v2801, %v3247
    %v3249 = vpop.f32.mrb[0].mxu0
    %v3250 = vadd.f32 %v2805, %v3249
    %v3251 = vpop.f32.mrb[0].mxu0
    %v3252 = vadd.f32 %v2801, %v3251
    %v3253 = vpop.f32.mrb[0].mxu0
    %v3254 = vadd.f32 %v2805, %v3253
    %3255 = vmatprep.mubr.bf16.mxu0 %v2720
    %3256 = vmatmul.mubr.bf16.gmra.mrb[0].mxu0 %v2719
    %v3257 = vpop.f32.mrb[0].mxu0
    %v3258 = vadd.f32 %v2801, %v3257
    %v3259 = vpop.f32.mrb[0].mxu0
    %v3260 = vadd.f32 %v2805, %v3259
    %v3261 = vpop.f32.mrb[0].mxu0
    %v3262 = vadd.f32 %v2801, %v3261
    %v3263 = vpop.f32.mrb[0].mxu0
    %v3264 = vadd.f32 %v2805, %v3263
    %3265 = vmatprep.mubr.bf16.mxu0 %v2722
    %3266 = vmatmul.mubr.bf16.gmra.mrb[0].mxu0 %v2721
    %v3267 = vpop.f32.mrb[0].mxu0
    %v3268 = vadd.f32 %v2801, %v3267
    %v3269 = vpop.f32.mrb[0].mxu0
    %v3270 = vadd.f32 %v2805, %v3269
    %v3271 = vpop.f32.mrb[0].mxu0
    %v3272 = vadd.f32 %v2801, %v3271
    %v3273 = vpop.f32.mrb[0].mxu0
    %v3274 = vadd.f32 %v2805, %v3273
    %3275 = vdwg.mxu0
    %3276 = vst [vmem:[#allocation5] sm:$0xff] %v3165
    %3277 = vst [vmem:[#allocation5 + $0x8] sm:$0xff] %v3167
    %3278 = vst [vmem:[#allocation5 + $0x10] sm:$0xff] %v3238
    %3279 = vst [vmem:[#allocation5 + $0x18] sm:$0xff] %v3240
    %3280 = vst [vmem:[#allocation5 + $0x20] sm:$0xff] %v3169
    %3281 = vst [vmem:[#allocation5 + $0x28] sm:$0xff] %v3171
    %3282 = vst [vmem:[#allocation5 + $0x30] sm:$0xff] %v3242
    %3283 = vst [vmem:[#allocation5 + $0x38] sm:$0xff] %v3244
    %3284 = vst [vmem:[#allocation5 + $0x40] sm:$0xff] %v3175
    %3285 = vst [vmem:[#allocation5 + $0x48] sm:$0xff] %v3177
    %3286 = vst [vmem:[#allocation5 + $0x50] sm:$0xff] %v3248
    %3287 = vst [vmem:[#allocation5 + $0x58] sm:$0xff] %v3250
    %3288 = vst [vmem:[#allocation5 + $0x60] sm:$0xff] %v3179
    %3289 = vst [vmem:[#allocation5 + $0x68] sm:$0xff] %v3181
    %3290 = vst [vmem:[#allocation5 + $0x70] sm:$0xff] %v3252
    %3291 = vst [vmem:[#allocation5 + $0x78] sm:$0xff] %v3254
    %3292 = vst [vmem:[#allocation5 + $0x80] sm:$0xff] %v3185
    %3293 = vst [vmem:[#allocation5 + $0x88] sm:$0xff] %v3187
    %3294 = vst [vmem:[#allocation5 + $0x90] sm:$0xff] %v3258
    %3295 = vst [vmem:[#allocation5 + $0x98] sm:$0xff] %v3260
    %3296 = vst [vmem:[#allocation5 + $0xa0] sm:$0xff] %v3189
    %3297 = vst [vmem:[#allocation5 + $0xa8] sm:$0xff] %v3191
    %3298 = vst [vmem:[#allocation5 + $0xb0] sm:$0xff] %v3262
    %3299 = vst [vmem:[#allocation5 + $0xb8] sm:$0xff] %v3264
    %3300 = vst [vmem:[#allocation5 + $0xc0] sm:$0xff] %v3195
    %3301 = vst [vmem:[#allocation5 + $0xc8] sm:$0xff] %v3197
    %3302 = vst [vmem:[#allocation5 + $0xd0] sm:$0xff] %v3268
    %3303 = vst [vmem:[#allocation5 + $0xd8] sm:$0xff] %v3270
    %3304 = vst [vmem:[#allocation5 + $0xe0] sm:$0xff] %v3199
    %3305 = vst [vmem:[#allocation5 + $0xe8] sm:$0xff] %v3201
    %3306 = vst [vmem:[#allocation5 + $0xf0] sm:$0xff] %v3272
    %3307 = vst [vmem:[#allocation5 + $0xf8] sm:$0xff] %v3274
    %v3308 = vld [vmem:[#allocation7 + $0x440] sm:$0xff]
    %v3309 = vld [vmem:[#allocation7 + $0x448] sm:$0xff]
    %v3310 = vld [vmem:[#allocation7 + $0x450] sm:$0xff]
    %v3311 = vld [vmem:[#allocation7 + $0x458] sm:$0xff]
    %v3312 = vld [vmem:[#allocation7 + $0x460] sm:$0xff]
    %v3313 = vld [vmem:[#allocation7 + $0x468] sm:$0xff]
    %v3314 = vld [vmem:[#allocation7 + $0x470] sm:$0xff]
    %v3315 = vld [vmem:[#allocation7 + $0x478] sm:$0xff]
    %v3316 = vld [vmem:[#allocation7 + $0x480] sm:$0xff]
    %v3317 = vld [vmem:[#allocation7 + $0x488] sm:$0xff]
    %v3318 = vld [vmem:[#allocation7 + $0x490] sm:$0xff]
    %v3319 = vld [vmem:[#allocation7 + $0x498] sm:$0xff]
    %v3320 = vld [vmem:[#allocation7 + $0x4a0] sm:$0xff]
    %v3321 = vld [vmem:[#allocation7 + $0x4a8] sm:$0xff]
    %v3322 = vld [vmem:[#allocation7 + $0x4b0] sm:$0xff]
    %v3323 = vld [vmem:[#allocation7 + $0x4b8] sm:$0xff]
    %v3324 = vld [vmem:[#allocation7 + $0x4c0] sm:$0xff]
    %v3325 = vld [vmem:[#allocation7 + $0x4c8] sm:$0xff]
    %v3326 = vld [vmem:[#allocation7 + $0x4d0] sm:$0xff]
    %v3327 = vld [vmem:[#allocation7 + $0x4d8] sm:$0xff]
    %v3328 = vld [vmem:[#allocation7 + $0x4e0] sm:$0xff]
    %v3329 = vld [vmem:[#allocation7 + $0x4e8] sm:$0xff]
    %v3330 = vld [vmem:[#allocation7 + $0x4f0] sm:$0xff]
    %v3331 = vld [vmem:[#allocation7 + $0x4f8] sm:$0xff]
    %v3332 = vld [vmem:[#allocation7 + $0x500] sm:$0xff]
    %v3333 = vld [vmem:[#allocation7 + $0x508] sm:$0xff]
    %v3334 = vld [vmem:[#allocation7 + $0x510] sm:$0xff]
    %v3335 = vld [vmem:[#allocation7 + $0x518] sm:$0xff]
    %v3336 = vld [vmem:[#allocation7 + $0x520] sm:$0xff]
    %v3337 = vld [vmem:[#allocation7 + $0x528] sm:$0xff]
    %v3338 = vld [vmem:[#allocation7 + $0x530] sm:$0xff]
    %v3339 = vld [vmem:[#allocation7 + $0x538] sm:$0xff]
    %v3340 = vld [vmem:[#allocation7 + $0x540] sm:$0xff]
    %v3341 = vld [vmem:[#allocation7 + $0x548] sm:$0xff]
    %v3342 = vld [vmem:[#allocation7 + $0x550] sm:$0xff]
    %v3343 = vld [vmem:[#allocation7 + $0x558] sm:$0xff]
    %v3344 = vld [vmem:[#allocation7 + $0x560] sm:$0xff]
    %v3345 = vld [vmem:[#allocation7 + $0x568] sm:$0xff]
    %v3346 = vld [vmem:[#allocation7 + $0x570] sm:$0xff]
    %v3347 = vld [vmem:[#allocation7 + $0x578] sm:$0xff]
    %v3348 = vld [vmem:[#allocation7 + $0x580] sm:$0xff]
    %v3349 = vld [vmem:[#allocation7 + $0x588] sm:$0xff]
    %v3350 = vld [vmem:[#allocation7 + $0x590] sm:$0xff]
    %v3351 = vld [vmem:[#allocation7 + $0x598] sm:$0xff]
    %v3352 = vld [vmem:[#allocation7 + $0x5a0] sm:$0xff]
    %v3353 = vld [vmem:[#allocation7 + $0x5a8] sm:$0xff]
    %v3354 = vld [vmem:[#allocation7 + $0x5b0] sm:$0xff]
    %v3355 = vld [vmem:[#allocation7 + $0x5b8] sm:$0xff]
    %v3356 = vld [vmem:[#allocation7 + $0x5c0] sm:$0xff]
    %v3357 = vld [vmem:[#allocation7 + $0x5c8] sm:$0xff]
    %v3358 = vld [vmem:[#allocation7 + $0x5d0] sm:$0xff]
    %v3359 = vld [vmem:[#allocation7 + $0x5d8] sm:$0xff]
    %v3360 = vld [vmem:[#allocation7 + $0x5e0] sm:$0xff]
    %v3361 = vld [vmem:[#allocation7 + $0x5e8] sm:$0xff]
    %v3362 = vld [vmem:[#allocation7 + $0x5f0] sm:$0xff]
    %v3363 = vld [vmem:[#allocation7 + $0x5f8] sm:$0xff]
    %v3364 = vld [vmem:[#allocation7 + $0x600] sm:$0xff]
    %v3365 = vld [vmem:[#allocation7 + $0x608] sm:$0xff]
    %v3366 = vld [vmem:[#allocation7 + $0x610] sm:$0xff]
    %v3367 = vld [vmem:[#allocation7 + $0x618] sm:$0xff]
    %v3368 = vld [vmem:[#allocation7 + $0x620] sm:$0xff]
    %v3369 = vld [vmem:[#allocation7 + $0x628] sm:$0xff]
    %v3370 = vld [vmem:[#allocation7 + $0x630] sm:$0xff]
    %v3371 = vld [vmem:[#allocation7 + $0x638] sm:$0xff]
    %s3372 = scalar_lea.vmem [#allocation10], 3
    %v3373 = vld [vmem:[%s3372] ss:$4 sm:$0xf]
    %v3375 = vlaneseq
    %v3376 = vshrl.u32 %v3375, 7
    %v3377 = vsub.s32 0, %v3376
    %v3378 = vrot.slane %v3373, %v3377
    %v3379 = vlaneseq
    %v3380 = vshrl.u32 %v3379, 7
    %v3381 = vsub.s32 1, %v3380
    %v3382 = vrot.slane %v3373, %v3381
    %v3383 = vlaneseq
    %v3384 = vshrl.u32 %v3383, 7
    %v3385 = vsub.s32 2, %v3384
    %v3386 = vrot.slane %v3373, %v3385
    %v3387 = vlaneseq
    %v3388 = vshrl.u32 %v3387, 7
    %v3389 = vsub.s32 3, %v3388
    %v3390 = vrot.slane %v3373, %v3389
    %v3459 = vunpack.c.l.b16 %v3308
    %v3460 = vunpack.c.h.b16 %v3308
    %v3461 = vunpack.c.l.b16 %v3309
    %v3462 = vunpack.c.h.b16 %v3309
    %v3463 = vunpack.c.l.b16 %v3310
    %v3464 = vunpack.c.h.b16 %v3310
    %v3465 = vunpack.c.l.b16 %v3311
    %v3466 = vunpack.c.h.b16 %v3311
    %v3467 = vunpack.c.l.b16 %v3312
    %v3468 = vunpack.c.h.b16 %v3312
    %v3469 = vunpack.c.l.b16 %v3313
    %v3470 = vunpack.c.h.b16 %v3313
    %v3471 = vunpack.c.l.b16 %v3314
    %v3472 = vunpack.c.h.b16 %v3314
    %v3473 = vunpack.c.l.b16 %v3315
    %v3474 = vunpack.c.h.b16 %v3315
    %v3475 = vunpack.c.l.b16 %v3316
    %v3476 = vunpack.c.h.b16 %v3316
    %v3477 = vunpack.c.l.b16 %v3317
    %v3478 = vunpack.c.h.b16 %v3317
    %v3479 = vunpack.c.l.b16 %v3318
    %v3480 = vunpack.c.h.b16 %v3318
    %v3481 = vunpack.c.l.b16 %v3319
    %v3482 = vunpack.c.h.b16 %v3319
    %v3483 = vunpack.c.l.b16 %v3320
    %v3484 = vunpack.c.h.b16 %v3320
    %v3485 = vunpack.c.l.b16 %v3321
    %v3486 = vunpack.c.h.b16 %v3321
    %v3487 = vunpack.c.l.b16 %v3322
    %v3488 = vunpack.c.h.b16 %v3322
    %v3489 = vunpack.c.l.b16 %v3323
    %v3490 = vunpack.c.h.b16 %v3323
    %v3491 = vunpack.c.l.b16 %v3324
    %v3492 = vunpack.c.h.b16 %v3324
    %v3493 = vunpack.c.l.b16 %v3325
    %v3494 = vunpack.c.h.b16 %v3325
    %v3495 = vunpack.c.l.b16 %v3326
    %v3496 = vunpack.c.h.b16 %v3326
    %v3497 = vunpack.c.l.b16 %v3327
    %v3498 = vunpack.c.h.b16 %v3327
    %v3499 = vunpack.c.l.b16 %v3328
    %v3500 = vunpack.c.h.b16 %v3328
    %v3501 = vunpack.c.l.b16 %v3329
    %v3502 = vunpack.c.h.b16 %v3329
    %v3503 = vunpack.c.l.b16 %v3330
    %v3504 = vunpack.c.h.b16 %v3330
    %v3505 = vunpack.c.l.b16 %v3331
    %v3506 = vunpack.c.h.b16 %v3331
    %v3507 = vunpack.c.l.b16 %v3332
    %v3508 = vunpack.c.h.b16 %v3332
    %v3509 = vunpack.c.l.b16 %v3333
    %v3510 = vunpack.c.h.b16 %v3333
    %v3511 = vunpack.c.l.b16 %v3334
    %v3512 = vunpack.c.h.b16 %v3334
    %v3513 = vunpack.c.l.b16 %v3335
    %v3514 = vunpack.c.h.b16 %v3335
    %v3515 = vunpack.c.l.b16 %v3336
    %v3516 = vunpack.c.h.b16 %v3336
    %v3517 = vunpack.c.l.b16 %v3337
    %v3518 = vunpack.c.h.b16 %v3337
    %v3519 = vunpack.c.l.b16 %v3338
    %v3520 = vunpack.c.h.b16 %v3338
    %v3521 = vunpack.c.l.b16 %v3339
    %v3522 = vunpack.c.h.b16 %v3339
    %v3523 = vunpack.c.l.b16 %v3340
    %v3524 = vunpack.c.h.b16 %v3340
    %v3525 = vunpack.c.l.b16 %v3341
    %v3526 = vunpack.c.h.b16 %v3341
    %v3527 = vunpack.c.l.b16 %v3342
    %v3528 = vunpack.c.h.b16 %v3342
    %v3529 = vunpack.c.l.b16 %v3343
    %v3530 = vunpack.c.h.b16 %v3343
    %v3531 = vunpack.c.l.b16 %v3344
    %v3532 = vunpack.c.h.b16 %v3344
    %v3533 = vunpack.c.l.b16 %v3345
    %v3534 = vunpack.c.h.b16 %v3345
    %v3535 = vunpack.c.l.b16 %v3346
    %v3536 = vunpack.c.h.b16 %v3346
    %v3537 = vunpack.c.l.b16 %v3347
    %v3538 = vunpack.c.h.b16 %v3347
    %v3539 = vunpack.c.l.b16 %v3348
    %v3540 = vunpack.c.h.b16 %v3348
    %v3541 = vunpack.c.l.b16 %v3349
    %v3542 = vunpack.c.h.b16 %v3349
    %v3543 = vunpack.c.l.b16 %v3350
    %v3544 = vunpack.c.h.b16 %v3350
    %v3545 = vunpack.c.l.b16 %v3351
    %v3546 = vunpack.c.h.b16 %v3351
    %v3547 = vunpack.c.l.b16 %v3352
    %v3548 = vunpack.c.h.b16 %v3352
    %v3549 = vunpack.c.l.b16 %v3353
    %v3550 = vunpack.c.h.b16 %v3353
    %v3551 = vunpack.c.l.b16 %v3354
    %v3552 = vunpack.c.h.b16 %v3354
    %v3553 = vunpack.c.l.b16 %v3355
    %v3554 = vunpack.c.h.b16 %v3355
    %v3555 = vunpack.c.l.b16 %v3356
    %v3556 = vunpack.c.h.b16 %v3356
    %v3557 = vunpack.c.l.b16 %v3357
    %v3558 = vunpack.c.h.b16 %v3357
    %v3559 = vunpack.c.l.b16 %v3358
    %v3560 = vunpack.c.h.b16 %v3358
    %v3561 = vunpack.c.l.b16 %v3359
    %v3562 = vunpack.c.h.b16 %v3359
    %v3563 = vunpack.c.l.b16 %v3360
    %v3564 = vunpack.c.h.b16 %v3360
    %v3565 = vunpack.c.l.b16 %v3361
    %v3566 = vunpack.c.h.b16 %v3361
    %v3567 = vunpack.c.l.b16 %v3362
    %v3568 = vunpack.c.h.b16 %v3362
    %v3569 = vunpack.c.l.b16 %v3363
    %v3570 = vunpack.c.h.b16 %v3363
    %v3571 = vunpack.c.l.b16 %v3364
    %v3572 = vunpack.c.h.b16 %v3364
    %v3573 = vunpack.c.l.b16 %v3365
    %v3574 = vunpack.c.h.b16 %v3365
    %v3575 = vunpack.c.l.b16 %v3366
    %v3576 = vunpack.c.h.b16 %v3366
    %v3577 = vunpack.c.l.b16 %v3367
    %v3578 = vunpack.c.h.b16 %v3367
    %v3579 = vunpack.c.l.b16 %v3368
    %v3580 = vunpack.c.h.b16 %v3368
    %v3581 = vunpack.c.l.b16 %v3369
    %v3582 = vunpack.c.h.b16 %v3369
    %v3583 = vunpack.c.l.b16 %v3370
    %v3584 = vunpack.c.h.b16 %v3370
    %v3585 = vunpack.c.l.b16 %v3371
    %v3586 = vunpack.c.h.b16 %v3371
    %v3587 = vpack.c.b16 %v3463, %v3459
    %v3588 = vpack.c.b16 %v3464, %v3460
    %v3589 = vpack.c.b16 %v3465, %v3461
    %v3590 = vpack.c.b16 %v3466, %v3462
    %v3591 = vpack.c.b16 %v3471, %v3467
    %v3592 = vpack.c.b16 %v3472, %v3468
    %v3593 = vpack.c.b16 %v3473, %v3469
    %v3594 = vpack.c.b16 %v3474, %v3470
    %v3595 = vpack.c.b16 %v3479, %v3475
    %v3596 = vpack.c.b16 %v3480, %v3476
    %v3597 = vpack.c.b16 %v3481, %v3477
    %v3598 = vpack.c.b16 %v3482, %v3478
    %v3599 = vpack.c.b16 %v3487, %v3483
    %v3600 = vpack.c.b16 %v3488, %v3484
    %v3601 = vpack.c.b16 %v3489, %v3485
    %v3602 = vpack.c.b16 %v3490, %v3486
    %v3603 = vpack.c.b16 %v3495, %v3491
    %v3604 = vpack.c.b16 %v3496, %v3492
    %v3605 = vpack.c.b16 %v3497, %v3493
    %v3606 = vpack.c.b16 %v3498, %v3494
    %v3607 = vpack.c.b16 %v3503, %v3499
    %v3608 = vpack.c.b16 %v3504, %v3500
    %v3609 = vpack.c.b16 %v3505, %v3501
    %v3610 = vpack.c.b16 %v3506, %v3502
    %v3611 = vpack.c.b16 %v3511, %v3507
    %v3612 = vpack.c.b16 %v3512, %v3508
    %v3613 = vpack.c.b16 %v3513, %v3509
    %v3614 = vpack.c.b16 %v3514, %v3510
    %v3615 = vpack.c.b16 %v3519, %v3515
    %v3616 = vpack.c.b16 %v3520, %v3516
    %v3617 = vpack.c.b16 %v3521, %v3517
    %v3618 = vpack.c.b16 %v3522, %v3518
    %v3619 = vpack.c.b16 %v3527, %v3523
    %v3620 = vpack.c.b16 %v3528, %v3524
    %v3621 = vpack.c.b16 %v3529, %v3525
    %v3622 = vpack.c.b16 %v3530, %v3526
    %v3623 = vpack.c.b16 %v3535, %v3531
    %v3624 = vpack.c.b16 %v3536, %v3532
    %v3625 = vpack.c.b16 %v3537, %v3533
    %v3626 = vpack.c.b16 %v3538, %v3534
    %v3627 = vpack.c.b16 %v3543, %v3539
    %v3628 = vpack.c.b16 %v3544, %v3540
    %v3629 = vpack.c.b16 %v3545, %v3541
    %v3630 = vpack.c.b16 %v3546, %v3542
    %v3631 = vpack.c.b16 %v3551, %v3547
    %v3632 = vpack.c.b16 %v3552, %v3548
    %v3633 = vpack.c.b16 %v3553, %v3549
    %v3634 = vpack.c.b16 %v3554, %v3550
    %v3635 = vpack.c.b16 %v3559, %v3555
    %v3636 = vpack.c.b16 %v3560, %v3556
    %v3637 = vpack.c.b16 %v3561, %v3557
    %v3638 = vpack.c.b16 %v3562, %v3558
    %v3639 = vpack.c.b16 %v3567, %v3563
    %v3640 = vpack.c.b16 %v3568, %v3564
    %v3641 = vpack.c.b16 %v3569, %v3565
    %v3642 = vpack.c.b16 %v3570, %v3566
    %v3643 = vpack.c.b16 %v3575, %v3571
    %v3644 = vpack.c.b16 %v3576, %v3572
    %v3645 = vpack.c.b16 %v3577, %v3573
    %v3646 = vpack.c.b16 %v3578, %v3574
    %v3647 = vpack.c.b16 %v3583, %v3579
    %v3648 = vpack.c.b16 %v3584, %v3580
    %v3649 = vpack.c.b16 %v3585, %v3581
    %v3650 = vpack.c.b16 %v3586, %v3582
    %3715 = vmatprep.subr.bf16.mxu0 %v3588
    %3716 = vmatpush1.bf16.msra.mxu0 %v3587
    %3717 = vmatprep.subr.bf16.mxu0 %v3592
    %3718 = vmatpush1.bf16.msra.mxu0 %v3591
    %3719 = vmatprep.subr.bf16.mxu0 %v3596
    %3720 = vmatpush1.bf16.msra.mxu0 %v3595
    %3721 = vmatprep.subr.bf16.mxu0 %v3600
    %3722 = vmatpush1.bf16.msra.mxu0 %v3599
    %3723 = vmatprep.subr.bf16.mxu0 %v3604
    %3724 = vmatpush1.bf16.msra.mxu0 %v3603
    %3725 = vmatprep.subr.bf16.mxu0 %v3608
    %3726 = vmatpush1.bf16.msra.mxu0 %v3607
    %3727 = vmatprep.subr.bf16.mxu0 %v3612
    %3728 = vmatpush1.bf16.msra.mxu0 %v3611
    %3729 = vmatprep.subr.bf16.mxu0 %v3616
    %3730 = vmatpush1.bf16.msra.mxu0 %v3615
    %3731 = vmatprep.subr.bf16.mxu0 %v3620
    %3732 = vmatpush1.bf16.msra.mxu0 %v3619
    %3733 = vmatprep.subr.bf16.mxu0 %v3624
    %3734 = vmatpush1.bf16.msra.mxu0 %v3623
    %3735 = vmatprep.subr.bf16.mxu0 %v3628
    %3736 = vmatpush1.bf16.msra.mxu0 %v3627
    %3737 = vmatprep.subr.bf16.mxu0 %v3632
    %3738 = vmatpush1.bf16.msra.mxu0 %v3631
    %3739 = vmatprep.subr.bf16.mxu0 %v3636
    %3740 = vmatpush1.bf16.msra.mxu0 %v3635
    %3741 = vmatprep.subr.bf16.mxu0 %v3640
    %3742 = vmatpush1.bf16.msra.mxu0 %v3639
    %3743 = vmatprep.subr.bf16.mxu0 %v3644
    %3744 = vmatpush1.bf16.msra.mxu0 %v3643
    %3745 = vmatprep.subr.bf16.mxu0 %v3648
    %3746 = vmatpush1.bf16.msra.mxu0 %v3647
    %3747 = vmatprep.mubr.bf16.mxu0 %v2716
    %3748 = vmatmul.mubr.bf16.gmra.mrb[0].mxu0 %v2715
    %v3749 = vpop.f32.mrb[0].mxu0
    %v3750 = vadd.f32 %v3378, %v3749
    %v3751 = vpop.f32.mrb[0].mxu0
    %v3752 = vadd.f32 %v3382, %v3751
    %v3753 = vpop.f32.mrb[0].mxu0
    %v3754 = vadd.f32 %v3378, %v3753
    %v3755 = vpop.f32.mrb[0].mxu0
    %v3756 = vadd.f32 %v3382, %v3755
    %3757 = vmatprep.mubr.bf16.mxu0 %v2718
    %3758 = vmatmul.mubr.bf16.gmra.mrb[0].mxu0 %v2717
    %v3759 = vpop.f32.mrb[0].mxu0
    %v3760 = vadd.f32 %v3378, %v3759
    %v3761 = vpop.f32.mrb[0].mxu0
    %v3762 = vadd.f32 %v3382, %v3761
    %v3763 = vpop.f32.mrb[0].mxu0
    %v3764 = vadd.f32 %v3378, %v3763
    %v3765 = vpop.f32.mrb[0].mxu0
    %v3766 = vadd.f32 %v3382, %v3765
    %3767 = vmatprep.mubr.bf16.mxu0 %v2720
    %3768 = vmatmul.mubr.bf16.gmra.mrb[0].mxu0 %v2719
    %v3769 = vpop.f32.mrb[0].mxu0
    %v3770 = vadd.f32 %v3378, %v3769
    %v3771 = vpop.f32.mrb[0].mxu0
    %v3772 = vadd.f32 %v3382, %v3771
    %v3773 = vpop.f32.mrb[0].mxu0
    %v3774 = vadd.f32 %v3378, %v3773
    %v3775 = vpop.f32.mrb[0].mxu0
    %v3776 = vadd.f32 %v3382, %v3775
    %3777 = vmatprep.mubr.bf16.mxu0 %v2722
    %3778 = vmatmul.mubr.bf16.gmra.mrb[0].mxu0 %v2721
    %v3779 = vpop.f32.mrb[0].mxu0
    %v3780 = vadd.f32 %v3378, %v3779
    %v3781 = vpop.f32.mrb[0].mxu0
    %v3782 = vadd.f32 %v3382, %v3781
    %v3783 = vpop.f32.mrb[0].mxu0
    %v3784 = vadd.f32 %v3378, %v3783
    %v3785 = vpop.f32.mrb[0].mxu0
    %v3786 = vadd.f32 %v3382, %v3785
    %3787 = vdwg.mxu0
    %3788 = vmatprep.subr.bf16.mxu0 %v3590
    %3789 = vmatpush1.bf16.msra.mxu0 %v3589
    %3790 = vmatprep.subr.bf16.mxu0 %v3594
    %3791 = vmatpush1.bf16.msra.mxu0 %v3593
    %3792 = vmatprep.subr.bf16.mxu0 %v3598
    %3793 = vmatpush1.bf16.msra.mxu0 %v3597
    %3794 = vmatprep.subr.bf16.mxu0 %v3602
    %3795 = vmatpush1.bf16.msra.mxu0 %v3601
    %3796 = vmatprep.subr.bf16.mxu0 %v3606
    %3797 = vmatpush1.bf16.msra.mxu0 %v3605
    %3798 = vmatprep.subr.bf16.mxu0 %v3610
    %3799 = vmatpush1.bf16.msra.mxu0 %v3609
    %3800 = vmatprep.subr.bf16.mxu0 %v3614
    %3801 = vmatpush1.bf16.msra.mxu0 %v3613
    %3802 = vmatprep.subr.bf16.mxu0 %v3618
    %3803 = vmatpush1.bf16.msra.mxu0 %v3617
    %3804 = vmatprep.subr.bf16.mxu0 %v3622
    %3805 = vmatpush1.bf16.msra.mxu0 %v3621
    %3806 = vmatprep.subr.bf16.mxu0 %v3626
    %3807 = vmatpush1.bf16.msra.mxu0 %v3625
    %3808 = vmatprep.subr.bf16.mxu0 %v3630
    %3809 = vmatpush1.bf16.msra.mxu0 %v3629
    %3810 = vmatprep.subr.bf16.mxu0 %v3634
    %3811 = vmatpush1.bf16.msra.mxu0 %v3633
    %3812 = vmatprep.subr.bf16.mxu0 %v3638
    %3813 = vmatpush1.bf16.msra.mxu0 %v3637
    %3814 = vmatprep.subr.bf16.mxu0 %v3642
    %3815 = vmatpush1.bf16.msra.mxu0 %v3641
    %3816 = vmatprep.subr.bf16.mxu0 %v3646
    %3817 = vmatpush1.bf16.msra.mxu0 %v3645
    %3818 = vmatprep.subr.bf16.mxu0 %v3650
    %3819 = vmatpush1.bf16.msra.mxu0 %v3649
    %3820 = vmatprep.mubr.bf16.mxu0 %v2716
    %3821 = vmatmul.mubr.bf16.gmra.mrb[0].mxu0 %v2715
    %v3822 = vpop.f32.mrb[0].mxu0
    %v3823 = vadd.f32 %v3386, %v3822
    %v3824 = vpop.f32.mrb[0].mxu0
    %v3825 = vadd.f32 %v3390, %v3824
    %v3826 = vpop.f32.mrb[0].mxu0
    %v3827 = vadd.f32 %v3386, %v3826
    %v3828 = vpop.f32.mrb[0].mxu0
    %v3829 = vadd.f32 %v3390, %v3828
    %3830 = vmatprep.mubr.bf16.mxu0 %v2718
    %3831 = vmatmul.mubr.bf16.gmra.mrb[0].mxu0 %v2717
    %v3832 = vpop.f32.mrb[0].mxu0
    %v3833 = vadd.f32 %v3386, %v3832
    %v3834 = vpop.f32.mrb[0].mxu0
    %v3835 = vadd.f32 %v3390, %v3834
    %v3836 = vpop.f32.mrb[0].mxu0
    %v3837 = vadd.f32 %v3386, %v3836
    %v3838 = vpop.f32.mrb[0].mxu0
    %v3839 = vadd.f32 %v3390, %v3838
    %3840 = vmatprep.mubr.bf16.mxu0 %v2720
    %3841 = vmatmul.mubr.bf16.gmra.mrb[0].mxu0 %v2719
    %v3842 = vpop.f32.mrb[0].mxu0
    %v3843 = vadd.f32 %v3386, %v3842
    %v3844 = vpop.f32.mrb[0].mxu0
    %v3845 = vadd.f32 %v3390, %v3844
    %v3846 = vpop.f32.mrb[0].mxu0
    %v3847 = vadd.f32 %v3386, %v3846
    %v3848 = vpop.f32.mrb[0].mxu0
    %v3849 = vadd.f32 %v3390, %v3848
    %3850 = vmatprep.mubr.bf16.mxu0 %v2722
    %3851 = vmatmul.mubr.bf16.gmra.mrb[0].mxu0 %v2721
    %v3852 = vpop.f32.mrb[0].mxu0
    %v3853 = vadd.f32 %v3386, %v3852
    %v3854 = vpop.f32.mrb[0].mxu0
    %v3855 = vadd.f32 %v3390, %v3854
    %v3856 = vpop.f32.mrb[0].mxu0
    %v3857 = vadd.f32 %v3386, %v3856
    %v3858 = vpop.f32.mrb[0].mxu0
    %v3859 = vadd.f32 %v3390, %v3858
    %3860 = vdwg.mxu0
    %3861 = vst [vmem:[#allocation6] sm:$0xff] %v3750
    %3862 = vst [vmem:[#allocation6 + $0x8] sm:$0xff] %v3752
    %3863 = vst [vmem:[#allocation6 + $0x10] sm:$0xff] %v3823
    %3864 = vst [vmem:[#allocation6 + $0x18] sm:$0xff] %v3825
    %3865 = vst [vmem:[#allocation6 + $0x20] sm:$0xff] %v3754
    %3866 = vst [vmem:[#allocation6 + $0x28] sm:$0xff] %v3756
    %3867 = vst [vmem:[#allocation6 + $0x30] sm:$0xff] %v3827
    %3868 = vst [vmem:[#allocation6 + $0x38] sm:$0xff] %v3829
    %3869 = vst [vmem:[#allocation6 + $0x40] sm:$0xff] %v3760
    %3870 = vst [vmem:[#allocation6 + $0x48] sm:$0xff] %v3762
    %3871 = vst [vmem:[#allocation6 + $0x50] sm:$0xff] %v3833
    %3872 = vst [vmem:[#allocation6 + $0x58] sm:$0xff] %v3835
    %3873 = vst [vmem:[#allocation6 + $0x60] sm:$0xff] %v3764
    %3874 = vst [vmem:[#allocation6 + $0x68] sm:$0xff] %v3766
    %3875 = vst [vmem:[#allocation6 + $0x70] sm:$0xff] %v3837
    %3876 = vst [vmem:[#allocation6 + $0x78] sm:$0xff] %v3839
    %3877 = vst [vmem:[#allocation6 + $0x80] sm:$0xff] %v3770
    %3878 = vst [vmem:[#allocation6 + $0x88] sm:$0xff] %v3772
    %3879 = vst [vmem:[#allocation6 + $0x90] sm:$0xff] %v3843
    %3880 = vst [vmem:[#allocation6 + $0x98] sm:$0xff] %v3845
    %3881 = vst [vmem:[#allocation6 + $0xa0] sm:$0xff] %v3774
    %3882 = vst [vmem:[#allocation6 + $0xa8] sm:$0xff] %v3776
    %3883 = vst [vmem:[#allocation6 + $0xb0] sm:$0xff] %v3847
    %3884 = vst [vmem:[#allocation6 + $0xb8] sm:$0xff] %v3849
    %3885 = vst [vmem:[#allocation6 + $0xc0] sm:$0xff] %v3780
    %3886 = vst [vmem:[#allocation6 + $0xc8] sm:$0xff] %v3782
    %3887 = vst [vmem:[#allocation6 + $0xd0] sm:$0xff] %v3853
    %3888 = vst [vmem:[#allocation6 + $0xd8] sm:$0xff] %v3855
    %3889 = vst [vmem:[#allocation6 + $0xe0] sm:$0xff] %v3784
    %3890 = vst [vmem:[#allocation6 + $0xe8] sm:$0xff] %v3786
    %3891 = vst [vmem:[#allocation6 + $0xf0] sm:$0xff] %v3857
    %3892 = vst [vmem:[#allocation6 + $0xf8] sm:$0xff] %v3859
    %v3893 = vld [vmem:[#allocation7 + $0x640] sm:$0xff]
    %v3894 = vld [vmem:[#allocation7 + $0x648] sm:$0xff]
    %v3895 = vld [vmem:[#allocation7 + $0x650] sm:$0xff]
    %v3896 = vld [vmem:[#allocation7 + $0x658] sm:$0xff]
    %v3897 = vld [vmem:[#allocation7 + $0x660] sm:$0xff]
    %v3898 = vld [vmem:[#allocation7 + $0x668] sm:$0xff]
    %v3899 = vld [vmem:[#allocation7 + $0x670] sm:$0xff]
    %v3900 = vld [vmem:[#allocation7 + $0x678] sm:$0xff]
    %v3901 = vld [vmem:[#allocation7 + $0x680] sm:$0xff]
    %v3902 = vld [vmem:[#allocation7 + $0x688] sm:$0xff]
    %v3903 = vld [vmem:[#allocation7 + $0x690] sm:$0xff]
    %v3904 = vld [vmem:[#allocation7 + $0x698] sm:$0xff]
    %v3905 = vld [vmem:[#allocation7 + $0x6a0] sm:$0xff]
    %v3906 = vld [vmem:[#allocation7 + $0x6a8] sm:$0xff]
    %v3907 = vld [vmem:[#allocation7 + $0x6b0] sm:$0xff]
    %v3908 = vld [vmem:[#allocation7 + $0x6b8] sm:$0xff]
    %v3909 = vld [vmem:[#allocation7 + $0x6c0] sm:$0xff]
    %v3910 = vld [vmem:[#allocation7 + $0x6c8] sm:$0xff]
    %v3911 = vld [vmem:[#allocation7 + $0x6d0] sm:$0xff]
    %v3912 = vld [vmem:[#allocation7 + $0x6d8] sm:$0xff]
    %v3913 = vld [vmem:[#allocation7 + $0x6e0] sm:$0xff]
    %v3914 = vld [vmem:[#allocation7 + $0x6e8] sm:$0xff]
    %v3915 = vld [vmem:[#allocation7 + $0x6f0] sm:$0xff]
    %v3916 = vld [vmem:[#allocation7 + $0x6f8] sm:$0xff]
    %v3917 = vld [vmem:[#allocation7 + $0x700] sm:$0xff]
    %v3918 = vld [vmem:[#allocation7 + $0x708] sm:$0xff]
    %v3919 = vld [vmem:[#allocation7 + $0x710] sm:$0xff]
    %v3920 = vld [vmem:[#allocation7 + $0x718] sm:$0xff]
    %v3921 = vld [vmem:[#allocation7 + $0x720] sm:$0xff]
    %v3922 = vld [vmem:[#allocation7 + $0x728] sm:$0xff]
    %v3923 = vld [vmem:[#allocation7 + $0x730] sm:$0xff]
    %v3924 = vld [vmem:[#allocation7 + $0x738] sm:$0xff]
    %v3925 = vld [vmem:[#allocation7 + $0x740] sm:$0xff]
    %v3926 = vld [vmem:[#allocation7 + $0x748] sm:$0xff]
    %v3927 = vld [vmem:[#allocation7 + $0x750] sm:$0xff]
    %v3928 = vld [vmem:[#allocation7 + $0x758] sm:$0xff]
    %v3929 = vld [vmem:[#allocation7 + $0x760] sm:$0xff]
    %v3930 = vld [vmem:[#allocation7 + $0x768] sm:$0xff]
    %v3931 = vld [vmem:[#allocation7 + $0x770] sm:$0xff]
    %v3932 = vld [vmem:[#allocation7 + $0x778] sm:$0xff]
    %v3933 = vld [vmem:[#allocation7 + $0x780] sm:$0xff]
    %v3934 = vld [vmem:[#allocation7 + $0x788] sm:$0xff]
    %v3935 = vld [vmem:[#allocation7 + $0x790] sm:$0xff]
    %v3936 = vld [vmem:[#allocation7 + $0x798] sm:$0xff]
    %v3937 = vld [vmem:[#allocation7 + $0x7a0] sm:$0xff]
    %v3938 = vld [vmem:[#allocation7 + $0x7a8] sm:$0xff]
    %v3939 = vld [vmem:[#allocation7 + $0x7b0] sm:$0xff]
    %v3940 = vld [vmem:[#allocation7 + $0x7b8] sm:$0xff]
    %v3941 = vld [vmem:[#allocation7 + $0x7c0] sm:$0xff]
    %v3942 = vld [vmem:[#allocation7 + $0x7c8] sm:$0xff]
    %v3943 = vld [vmem:[#allocation7 + $0x7d0] sm:$0xff]
    %v3944 = vld [vmem:[#allocation7 + $0x7d8] sm:$0xff]
    %v3945 = vld [vmem:[#allocation7 + $0x7e0] sm:$0xff]
    %v3946 = vld [vmem:[#allocation7 + $0x7e8] sm:$0xff]
    %v3947 = vld [vmem:[#allocation7 + $0x7f0] sm:$0xff]
    %v3948 = vld [vmem:[#allocation7 + $0x7f8] sm:$0xff]
    %v3949 = vld [vmem:[#allocation7 + $0x800] sm:$0xff]
    %v3950 = vld [vmem:[#allocation7 + $0x808] sm:$0xff]
    %v3951 = vld [vmem:[#allocation7 + $0x810] sm:$0xff]
    %v3952 = vld [vmem:[#allocation7 + $0x818] sm:$0xff]
    %v3953 = vld [vmem:[#allocation7 + $0x820] sm:$0xff]
    %v3954 = vld [vmem:[#allocation7 + $0x828] sm:$0xff]
    %v3955 = vld [vmem:[#allocation7 + $0x830] sm:$0xff]
    %v3956 = vld [vmem:[#allocation7 + $0x838] sm:$0xff]
    %v3957 = vld [vmem:[#allocation5] sm:$0xff]
    %v3958 = vld [vmem:[#allocation5 + $0x8] sm:$0xff]
    %v3959 = vld [vmem:[#allocation5 + $0x10] sm:$0xff]
    %v3960 = vld [vmem:[#allocation5 + $0x18] sm:$0xff]
    %v3993 = vunpack.c.l.b16 %v3893
    %v3994 = vunpack.c.h.b16 %v3893
    %v3995 = vunpack.c.l.b16 %v3894
    %v3996 = vunpack.c.h.b16 %v3894
    %v3997 = vunpack.c.l.b16 %v3895
    %v3998 = vunpack.c.h.b16 %v3895
    %v3999 = vunpack.c.l.b16 %v3896
    %v4000 = vunpack.c.h.b16 %v3896
    %v4001 = vunpack.c.l.b16 %v3897
    %v4002 = vunpack.c.h.b16 %v3897
    %v4003 = vunpack.c.l.b16 %v3898
    %v4004 = vunpack.c.h.b16 %v3898
    %v4005 = vunpack.c.l.b16 %v3899
    %v4006 = vunpack.c.h.b16 %v3899
    %v4007 = vunpack.c.l.b16 %v3900
    %v4008 = vunpack.c.h.b16 %v3900
    %v4009 = vunpack.c.l.b16 %v3901
    %v4010 = vunpack.c.h.b16 %v3901
    %v4011 = vunpack.c.l.b16 %v3902
    %v4012 = vunpack.c.h.b16 %v3902
    %v4013 = vunpack.c.l.b16 %v3903
    %v4014 = vunpack.c.h.b16 %v3903
    %v4015 = vunpack.c.l.b16 %v3904
    %v4016 = vunpack.c.h.b16 %v3904
    %v4017 = vunpack.c.l.b16 %v3905
    %v4018 = vunpack.c.h.b16 %v3905
    %v4019 = vunpack.c.l.b16 %v3906
    %v4020 = vunpack.c.h.b16 %v3906
    %v4021 = vunpack.c.l.b16 %v3907
    %v4022 = vunpack.c.h.b16 %v3907
    %v4023 = vunpack.c.l.b16 %v3908
    %v4024 = vunpack.c.h.b16 %v3908
    %v4025 = vunpack.c.l.b16 %v3909
    %v4026 = vunpack.c.h.b16 %v3909
    %v4027 = vunpack.c.l.b16 %v3910
    %v4028 = vunpack.c.h.b16 %v3910
    %v4029 = vunpack.c.l.b16 %v3911
    %v4030 = vunpack.c.h.b16 %v3911
    %v4031 = vunpack.c.l.b16 %v3912
    %v4032 = vunpack.c.h.b16 %v3912
    %v4033 = vunpack.c.l.b16 %v3913
    %v4034 = vunpack.c.h.b16 %v3913
    %v4035 = vunpack.c.l.b16 %v3914
    %v4036 = vunpack.c.h.b16 %v3914
    %v4037 = vunpack.c.l.b16 %v3915
    %v4038 = vunpack.c.h.b16 %v3915
    %v4039 = vunpack.c.l.b16 %v3916
    %v4040 = vunpack.c.h.b16 %v3916
    %v4041 = vunpack.c.l.b16 %v3917
    %v4042 = vunpack.c.h.b16 %v3917
    %v4043 = vunpack.c.l.b16 %v3918
    %v4044 = vunpack.c.h.b16 %v3918
    %v4045 = vunpack.c.l.b16 %v3919
    %v4046 = vunpack.c.h.b16 %v3919
    %v4047 = vunpack.c.l.b16 %v3920
    %v4048 = vunpack.c.h.b16 %v3920
    %v4049 = vunpack.c.l.b16 %v3921
    %v4050 = vunpack.c.h.b16 %v3921
    %v4051 = vunpack.c.l.b16 %v3922
    %v4052 = vunpack.c.h.b16 %v3922
    %v4053 = vunpack.c.l.b16 %v3923
    %v4054 = vunpack.c.h.b16 %v3923
    %v4055 = vunpack.c.l.b16 %v3924
    %v4056 = vunpack.c.h.b16 %v3924
    %v4057 = vpack.c.b16 %v3997, %v3993
    %v4058 = vpack.c.b16 %v3998, %v3994
    %v4059 = vpack.c.b16 %v3999, %v3995
    %v4060 = vpack.c.b16 %v4000, %v3996
    %v4061 = vpack.c.b16 %v4005, %v4001
    %v4062 = vpack.c.b16 %v4006, %v4002
    %v4063 = vpack.c.b16 %v4007, %v4003
    %v4064 = vpack.c.b16 %v4008, %v4004
    %v4065 = vpack.c.b16 %v4013, %v4009
    %v4066 = vpack.c.b16 %v4014, %v4010
    %v4067 = vpack.c.b16 %v4015, %v4011
    %v4068 = vpack.c.b16 %v4016, %v4012
    %v4069 = vpack.c.b16 %v4021, %v4017
    %v4070 = vpack.c.b16 %v4022, %v4018
    %v4071 = vpack.c.b16 %v4023, %v4019
    %v4072 = vpack.c.b16 %v4024, %v4020
    %v4073 = vpack.c.b16 %v4029, %v4025
    %v4074 = vpack.c.b16 %v4030, %v4026
    %v4075 = vpack.c.b16 %v4031, %v4027
    %v4076 = vpack.c.b16 %v4032, %v4028
    %v4077 = vpack.c.b16 %v4037, %v4033
    %v4078 = vpack.c.b16 %v4038, %v4034
    %v4079 = vpack.c.b16 %v4039, %v4035
    %v4080 = vpack.c.b16 %v4040, %v4036
    %v4081 = vpack.c.b16 %v4045, %v4041
    %v4082 = vpack.c.b16 %v4046, %v4042
    %v4083 = vpack.c.b16 %v4047, %v4043
    %v4084 = vpack.c.b16 %v4048, %v4044
    %v4085 = vpack.c.b16 %v4053, %v4049
    %v4086 = vpack.c.b16 %v4054, %v4050
    %v4087 = vpack.c.b16 %v4055, %v4051
    %v4088 = vpack.c.b16 %v4056, %v4052
    %4121 = vmatprep.subr.bf16.mxu0 %v4058
    %4122 = vmatpush1.bf16.msra.mxu0 %v4057
    %4123 = vmatprep.subr.bf16.mxu0 %v4062
    %4124 = vmatpush1.bf16.msra.mxu0 %v4061
    %4125 = vmatprep.subr.bf16.mxu0 %v4066
    %4126 = vmatpush1.bf16.msra.mxu0 %v4065
    %4127 = vmatprep.subr.bf16.mxu0 %v4070
    %4128 = vmatpush1.bf16.msra.mxu0 %v4069
    %4129 = vmatprep.subr.bf16.mxu0 %v4074
    %4130 = vmatpush1.bf16.msra.mxu0 %v4073
    %4131 = vmatprep.subr.bf16.mxu0 %v4078
    %4132 = vmatpush1.bf16.msra.mxu0 %v4077
    %4133 = vmatprep.subr.bf16.mxu0 %v4082
    %4134 = vmatpush1.bf16.msra.mxu0 %v4081
    %4135 = vmatprep.subr.bf16.mxu0 %v4086
    %4136 = vmatpush1.bf16.msra.mxu0 %v4085
    %4137 = vmatprep.subr.bf16.mxu0 0
    %4138 = vmatpush1.bf16.msra.mxu0 0
    %4139 = vmatprep.subr.bf16.mxu0 0
    %4140 = vmatpush1.bf16.msra.mxu0 0
    %4141 = vmatprep.subr.bf16.mxu0 0
    %4142 = vmatpush1.bf16.msra.mxu0 0
    %4143 = vmatprep.subr.bf16.mxu0 0
    %4144 = vmatpush1.bf16.msra.mxu0 0
    %4145 = vmatprep.subr.bf16.mxu0 0
    %4146 = vmatpush1.bf16.msra.mxu0 0
    %4147 = vmatprep.subr.bf16.mxu0 0
    %4148 = vmatpush1.bf16.msra.mxu0 0
    %4149 = vmatprep.subr.bf16.mxu0 0
    %4150 = vmatpush1.bf16.msra.mxu0 0
    %4151 = vmatprep.subr.bf16.mxu0 0
    %4152 = vmatpush1.bf16.msra.mxu0 0
    %4153 = vmatprep.mubr.bf16.mxu0 0
    %4154 = vmatmul.mubr.bf16.gmra.mrb[0].mxu0 0
    %v4155 = vpop.f32.mrb[0].mxu0
    %v4156 = vadd.f32 0.0, %v4155
    %v4157 = vpop.f32.mrb[0].mxu0
    %v4158 = vadd.f32 0.0, %v4157
    %v4159 = vpop.f32.mrb[0].mxu0
    %v4160 = vpop.f32.mrb[0].mxu0
    %4161 = vdwg.mxu0
    %4162 = vmatprep.subr.bf16.mxu0 %v4060
    %4163 = vmatpush1.bf16.msra.mxu0 %v4059
    %4164 = vmatprep.subr.bf16.mxu0 %v4064
    %4165 = vmatpush1.bf16.msra.mxu0 %v4063
    %4166 = vmatprep.subr.bf16.mxu0 %v4068
    %4167 = vmatpush1.bf16.msra.mxu0 %v4067
    %4168 = vmatprep.subr.bf16.mxu0 %v4072
    %4169 = vmatpush1.bf16.msra.mxu0 %v4071
    %4170 = vmatprep.subr.bf16.mxu0 %v4076
    %4171 = vmatpush1.bf16.msra.mxu0 %v4075
    %4172 = vmatprep.subr.bf16.mxu0 %v4080
    %4173 = vmatpush1.bf16.msra.mxu0 %v4079
    %4174 = vmatprep.subr.bf16.mxu0 %v4084
    %4175 = vmatpush1.bf16.msra.mxu0 %v4083
    %4176 = vmatprep.subr.bf16.mxu0 %v4088
    %4177 = vmatpush1.bf16.msra.mxu0 %v4087
    %4178 = vmatprep.subr.bf16.mxu0 0
    %4179 = vmatpush1.bf16.msra.mxu0 0
    %4180 = vmatprep.subr.bf16.mxu0 0
    %4181 = vmatpush1.bf16.msra.mxu0 0
    %4182 = vmatprep.subr.bf16.mxu0 0
    %4183 = vmatpush1.bf16.msra.mxu0 0
    %4184 = vmatprep.subr.bf16.mxu0 0
    %4185 = vmatpush1.bf16.msra.mxu0 0
    %4186 = vmatprep.subr.bf16.mxu0 0
    %4187 = vmatpush1.bf16.msra.mxu0 0
    %4188 = vmatprep.subr.bf16.mxu0 0
    %4189 = vmatpush1.bf16.msra.mxu0 0
    %4190 = vmatprep.subr.bf16.mxu0 0
    %4191 = vmatpush1.bf16.msra.mxu0 0
    %4192 = vmatprep.subr.bf16.mxu0 0
    %4193 = vmatpush1.bf16.msra.mxu0 0
    %4194 = vmatprep.mubr.bf16.mxu0 0
    %4195 = vmatmul.mubr.bf16.gmra.mrb[0].mxu0 0
    %v4196 = vpop.f32.mrb[0].mxu0
    %v4197 = vadd.f32 0.0, %v4196
    %v4198 = vpop.f32.mrb[0].mxu0
    %v4199 = vadd.f32 0.0, %v4198
    %v4200 = vpop.f32.mrb[0].mxu0
    %v4201 = vpop.f32.mrb[0].mxu0
    %4202 = vdwg.mxu0
    %v4203 = vadd.f32 %v3957, %v4156
    %v4204 = vadd.f32 %v3958, %v4158
    %v4205 = vadd.f32 %v3959, %v4197
    %v4206 = vadd.f32 %v3960, %v4199
    %v4207 = vmul.f32 %v4203, 0.5
    %v4208 = vtanh.pop %v4207
    %v4209 = vmul.f32 %v4208, 0.5
    %v4210 = vadd.f32 %v4209, 0.5
    %v4211 = vmul.f32 %v4204, 0.5
    %v4212 = vtanh.pop %v4211
    %v4213 = vmul.f32 %v4212, 0.5
    %v4214 = vadd.f32 %v4213, 0.5
    %v4215 = vtanh.pop %v4205
    %v4216 = vmul.f32 %v4206, 0.5
    %v4217 = vtanh.pop %v4216
    %v4218 = vmul.f32 %v4217, 0.5
    %v4219 = vadd.f32 %v4218, 0.5
    %v4220 = vmul.f32 %v4214, 0.0
    %v4221 = vmul.f32 %v4210, %v4215
    %v4222 = vadd.f32 %v4220, %v4221
    %v4223 = vtanh.pop %v4222
    %v4224 = vmul.f32 %v4219, %v4223
    %v4225 = vld [vmem:[#allocation6 + $0xe0] sm:$0xff]
    %v4226 = vld [vmem:[#allocation6 + $0xe8] sm:$0xff]
    %v4227 = vld [vmem:[#allocation6 + $0xf0] sm:$0xff]
    %v4228 = vld [vmem:[#allocation6 + $0xf8] sm:$0xff]
    %v4261 = vunpack.c.l.b16 %v3925
    %v4262 = vunpack.c.h.b16 %v3925
    %v4263 = vunpack.c.l.b16 %v3926
    %v4264 = vunpack.c.h.b16 %v3926
    %v4265 = vunpack.c.l.b16 %v3927
    %v4266 = vunpack.c.h.b16 %v3927
    %v4267 = vunpack.c.l.b16 %v3928
    %v4268 = vunpack.c.h.b16 %v3928
    %v4269 = vunpack.c.l.b16 %v3929
    %v4270 = vunpack.c.h.b16 %v3929
    %v4271 = vunpack.c.l.b16 %v3930
    %v4272 = vunpack.c.h.b16 %v3930
    %v4273 = vunpack.c.l.b16 %v3931
    %v4274 = vunpack.c.h.b16 %v3931
    %v4275 = vunpack.c.l.b16 %v3932
    %v4276 = vunpack.c.h.b16 %v3932
    %v4277 = vunpack.c.l.b16 %v3933
    %v4278 = vunpack.c.h.b16 %v3933
    %v4279 = vunpack.c.l.b16 %v3934
    %v4280 = vunpack.c.h.b16 %v3934
    %v4281 = vunpack.c.l.b16 %v3935
    %v4282 = vunpack.c.h.b16 %v3935
    %v4283 = vunpack.c.l.b16 %v3936
    %v4284 = vunpack.c.h.b16 %v3936
    %v4285 = vunpack.c.l.b16 %v3937
    %v4286 = vunpack.c.h.b16 %v3937
    %v4287 = vunpack.c.l.b16 %v3938
    %v4288 = vunpack.c.h.b16 %v3938
    %v4289 = vunpack.c.l.b16 %v3939
    %v4290 = vunpack.c.h.b16 %v3939
    %v4291 = vunpack.c.l.b16 %v3940
    %v4292 = vunpack.c.h.b16 %v3940
    %v4293 = vunpack.c.l.b16 %v3941
    %v4294 = vunpack.c.h.b16 %v3941
    %v4295 = vunpack.c.l.b16 %v3942
    %v4296 = vunpack.c.h.b16 %v3942
    %v4297 = vunpack.c.l.b16 %v3943
    %v4298 = vunpack.c.h.b16 %v3943
    %v4299 = vunpack.c.l.b16 %v3944
    %v4300 = vunpack.c.h.b16 %v3944
    %v4301 = vunpack.c.l.b16 %v3945
    %v4302 = vunpack.c.h.b16 %v3945
    %v4303 = vunpack.c.l.b16 %v3946
    %v4304 = vunpack.c.h.b16 %v3946
    %v4305 = vunpack.c.l.b16 %v3947
    %v4306 = vunpack.c.h.b16 %v3947
    %v4307 = vunpack.c.l.b16 %v3948
    %v4308 = vunpack.c.h.b16 %v3948
    %v4309 = vunpack.c.l.b16 %v3949
    %v4310 = vunpack.c.h.b16 %v3949
    %v4311 = vunpack.c.l.b16 %v3950
    %v4312 = vunpack.c.h.b16 %v3950
    %v4313 = vunpack.c.l.b16 %v3951
    %v4314 = vunpack.c.h.b16 %v3951
    %v4315 = vunpack.c.l.b16 %v3952
    %v4316 = vunpack.c.h.b16 %v3952
    %v4317 = vunpack.c.l.b16 %v3953
    %v4318 = vunpack.c.h.b16 %v3953
    %v4319 = vunpack.c.l.b16 %v3954
    %v4320 = vunpack.c.h.b16 %v3954
    %v4321 = vunpack.c.l.b16 %v3955
    %v4322 = vunpack.c.h.b16 %v3955
    %v4323 = vunpack.c.l.b16 %v3956
    %v4324 = vunpack.c.h.b16 %v3956
    %v4325 = vpack.c.b16 %v4265, %v4261
    %v4326 = vpack.c.b16 %v4266, %v4262
    %v4327 = vpack.c.b16 %v4267, %v4263
    %v4328 = vpack.c.b16 %v4268, %v4264
    %v4329 = vpack.c.b16 %v4273, %v4269
    %v4330 = vpack.c.b16 %v4274, %v4270
    %v4331 = vpack.c.b16 %v4275, %v4271
    %v4332 = vpack.c.b16 %v4276, %v4272
    %v4333 = vpack.c.b16 %v4281, %v4277
    %v4334 = vpack.c.b16 %v4282, %v4278
    %v4335 = vpack.c.b16 %v4283, %v4279
    %v4336 = vpack.c.b16 %v4284, %v4280
    %v4337 = vpack.c.b16 %v4289, %v4285
    %v4338 = vpack.c.b16 %v4290, %v4286
    %v4339 = vpack.c.b16 %v4291, %v4287
    %v4340 = vpack.c.b16 %v4292, %v4288
    %v4341 = vpack.c.b16 %v4297, %v4293
    %v4342 = vpack.c.b16 %v4298, %v4294
    %v4343 = vpack.c.b16 %v4299, %v4295
    %v4344 = vpack.c.b16 %v4300, %v4296
    %v4345 = vpack.c.b16 %v4305, %v4301
    %v4346 = vpack.c.b16 %v4306, %v4302
    %v4347 = vpack.c.b16 %v4307, %v4303
    %v4348 = vpack.c.b16 %v4308, %v4304
    %v4349 = vpack.c.b16 %v4313, %v4309
    %v4350 = vpack.c.b16 %v4314, %v4310
    %v4351 = vpack.c.b16 %v4315, %v4311
    %v4352 = vpack.c.b16 %v4316, %v4312
    %v4353 = vpack.c.b16 %v4321, %v4317
    %v4354 = vpack.c.b16 %v4322, %v4318
    %v4355 = vpack.c.b16 %v4323, %v4319
    %v4356 = vpack.c.b16 %v4324, %v4320
    %4389 = vmatprep.subr.bf16.mxu0 %v4326
    %4390 = vmatpush1.bf16.msra.mxu0 %v4325
    %4391 = vmatprep.subr.bf16.mxu0 %v4330
    %4392 = vmatpush1.bf16.msra.mxu0 %v4329
    %4393 = vmatprep.subr.bf16.mxu0 %v4334
    %4394 = vmatpush1.bf16.msra.mxu0 %v4333
    %4395 = vmatprep.subr.bf16.mxu0 %v4338
    %4396 = vmatpush1.bf16.msra.mxu0 %v4337
    %4397 = vmatprep.subr.bf16.mxu0 %v4342
    %4398 = vmatpush1.bf16.msra.mxu0 %v4341
    %4399 = vmatprep.subr.bf16.mxu0 %v4346
    %4400 = vmatpush1.bf16.msra.mxu0 %v4345
    %4401 = vmatprep.subr.bf16.mxu0 %v4350
    %4402 = vmatpush1.bf16.msra.mxu0 %v4349
    %4403 = vmatprep.subr.bf16.mxu0 %v4354
    %4404 = vmatpush1.bf16.msra.mxu0 %v4353
    %4405 = vmatprep.subr.bf16.mxu0 0
    %4406 = vmatpush1.bf16.msra.mxu0 0
    %4407 = vmatprep.subr.bf16.mxu0 0
    %4408 = vmatpush1.bf16.msra.mxu0 0
    %4409 = vmatprep.subr.bf16.mxu0 0
    %4410 = vmatpush1.bf16.msra.mxu0 0
    %4411 = vmatprep.subr.bf16.mxu0 0
    %4412 = vmatpush1.bf16.msra.mxu0 0
    %4413 = vmatprep.subr.bf16.mxu0 0
    %4414 = vmatpush1.bf16.msra.mxu0 0
    %4415 = vmatprep.subr.bf16.mxu0 0
    %4416 = vmatpush1.bf16.msra.mxu0 0
    %4417 = vmatprep.subr.bf16.mxu0 0
    %4418 = vmatpush1.bf16.msra.mxu0 0
    %4419 = vmatprep.subr.bf16.mxu0 0
    %4420 = vmatpush1.bf16.msra.mxu0 0
    %4421 = vmatprep.mubr.bf16.mxu0 0
    %4422 = vmatmul.mubr.bf16.gmra.mrb[0].mxu0 0
    %v4423 = vpop.f32.mrb[0].mxu0
    %v4424 = vadd.f32 0.0, %v4423
    %v4425 = vpop.f32.mrb[0].mxu0
    %v4426 = vadd.f32 0.0, %v4425
    %v4427 = vpop.f32.mrb[0].mxu0
    %v4428 = vpop.f32.mrb[0].mxu0
    %4429 = vdwg.mxu0
    %4430 = vmatprep.subr.bf16.mxu0 %v4328
    %4431 = vmatpush1.bf16.msra.mxu0 %v4327
    %4432 = vmatprep.subr.bf16.mxu0 %v4332
    %4433 = vmatpush1.bf16.msra.mxu0 %v4331
    %4434 = vmatprep.subr.bf16.mxu0 %v4336
    %4435 = vmatpush1.bf16.msra.mxu0 %v4335
    %4436 = vmatprep.subr.bf16.mxu0 %v4340
    %4437 = vmatpush1.bf16.msra.mxu0 %v4339
    %4438 = vmatprep.subr.bf16.mxu0 %v4344
    %4439 = vmatpush1.bf16.msra.mxu0 %v4343
    %4440 = vmatprep.subr.bf16.mxu0 %v4348
    %4441 = vmatpush1.bf16.msra.mxu0 %v4347
    %4442 = vmatprep.subr.bf16.mxu0 %v4352
    %4443 = vmatpush1.bf16.msra.mxu0 %v4351
    %4444 = vmatprep.subr.bf16.mxu0 %v4356
    %4445 = vmatpush1.bf16.msra.mxu0 %v4355
    %4446 = vmatprep.subr.bf16.mxu0 0
    %4447 = vmatpush1.bf16.msra.mxu0 0
    %4448 = vmatprep.subr.bf16.mxu0 0
    %4449 = vmatpush1.bf16.msra.mxu0 0
    %4450 = vmatprep.subr.bf16.mxu0 0
    %4451 = vmatpush1.bf16.msra.mxu0 0
    %4452 = vmatprep.subr.bf16.mxu0 0
    %4453 = vmatpush1.bf16.msra.mxu0 0
    %4454 = vmatprep.subr.bf16.mxu0 0
    %4455 = vmatpush1.bf16.msra.mxu0 0
    %4456 = vmatprep.subr.bf16.mxu0 0
    %4457 = vmatpush1.bf16.msra.mxu0 0
    %4458 = vmatprep.subr.bf16.mxu0 0
    %4459 = vmatpush1.bf16.msra.mxu0 0
    %4460 = vmatprep.subr.bf16.mxu0 0
    %4461 = vmatpush1.bf16.msra.mxu0 0
    %4462 = vmatprep.mubr.bf16.mxu0 0
    %4463 = vmatmul.mubr.bf16.gmra.mrb[0].mxu0 0
    %v4464 = vpop.f32.mrb[0].mxu0
    %v4465 = vadd.f32 0.0, %v4464
    %v4466 = vpop.f32.mrb[0].mxu0
    %v4467 = vadd.f32 0.0, %v4466
    %v4468 = vpop.f32.mrb[0].mxu0
    %v4469 = vpop.f32.mrb[0].mxu0
    %4470 = vdwg.mxu0
    %v4471 = vadd.f32 %v4225, %v4424
    %v4472 = vadd.f32 %v4226, %v4426
    %v4473 = vadd.f32 %v4227, %v4465
    %v4474 = vadd.f32 %v4228, %v4467
    %v4475 = vmul.f32 %v4471, 0.5
    %v4476 = vtanh.pop %v4475
    %v4477 = vmul.f32 %v4476, 0.5
    %v4478 = vadd.f32 %v4477, 0.5
    %v4479 = vmul.f32 %v4472, 0.5
    %v4480 = vtanh.pop %v4479
    %v4481 = vmul.f32 %v4480, 0.5
    %v4482 = vadd.f32 %v4481, 0.5
    %v4483 = vtanh.pop %v4473
    %v4484 = vmul.f32 %v4474, 0.5
    %v4485 = vtanh.pop %v4484
    %v4486 = vmul.f32 %v4485, 0.5
    %v4487 = vadd.f32 %v4486, 0.5
    %v4488 = vmul.f32 %v4482, 0.0
    %v4489 = vmul.f32 %v4478, %v4483
    %v4490 = vadd.f32 %v4488, %v4489
    %v4491 = vtanh.pop %v4490
    %v4492 = vmul.f32 %v4487, %v4491
    %v4493 = vld [vmem:[#allocation5 + $0x20] sm:$0xff]
    %v4494 = vld [vmem:[#allocation5 + $0x28] sm:$0xff]
    %v4495 = vld [vmem:[#allocation5 + $0x30] sm:$0xff]
    %v4496 = vld [vmem:[#allocation5 + $0x38] sm:$0xff]
    %v4497 = vpack.c.bf16 %v4224, %v4224
    %4498 = vmatprep.subr.bf16.mxu0 %v4058
    %4499 = vmatpush1.bf16.msra.mxu0 %v4057
    %4500 = vmatprep.subr.bf16.mxu0 %v4062
    %4501 = vmatpush1.bf16.msra.mxu0 %v4061
    %4502 = vmatprep.subr.bf16.mxu0 %v4066
    %4503 = vmatpush1.bf16.msra.mxu0 %v4065
    %4504 = vmatprep.subr.bf16.mxu0 %v4070
    %4505 = vmatpush1.bf16.msra.mxu0 %v4069
    %4506 = vmatprep.subr.bf16.mxu0 %v4074
    %4507 = vmatpush1.bf16.msra.mxu0 %v4073
    %4508 = vmatprep.subr.bf16.mxu0 %v4078
    %4509 = vmatpush1.bf16.msra.mxu0 %v4077
    %4510 = vmatprep.subr.bf16.mxu0 %v4082
    %4511 = vmatpush1.bf16.msra.mxu0 %v4081
    %4512 = vmatprep.subr.bf16.mxu0 %v4086
    %4513 = vmatpush1.bf16.msra.mxu0 %v4085
    %4514 = vmatprep.subr.bf16.mxu0 0
    %4515 = vmatpush1.bf16.msra.mxu0 0
    %4516 = vmatprep.subr.bf16.mxu0 0
    %4517 = vmatpush1.bf16.msra.mxu0 0
    %4518 = vmatprep.subr.bf16.mxu0 0
    %4519 = vmatpush1.bf16.msra.mxu0 0
    %4520 = vmatprep.subr.bf16.mxu0 0
    %4521 = vmatpush1.bf16.msra.mxu0 0
    %4522 = vmatprep.subr.bf16.mxu0 0
    %4523 = vmatpush1.bf16.msra.mxu0 0
    %4524 = vmatprep.subr.bf16.mxu0 0
    %4525 = vmatpush1.bf16.msra.mxu0 0
    %4526 = vmatprep.subr.bf16.mxu0 0
    %4527 = vmatpush1.bf16.msra.mxu0 0
    %4528 = vmatprep.subr.bf16.mxu0 0
    %4529 = vmatpush1.bf16.msra.mxu0 0
    %4530 = vmatprep.mubr.bf16.mxu0 0
    %4531 = vmatmul.mubr.bf16.gmra.mrb[0].mxu0 %v4497
    %v4532 = vpop.f32.mrb[0].mxu0
    %v4533 = vadd.f32 0.0, %v4532
    %v4534 = vpop.f32.mrb[0].mxu0
    %v4535 = vadd.f32 0.0, %v4534
    %v4536 = vpop.f32.mrb[0].mxu0
    %v4537 = vpop.f32.mrb[0].mxu0
    %4538 = vdwg.mxu0
    %4539 = vmatprep.subr.bf16.mxu0 %v4060
    %4540 = vmatpush1.bf16.msra.mxu0 %v4059
    %4541 = vmatprep.subr.bf16.mxu0 %v4064
    %4542 = vmatpush1.bf16.msra.mxu0 %v4063
    %4543 = vmatprep.subr.bf16.mxu0 %v4068
    %4544 = vmatpush1.bf16.msra.mxu0 %v4067
    %4545 = vmatprep.subr.bf16.mxu0 %v4072
    %4546 = vmatpush1.bf16.msra.mxu0 %v4071
    %4547 = vmatprep.subr.bf16.mxu0 %v4076
    %4548 = vmatpush1.bf16.msra.mxu0 %v4075
    %4549 = vmatprep.subr.bf16.mxu0 %v4080
    %4550 = vmatpush1.bf16.msra.mxu0 %v4079
    %4551 = vmatprep.subr.bf16.mxu0 %v4084
    %4552 = vmatpush1.bf16.msra.mxu0 %v4083
    %4553 = vmatprep.subr.bf16.mxu0 %v4088
    %4554 = vmatpush1.bf16.msra.mxu0 %v4087
    %4555 = vmatprep.subr.bf16.mxu0 0
    %4556 = vmatpush1.bf16.msra.mxu0 0
    %4557 = vmatprep.subr.bf16.mxu0 0
    %4558 = vmatpush1.bf16.msra.mxu0 0
    %4559 = vmatprep.subr.bf16.mxu0 0
    %4560 = vmatpush1.bf16.msra.mxu0 0
    %4561 = vmatprep.subr.bf16.mxu0 0
    %4562 = vmatpush1.bf16.msra.mxu0 0
    %4563 = vmatprep.subr.bf16.mxu0 0
    %4564 = vmatpush1.bf16.msra.mxu0 0
    %4565 = vmatprep.subr.bf16.mxu0 0
    %4566 = vmatpush1.bf16.msra.mxu0 0
    %4567 = vmatprep.subr.bf16.mxu0 0
    %4568 = vmatpush1.bf16.msra.mxu0 0
    %4569 = vmatprep.subr.bf16.mxu0 0
    %4570 = vmatpush1.bf16.msra.mxu0 0
    %4571 = vmatprep.mubr.bf16.mxu0 0
    %4572 = vmatmul.mubr.bf16.gmra.mrb[0].mxu0 %v4497
    %v4573 = vpop.f32.mrb[0].mxu0
    %v4574 = vadd.f32 0.0, %v4573
    %v4575 = vpop.f32.mrb[0].mxu0
    %v4576 = vadd.f32 0.0, %v4575
    %v4577 = vpop.f32.mrb[0].mxu0
    %v4578 = vpop.f32.mrb[0].mxu0
    %4579 = vdwg.mxu0
    %v4580 = vadd.f32 %v4493, %v4533
    %v4581 = vadd.f32 %v4494, %v4535
    %v4582 = vadd.f32 %v4495, %v4574
    %v4583 = vadd.f32 %v4496, %v4576
    %v4584 = vmul.f32 %v4580, 0.5
    %v4585 = vtanh.pop %v4584
    %v4586 = vmul.f32 %v4585, 0.5
    %v4587 = vadd.f32 %v4586, 0.5
    %v4588 = vmul.f32 %v4581, 0.5
    %v4589 = vtanh.pop %v4588
    %v4590 = vmul.f32 %v4589, 0.5
    %v4591 = vadd.f32 %v4590, 0.5
    %v4592 = vtanh.pop %v4582
    %v4593 = vmul.f32 %v4583, 0.5
    %v4594 = vtanh.pop %v4593
    %v4595 = vmul.f32 %v4594, 0.5
    %v4596 = vadd.f32 %v4595, 0.5
    %v4597 = vmul.f32 %v4591, %v4222
    %v4598 = vmul.f32 %v4587, %v4592
    %v4599 = vadd.f32 %v4597, %v4598
    %v4600 = vtanh.pop %v4599
    %v4601 = vmul.f32 %v4596, %v4600
    %v4602 = vld [vmem:[#allocation6 + $0xc0] sm:$0xff]
    %v4603 = vld [vmem:[#allocation6 + $0xc8] sm:$0xff]
    %v4604 = vld [vmem:[#allocation6 + $0xd0] sm:$0xff]
    %v4605 = vld [vmem:[#allocation6 + $0xd8] sm:$0xff]
    %v4606 = vpack.c.bf16 %v4492, %v4492
    %4607 = vmatprep.subr.bf16.mxu0 %v4326
    %4608 = vmatpush1.bf16.msra.mxu0 %v4325
    %4609 = vmatprep.subr.bf16.mxu0 %v4330
    %4610 = vmatpush1.bf16.msra.mxu0 %v4329
    %4611 = vmatprep.subr.bf16.mxu0 %v4334
    %4612 = vmatpush1.bf16.msra.mxu0 %v4333
    %4613 = vmatprep.subr.bf16.mxu0 %v4338
    %4614 = vmatpush1.bf16.msra.mxu0 %v4337
    %4615 = vmatprep.subr.bf16.mxu0 %v4342
    %4616 = vmatpush1.bf16.msra.mxu0 %v4341
    %4617 = vmatprep.subr.bf16.mxu0 %v4346
    %4618 = vmatpush1.bf16.msra.mxu0 %v4345
    %4619 = vmatprep.subr.bf16.mxu0 %v4350
    %4620 = vmatpush1.bf16.msra.mxu0 %v4349
    %4621 = vmatprep.subr.bf16.mxu0 %v4354
    %4622 = vmatpush1.bf16.msra.mxu0 %v4353
    %4623 = vmatprep.subr.bf16.mxu0 0
    %4624 = vmatpush1.bf16.msra.mxu0 0
    %4625 = vmatprep.subr.bf16.mxu0 0
    %4626 = vmatpush1.bf16.msra.mxu0 0
    %4627 = vmatprep.subr.bf16.mxu0 0
    %4628 = vmatpush1.bf16.msra.mxu0 0
    %4629 = vmatprep.subr.bf16.mxu0 0
    %4630 = vmatpush1.bf16.msra.mxu0 0
    %4631 = vmatprep.subr.bf16.mxu0 0
    %4632 = vmatpush1.bf16.msra.mxu0 0
    %4633 = vmatprep.subr.bf16.mxu0 0
    %4634 = vmatpush1.bf16.msra.mxu0 0
    %4635 = vmatprep.subr.bf16.mxu0 0
    %4636 = vmatpush1.bf16.msra.mxu0 0
    %4637 = vmatprep.subr.bf16.mxu0 0
    %4638 = vmatpush1.bf16.msra.mxu0 0
    %4639 = vmatprep.mubr.bf16.mxu0 0
    %4640 = vmatmul.mubr.bf16.gmra.mrb[0].mxu0 %v4606
    %v4641 = vpop.f32.mrb[0].mxu0
    %v4642 = vadd.f32 0.0, %v4641
    %v4643 = vpop.f32.mrb[0].mxu0
    %v4644 = vadd.f32 0.0, %v4643
    %v4645 = vpop.f32.mrb[0].mxu0
    %v4646 = vpop.f32.mrb[0].mxu0
    %4647 = vdwg.mxu0
    %4648 = vmatprep.subr.bf16.mxu0 %v4328
    %4649 = vmatpush1.bf16.msra.mxu0 %v4327
    %4650 = vmatprep.subr.bf16.mxu0 %v4332
    %4651 = vmatpush1.bf16.msra.mxu0 %v4331
    %4652 = vmatprep.subr.bf16.mxu0 %v4336
    %4653 = vmatpush1.bf16.msra.mxu0 %v4335
    %4654 = vmatprep.subr.bf16.mxu0 %v4340
    %4655 = vmatpush1.bf16.msra.mxu0 %v4339
    %4656 = vmatprep.subr.bf16.mxu0 %v4344
    %4657 = vmatpush1.bf16.msra.mxu0 %v4343
    %4658 = vmatprep.subr.bf16.mxu0 %v4348
    %4659 = vmatpush1.bf16.msra.mxu0 %v4347
    %4660 = vmatprep.subr.bf16.mxu0 %v4352
    %4661 = vmatpush1.bf16.msra.mxu0 %v4351
    %4662 = vmatprep.subr.bf16.mxu0 %v4356
    %4663 = vmatpush1.bf16.msra.mxu0 %v4355
    %4664 = vmatprep.subr.bf16.mxu0 0
    %4665 = vmatpush1.bf16.msra.mxu0 0
    %4666 = vmatprep.subr.bf16.mxu0 0
    %4667 = vmatpush1.bf16.msra.mxu0 0
    %4668 = vmatprep.subr.bf16.mxu0 0
    %4669 = vmatpush1.bf16.msra.mxu0 0
    %4670 = vmatprep.subr.bf16.mxu0 0
    %4671 = vmatpush1.bf16.msra.mxu0 0
    %4672 = vmatprep.subr.bf16.mxu0 0
    %4673 = vmatpush1.bf16.msra.mxu0 0
    %4674 = vmatprep.subr.bf16.mxu0 0
    %4675 = vmatpush1.bf16.msra.mxu0 0
    %4676 = vmatprep.subr.bf16.mxu0 0
    %4677 = vmatpush1.bf16.msra.mxu0 0
    %4678 = vmatprep.subr.bf16.mxu0 0
    %4679 = vmatpush1.bf16.msra.mxu0 0
    %4680 = vmatprep.mubr.bf16.mxu0 0
    %4681 = vmatmul.mubr.bf16.gmra.mrb[0].mxu0 %v4606
    %v4682 = vpop.f32.mrb[0].mxu0
    %v4683 = vadd.f32 0.0, %v4682
    %v4684 = vpop.f32.mrb[0].mxu0
    %v4685 = vadd.f32 0.0, %v4684
    %v4686 = vpop.f32.mrb[0].mxu0
    %v4687 = vpop.f32.mrb[0].mxu0
    %4688 = vdwg.mxu0
    %v4689 = vadd.f32 %v4602, %v4642
    %v4690 = vadd.f32 %v4603, %v4644
    %v4691 = vadd.f32 %v4604, %v4683
    %v4692 = vadd.f32 %v4605, %v4685
    %v4693 = vmul.f32 %v4689, 0.5
    %v4694 = vtanh.pop %v4693
    %v4695 = vmul.f32 %v4694, 0.5
    %v4696 = vadd.f32 %v4695, 0.5
    %v4697 = vmul.f32 %v4690, 0.5
    %v4698 = vtanh.pop %v4697
    %v4699 = vmul.f32 %v4698, 0.5
    %v4700 = vadd.f32 %v4699, 0.5
    %v4701 = vtanh.pop %v4691
    %v4702 = vmul.f32 %v4692, 0.5
    %v4703 = vtanh.pop %v4702
    %v4704 = vmul.f32 %v4703, 0.5
    %v4705 = vadd.f32 %v4704, 0.5
    %v4706 = vmul.f32 %v4700, %v4490
    %v4707 = vmul.f32 %v4696, %v4701
    %v4708 = vadd.f32 %v4706, %v4707
    %v4709 = vtanh.pop %v4708
    %v4710 = vmul.f32 %v4705, %v4709
    %v4711 = vld [vmem:[#allocation5 + $0x40] sm:$0xff]
    %v4712 = vld [vmem:[#allocation5 + $0x48] sm:$0xff]
    %v4713 = vld [vmem:[#allocation5 + $0x50] sm:$0xff]
    %v4714 = vld [vmem:[#allocation5 + $0x58] sm:$0xff]
    %v4715 = vpack.c.bf16 %v4601, %v4601
    %4716 = vmatprep.subr.bf16.mxu0 %v4058
    %4717 = vmatpush1.bf16.msra.mxu0 %v4057
    %4718 = vmatprep.subr.bf16.mxu0 %v4062
    %4719 = vmatpush1.bf16.msra.mxu0 %v4061
    %4720 = vmatprep.subr.bf16.mxu0 %v4066
    %4721 = vmatpush1.bf16.msra.mxu0 %v4065
    %4722 = vmatprep.subr.bf16.mxu0 %v4070
    %4723 = vmatpush1.bf16.msra.mxu0 %v4069
    %4724 = vmatprep.subr.bf16.mxu0 %v4074
    %4725 = vmatpush1.bf16.msra.mxu0 %v4073
    %4726 = vmatprep.subr.bf16.mxu0 %v4078
    %4727 = vmatpush1.bf16.msra.mxu0 %v4077
    %4728 = vmatprep.subr.bf16.mxu0 %v4082
    %4729 = vmatpush1.bf16.msra.mxu0 %v4081
    %4730 = vmatprep.subr.bf16.mxu0 %v4086
    %4731 = vmatpush1.bf16.msra.mxu0 %v4085
    %4732 = vmatprep.subr.bf16.mxu0 0
    %4733 = vmatpush1.bf16.msra.mxu0 0
    %4734 = vmatprep.subr.bf16.mxu0 0
    %4735 = vmatpush1.bf16.msra.mxu0 0
    %4736 = vmatprep.subr.bf16.mxu0 0
    %4737 = vmatpush1.bf16.msra.mxu0 0
    %4738 = vmatprep.subr.bf16.mxu0 0
    %4739 = vmatpush1.bf16.msra.mxu0 0
    %4740 = vmatprep.subr.bf16.mxu0 0
    %4741 = vmatpush1.bf16.msra.mxu0 0
    %4742 = vmatprep.subr.bf16.mxu0 0
    %4743 = vmatpush1.bf16.msra.mxu0 0
    %4744 = vmatprep.subr.bf16.mxu0 0
    %4745 = vmatpush1.bf16.msra.mxu0 0
    %4746 = vmatprep.subr.bf16.mxu0 0
    %4747 = vmatpush1.bf16.msra.mxu0 0
    %4748 = vmatprep.mubr.bf16.mxu0 0
    %4749 = vmatmul.mubr.bf16.gmra.mrb[0].mxu0 %v4715
    %v4750 = vpop.f32.mrb[0].mxu0
    %v4751 = vadd.f32 0.0, %v4750
    %v4752 = vpop.f32.mrb[0].mxu0
    %v4753 = vadd.f32 0.0, %v4752
    %v4754 = vpop.f32.mrb[0].mxu0
    %v4755 = vpop.f32.mrb[0].mxu0
    %4756 = vdwg.mxu0
    %4757 = vmatprep.subr.bf16.mxu0 %v4060
    %4758 = vmatpush1.bf16.msra.mxu0 %v4059
    %4759 = vmatprep.subr.bf16.mxu0 %v4064
    %4760 = vmatpush1.bf16.msra.mxu0 %v4063
    %4761 = vmatprep.subr.bf16.mxu0 %v4068
    %4762 = vmatpush1.bf16.msra.mxu0 %v4067
    %4763 = vmatprep.subr.bf16.mxu0 %v4072
    %4764 = vmatpush1.bf16.msra.mxu0 %v4071
    %4765 = vmatprep.subr.bf16.mxu0 %v4076
    %4766 = vmatpush1.bf16.msra.mxu0 %v4075
    %4767 = vmatprep.subr.bf16.mxu0 %v4080
    %4768 = vmatpush1.bf16.msra.mxu0 %v4079
    %4769 = vmatprep.subr.bf16.mxu0 %v4084
    %4770 = vmatpush1.bf16.msra.mxu0 %v4083
    %4771 = vmatprep.subr.bf16.mxu0 %v4088
    %4772 = vmatpush1.bf16.msra.mxu0 %v4087
    %4773 = vmatprep.subr.bf16.mxu0 0
    %4774 = vmatpush1.bf16.msra.mxu0 0
    %4775 = vmatprep.subr.bf16.mxu0 0
    %4776 = vmatpush1.bf16.msra.mxu0 0
    %4777 = vmatprep.subr.bf16.mxu0 0
    %4778 = vmatpush1.bf16.msra.mxu0 0
    %4779 = vmatprep.subr.bf16.mxu0 0
    %4780 = vmatpush1.bf16.msra.mxu0 0
    %4781 = vmatprep.subr.bf16.mxu0 0
    %4782 = vmatpush1.bf16.msra.mxu0 0
    %4783 = vmatprep.subr.bf16.mxu0 0
    %4784 = vmatpush1.bf16.msra.mxu0 0
    %4785 = vmatprep.subr.bf16.mxu0 0
    %4786 = vmatpush1.bf16.msra.mxu0 0
    %4787 = vmatprep.subr.bf16.mxu0 0
    %4788 = vmatpush1.bf16.msra.mxu0 0
    %4789 = vmatprep.mubr.bf16.mxu0 0
    %4790 = vmatmul.mubr.bf16.gmra.mrb[0].mxu0 %v4715
    %v4791 = vpop.f32.mrb[0].mxu0
    %v4792 = vadd.f32 0.0, %v4791
    %v4793 = vpop.f32.mrb[0].mxu0
    %v4794 = vadd.f32 0.0, %v4793
    %v4795 = vpop.f32.mrb[0].mxu0
    %v4796 = vpop.f32.mrb[0].mxu0
    %4797 = vdwg.mxu0
    %v4798 = vadd.f32 %v4711, %v4751
    %v4799 = vadd.f32 %v4712, %v4753
    %v4800 = vadd.f32 %v4713, %v4792
    %v4801 = vadd.f32 %v4714, %v4794
    %v4802 = vmul.f32 %v4798, 0.5
    %v4803 = vtanh.pop %v4802
    %v4804 = vmul.f32 %v4803, 0.5
    %v4805 = vadd.f32 %v4804, 0.5
    %v4806 = vmul.f32 %v4799, 0.5
    %v4807 = vtanh.pop %v4806
    %v4808 = vmul.f32 %v4807, 0.5
    %v4809 = vadd.f32 %v4808, 0.5
    %v4810 = vtanh.pop %v4800
    %v4811 = vmul.f32 %v4801, 0.5
    %v4812 = vtanh.pop %v4811
    %v4813 = vmul.f32 %v4812, 0.5
    %v4814 = vadd.f32 %v4813, 0.5
    %v4815 = vmul.f32 %v4809, %v4599
    %v4816 = vmul.f32 %v4805, %v4810
    %v4817 = vadd.f32 %v4815, %v4816
    %v4818 = vtanh.pop %v4817
    %v4819 = vmul.f32 %v4814, %v4818
    %v4820 = vld [vmem:[#allocation6 + $0xa0] sm:$0xff]
    %v4821 = vld [vmem:[#allocation6 + $0xa8] sm:$0xff]
    %v4822 = vld [vmem:[#allocation6 + $0xb0] sm:$0xff]
    %v4823 = vld [vmem:[#allocation6 + $0xb8] sm:$0xff]
    %v4824 = vpack.c.bf16 %v4710, %v4710
    %4825 = vmatprep.subr.bf16.mxu0 %v4326
    %4826 = vmatpush1.bf16.msra.mxu0 %v4325
    %4827 = vmatprep.subr.bf16.mxu0 %v4330
    %4828 = vmatpush1.bf16.msra.mxu0 %v4329
    %4829 = vmatprep.subr.bf16.mxu0 %v4334
    %4830 = vmatpush1.bf16.msra.mxu0 %v4333
    %4831 = vmatprep.subr.bf16.mxu0 %v4338
    %4832 = vmatpush1.bf16.msra.mxu0 %v4337
    %4833 = vmatprep.subr.bf16.mxu0 %v4342
    %4834 = vmatpush1.bf16.msra.mxu0 %v4341
    %4835 = vmatprep.subr.bf16.mxu0 %v4346
    %4836 = vmatpush1.bf16.msra.mxu0 %v4345
    %4837 = vmatprep.subr.bf16.mxu0 %v4350
    %4838 = vmatpush1.bf16.msra.mxu0 %v4349
    %4839 = vmatprep.subr.bf16.mxu0 %v4354
    %4840 = vmatpush1.bf16.msra.mxu0 %v4353
    %4841 = vmatprep.subr.bf16.mxu0 0
    %4842 = vmatpush1.bf16.msra.mxu0 0
    %4843 = vmatprep.subr.bf16.mxu0 0
    %4844 = vmatpush1.bf16.msra.mxu0 0
    %4845 = vmatprep.subr.bf16.mxu0 0
    %4846 = vmatpush1.bf16.msra.mxu0 0
    %4847 = vmatprep.subr.bf16.mxu0 0
    %4848 = vmatpush1.bf16.msra.mxu0 0
    %4849 = vmatprep.subr.bf16.mxu0 0
    %4850 = vmatpush1.bf16.msra.mxu0 0
    %4851 = vmatprep.subr.bf16.mxu0 0
    %4852 = vmatpush1.bf16.msra.mxu0 0
    %4853 = vmatprep.subr.bf16.mxu0 0
    %4854 = vmatpush1.bf16.msra.mxu0 0
    %4855 = vmatprep.subr.bf16.mxu0 0
    %4856 = vmatpush1.bf16.msra.mxu0 0
    %4857 = vmatprep.mubr.bf16.mxu0 0
    %4858 = vmatmul.mubr.bf16.gmra.mrb[0].mxu0 %v4824
    %v4859 = vpop.f32.mrb[0].mxu0
    %v4860 = vadd.f32 0.0, %v4859
    %v4861 = vpop.f32.mrb[0].mxu0
    %v4862 = vadd.f32 0.0, %v4861
    %v4863 = vpop.f32.mrb[0].mxu0
    %v4864 = vpop.f32.mrb[0].mxu0
    %4865 = vdwg.mxu0
    %4866 = vmatprep.subr.bf16.mxu0 %v4328
    %4867 = vmatpush1.bf16.msra.mxu0 %v4327
    %4868 = vmatprep.subr.bf16.mxu0 %v4332
    %4869 = vmatpush1.bf16.msra.mxu0 %v4331
    %4870 = vmatprep.subr.bf16.mxu0 %v4336
    %4871 = vmatpush1.bf16.msra.mxu0 %v4335
    %4872 = vmatprep.subr.bf16.mxu0 %v4340
    %4873 = vmatpush1.bf16.msra.mxu0 %v4339
    %4874 = vmatprep.subr.bf16.mxu0 %v4344
    %4875 = vmatpush1.bf16.msra.mxu0 %v4343
    %4876 = vmatprep.subr.bf16.mxu0 %v4348
    %4877 = vmatpush1.bf16.msra.mxu0 %v4347
    %4878 = vmatprep.subr.bf16.mxu0 %v4352
    %4879 = vmatpush1.bf16.msra.mxu0 %v4351
    %4880 = vmatprep.subr.bf16.mxu0 %v4356
    %4881 = vmatpush1.bf16.msra.mxu0 %v4355
    %4882 = vmatprep.subr.bf16.mxu0 0
    %4883 = vmatpush1.bf16.msra.mxu0 0
    %4884 = vmatprep.subr.bf16.mxu0 0
    %4885 = vmatpush1.bf16.msra.mxu0 0
    %4886 = vmatprep.subr.bf16.mxu0 0
    %4887 = vmatpush1.bf16.msra.mxu0 0
    %4888 = vmatprep.subr.bf16.mxu0 0
    %4889 = vmatpush1.bf16.msra.mxu0 0
    %4890 = vmatprep.subr.bf16.mxu0 0
    %4891 = vmatpush1.bf16.msra.mxu0 0
    %4892 = vmatprep.subr.bf16.mxu0 0
    %4893 = vmatpush1.bf16.msra.mxu0 0
    %4894 = vmatprep.subr.bf16.mxu0 0
    %4895 = vmatpush1.bf16.msra.mxu0 0
    %4896 = vmatprep.subr.bf16.mxu0 0
    %4897 = vmatpush1.bf16.msra.mxu0 0
    %4898 = vmatprep.mubr.bf16.mxu0 0
    %4899 = vmatmul.mubr.bf16.gmra.mrb[0].mxu0 %v4824
    %v4900 = vpop.f32.mrb[0].mxu0
    %v4901 = vadd.f32 0.0, %v4900
    %v4902 = vpop.f32.mrb[0].mxu0
    %v4903 = vadd.f32 0.0, %v4902
    %v4904 = vpop.f32.mrb[0].mxu0
    %v4905 = vpop.f32.mrb[0].mxu0
    %4906 = vdwg.mxu0
    %v4907 = vadd.f32 %v4820, %v4860
    %v4908 = vadd.f32 %v4821, %v4862
    %v4909 = vadd.f32 %v4822, %v4901
    %v4910 = vadd.f32 %v4823, %v4903
    %v4911 = vmul.f32 %v4907, 0.5
    %v4912 = vtanh.pop %v4911
    %v4913 = vmul.f32 %v4912, 0.5
    %v4914 = vadd.f32 %v4913, 0.5
    %v4915 = vmul.f32 %v4908, 0.5
    %v4916 = vtanh.pop %v4915
    %v4917 = vmul.f32 %v4916, 0.5
    %v4918 = vadd.f32 %v4917, 0.5
    %v4919 = vtanh.pop %v4909
    %v4920 = vmul.f32 %v4910, 0.5
    %v4921 = vtanh.pop %v4920
    %v4922 = vmul.f32 %v4921, 0.5
    %v4923 = vadd.f32 %v4922, 0.5
    %v4924 = vmul.f32 %v4918, %v4708
    %v4925 = vmul.f32 %v4914, %v4919
    %v4926 = vadd.f32 %v4924, %v4925
    %v4927 = vtanh.pop %v4926
    %v4928 = vmul.f32 %v4923, %v4927
    %v4929 = vld [vmem:[#allocation5 + $0x60] sm:$0xff]
    %v4930 = vld [vmem:[#allocation5 + $0x68] sm:$0xff]
    %v4931 = vld [vmem:[#allocation5 + $0x70] sm:$0xff]
    %v4932 = vld [vmem:[#allocation5 + $0x78] sm:$0xff]
    %v4933 = vpack.c.bf16 %v4819, %v4819
    %4934 = vmatprep.subr.bf16.mxu0 %v4058
    %4935 = vmatpush1.bf16.msra.mxu0 %v4057
    %4936 = vmatprep.subr.bf16.mxu0 %v4062
    %4937 = vmatpush1.bf16.msra.mxu0 %v4061
    %4938 = vmatprep.subr.bf16.mxu0 %v4066
    %4939 = vmatpush1.bf16.msra.mxu0 %v4065
    %4940 = vmatprep.subr.bf16.mxu0 %v4070
    %4941 = vmatpush1.bf16.msra.mxu0 %v4069
    %4942 = vmatprep.subr.bf16.mxu0 %v4074
    %4943 = vmatpush1.bf16.msra.mxu0 %v4073
    %4944 = vmatprep.subr.bf16.mxu0 %v4078
    %4945 = vmatpush1.bf16.msra.mxu0 %v4077
    %4946 = vmatprep.subr.bf16.mxu0 %v4082
    %4947 = vmatpush1.bf16.msra.mxu0 %v4081
    %4948 = vmatprep.subr.bf16.mxu0 %v4086
    %4949 = vmatpush1.bf16.msra.mxu0 %v4085
    %4950 = vmatprep.subr.bf16.mxu0 0
    %4951 = vmatpush1.bf16.msra.mxu0 0
    %4952 = vmatprep.subr.bf16.mxu0 0
    %4953 = vmatpush1.bf16.msra.mxu0 0
    %4954 = vmatprep.subr.bf16.mxu0 0
    %4955 = vmatpush1.bf16.msra.mxu0 0
    %4956 = vmatprep.subr.bf16.mxu0 0
    %4957 = vmatpush1.bf16.msra.mxu0 0
    %4958 = vmatprep.subr.bf16.mxu0 0
    %4959 = vmatpush1.bf16.msra.mxu0 0
    %4960 = vmatprep.subr.bf16.mxu0 0
    %4961 = vmatpush1.bf16.msra.mxu0 0
    %4962 = vmatprep.subr.bf16.mxu0 0
    %4963 = vmatpush1.bf16.msra.mxu0 0
    %4964 = vmatprep.subr.bf16.mxu0 0
    %4965 = vmatpush1.bf16.msra.mxu0 0
    %4966 = vmatprep.mubr.bf16.mxu0 0
    %4967 = vmatmul.mubr.bf16.gmra.mrb[0].mxu0 %v4933
    %v4968 = vpop.f32.mrb[0].mxu0
    %v4969 = vadd.f32 0.0, %v4968
    %v4970 = vpop.f32.mrb[0].mxu0
    %v4971 = vadd.f32 0.0, %v4970
    %v4972 = vpop.f32.mrb[0].mxu0
    %v4973 = vpop.f32.mrb[0].mxu0
    %4974 = vdwg.mxu0
    %4975 = vmatprep.subr.bf16.mxu0 %v4060
    %4976 = vmatpush1.bf16.msra.mxu0 %v4059
    %4977 = vmatprep.subr.bf16.mxu0 %v4064
    %4978 = vmatpush1.bf16.msra.mxu0 %v4063
    %4979 = vmatprep.subr.bf16.mxu0 %v4068
    %4980 = vmatpush1.bf16.msra.mxu0 %v4067
    %4981 = vmatprep.subr.bf16.mxu0 %v4072
    %4982 = vmatpush1.bf16.msra.mxu0 %v4071
    %4983 = vmatprep.subr.bf16.mxu0 %v4076
    %4984 = vmatpush1.bf16.msra.mxu0 %v4075
    %4985 = vmatprep.subr.bf16.mxu0 %v4080
    %4986 = vmatpush1.bf16.msra.mxu0 %v4079
    %4987 = vmatprep.subr.bf16.mxu0 %v4084
    %4988 = vmatpush1.bf16.msra.mxu0 %v4083
    %4989 = vmatprep.subr.bf16.mxu0 %v4088
    %4990 = vmatpush1.bf16.msra.mxu0 %v4087
    %4991 = vmatprep.subr.bf16.mxu0 0
    %4992 = vmatpush1.bf16.msra.mxu0 0
    %4993 = vmatprep.subr.bf16.mxu0 0
    %4994 = vmatpush1.bf16.msra.mxu0 0
    %4995 = vmatprep.subr.bf16.mxu0 0
    %4996 = vmatpush1.bf16.msra.mxu0 0
    %4997 = vmatprep.subr.bf16.mxu0 0
    %4998 = vmatpush1.bf16.msra.mxu0 0
    %4999 = vmatprep.subr.bf16.mxu0 0
    %5000 = vmatpush1.bf16.msra.mxu0 0
    %5001 = vmatprep.subr.bf16.mxu0 0
    %5002 = vmatpush1.bf16.msra.mxu0 0
    %5003 = vmatprep.subr.bf16.mxu0 0
    %5004 = vmatpush1.bf16.msra.mxu0 0
    %5005 = vmatprep.subr.bf16.mxu0 0
    %5006 = vmatpush1.bf16.msra.mxu0 0
    %5007 = vmatprep.mubr.bf16.mxu0 0
    %5008 = vmatmul.mubr.bf16.gmra.mrb[0].mxu0 %v4933
    %v5009 = vpop.f32.mrb[0].mxu0
    %v5010 = vadd.f32 0.0, %v5009
    %v5011 = vpop.f32.mrb[0].mxu0
    %v5012 = vadd.f32 0.0, %v5011
    %v5013 = vpop.f32.mrb[0].mxu0
    %v5014 = vpop.f32.mrb[0].mxu0
    %5015 = vdwg.mxu0
    %v5016 = vadd.f32 %v4929, %v4969
    %v5017 = vadd.f32 %v4930, %v4971
    %v5018 = vadd.f32 %v4931, %v5010
    %v5019 = vadd.f32 %v4932, %v5012
    %v5020 = vmul.f32 %v5016, 0.5
    %v5021 = vtanh.pop %v5020
    %v5022 = vmul.f32 %v5021, 0.5
    %v5023 = vadd.f32 %v5022, 0.5
    %v5024 = vmul.f32 %v5017, 0.5
    %v5025 = vtanh.pop %v5024
    %v5026 = vmul.f32 %v5025, 0.5
    %v5027 = vadd.f32 %v5026, 0.5
    %v5028 = vtanh.pop %v5018
    %v5029 = vmul.f32 %v5019, 0.5
    %v5030 = vtanh.pop %v5029
    %v5031 = vmul.f32 %v5030, 0.5
    %v5032 = vadd.f32 %v5031, 0.5
    %v5033 = vmul.f32 %v5027, %v4817
    %v5034 = vmul.f32 %v5023, %v5028
    %v5035 = vadd.f32 %v5033, %v5034
    %v5036 = vtanh.pop %v5035
    %v5037 = vmul.f32 %v5032, %v5036
    %v5038 = vld [vmem:[#allocation6 + $0x80] sm:$0xff]
    %v5039 = vld [vmem:[#allocation6 + $0x88] sm:$0xff]
    %v5040 = vld [vmem:[#allocation6 + $0x90] sm:$0xff]
    %v5041 = vld [vmem:[#allocation6 + $0x98] sm:$0xff]
    %v5042 = vpack.c.bf16 %v4928, %v4928
    %5043 = vmatprep.subr.bf16.mxu0 %v4326
    %5044 = vmatpush1.bf16.msra.mxu0 %v4325
    %5045 = vmatprep.subr.bf16.mxu0 %v4330
    %5046 = vmatpush1.bf16.msra.mxu0 %v4329
    %5047 = vmatprep.subr.bf16.mxu0 %v4334
    %5048 = vmatpush1.bf16.msra.mxu0 %v4333
    %5049 = vmatprep.subr.bf16.mxu0 %v4338
    %5050 = vmatpush1.bf16.msra.mxu0 %v4337
    %5051 = vmatprep.subr.bf16.mxu0 %v4342
    %5052 = vmatpush1.bf16.msra.mxu0 %v4341
    %5053 = vmatprep.subr.bf16.mxu0 %v4346
    %5054 = vmatpush1.bf16.msra.mxu0 %v4345
    %5055 = vmatprep.subr.bf16.mxu0 %v4350
    %5056 = vmatpush1.bf16.msra.mxu0 %v4349
    %5057 = vmatprep.subr.bf16.mxu0 %v4354
    %5058 = vmatpush1.bf16.msra.mxu0 %v4353
    %5059 = vmatprep.subr.bf16.mxu0 0
    %5060 = vmatpush1.bf16.msra.mxu0 0
    %5061 = vmatprep.subr.bf16.mxu0 0
    %5062 = vmatpush1.bf16.msra.mxu0 0
    %5063 = vmatprep.subr.bf16.mxu0 0
    %5064 = vmatpush1.bf16.msra.mxu0 0
    %5065 = vmatprep.subr.bf16.mxu0 0
    %5066 = vmatpush1.bf16.msra.mxu0 0
    %5067 = vmatprep.subr.bf16.mxu0 0
    %5068 = vmatpush1.bf16.msra.mxu0 0
    %5069 = vmatprep.subr.bf16.mxu0 0
    %5070 = vmatpush1.bf16.msra.mxu0 0
    %5071 = vmatprep.subr.bf16.mxu0 0
    %5072 = vmatpush1.bf16.msra.mxu0 0
    %5073 = vmatprep.subr.bf16.mxu0 0
    %5074 = vmatpush1.bf16.msra.mxu0 0
    %5075 = vmatprep.mubr.bf16.mxu0 0
    %5076 = vmatmul.mubr.bf16.gmra.mrb[0].mxu0 %v5042
    %v5077 = vpop.f32.mrb[0].mxu0
    %v5078 = vadd.f32 0.0, %v5077
    %v5079 = vpop.f32.mrb[0].mxu0
    %v5080 = vadd.f32 0.0, %v5079
    %v5081 = vpop.f32.mrb[0].mxu0
    %v5082 = vpop.f32.mrb[0].mxu0
    %5083 = vdwg.mxu0
    %5084 = vmatprep.subr.bf16.mxu0 %v4328
    %5085 = vmatpush1.bf16.msra.mxu0 %v4327
    %5086 = vmatprep.subr.bf16.mxu0 %v4332
    %5087 = vmatpush1.bf16.msra.mxu0 %v4331
    %5088 = vmatprep.subr.bf16.mxu0 %v4336
    %5089 = vmatpush1.bf16.msra.mxu0 %v4335
    %5090 = vmatprep.subr.bf16.mxu0 %v4340
    %5091 = vmatpush1.bf16.msra.mxu0 %v4339
    %5092 = vmatprep.subr.bf16.mxu0 %v4344
    %5093 = vmatpush1.bf16.msra.mxu0 %v4343
    %5094 = vmatprep.subr.bf16.mxu0 %v4348
    %5095 = vmatpush1.bf16.msra.mxu0 %v4347
    %5096 = vmatprep.subr.bf16.mxu0 %v4352
    %5097 = vmatpush1.bf16.msra.mxu0 %v4351
    %5098 = vmatprep.subr.bf16.mxu0 %v4356
    %5099 = vmatpush1.bf16.msra.mxu0 %v4355
    %5100 = vmatprep.subr.bf16.mxu0 0
    %5101 = vmatpush1.bf16.msra.mxu0 0
    %5102 = vmatprep.subr.bf16.mxu0 0
    %5103 = vmatpush1.bf16.msra.mxu0 0
    %5104 = vmatprep.subr.bf16.mxu0 0
    %5105 = vmatpush1.bf16.msra.mxu0 0
    %5106 = vmatprep.subr.bf16.mxu0 0
    %5107 = vmatpush1.bf16.msra.mxu0 0
    %5108 = vmatprep.subr.bf16.mxu0 0
    %5109 = vmatpush1.bf16.msra.mxu0 0
    %5110 = vmatprep.subr.bf16.mxu0 0
    %5111 = vmatpush1.bf16.msra.mxu0 0
    %5112 = vmatprep.subr.bf16.mxu0 0
    %5113 = vmatpush1.bf16.msra.mxu0 0
    %5114 = vmatprep.subr.bf16.mxu0 0
    %5115 = vmatpush1.bf16.msra.mxu0 0
    %5116 = vmatprep.mubr.bf16.mxu0 0
    %5117 = vmatmul.mubr.bf16.gmra.mrb[0].mxu0 %v5042
    %v5118 = vpop.f32.mrb[0].mxu0
    %v5119 = vadd.f32 0.0, %v5118
    %v5120 = vpop.f32.mrb[0].mxu0
    %v5121 = vadd.f32 0.0, %v5120
    %v5122 = vpop.f32.mrb[0].mxu0
    %v5123 = vpop.f32.mrb[0].mxu0
    %5124 = vdwg.mxu0
    %v5125 = vadd.f32 %v5038, %v5078
    %v5126 = vadd.f32 %v5039, %v5080
    %v5127 = vadd.f32 %v5040, %v5119
    %v5128 = vadd.f32 %v5041, %v5121
    %v5129 = vmul.f32 %v5125, 0.5
    %v5130 = vtanh.pop %v5129
    %v5131 = vmul.f32 %v5130, 0.5
    %v5132 = vadd.f32 %v5131, 0.5
    %v5133 = vmul.f32 %v5126, 0.5
    %v5134 = vtanh.pop %v5133
    %v5135 = vmul.f32 %v5134, 0.5
    %v5136 = vadd.f32 %v5135, 0.5
    %v5137 = vtanh.pop %v5127
    %v5138 = vmul.f32 %v5128, 0.5
    %v5139 = vtanh.pop %v5138
    %v5140 = vmul.f32 %v5139, 0.5
    %v5141 = vadd.f32 %v5140, 0.5
    %v5142 = vmul.f32 %v5136, %v4926
    %v5143 = vmul.f32 %v5132, %v5137
    %v5144 = vadd.f32 %v5142, %v5143
    %v5145 = vtanh.pop %v5144
    %v5146 = vmul.f32 %v5141, %v5145
    %v5147 = vld [vmem:[#allocation5 + $0x80] sm:$0xff]
    %v5148 = vld [vmem:[#allocation5 + $0x88] sm:$0xff]
    %v5149 = vld [vmem:[#allocation5 + $0x90] sm:$0xff]
    %v5150 = vld [vmem:[#allocation5 + $0x98] sm:$0xff]
    %v5151 = vpack.c.bf16 %v5037, %v5037
    %5152 = vmatprep.subr.bf16.mxu0 %v4058
    %5153 = vmatpush1.bf16.msra.mxu0 %v4057
    %5154 = vmatprep.subr.bf16.mxu0 %v4062
    %5155 = vmatpush1.bf16.msra.mxu0 %v4061
    %5156 = vmatprep.subr.bf16.mxu0 %v4066
    %5157 = vmatpush1.bf16.msra.mxu0 %v4065
    %5158 = vmatprep.subr.bf16.mxu0 %v4070
    %5159 = vmatpush1.bf16.msra.mxu0 %v4069
    %5160 = vmatprep.subr.bf16.mxu0 %v4074
    %5161 = vmatpush1.bf16.msra.mxu0 %v4073
    %5162 = vmatprep.subr.bf16.mxu0 %v4078
    %5163 = vmatpush1.bf16.msra.mxu0 %v4077
    %5164 = vmatprep.subr.bf16.mxu0 %v4082
    %5165 = vmatpush1.bf16.msra.mxu0 %v4081
    %5166 = vmatprep.subr.bf16.mxu0 %v4086
    %5167 = vmatpush1.bf16.msra.mxu0 %v4085
    %5168 = vmatprep.subr.bf16.mxu0 0
    %5169 = vmatpush1.bf16.msra.mxu0 0
    %5170 = vmatprep.subr.bf16.mxu0 0
    %5171 = vmatpush1.bf16.msra.mxu0 0
    %5172 = vmatprep.subr.bf16.mxu0 0
    %5173 = vmatpush1.bf16.msra.mxu0 0
    %5174 = vmatprep.subr.bf16.mxu0 0
    %5175 = vmatpush1.bf16.msra.mxu0 0
    %5176 = vmatprep.subr.bf16.mxu0 0
    %5177 = vmatpush1.bf16.msra.mxu0 0
    %5178 = vmatprep.subr.bf16.mxu0 0
    %5179 = vmatpush1.bf16.msra.mxu0 0
    %5180 = vmatprep.subr.bf16.mxu0 0
    %5181 = vmatpush1.bf16.msra.mxu0 0
    %5182 = vmatprep.subr.bf16.mxu0 0
    %5183 = vmatpush1.bf16.msra.mxu0 0
    %5184 = vmatprep.mubr.bf16.mxu0 0
    %5185 = vmatmul.mubr.bf16.gmra.mrb[0].mxu0 %v5151
    %v5186 = vpop.f32.mrb[0].mxu0
    %v5187 = vadd.f32 0.0, %v5186
    %v5188 = vpop.f32.mrb[0].mxu0
    %v5189 = vadd.f32 0.0, %v5188
    %v5190 = vpop.f32.mrb[0].mxu0
    %v5191 = vpop.f32.mrb[0].mxu0
    %5192 = vdwg.mxu0
    %5193 = vmatprep.subr.bf16.mxu0 %v4060
    %5194 = vmatpush1.bf16.msra.mxu0 %v4059
    %5195 = vmatprep.subr.bf16.mxu0 %v4064
    %5196 = vmatpush1.bf16.msra.mxu0 %v4063
    %5197 = vmatprep.subr.bf16.mxu0 %v4068
    %5198 = vmatpush1.bf16.msra.mxu0 %v4067
    %5199 = vmatprep.subr.bf16.mxu0 %v4072
    %5200 = vmatpush1.bf16.msra.mxu0 %v4071
    %5201 = vmatprep.subr.bf16.mxu0 %v4076
    %5202 = vmatpush1.bf16.msra.mxu0 %v4075
    %5203 = vmatprep.subr.bf16.mxu0 %v4080
    %5204 = vmatpush1.bf16.msra.mxu0 %v4079
    %5205 = vmatprep.subr.bf16.mxu0 %v4084
    %5206 = vmatpush1.bf16.msra.mxu0 %v4083
    %5207 = vmatprep.subr.bf16.mxu0 %v4088
    %5208 = vmatpush1.bf16.msra.mxu0 %v4087
    %5209 = vmatprep.subr.bf16.mxu0 0
    %5210 = vmatpush1.bf16.msra.mxu0 0
    %5211 = vmatprep.subr.bf16.mxu0 0
    %5212 = vmatpush1.bf16.msra.mxu0 0
    %5213 = vmatprep.subr.bf16.mxu0 0
    %5214 = vmatpush1.bf16.msra.mxu0 0
    %5215 = vmatprep.subr.bf16.mxu0 0
    %5216 = vmatpush1.bf16.msra.mxu0 0
    %5217 = vmatprep.subr.bf16.mxu0 0
    %5218 = vmatpush1.bf16.msra.mxu0 0
    %5219 = vmatprep.subr.bf16.mxu0 0
    %5220 = vmatpush1.bf16.msra.mxu0 0
    %5221 = vmatprep.subr.bf16.mxu0 0
    %5222 = vmatpush1.bf16.msra.mxu0 0
    %5223 = vmatprep.subr.bf16.mxu0 0
    %5224 = vmatpush1.bf16.msra.mxu0 0
    %5225 = vmatprep.mubr.bf16.mxu0 0
    %5226 = vmatmul.mubr.bf16.gmra.mrb[0].mxu0 %v5151
    %v5227 = vpop.f32.mrb[0].mxu0
    %v5228 = vadd.f32 0.0, %v5227
    %v5229 = vpop.f32.mrb[0].mxu0
    %v5230 = vadd.f32 0.0, %v5229
    %v5231 = vpop.f32.mrb[0].mxu0
    %v5232 = vpop.f32.mrb[0].mxu0
    %5233 = vdwg.mxu0
    %v5234 = vadd.f32 %v5147, %v5187
    %v5235 = vadd.f32 %v5148, %v5189
    %v5236 = vadd.f32 %v5149, %v5228
    %v5237 = vadd.f32 %v5150, %v5230
    %v5238 = vmul.f32 %v5234, 0.5
    %v5239 = vtanh.pop %v5238
    %v5240 = vmul.f32 %v5239, 0.5
    %v5241 = vadd.f32 %v5240, 0.5
    %v5242 = vmul.f32 %v5235, 0.5
    %v5243 = vtanh.pop %v5242
    %v5244 = vmul.f32 %v5243, 0.5
    %v5245 = vadd.f32 %v5244, 0.5
    %v5246 = vtanh.pop %v5236
    %v5247 = vmul.f32 %v5237, 0.5
    %v5248 = vtanh.pop %v5247
    %v5249 = vmul.f32 %v5248, 0.5
    %v5250 = vadd.f32 %v5249, 0.5
    %v5251 = vmul.f32 %v5245, %v5035
    %v5252 = vmul.f32 %v5241, %v5246
    %v5253 = vadd.f32 %v5251, %v5252
    %v5254 = vtanh.pop %v5253
    %v5255 = vmul.f32 %v5250, %v5254
    %v5256 = vld [vmem:[#allocation6 + $0x60] sm:$0xff]
    %v5257 = vld [vmem:[#allocation6 + $0x68] sm:$0xff]
    %v5258 = vld [vmem:[#allocation6 + $0x70] sm:$0xff]
    %v5259 = vld [vmem:[#allocation6 + $0x78] sm:$0xff]
    %v5260 = vpack.c.bf16 %v5146, %v5146
    %5261 = vmatprep.subr.bf16.mxu0 %v4326
    %5262 = vmatpush1.bf16.msra.mxu0 %v4325
    %5263 = vmatprep.subr.bf16.mxu0 %v4330
    %5264 = vmatpush1.bf16.msra.mxu0 %v4329
    %5265 = vmatprep.subr.bf16.mxu0 %v4334
    %5266 = vmatpush1.bf16.msra.mxu0 %v4333
    %5267 = vmatprep.subr.bf16.mxu0 %v4338
    %5268 = vmatpush1.bf16.msra.mxu0 %v4337
    %5269 = vmatprep.subr.bf16.mxu0 %v4342
    %5270 = vmatpush1.bf16.msra.mxu0 %v4341
    %5271 = vmatprep.subr.bf16.mxu0 %v4346
    %5272 = vmatpush1.bf16.msra.mxu0 %v4345
    %5273 = vmatprep.subr.bf16.mxu0 %v4350
    %5274 = vmatpush1.bf16.msra.mxu0 %v4349
    %5275 = vmatprep.subr.bf16.mxu0 %v4354
    %5276 = vmatpush1.bf16.msra.mxu0 %v4353
    %5277 = vmatprep.subr.bf16.mxu0 0
    %5278 = vmatpush1.bf16.msra.mxu0 0
    %5279 = vmatprep.subr.bf16.mxu0 0
    %5280 = vmatpush1.bf16.msra.mxu0 0
    %5281 = vmatprep.subr.bf16.mxu0 0
    %5282 = vmatpush1.bf16.msra.mxu0 0
    %5283 = vmatprep.subr.bf16.mxu0 0
    %5284 = vmatpush1.bf16.msra.mxu0 0
    %5285 = vmatprep.subr.bf16.mxu0 0
    %5286 = vmatpush1.bf16.msra.mxu0 0
    %5287 = vmatprep.subr.bf16.mxu0 0
    %5288 = vmatpush1.bf16.msra.mxu0 0
    %5289 = vmatprep.subr.bf16.mxu0 0
    %5290 = vmatpush1.bf16.msra.mxu0 0
    %5291 = vmatprep.subr.bf16.mxu0 0
    %5292 = vmatpush1.bf16.msra.mxu0 0
    %5293 = vmatprep.mubr.bf16.mxu0 0
    %5294 = vmatmul.mubr.bf16.gmra.mrb[0].mxu0 %v5260
    %v5295 = vpop.f32.mrb[0].mxu0
    %v5296 = vadd.f32 0.0, %v5295
    %v5297 = vpop.f32.mrb[0].mxu0
    %v5298 = vadd.f32 0.0, %v5297
    %v5299 = vpop.f32.mrb[0].mxu0
    %v5300 = vpop.f32.mrb[0].mxu0
    %5301 = vdwg.mxu0
    %5302 = vmatprep.subr.bf16.mxu0 %v4328
    %5303 = vmatpush1.bf16.msra.mxu0 %v4327
    %5304 = vmatprep.subr.bf16.mxu0 %v4332
    %5305 = vmatpush1.bf16.msra.mxu0 %v4331
    %5306 = vmatprep.subr.bf16.mxu0 %v4336
    %5307 = vmatpush1.bf16.msra.mxu0 %v4335
    %5308 = vmatprep.subr.bf16.mxu0 %v4340
    %5309 = vmatpush1.bf16.msra.mxu0 %v4339
    %5310 = vmatprep.subr.bf16.mxu0 %v4344
    %5311 = vmatpush1.bf16.msra.mxu0 %v4343
    %5312 = vmatprep.subr.bf16.mxu0 %v4348
    %5313 = vmatpush1.bf16.msra.mxu0 %v4347
    %5314 = vmatprep.subr.bf16.mxu0 %v4352
    %5315 = vmatpush1.bf16.msra.mxu0 %v4351
    %5316 = vmatprep.subr.bf16.mxu0 %v4356
    %5317 = vmatpush1.bf16.msra.mxu0 %v4355
    %5318 = vmatprep.subr.bf16.mxu0 0
    %5319 = vmatpush1.bf16.msra.mxu0 0
    %5320 = vmatprep.subr.bf16.mxu0 0
    %5321 = vmatpush1.bf16.msra.mxu0 0
    %5322 = vmatprep.subr.bf16.mxu0 0
    %5323 = vmatpush1.bf16.msra.mxu0 0
    %5324 = vmatprep.subr.bf16.mxu0 0
    %5325 = vmatpush1.bf16.msra.mxu0 0
    %5326 = vmatprep.subr.bf16.mxu0 0
    %5327 = vmatpush1.bf16.msra.mxu0 0
    %5328 = vmatprep.subr.bf16.mxu0 0
    %5329 = vmatpush1.bf16.msra.mxu0 0
    %5330 = vmatprep.subr.bf16.mxu0 0
    %5331 = vmatpush1.bf16.msra.mxu0 0
    %5332 = vmatprep.subr.bf16.mxu0 0
    %5333 = vmatpush1.bf16.msra.mxu0 0
    %5334 = vmatprep.mubr.bf16.mxu0 0
    %5335 = vmatmul.mubr.bf16.gmra.mrb[0].mxu0 %v5260
    %v5336 = vpop.f32.mrb[0].mxu0
    %v5337 = vadd.f32 0.0, %v5336
    %v5338 = vpop.f32.mrb[0].mxu0
    %v5339 = vadd.f32 0.0, %v5338
    %v5340 = vpop.f32.mrb[0].mxu0
    %v5341 = vpop.f32.mrb[0].mxu0
    %5342 = vdwg.mxu0
    %v5343 = vadd.f32 %v5256, %v5296
    %v5344 = vadd.f32 %v5257, %v5298
    %v5345 = vadd.f32 %v5258, %v5337
    %v5346 = vadd.f32 %v5259, %v5339
    %v5347 = vmul.f32 %v5343, 0.5
    %v5348 = vtanh.pop %v5347
    %v5349 = vmul.f32 %v5348, 0.5
    %v5350 = vadd.f32 %v5349, 0.5
    %v5351 = vmul.f32 %v5344, 0.5
    %v5352 = vtanh.pop %v5351
    %v5353 = vmul.f32 %v5352, 0.5
    %v5354 = vadd.f32 %v5353, 0.5
    %v5355 = vtanh.pop %v5345
    %v5356 = vmul.f32 %v5346, 0.5
    %v5357 = vtanh.pop %v5356
    %v5358 = vmul.f32 %v5357, 0.5
    %v5359 = vadd.f32 %v5358, 0.5
    %v5360 = vmul.f32 %v5354, %v5144
    %v5361 = vmul.f32 %v5350, %v5355
    %v5362 = vadd.f32 %v5360, %v5361
    %v5363 = vtanh.pop %v5362
    %v5364 = vmul.f32 %v5359, %v5363
    %v5365 = vld [vmem:[#allocation5 + $0xa0] sm:$0xff]
    %v5366 = vld [vmem:[#allocation5 + $0xa8] sm:$0xff]
    %v5367 = vld [vmem:[#allocation5 + $0xb0] sm:$0xff]
    %v5368 = vld [vmem:[#allocation5 + $0xb8] sm:$0xff]
    %v5369 = vpack.c.bf16 %v5255, %v5255
    %5370 = vmatprep.subr.bf16.mxu0 %v4058
    %5371 = vmatpush1.bf16.msra.mxu0 %v4057
    %5372 = vmatprep.subr.bf16.mxu0 %v4062
    %5373 = vmatpush1.bf16.msra.mxu0 %v4061
    %5374 = vmatprep.subr.bf16.mxu0 %v4066
    %5375 = vmatpush1.bf16.msra.mxu0 %v4065
    %5376 = vmatprep.subr.bf16.mxu0 %v4070
    %5377 = vmatpush1.bf16.msra.mxu0 %v4069
    %5378 = vmatprep.subr.bf16.mxu0 %v4074
    %5379 = vmatpush1.bf16.msra.mxu0 %v4073
    %5380 = vmatprep.subr.bf16.mxu0 %v4078
    %5381 = vmatpush1.bf16.msra.mxu0 %v4077
    %5382 = vmatprep.subr.bf16.mxu0 %v4082
    %5383 = vmatpush1.bf16.msra.mxu0 %v4081
    %5384 = vmatprep.subr.bf16.mxu0 %v4086
    %5385 = vmatpush1.bf16.msra.mxu0 %v4085
    %5386 = vmatprep.subr.bf16.mxu0 0
    %5387 = vmatpush1.bf16.msra.mxu0 0
    %5388 = vmatprep.subr.bf16.mxu0 0
    %5389 = vmatpush1.bf16.msra.mxu0 0
    %5390 = vmatprep.subr.bf16.mxu0 0
    %5391 = vmatpush1.bf16.msra.mxu0 0
    %5392 = vmatprep.subr.bf16.mxu0 0
    %5393 = vmatpush1.bf16.msra.mxu0 0
    %5394 = vmatprep.subr.bf16.mxu0 0
    %5395 = vmatpush1.bf16.msra.mxu0 0
    %5396 = vmatprep.subr.bf16.mxu0 0
    %5397 = vmatpush1.bf16.msra.mxu0 0
    %5398 = vmatprep.subr.bf16.mxu0 0
    %5399 = vmatpush1.bf16.msra.mxu0 0
    %5400 = vmatprep.subr.bf16.mxu0 0
    %5401 = vmatpush1.bf16.msra.mxu0 0
    %5402 = vmatprep.mubr.bf16.mxu0 0
    %5403 = vmatmul.mubr.bf16.gmra.mrb[0].mxu0 %v5369
    %v5404 = vpop.f32.mrb[0].mxu0
    %v5405 = vadd.f32 0.0, %v5404
    %v5406 = vpop.f32.mrb[0].mxu0
    %v5407 = vadd.f32 0.0, %v5406
    %v5408 = vpop.f32.mrb[0].mxu0
    %v5409 = vpop.f32.mrb[0].mxu0
    %5410 = vdwg.mxu0
    %5411 = vmatprep.subr.bf16.mxu0 %v4060
    %5412 = vmatpush1.bf16.msra.mxu0 %v4059
    %5413 = vmatprep.subr.bf16.mxu0 %v4064
    %5414 = vmatpush1.bf16.msra.mxu0 %v4063
    %5415 = vmatprep.subr.bf16.mxu0 %v4068
    %5416 = vmatpush1.bf16.msra.mxu0 %v4067
    %5417 = vmatprep.subr.bf16.mxu0 %v4072
    %5418 = vmatpush1.bf16.msra.mxu0 %v4071
    %5419 = vmatprep.subr.bf16.mxu0 %v4076
    %5420 = vmatpush1.bf16.msra.mxu0 %v4075
    %5421 = vmatprep.subr.bf16.mxu0 %v4080
    %5422 = vmatpush1.bf16.msra.mxu0 %v4079
    %5423 = vmatprep.subr.bf16.mxu0 %v4084
    %5424 = vmatpush1.bf16.msra.mxu0 %v4083
    %5425 = vmatprep.subr.bf16.mxu0 %v4088
    %5426 = vmatpush1.bf16.msra.mxu0 %v4087
    %5427 = vmatprep.subr.bf16.mxu0 0
    %5428 = vmatpush1.bf16.msra.mxu0 0
    %5429 = vmatprep.subr.bf16.mxu0 0
    %5430 = vmatpush1.bf16.msra.mxu0 0
    %5431 = vmatprep.subr.bf16.mxu0 0
    %5432 = vmatpush1.bf16.msra.mxu0 0
    %5433 = vmatprep.subr.bf16.mxu0 0
    %5434 = vmatpush1.bf16.msra.mxu0 0
    %5435 = vmatprep.subr.bf16.mxu0 0
    %5436 = vmatpush1.bf16.msra.mxu0 0
    %5437 = vmatprep.subr.bf16.mxu0 0
    %5438 = vmatpush1.bf16.msra.mxu0 0
    %5439 = vmatprep.subr.bf16.mxu0 0
    %5440 = vmatpush1.bf16.msra.mxu0 0
    %5441 = vmatprep.subr.bf16.mxu0 0
    %5442 = vmatpush1.bf16.msra.mxu0 0
    %5443 = vmatprep.mubr.bf16.mxu0 0
    %5444 = vmatmul.mubr.bf16.gmra.mrb[0].mxu0 %v5369
    %v5445 = vpop.f32.mrb[0].mxu0
    %v5446 = vadd.f32 0.0, %v5445
    %v5447 = vpop.f32.mrb[0].mxu0
    %v5448 = vadd.f32 0.0, %v5447
    %v5449 = vpop.f32.mrb[0].mxu0
    %v5450 = vpop.f32.mrb[0].mxu0
    %5451 = vdwg.mxu0
    %v5452 = vadd.f32 %v5365, %v5405
    %v5453 = vadd.f32 %v5366, %v5407
    %v5454 = vadd.f32 %v5367, %v5446
    %v5455 = vadd.f32 %v5368, %v5448
    %v5456 = vmul.f32 %v5452, 0.5
    %v5457 = vtanh.pop %v5456
    %v5458 = vmul.f32 %v5457, 0.5
    %v5459 = vadd.f32 %v5458, 0.5
    %v5460 = vmul.f32 %v5453, 0.5
    %v5461 = vtanh.pop %v5460
    %v5462 = vmul.f32 %v5461, 0.5
    %v5463 = vadd.f32 %v5462, 0.5
    %v5464 = vtanh.pop %v5454
    %v5465 = vmul.f32 %v5455, 0.5
    %v5466 = vtanh.pop %v5465
    %v5467 = vmul.f32 %v5466, 0.5
    %v5468 = vadd.f32 %v5467, 0.5
    %v5469 = vmul.f32 %v5463, %v5253
    %v5470 = vmul.f32 %v5459, %v5464
    %v5471 = vadd.f32 %v5469, %v5470
    %v5472 = vtanh.pop %v5471
    %v5473 = vmul.f32 %v5468, %v5472
    %v5474 = vld [vmem:[#allocation6 + $0x40] sm:$0xff]
    %v5475 = vld [vmem:[#allocation6 + $0x48] sm:$0xff]
    %v5476 = vld [vmem:[#allocation6 + $0x50] sm:$0xff]
    %v5477 = vld [vmem:[#allocation6 + $0x58] sm:$0xff]
    %v5478 = vpack.c.bf16 %v5364, %v5364
    %5479 = vmatprep.subr.bf16.mxu0 %v4326
    %5480 = vmatpush1.bf16.msra.mxu0 %v4325
    %5481 = vmatprep.subr.bf16.mxu0 %v4330
    %5482 = vmatpush1.bf16.msra.mxu0 %v4329
    %5483 = vmatprep.subr.bf16.mxu0 %v4334
    %5484 = vmatpush1.bf16.msra.mxu0 %v4333
    %5485 = vmatprep.subr.bf16.mxu0 %v4338
    %5486 = vmatpush1.bf16.msra.mxu0 %v4337
    %5487 = vmatprep.subr.bf16.mxu0 %v4342
    %5488 = vmatpush1.bf16.msra.mxu0 %v4341
    %5489 = vmatprep.subr.bf16.mxu0 %v4346
    %5490 = vmatpush1.bf16.msra.mxu0 %v4345
    %5491 = vmatprep.subr.bf16.mxu0 %v4350
    %5492 = vmatpush1.bf16.msra.mxu0 %v4349
    %5493 = vmatprep.subr.bf16.mxu0 %v4354
    %5494 = vmatpush1.bf16.msra.mxu0 %v4353
    %5495 = vmatprep.subr.bf16.mxu0 0
    %5496 = vmatpush1.bf16.msra.mxu0 0
    %5497 = vmatprep.subr.bf16.mxu0 0
    %5498 = vmatpush1.bf16.msra.mxu0 0
    %5499 = vmatprep.subr.bf16.mxu0 0
    %5500 = vmatpush1.bf16.msra.mxu0 0
    %5501 = vmatprep.subr.bf16.mxu0 0
    %5502 = vmatpush1.bf16.msra.mxu0 0
    %5503 = vmatprep.subr.bf16.mxu0 0
    %5504 = vmatpush1.bf16.msra.mxu0 0
    %5505 = vmatprep.subr.bf16.mxu0 0
    %5506 = vmatpush1.bf16.msra.mxu0 0
    %5507 = vmatprep.subr.bf16.mxu0 0
    %5508 = vmatpush1.bf16.msra.mxu0 0
    %5509 = vmatprep.subr.bf16.mxu0 0
    %5510 = vmatpush1.bf16.msra.mxu0 0
    %5511 = vmatprep.mubr.bf16.mxu0 0
    %5512 = vmatmul.mubr.bf16.gmra.mrb[0].mxu0 %v5478
    %v5513 = vpop.f32.mrb[0].mxu0
    %v5514 = vadd.f32 0.0, %v5513
    %v5515 = vpop.f32.mrb[0].mxu0
    %v5516 = vadd.f32 0.0, %v5515
    %v5517 = vpop.f32.mrb[0].mxu0
    %v5518 = vpop.f32.mrb[0].mxu0
    %5519 = vdwg.mxu0
    %5520 = vmatprep.subr.bf16.mxu0 %v4328
    %5521 = vmatpush1.bf16.msra.mxu0 %v4327
    %5522 = vmatprep.subr.bf16.mxu0 %v4332
    %5523 = vmatpush1.bf16.msra.mxu0 %v4331
    %5524 = vmatprep.subr.bf16.mxu0 %v4336
    %5525 = vmatpush1.bf16.msra.mxu0 %v4335
    %5526 = vmatprep.subr.bf16.mxu0 %v4340
    %5527 = vmatpush1.bf16.msra.mxu0 %v4339
    %5528 = vmatprep.subr.bf16.mxu0 %v4344
    %5529 = vmatpush1.bf16.msra.mxu0 %v4343
    %5530 = vmatprep.subr.bf16.mxu0 %v4348
    %5531 = vmatpush1.bf16.msra.mxu0 %v4347
    %5532 = vmatprep.subr.bf16.mxu0 %v4352
    %5533 = vmatpush1.bf16.msra.mxu0 %v4351
    %5534 = vmatprep.subr.bf16.mxu0 %v4356
    %5535 = vmatpush1.bf16.msra.mxu0 %v4355
    %5536 = vmatprep.subr.bf16.mxu0 0
    %5537 = vmatpush1.bf16.msra.mxu0 0
    %5538 = vmatprep.subr.bf16.mxu0 0
    %5539 = vmatpush1.bf16.msra.mxu0 0
    %5540 = vmatprep.subr.bf16.mxu0 0
    %5541 = vmatpush1.bf16.msra.mxu0 0
    %5542 = vmatprep.subr.bf16.mxu0 0
    %5543 = vmatpush1.bf16.msra.mxu0 0
    %5544 = vmatprep.subr.bf16.mxu0 0
    %5545 = vmatpush1.bf16.msra.mxu0 0
    %5546 = vmatprep.subr.bf16.mxu0 0
    %5547 = vmatpush1.bf16.msra.mxu0 0
    %5548 = vmatprep.subr.bf16.mxu0 0
    %5549 = vmatpush1.bf16.msra.mxu0 0
    %5550 = vmatprep.subr.bf16.mxu0 0
    %5551 = vmatpush1.bf16.msra.mxu0 0
    %5552 = vmatprep.mubr.bf16.mxu0 0
    %5553 = vmatmul.mubr.bf16.gmra.mrb[0].mxu0 %v5478
    %v5554 = vpop.f32.mrb[0].mxu0
    %v5555 = vadd.f32 0.0, %v5554
    %v5556 = vpop.f32.mrb[0].mxu0
    %v5557 = vadd.f32 0.0, %v5556
    %v5558 = vpop.f32.mrb[0].mxu0
    %v5559 = vpop.f32.mrb[0].mxu0
    %5560 = vdwg.mxu0
    %v5561 = vadd.f32 %v5474, %v5514
    %v5562 = vadd.f32 %v5475, %v5516
    %v5563 = vadd.f32 %v5476, %v5555
    %v5564 = vadd.f32 %v5477, %v5557
    %v5565 = vmul.f32 %v5561, 0.5
    %v5566 = vtanh.pop %v5565
    %v5567 = vmul.f32 %v5566, 0.5
    %v5568 = vadd.f32 %v5567, 0.5
    %v5569 = vmul.f32 %v5562, 0.5
    %v5570 = vtanh.pop %v5569
    %v5571 = vmul.f32 %v5570, 0.5
    %v5572 = vadd.f32 %v5571, 0.5
    %v5573 = vtanh.pop %v5563
    %v5574 = vmul.f32 %v5564, 0.5
    %v5575 = vtanh.pop %v5574
    %v5576 = vmul.f32 %v5575, 0.5
    %v5577 = vadd.f32 %v5576, 0.5
    %v5578 = vmul.f32 %v5572, %v5362
    %v5579 = vmul.f32 %v5568, %v5573
    %v5580 = vadd.f32 %v5578, %v5579
    %v5581 = vtanh.pop %v5580
    %v5582 = vmul.f32 %v5577, %v5581
    %v5583 = vld [vmem:[#allocation5 + $0xc0] sm:$0xff]
    %v5584 = vld [vmem:[#allocation5 + $0xc8] sm:$0xff]
    %v5585 = vld [vmem:[#allocation5 + $0xd0] sm:$0xff]
    %v5586 = vld [vmem:[#allocation5 + $0xd8] sm:$0xff]
    %v5587 = vpack.c.bf16 %v5473, %v5473
    %5588 = vmatprep.subr.bf16.mxu0 %v4058
    %5589 = vmatpush1.bf16.msra.mxu0 %v4057
    %5590 = vmatprep.subr.bf16.mxu0 %v4062
    %5591 = vmatpush1.bf16.msra.mxu0 %v4061
    %5592 = vmatprep.subr.bf16.mxu0 %v4066
    %5593 = vmatpush1.bf16.msra.mxu0 %v4065
    %5594 = vmatprep.subr.bf16.mxu0 %v4070
    %5595 = vmatpush1.bf16.msra.mxu0 %v4069
    %5596 = vmatprep.subr.bf16.mxu0 %v4074
    %5597 = vmatpush1.bf16.msra.mxu0 %v4073
    %5598 = vmatprep.subr.bf16.mxu0 %v4078
    %5599 = vmatpush1.bf16.msra.mxu0 %v4077
    %5600 = vmatprep.subr.bf16.mxu0 %v4082
    %5601 = vmatpush1.bf16.msra.mxu0 %v4081
    %5602 = vmatprep.subr.bf16.mxu0 %v4086
    %5603 = vmatpush1.bf16.msra.mxu0 %v4085
    %5604 = vmatprep.subr.bf16.mxu0 0
    %5605 = vmatpush1.bf16.msra.mxu0 0
    %5606 = vmatprep.subr.bf16.mxu0 0
    %5607 = vmatpush1.bf16.msra.mxu0 0
    %5608 = vmatprep.subr.bf16.mxu0 0
    %5609 = vmatpush1.bf16.msra.mxu0 0
    %5610 = vmatprep.subr.bf16.mxu0 0
    %5611 = vmatpush1.bf16.msra.mxu0 0
    %5612 = vmatprep.subr.bf16.mxu0 0
    %5613 = vmatpush1.bf16.msra.mxu0 0
    %5614 = vmatprep.subr.bf16.mxu0 0
    %5615 = vmatpush1.bf16.msra.mxu0 0
    %5616 = vmatprep.subr.bf16.mxu0 0
    %5617 = vmatpush1.bf16.msra.mxu0 0
    %5618 = vmatprep.subr.bf16.mxu0 0
    %5619 = vmatpush1.bf16.msra.mxu0 0
    %5620 = vmatprep.mubr.bf16.mxu0 0
    %5621 = vmatmul.mubr.bf16.gmra.mrb[0].mxu0 %v5587
    %v5622 = vpop.f32.mrb[0].mxu0
    %v5623 = vadd.f32 0.0, %v5622
    %v5624 = vpop.f32.mrb[0].mxu0
    %v5625 = vadd.f32 0.0, %v5624
    %v5626 = vpop.f32.mrb[0].mxu0
    %v5627 = vpop.f32.mrb[0].mxu0
    %5628 = vdwg.mxu0
    %5629 = vmatprep.subr.bf16.mxu0 %v4060
    %5630 = vmatpush1.bf16.msra.mxu0 %v4059
    %5631 = vmatprep.subr.bf16.mxu0 %v4064
    %5632 = vmatpush1.bf16.msra.mxu0 %v4063
    %5633 = vmatprep.subr.bf16.mxu0 %v4068
    %5634 = vmatpush1.bf16.msra.mxu0 %v4067
    %5635 = vmatprep.subr.bf16.mxu0 %v4072
    %5636 = vmatpush1.bf16.msra.mxu0 %v4071
    %5637 = vmatprep.subr.bf16.mxu0 %v4076
    %5638 = vmatpush1.bf16.msra.mxu0 %v4075
    %5639 = vmatprep.subr.bf16.mxu0 %v4080
    %5640 = vmatpush1.bf16.msra.mxu0 %v4079
    %5641 = vmatprep.subr.bf16.mxu0 %v4084
    %5642 = vmatpush1.bf16.msra.mxu0 %v4083
    %5643 = vmatprep.subr.bf16.mxu0 %v4088
    %5644 = vmatpush1.bf16.msra.mxu0 %v4087
    %5645 = vmatprep.subr.bf16.mxu0 0
    %5646 = vmatpush1.bf16.msra.mxu0 0
    %5647 = vmatprep.subr.bf16.mxu0 0
    %5648 = vmatpush1.bf16.msra.mxu0 0
    %5649 = vmatprep.subr.bf16.mxu0 0
    %5650 = vmatpush1.bf16.msra.mxu0 0
    %5651 = vmatprep.subr.bf16.mxu0 0
    %5652 = vmatpush1.bf16.msra.mxu0 0
    %5653 = vmatprep.subr.bf16.mxu0 0
    %5654 = vmatpush1.bf16.msra.mxu0 0
    %5655 = vmatprep.subr.bf16.mxu0 0
    %5656 = vmatpush1.bf16.msra.mxu0 0
    %5657 = vmatprep.subr.bf16.mxu0 0
    %5658 = vmatpush1.bf16.msra.mxu0 0
    %5659 = vmatprep.subr.bf16.mxu0 0
    %5660 = vmatpush1.bf16.msra.mxu0 0
    %5661 = vmatprep.mubr.bf16.mxu0 0
    %5662 = vmatmul.mubr.bf16.gmra.mrb[0].mxu0 %v5587
    %v5663 = vpop.f32.mrb[0].mxu0
    %v5664 = vadd.f32 0.0, %v5663
    %v5665 = vpop.f32.mrb[0].mxu0
    %v5666 = vadd.f32 0.0, %v5665
    %v5667 = vpop.f32.mrb[0].mxu0
    %v5668 = vpop.f32.mrb[0].mxu0
    %5669 = vdwg.mxu0
    %v5670 = vadd.f32 %v5583, %v5623
    %v5671 = vadd.f32 %v5584, %v5625
    %v5672 = vadd.f32 %v5585, %v5664
    %v5673 = vadd.f32 %v5586, %v5666
    %v5674 = vmul.f32 %v5670, 0.5
    %v5675 = vtanh.pop %v5674
    %v5676 = vmul.f32 %v5675, 0.5
    %v5677 = vadd.f32 %v5676, 0.5
    %v5678 = vmul.f32 %v5671, 0.5
    %v5679 = vtanh.pop %v5678
    %v5680 = vmul.f32 %v5679, 0.5
    %v5681 = vadd.f32 %v5680, 0.5
    %v5682 = vtanh.pop %v5672
    %v5683 = vmul.f32 %v5673, 0.5
    %v5684 = vtanh.pop %v5683
    %v5685 = vmul.f32 %v5684, 0.5
    %v5686 = vadd.f32 %v5685, 0.5
    %v5687 = vmul.f32 %v5681, %v5471
    %v5688 = vmul.f32 %v5677, %v5682
    %v5689 = vadd.f32 %v5687, %v5688
    %v5690 = vtanh.pop %v5689
    %v5691 = vmul.f32 %v5686, %v5690
    %v5692 = vld [vmem:[#allocation6 + $0x20] sm:$0xff]
    %v5693 = vld [vmem:[#allocation6 + $0x28] sm:$0xff]
    %v5694 = vld [vmem:[#allocation6 + $0x30] sm:$0xff]
    %v5695 = vld [vmem:[#allocation6 + $0x38] sm:$0xff]
    %v5696 = vpack.c.bf16 %v5582, %v5582
    %5697 = vmatprep.subr.bf16.mxu0 %v4326
    %5698 = vmatpush1.bf16.msra.mxu0 %v4325
    %5699 = vmatprep.subr.bf16.mxu0 %v4330
    %5700 = vmatpush1.bf16.msra.mxu0 %v4329
    %5701 = vmatprep.subr.bf16.mxu0 %v4334
    %5702 = vmatpush1.bf16.msra.mxu0 %v4333
    %5703 = vmatprep.subr.bf16.mxu0 %v4338
    %5704 = vmatpush1.bf16.msra.mxu0 %v4337
    %5705 = vmatprep.subr.bf16.mxu0 %v4342
    %5706 = vmatpush1.bf16.msra.mxu0 %v4341
    %5707 = vmatprep.subr.bf16.mxu0 %v4346
    %5708 = vmatpush1.bf16.msra.mxu0 %v4345
    %5709 = vmatprep.subr.bf16.mxu0 %v4350
    %5710 = vmatpush1.bf16.msra.mxu0 %v4349
    %5711 = vmatprep.subr.bf16.mxu0 %v4354
    %5712 = vmatpush1.bf16.msra.mxu0 %v4353
    %5713 = vmatprep.subr.bf16.mxu0 0
    %5714 = vmatpush1.bf16.msra.mxu0 0
    %5715 = vmatprep.subr.bf16.mxu0 0
    %5716 = vmatpush1.bf16.msra.mxu0 0
    %5717 = vmatprep.subr.bf16.mxu0 0
    %5718 = vmatpush1.bf16.msra.mxu0 0
    %5719 = vmatprep.subr.bf16.mxu0 0
    %5720 = vmatpush1.bf16.msra.mxu0 0
    %5721 = vmatprep.subr.bf16.mxu0 0
    %5722 = vmatpush1.bf16.msra.mxu0 0
    %5723 = vmatprep.subr.bf16.mxu0 0
    %5724 = vmatpush1.bf16.msra.mxu0 0
    %5725 = vmatprep.subr.bf16.mxu0 0
    %5726 = vmatpush1.bf16.msra.mxu0 0
    %5727 = vmatprep.subr.bf16.mxu0 0
    %5728 = vmatpush1.bf16.msra.mxu0 0
    %5729 = vmatprep.mubr.bf16.mxu0 0
    %5730 = vmatmul.mubr.bf16.gmra.mrb[0].mxu0 %v5696
    %v5731 = vpop.f32.mrb[0].mxu0
    %v5732 = vadd.f32 0.0, %v5731
    %v5733 = vpop.f32.mrb[0].mxu0
    %v5734 = vadd.f32 0.0, %v5733
    %v5735 = vpop.f32.mrb[0].mxu0
    %v5736 = vpop.f32.mrb[0].mxu0
    %5737 = vdwg.mxu0
    %5738 = vmatprep.subr.bf16.mxu0 %v4328
    %5739 = vmatpush1.bf16.msra.mxu0 %v4327
    %5740 = vmatprep.subr.bf16.mxu0 %v4332
    %5741 = vmatpush1.bf16.msra.mxu0 %v4331
    %5742 = vmatprep.subr.bf16.mxu0 %v4336
    %5743 = vmatpush1.bf16.msra.mxu0 %v4335
    %5744 = vmatprep.subr.bf16.mxu0 %v4340
    %5745 = vmatpush1.bf16.msra.mxu0 %v4339
    %5746 = vmatprep.subr.bf16.mxu0 %v4344
    %5747 = vmatpush1.bf16.msra.mxu0 %v4343
    %5748 = vmatprep.subr.bf16.mxu0 %v4348
    %5749 = vmatpush1.bf16.msra.mxu0 %v4347
    %5750 = vmatprep.subr.bf16.mxu0 %v4352
    %5751 = vmatpush1.bf16.msra.mxu0 %v4351
    %5752 = vmatprep.subr.bf16.mxu0 %v4356
    %5753 = vmatpush1.bf16.msra.mxu0 %v4355
    %5754 = vmatprep.subr.bf16.mxu0 0
    %5755 = vmatpush1.bf16.msra.mxu0 0
    %5756 = vmatprep.subr.bf16.mxu0 0
    %5757 = vmatpush1.bf16.msra.mxu0 0
    %5758 = vmatprep.subr.bf16.mxu0 0
    %5759 = vmatpush1.bf16.msra.mxu0 0
    %5760 = vmatprep.subr.bf16.mxu0 0
    %5761 = vmatpush1.bf16.msra.mxu0 0
    %5762 = vmatprep.subr.bf16.mxu0 0
    %5763 = vmatpush1.bf16.msra.mxu0 0
    %5764 = vmatprep.subr.bf16.mxu0 0
    %5765 = vmatpush1.bf16.msra.mxu0 0
    %5766 = vmatprep.subr.bf16.mxu0 0
    %5767 = vmatpush1.bf16.msra.mxu0 0
    %5768 = vmatprep.subr.bf16.mxu0 0
    %5769 = vmatpush1.bf16.msra.mxu0 0
    %5770 = vmatprep.mubr.bf16.mxu0 0
    %5771 = vmatmul.mubr.bf16.gmra.mrb[0].mxu0 %v5696
    %v5772 = vpop.f32.mrb[0].mxu0
    %v5773 = vadd.f32 0.0, %v5772
    %v5774 = vpop.f32.mrb[0].mxu0
    %v5775 = vadd.f32 0.0, %v5774
    %v5776 = vpop.f32.mrb[0].mxu0
    %v5777 = vpop.f32.mrb[0].mxu0
    %5778 = vdwg.mxu0
    %v5779 = vadd.f32 %v5692, %v5732
    %v5780 = vadd.f32 %v5693, %v5734
    %v5781 = vadd.f32 %v5694, %v5773
    %v5782 = vadd.f32 %v5695, %v5775
    %v5783 = vmul.f32 %v5779, 0.5
    %v5784 = vtanh.pop %v5783
    %v5785 = vmul.f32 %v5784, 0.5
    %v5786 = vadd.f32 %v5785, 0.5
    %v5787 = vmul.f32 %v5780, 0.5
    %v5788 = vtanh.pop %v5787
    %v5789 = vmul.f32 %v5788, 0.5
    %v5790 = vadd.f32 %v5789, 0.5
    %v5791 = vtanh.pop %v5781
    %v5792 = vmul.f32 %v5782, 0.5
    %v5793 = vtanh.pop %v5792
    %v5794 = vmul.f32 %v5793, 0.5
    %v5795 = vadd.f32 %v5794, 0.5
    %v5796 = vmul.f32 %v5790, %v5580
    %v5797 = vmul.f32 %v5786, %v5791
    %v5798 = vadd.f32 %v5796, %v5797
    %v5799 = vtanh.pop %v5798
    %v5800 = vmul.f32 %v5795, %v5799
    %v5801 = vld [vmem:[#allocation5 + $0xe0] sm:$0xff]
    %v5802 = vld [vmem:[#allocation5 + $0xe8] sm:$0xff]
    %v5803 = vld [vmem:[#allocation5 + $0xf0] sm:$0xff]
    %v5804 = vld [vmem:[#allocation5 + $0xf8] sm:$0xff]
    %v5805 = vpack.c.bf16 %v5691, %v5691
    %5806 = vmatprep.subr.bf16.mxu0 %v4058
    %5807 = vmatpush1.bf16.msra.mxu0 %v4057
    %5808 = vmatprep.subr.bf16.mxu0 %v4062
    %5809 = vmatpush1.bf16.msra.mxu0 %v4061
    %5810 = vmatprep.subr.bf16.mxu0 %v4066
    %5811 = vmatpush1.bf16.msra.mxu0 %v4065
    %5812 = vmatprep.subr.bf16.mxu0 %v4070
    %5813 = vmatpush1.bf16.msra.mxu0 %v4069
    %5814 = vmatprep.subr.bf16.mxu0 %v4074
    %5815 = vmatpush1.bf16.msra.mxu0 %v4073
    %5816 = vmatprep.subr.bf16.mxu0 %v4078
    %5817 = vmatpush1.bf16.msra.mxu0 %v4077
    %5818 = vmatprep.subr.bf16.mxu0 %v4082
    %5819 = vmatpush1.bf16.msra.mxu0 %v4081
    %5820 = vmatprep.subr.bf16.mxu0 %v4086
    %5821 = vmatpush1.bf16.msra.mxu0 %v4085
    %5822 = vmatprep.subr.bf16.mxu0 0
    %5823 = vmatpush1.bf16.msra.mxu0 0
    %5824 = vmatprep.subr.bf16.mxu0 0
    %5825 = vmatpush1.bf16.msra.mxu0 0
    %5826 = vmatprep.subr.bf16.mxu0 0
    %5827 = vmatpush1.bf16.msra.mxu0 0
    %5828 = vmatprep.subr.bf16.mxu0 0
    %5829 = vmatpush1.bf16.msra.mxu0 0
    %5830 = vmatprep.subr.bf16.mxu0 0
    %5831 = vmatpush1.bf16.msra.mxu0 0
    %5832 = vmatprep.subr.bf16.mxu0 0
    %5833 = vmatpush1.bf16.msra.mxu0 0
    %5834 = vmatprep.subr.bf16.mxu0 0
    %5835 = vmatpush1.bf16.msra.mxu0 0
    %5836 = vmatprep.subr.bf16.mxu0 0
    %5837 = vmatpush1.bf16.msra.mxu0 0
    %5838 = vmatprep.mubr.bf16.mxu0 0
    %5839 = vmatmul.mubr.bf16.gmra.mrb[0].mxu0 %v5805
    %v5840 = vpop.f32.mrb[0].mxu0
    %v5841 = vadd.f32 0.0, %v5840
    %v5842 = vpop.f32.mrb[0].mxu0
    %v5843 = vadd.f32 0.0, %v5842
    %v5844 = vpop.f32.mrb[0].mxu0
    %v5845 = vpop.f32.mrb[0].mxu0
    %5846 = vdwg.mxu0
    %5847 = vmatprep.subr.bf16.mxu0 %v4060
    %5848 = vmatpush1.bf16.msra.mxu0 %v4059
    %5849 = vmatprep.subr.bf16.mxu0 %v4064
    %5850 = vmatpush1.bf16.msra.mxu0 %v4063
    %5851 = vmatprep.subr.bf16.mxu0 %v4068
    %5852 = vmatpush1.bf16.msra.mxu0 %v4067
    %5853 = vmatprep.subr.bf16.mxu0 %v4072
    %5854 = vmatpush1.bf16.msra.mxu0 %v4071
    %5855 = vmatprep.subr.bf16.mxu0 %v4076
    %5856 = vmatpush1.bf16.msra.mxu0 %v4075
    %5857 = vmatprep.subr.bf16.mxu0 %v4080
    %5858 = vmatpush1.bf16.msra.mxu0 %v4079
    %5859 = vmatprep.subr.bf16.mxu0 %v4084
    %5860 = vmatpush1.bf16.msra.mxu0 %v4083
    %5861 = vmatprep.subr.bf16.mxu0 %v4088
    %5862 = vmatpush1.bf16.msra.mxu0 %v4087
    %5863 = vmatprep.subr.bf16.mxu0 0
    %5864 = vmatpush1.bf16.msra.mxu0 0
    %5865 = vmatprep.subr.bf16.mxu0 0
    %5866 = vmatpush1.bf16.msra.mxu0 0
    %5867 = vmatprep.subr.bf16.mxu0 0
    %5868 = vmatpush1.bf16.msra.mxu0 0
    %5869 = vmatprep.subr.bf16.mxu0 0
    %5870 = vmatpush1.bf16.msra.mxu0 0
    %5871 = vmatprep.subr.bf16.mxu0 0
    %5872 = vmatpush1.bf16.msra.mxu0 0
    %5873 = vmatprep.subr.bf16.mxu0 0
    %5874 = vmatpush1.bf16.msra.mxu0 0
    %5875 = vmatprep.subr.bf16.mxu0 0
    %5876 = vmatpush1.bf16.msra.mxu0 0
    %5877 = vmatprep.subr.bf16.mxu0 0
    %5878 = vmatpush1.bf16.msra.mxu0 0
    %5879 = vmatprep.mubr.bf16.mxu0 0
    %5880 = vmatmul.mubr.bf16.gmra.mrb[0].mxu0 %v5805
    %v5881 = vpop.f32.mrb[0].mxu0
    %v5882 = vadd.f32 0.0, %v5881
    %v5883 = vpop.f32.mrb[0].mxu0
    %v5884 = vadd.f32 0.0, %v5883
    %v5885 = vpop.f32.mrb[0].mxu0
    %v5886 = vpop.f32.mrb[0].mxu0
    %5887 = vdwg.mxu0
    %v5888 = vadd.f32 %v5801, %v5841
    %v5889 = vadd.f32 %v5802, %v5843
    %v5890 = vadd.f32 %v5803, %v5882
    %v5891 = vadd.f32 %v5804, %v5884
    %v5892 = vmul.f32 %v5888, 0.5
    %v5893 = vtanh.pop %v5892
    %v5894 = vmul.f32 %v5893, 0.5
    %v5895 = vadd.f32 %v5894, 0.5
    %v5896 = vmul.f32 %v5889, 0.5
    %v5897 = vtanh.pop %v5896
    %v5898 = vmul.f32 %v5897, 0.5
    %v5899 = vadd.f32 %v5898, 0.5
    %v5900 = vtanh.pop %v5890
    %v5901 = vmul.f32 %v5891, 0.5
    %v5902 = vtanh.pop %v5901
    %v5903 = vmul.f32 %v5902, 0.5
    %v5904 = vadd.f32 %v5903, 0.5
    %v5905 = vmul.f32 %v5899, %v5689
    %v5906 = vmul.f32 %v5895, %v5900
    %v5907 = vadd.f32 %v5905, %v5906
    %v5908 = vtanh.pop %v5907
    %v5909 = vmul.f32 %v5904, %v5908
    %v5910 = vld [vmem:[#allocation6] sm:$0xff]
    %v5911 = vld [vmem:[#allocation6 + $0x8] sm:$0xff]
    %v5912 = vld [vmem:[#allocation6 + $0x10] sm:$0xff]
    %v5913 = vld [vmem:[#allocation6 + $0x18] sm:$0xff]
    %v5914 = vpack.c.bf16 %v5800, %v5800
    %5915 = vmatprep.subr.bf16.mxu0 %v4326
    %5916 = vmatpush1.bf16.msra.mxu0 %v4325
    %5917 = vmatprep.subr.bf16.mxu0 %v4330
    %5918 = vmatpush1.bf16.msra.mxu0 %v4329
    %5919 = vmatprep.subr.bf16.mxu0 %v4334
    %5920 = vmatpush1.bf16.msra.mxu0 %v4333
    %5921 = vmatprep.subr.bf16.mxu0 %v4338
    %5922 = vmatpush1.bf16.msra.mxu0 %v4337
    %5923 = vmatprep.subr.bf16.mxu0 %v4342
    %5924 = vmatpush1.bf16.msra.mxu0 %v4341
    %5925 = vmatprep.subr.bf16.mxu0 %v4346
    %5926 = vmatpush1.bf16.msra.mxu0 %v4345
    %5927 = vmatprep.subr.bf16.mxu0 %v4350
    %5928 = vmatpush1.bf16.msra.mxu0 %v4349
    %5929 = vmatprep.subr.bf16.mxu0 %v4354
    %5930 = vmatpush1.bf16.msra.mxu0 %v4353
    %5931 = vmatprep.subr.bf16.mxu0 0
    %5932 = vmatpush1.bf16.msra.mxu0 0
    %5933 = vmatprep.subr.bf16.mxu0 0
    %5934 = vmatpush1.bf16.msra.mxu0 0
    %5935 = vmatprep.subr.bf16.mxu0 0
    %5936 = vmatpush1.bf16.msra.mxu0 0
    %5937 = vmatprep.subr.bf16.mxu0 0
    %5938 = vmatpush1.bf16.msra.mxu0 0
    %5939 = vmatprep.subr.bf16.mxu0 0
    %5940 = vmatpush1.bf16.msra.mxu0 0
    %5941 = vmatprep.subr.bf16.mxu0 0
    %5942 = vmatpush1.bf16.msra.mxu0 0
    %5943 = vmatprep.subr.bf16.mxu0 0
    %5944 = vmatpush1.bf16.msra.mxu0 0
    %5945 = vmatprep.subr.bf16.mxu0 0
    %5946 = vmatpush1.bf16.msra.mxu0 0
    %5947 = vmatprep.mubr.bf16.mxu0 0
    %5948 = vmatmul.mubr.bf16.gmra.mrb[0].mxu0 %v5914
    %v5949 = vpop.f32.mrb[0].mxu0
    %v5950 = vadd.f32 0.0, %v5949
    %v5951 = vpop.f32.mrb[0].mxu0
    %v5952 = vadd.f32 0.0, %v5951
    %v5953 = vpop.f32.mrb[0].mxu0
    %v5954 = vpop.f32.mrb[0].mxu0
    %5955 = vdwg.mxu0
    %5956 = vmatprep.subr.bf16.mxu0 %v4328
    %5957 = vmatpush1.bf16.msra.mxu0 %v4327
    %5958 = vmatprep.subr.bf16.mxu0 %v4332
    %5959 = vmatpush1.bf16.msra.mxu0 %v4331
    %5960 = vmatprep.subr.bf16.mxu0 %v4336
    %5961 = vmatpush1.bf16.msra.mxu0 %v4335
    %5962 = vmatprep.subr.bf16.mxu0 %v4340
    %5963 = vmatpush1.bf16.msra.mxu0 %v4339
    %5964 = vmatprep.subr.bf16.mxu0 %v4344
    %5965 = vmatpush1.bf16.msra.mxu0 %v4343
    %5966 = vmatprep.subr.bf16.mxu0 %v4348
    %5967 = vmatpush1.bf16.msra.mxu0 %v4347
    %5968 = vmatprep.subr.bf16.mxu0 %v4352
    %5969 = vmatpush1.bf16.msra.mxu0 %v4351
    %5970 = vmatprep.subr.bf16.mxu0 %v4356
    %5971 = vmatpush1.bf16.msra.mxu0 %v4355
    %5972 = vmatprep.subr.bf16.mxu0 0
    %5973 = vmatpush1.bf16.msra.mxu0 0
    %5974 = vmatprep.subr.bf16.mxu0 0
    %5975 = vmatpush1.bf16.msra.mxu0 0
    %5976 = vmatprep.subr.bf16.mxu0 0
    %5977 = vmatpush1.bf16.msra.mxu0 0
    %5978 = vmatprep.subr.bf16.mxu0 0
    %5979 = vmatpush1.bf16.msra.mxu0 0
    %5980 = vmatprep.subr.bf16.mxu0 0
    %5981 = vmatpush1.bf16.msra.mxu0 0
    %5982 = vmatprep.subr.bf16.mxu0 0
    %5983 = vmatpush1.bf16.msra.mxu0 0
    %5984 = vmatprep.subr.bf16.mxu0 0
    %5985 = vmatpush1.bf16.msra.mxu0 0
    %5986 = vmatprep.subr.bf16.mxu0 0
    %5987 = vmatpush1.bf16.msra.mxu0 0
    %5988 = vmatprep.mubr.bf16.mxu0 0
    %5989 = vmatmul.mubr.bf16.gmra.mrb[0].mxu0 %v5914
    %v5990 = vpop.f32.mrb[0].mxu0
    %v5991 = vadd.f32 0.0, %v5990
    %v5992 = vpop.f32.mrb[0].mxu0
    %v5993 = vadd.f32 0.0, %v5992
    %v5994 = vpop.f32.mrb[0].mxu0
    %v5995 = vpop.f32.mrb[0].mxu0
    %5996 = vdwg.mxu0
    %v5997 = vadd.f32 %v5910, %v5950
    %v5998 = vadd.f32 %v5911, %v5952
    %v5999 = vadd.f32 %v5912, %v5991
    %v6000 = vadd.f32 %v5913, %v5993
    %v6001 = vmul.f32 %v5997, 0.5
    %v6002 = vtanh.pop %v6001
    %v6003 = vmul.f32 %v6002, 0.5
    %v6004 = vadd.f32 %v6003, 0.5
    %v6005 = vmul.f32 %v5998, 0.5
    %v6006 = vtanh.pop %v6005
    %v6007 = vmul.f32 %v6006, 0.5
    %v6008 = vadd.f32 %v6007, 0.5
    %v6009 = vtanh.pop %v5999
    %v6010 = vmul.f32 %v6000, 0.5
    %v6011 = vtanh.pop %v6010
    %v6012 = vmul.f32 %v6011, 0.5
    %v6013 = vadd.f32 %v6012, 0.5
    %v6014 = vmul.f32 %v6008, %v5798
    %v6015 = vmul.f32 %v6004, %v6009
    %v6016 = vadd.f32 %v6014, %v6015
    %v6017 = vtanh.pop %v6016
    %v6018 = vmul.f32 %v6013, %v6017
    %s6019 = scalar_lea.vmem [#allocation16], 32
    %6020 = vst [vmem:[%s6019] sm:$0xff] %v5909
    %s6021 = scalar_lea.vmem [#allocation16], 40
    %6022 = vst [vmem:[%s6021] sm:$0xff] %v5907
    %s6023 = scalar_lea.vmem [#allocation16], 48
    %6024 = vst [vmem:[%s6023] sm:$0xff] %v6018
    %s6025 = scalar_lea.vmem [#allocation16], 56
    %6026 = vst [vmem:[%s6025] sm:$0xff] %v6016
    %v6027 = vpack.c.bf16 %v5909, %v5909
    %v6028 = vld [vmem:[#allocation12] sm:$0xf]
    %v6029 = vld [vmem:[#allocation12 + $0x4] sm:$0xf]
    %v6030 = vld [vmem:[#allocation12 + $0x8] sm:$0xf]
    %v6031 = vld [vmem:[#allocation12 + $0xc] sm:$0xf]
    %v6032 = vld [vmem:[#allocation12 + $0x10] sm:$0xf]
    %v6033 = vld [vmem:[#allocation12 + $0x14] sm:$0xf]
    %v6034 = vld [vmem:[#allocation12 + $0x18] sm:$0xf]
    %v6035 = vld [vmem:[#allocation12 + $0x1c] sm:$0xf]
    %v6036 = vld [vmem:[#allocation12 + $0x20] sm:$0xf]
    %v6037 = vld [vmem:[#allocation12 + $0x24] sm:$0xf]
    %v6038 = vld [vmem:[#allocation12 + $0x28] sm:$0xf]
    %v6039 = vld [vmem:[#allocation12 + $0x2c] sm:$0xf]
    %v6040 = vld [vmem:[#allocation12 + $0x30] sm:$0xf]
    %v6041 = vld [vmem:[#allocation12 + $0x34] sm:$0xf]
    %v6042 = vld [vmem:[#allocation12 + $0x38] sm:$0xf]
    %v6043 = vld [vmem:[#allocation12 + $0x3c] sm:$0xf]
    %v6044 = vld [vmem:[#allocation12 + $0x40] sm:$0xf]
    %v6045 = vld [vmem:[#allocation12 + $0x44] sm:$0xf]
    %v6046 = vld [vmem:[#allocation12 + $0x48] sm:$0xf]
    %v6047 = vld [vmem:[#allocation12 + $0x4c] sm:$0xf]
    %v6048 = vld [vmem:[#allocation12 + $0x50] sm:$0xf]
    %v6049 = vld [vmem:[#allocation12 + $0x54] sm:$0xf]
    %v6050 = vld [vmem:[#allocation12 + $0x58] sm:$0xf]
    %v6051 = vld [vmem:[#allocation12 + $0x5c] sm:$0xf]
    %v6052 = vld [vmem:[#allocation12 + $0x60] sm:$0xf]
    %v6053 = vld [vmem:[#allocation12 + $0x64] sm:$0xf]
    %v6054 = vld [vmem:[#allocation12 + $0x68] sm:$0xf]
    %v6055 = vld [vmem:[#allocation12 + $0x6c] sm:$0xf]
    %v6056 = vld [vmem:[#allocation12 + $0x70] sm:$0xf]
    %v6057 = vld [vmem:[#allocation12 + $0x74] sm:$0xf]
    %v6058 = vld [vmem:[#allocation12 + $0x78] sm:$0xf]
    %v6059 = vld [vmem:[#allocation12 + $0x7c] sm:$0xf]
    %v6060 = vld [vmem:[#allocation13] sm:$0x1]
    %v6061 = vlaneseq
    %v6062 = vshrl.u32 %v6061, 7
    %v6063 = vsub.s32 0, %v6062
    %v6064 = vrot.slane %v6060, %v6063
    %v6097 = vunpack.c.l.b16 %v6028
    %v6098 = vunpack.c.l.b16 %v6029
    %v6099 = vunpack.c.l.b16 %v6030
    %v6100 = vunpack.c.l.b16 %v6031
    %v6101 = vunpack.c.l.b16 %v6032
    %v6102 = vunpack.c.l.b16 %v6033
    %v6103 = vunpack.c.l.b16 %v6034
    %v6104 = vunpack.c.l.b16 %v6035
    %v6105 = vunpack.c.l.b16 %v6036
    %v6106 = vunpack.c.l.b16 %v6037
    %v6107 = vunpack.c.l.b16 %v6038
    %v6108 = vunpack.c.l.b16 %v6039
    %v6109 = vunpack.c.l.b16 %v6040
    %v6110 = vunpack.c.l.b16 %v6041
    %v6111 = vunpack.c.l.b16 %v6042
    %v6112 = vunpack.c.l.b16 %v6043
    %v6113 = vunpack.c.l.b16 %v6044
    %v6114 = vunpack.c.l.b16 %v6045
    %v6115 = vunpack.c.l.b16 %v6046
    %v6116 = vunpack.c.l.b16 %v6047
    %v6117 = vunpack.c.l.b16 %v6048
    %v6118 = vunpack.c.l.b16 %v6049
    %v6119 = vunpack.c.l.b16 %v6050
    %v6120 = vunpack.c.l.b16 %v6051
    %v6121 = vunpack.c.l.b16 %v6052
    %v6122 = vunpack.c.l.b16 %v6053
    %v6123 = vunpack.c.l.b16 %v6054
    %v6124 = vunpack.c.l.b16 %v6055
    %v6125 = vunpack.c.l.b16 %v6056
    %v6126 = vunpack.c.l.b16 %v6057
    %v6127 = vunpack.c.l.b16 %v6058
    %v6128 = vunpack.c.l.b16 %v6059
    %v6129 = vpack.c.b16 %v6098, %v6097
    %v6130 = vpack.c.b16 %v6100, %v6099
    %v6131 = vpack.c.b16 %v6102, %v6101
    %v6132 = vpack.c.b16 %v6104, %v6103
    %v6133 = vpack.c.b16 %v6106, %v6105
    %v6134 = vpack.c.b16 %v6108, %v6107
    %v6135 = vpack.c.b16 %v6110, %v6109
    %v6136 = vpack.c.b16 %v6112, %v6111
    %v6137 = vpack.c.b16 %v6114, %v6113
    %v6138 = vpack.c.b16 %v6116, %v6115
    %v6139 = vpack.c.b16 %v6118, %v6117
    %v6140 = vpack.c.b16 %v6120, %v6119
    %v6141 = vpack.c.b16 %v6122, %v6121
    %v6142 = vpack.c.b16 %v6124, %v6123
    %v6143 = vpack.c.b16 %v6126, %v6125
    %v6144 = vpack.c.b16 %v6128, %v6127
    %6161 = vmatprep.subr.bf16.mxu0 0
    %6162 = vmatpush1.bf16.msra.mxu0 %v6129
    %6163 = vmatprep.subr.bf16.mxu0 0
    %6164 = vmatpush1.bf16.msra.mxu0 %v6130
    %6165 = vmatprep.subr.bf16.mxu0 0
    %6166 = vmatpush1.bf16.msra.mxu0 %v6131
    %6167 = vmatprep.subr.bf16.mxu0 0
    %6168 = vmatpush1.bf16.msra.mxu0 %v6132
    %6169 = vmatprep.subr.bf16.mxu0 0
    %6170 = vmatpush1.bf16.msra.mxu0 %v6133
    %6171 = vmatprep.subr.bf16.mxu0 0
    %6172 = vmatpush1.bf16.msra.mxu0 %v6134
    %6173 = vmatprep.subr.bf16.mxu0 0
    %6174 = vmatpush1.bf16.msra.mxu0 %v6135
    %6175 = vmatprep.subr.bf16.mxu0 0
    %6176 = vmatpush1.bf16.msra.mxu0 %v6136
    %6177 = vmatprep.subr.bf16.mxu0 0
    %6178 = vmatpush1.bf16.msra.mxu0 %v6137
    %6179 = vmatprep.subr.bf16.mxu0 0
    %6180 = vmatpush1.bf16.msra.mxu0 %v6138
    %6181 = vmatprep.subr.bf16.mxu0 0
    %6182 = vmatpush1.bf16.msra.mxu0 %v6139
    %6183 = vmatprep.subr.bf16.mxu0 0
    %6184 = vmatpush1.bf16.msra.mxu0 %v6140
    %6185 = vmatprep.subr.bf16.mxu0 0
    %6186 = vmatpush1.bf16.msra.mxu0 %v6141
    %6187 = vmatprep.subr.bf16.mxu0 0
    %6188 = vmatpush1.bf16.msra.mxu0 %v6142
    %6189 = vmatprep.subr.bf16.mxu0 0
    %6190 = vmatpush1.bf16.msra.mxu0 %v6143
    %6191 = vmatprep.subr.bf16.mxu0 0
    %6192 = vmatpush1.bf16.msra.mxu0 %v6144
    %6193 = vmatprep.mubr.bf16.mxu0 %v4606
    %6194 = vmatmul.mubr.bf16.gmra.mrb[0].mxu0 %v6027
    %v6195 = vpop.f32.mrb[0].mxu0
    %v6196 = vadd.f32 %v6064, %v6195
    %v6197 = vpop.f32.mrb[0].mxu0
    %v6198 = vpop.f32.mrb[0].mxu0
    %v6199 = vpop.f32.mrb[0].mxu0
    %6200 = vdwg.mxu0
    %v6201 = vmax.f32 %v6196, 0.0
    %v6202 = vpack.c.bf16 %v6201, %v6201
    %v6203 = vld [vmem:[#allocation12 + $0x80] sm:$0xf]
    %v6204 = vld [vmem:[#allocation12 + $0x84] sm:$0xf]
    %v6205 = vld [vmem:[#allocation12 + $0x88] sm:$0xf]
    %v6206 = vld [vmem:[#allocation12 + $0x8c] sm:$0xf]
    %v6207 = vld [vmem:[#allocation12 + $0x90] sm:$0xf]
    %v6208 = vld [vmem:[#allocation12 + $0x94] sm:$0xf]
    %v6209 = vld [vmem:[#allocation12 + $0x98] sm:$0xf]
    %v6210 = vld [vmem:[#allocation12 + $0x9c] sm:$0xf]
    %v6211 = vld [vmem:[#allocation12 + $0xa0] sm:$0xf]
    %v6212 = vld [vmem:[#allocation12 + $0xa4] sm:$0xf]
    %v6213 = vld [vmem:[#allocation12 + $0xa8] sm:$0xf]
    %v6214 = vld [vmem:[#allocation12 + $0xac] sm:$0xf]
    %v6215 = vld [vmem:[#allocation12 + $0xb0] sm:$0xf]
    %v6216 = vld [vmem:[#allocation12 + $0xb4] sm:$0xf]
    %v6217 = vld [vmem:[#allocation12 + $0xb8] sm:$0xf]
    %v6218 = vld [vmem:[#allocation12 + $0xbc] sm:$0xf]
    %v6219 = vld [vmem:[#allocation13 + $0x1] sm:$0x1]
    %v6220 = vlaneseq
    %v6221 = vshrl.u32 %v6220, 7
    %v6222 = vsub.s32 0, %v6221
    %v6223 = vrot.slane %v6219, %v6222
    %v6240 = vunpack.c.l.b16 %v6203
    %v6241 = vunpack.c.l.b16 %v6204
    %v6242 = vunpack.c.l.b16 %v6205
    %v6243 = vunpack.c.l.b16 %v6206
    %v6244 = vunpack.c.l.b16 %v6207
    %v6245 = vunpack.c.l.b16 %v6208
    %v6246 = vunpack.c.l.b16 %v6209
    %v6247 = vunpack.c.l.b16 %v6210
    %v6248 = vunpack.c.l.b16 %v6211
    %v6249 = vunpack.c.l.b16 %v6212
    %v6250 = vunpack.c.l.b16 %v6213
    %v6251 = vunpack.c.l.b16 %v6214
    %v6252 = vunpack.c.l.b16 %v6215
    %v6253 = vunpack.c.l.b16 %v6216
    %v6254 = vunpack.c.l.b16 %v6217
    %v6255 = vunpack.c.l.b16 %v6218
    %v6256 = vpack.c.b16 %v6241, %v6240
    %v6257 = vpack.c.b16 %v6243, %v6242
    %v6258 = vpack.c.b16 %v6245, %v6244
    %v6259 = vpack.c.b16 %v6247, %v6246
    %v6260 = vpack.c.b16 %v6249, %v6248
    %v6261 = vpack.c.b16 %v6251, %v6250
    %v6262 = vpack.c.b16 %v6253, %v6252
    %v6263 = vpack.c.b16 %v6255, %v6254
    %6272 = vmatprep.subr.bf16.mxu0 0
    %6273 = vmatpush1.bf16.msra.mxu0 %v6256
    %6274 = vmatprep.subr.bf16.mxu0 0
    %6275 = vmatpush1.bf16.msra.mxu0 %v6257
    %6276 = vmatprep.subr.bf16.mxu0 0
    %6277 = vmatpush1.bf16.msra.mxu0 %v6258
    %6278 = vmatprep.subr.bf16.mxu0 0
    %6279 = vmatpush1.bf16.msra.mxu0 %v6259
    %6280 = vmatprep.subr.bf16.mxu0 0
    %6281 = vmatpush1.bf16.msra.mxu0 %v6260
    %6282 = vmatprep.subr.bf16.mxu0 0
    %6283 = vmatpush1.bf16.msra.mxu0 %v6261
    %6284 = vmatprep.subr.bf16.mxu0 0
    %6285 = vmatpush1.bf16.msra.mxu0 %v6262
    %6286 = vmatprep.subr.bf16.mxu0 0
    %6287 = vmatpush1.bf16.msra.mxu0 %v6263
    %6288 = vmatprep.subr.bf16.mxu0 0
    %6289 = vmatpush1.bf16.msra.mxu0 0
    %6290 = vmatprep.subr.bf16.mxu0 0
    %6291 = vmatpush1.bf16.msra.mxu0 0
    %6292 = vmatprep.subr.bf16.mxu0 0
    %6293 = vmatpush1.bf16.msra.mxu0 0
    %6294 = vmatprep.subr.bf16.mxu0 0
    %6295 = vmatpush1.bf16.msra.mxu0 0
    %6296 = vmatprep.subr.bf16.mxu0 0
    %6297 = vmatpush1.bf16.msra.mxu0 0
    %6298 = vmatprep.subr.bf16.mxu0 0
    %6299 = vmatpush1.bf16.msra.mxu0 0
    %6300 = vmatprep.subr.bf16.mxu0 0
    %6301 = vmatpush1.bf16.msra.mxu0 0
    %6302 = vmatprep.subr.bf16.mxu0 0
    %6303 = vmatpush1.bf16.msra.mxu0 0
    %6304 = vmatprep.mubr.bf16.mxu0 0
    %6305 = vmatmul.mubr.bf16.gmra.mrb[0].mxu0 %v6202
    %v6306 = vpop.f32.mrb[0].mxu0
    %v6307 = vadd.f32 %v6223, %v6306
    %v6308 = vpop.f32.mrb[0].mxu0
    %v6309 = vpop.f32.mrb[0].mxu0
    %v6310 = vpop.f32.mrb[0].mxu0
    %6311 = vdwg.mxu0
    %v6312 = vmax.f32 %v6307, 0.0
    %v6313 = vpack.c.bf16 %v6312, %v6312
    %v6314 = vld [vmem:[#allocation12 + $0xc0] sm:$0xf]
    %v6315 = vld [vmem:[#allocation12 + $0xc4] sm:$0xf]
    %v6316 = vld [vmem:[#allocation12 + $0xc8] sm:$0xf]
    %v6317 = vld [vmem:[#allocation12 + $0xcc] sm:$0xf]
    %v6318 = vld [vmem:[#allocation12 + $0xd0] sm:$0xf]
    %v6319 = vld [vmem:[#allocation12 + $0xd4] sm:$0xf]
    %v6320 = vld [vmem:[#allocation12 + $0xd8] sm:$0xf]
    %v6321 = vld [vmem:[#allocation12 + $0xdc] sm:$0xf]
    %v6322 = vld [vmem:[#allocation12 + $0xe0] sm:$0xf]
    %v6323 = vld [vmem:[#allocation12 + $0xe4] sm:$0xf]
    %v6324 = vld [vmem:[#allocation12 + $0xe8] sm:$0xf]
    %v6325 = vld [vmem:[#allocation12 + $0xec] sm:$0xf]
    %v6326 = vld [vmem:[#allocation12 + $0xf0] sm:$0xf]
    %v6327 = vld [vmem:[#allocation12 + $0xf4] sm:$0xf]
    %v6328 = vld [vmem:[#allocation12 + $0xf8] sm:$0xf]
    %v6329 = vld [vmem:[#allocation12 + $0xfc] sm:$0xf]
    %v6330 = vld [vmem:[#allocation13 + $0x2] sm:$0x1]
    %v6331 = vlaneseq
    %v6332 = vshrl.u32 %v6331, 7
    %v6333 = vsub.s32 0, %v6332
    %v6334 = vrot.slane %v6330, %v6333
    %v6351 = vunpack.c.l.b16 %v6314
    %v6352 = vunpack.c.l.b16 %v6315
    %v6353 = vunpack.c.l.b16 %v6316
    %v6354 = vunpack.c.l.b16 %v6317
    %v6355 = vunpack.c.l.b16 %v6318
    %v6356 = vunpack.c.l.b16 %v6319
    %v6357 = vunpack.c.l.b16 %v6320
    %v6358 = vunpack.c.l.b16 %v6321
    %v6359 = vunpack.c.l.b16 %v6322
    %v6360 = vunpack.c.l.b16 %v6323
    %v6361 = vunpack.c.l.b16 %v6324
    %v6362 = vunpack.c.l.b16 %v6325
    %v6363 = vunpack.c.l.b16 %v6326
    %v6364 = vunpack.c.l.b16 %v6327
    %v6365 = vunpack.c.l.b16 %v6328
    %v6366 = vunpack.c.l.b16 %v6329
    %v6367 = vpack.c.b16 %v6352, %v6351
    %v6368 = vpack.c.b16 %v6354, %v6353
    %v6369 = vpack.c.b16 %v6356, %v6355
    %v6370 = vpack.c.b16 %v6358, %v6357
    %v6371 = vpack.c.b16 %v6360, %v6359
    %v6372 = vpack.c.b16 %v6362, %v6361
    %v6373 = vpack.c.b16 %v6364, %v6363
    %v6374 = vpack.c.b16 %v6366, %v6365
    %6383 = vmatprep.subr.bf16.mxu0 0
    %6384 = vmatpush1.bf16.msra.mxu0 %v6367
    %6385 = vmatprep.subr.bf16.mxu0 0
    %6386 = vmatpush1.bf16.msra.mxu0 %v6368
    %6387 = vmatprep.subr.bf16.mxu0 0
    %6388 = vmatpush1.bf16.msra.mxu0 %v6369
    %6389 = vmatprep.subr.bf16.mxu0 0
    %6390 = vmatpush1.bf16.msra.mxu0 %v6370
    %6391 = vmatprep.subr.bf16.mxu0 0
    %6392 = vmatpush1.bf16.msra.mxu0 %v6371
    %6393 = vmatprep.subr.bf16.mxu0 0
    %6394 = vmatpush1.bf16.msra.mxu0 %v6372
    %6395 = vmatprep.subr.bf16.mxu0 0
    %6396 = vmatpush1.bf16.msra.mxu0 %v6373
    %6397 = vmatprep.subr.bf16.mxu0 0
    %6398 = vmatpush1.bf16.msra.mxu0 %v6374
    %6399 = vmatprep.subr.bf16.mxu0 0
    %6400 = vmatpush1.bf16.msra.mxu0 0
    %6401 = vmatprep.subr.bf16.mxu0 0
    %6402 = vmatpush1.bf16.msra.mxu0 0
    %6403 = vmatprep.subr.bf16.mxu0 0
    %6404 = vmatpush1.bf16.msra.mxu0 0
    %6405 = vmatprep.subr.bf16.mxu0 0
    %6406 = vmatpush1.bf16.msra.mxu0 0
    %6407 = vmatprep.subr.bf16.mxu0 0
    %6408 = vmatpush1.bf16.msra.mxu0 0
    %6409 = vmatprep.subr.bf16.mxu0 0
    %6410 = vmatpush1.bf16.msra.mxu0 0
    %6411 = vmatprep.subr.bf16.mxu0 0
    %6412 = vmatpush1.bf16.msra.mxu0 0
    %6413 = vmatprep.subr.bf16.mxu0 0
    %6414 = vmatpush1.bf16.msra.mxu0 0
    %6415 = vmatprep.mubr.bf16.mxu0 0
    %6416 = vmatmul.mubr.bf16.gmra.mrb[0].mxu0 %v6313
    %v6417 = vpop.f32.mrb[0].mxu0
    %v6418 = vadd.f32 %v6334, %v6417
    %v6419 = vpop.f32.mrb[0].mxu0
    %v6420 = vpop.f32.mrb[0].mxu0
    %v6421 = vpop.f32.mrb[0].mxu0
    %6422 = vdwg.mxu0
    %6423 = vst [vmem:[#allocation15] sm:$0xff] %v6418
    // Predicated region
    $region38: #{tpu_custom_call.1} parent=1 // pred_check
      _
    $region39: #{tpu_custom_call.1} parent=1 // pred_check_branch
      %6425 = sbr.rel (0) target = $region41
    $region40: #{tpu_custom_call.1} parent=1 // pred_region
      %s6427 = ssub.s32 128, 128
      %6428 = vsyncadd [#allocation9], %s6427
      %s6430 = sshll.u32 [#allocation15], 4
      %s6431 = int_to_ptr.vmem [resolvable:$true] %s6430
      %6433 = dma.vmem_to_hbm [thread:$0]  %s6431, 128, %s5, [#allocation9]
    $region41: #{tpu_custom_call.1} parent=1 // pred_fallthru
      _
    // Predicated region
    $region42: #{tpu_custom_call.1} parent=1 // pred_check
      _
    $region43: #{tpu_custom_call.1} parent=1 // pred_check_branch
      %6435 = sbr.rel (0) target = $region45
    $region44: #{tpu_custom_call.1} parent=1 // pred_region
      %s6437 = ssub.s32 1024, 1024
      %6438 = vsyncadd [#allocation17], %s6437
      %s6439 = sshll.u32 [#allocation16], 4
      %s6440 = int_to_ptr.vmem [resolvable:$true] %s6439
      %6445 = dma.vmem_to_hbm [thread:$0]  %s6440, 1024, %s6, [#allocation17], 128, 128, 8
    $region45: #{tpu_custom_call.1} parent=1 // pred_fallthru
      _
    // Predicated region
    $region46: #{tpu_custom_call.1} parent=1 // pred_check
      _
    $region47: #{tpu_custom_call.1} parent=1 // pred_check_branch
      %6447 = sbr.rel (0) target = $region49
    $region48: #{tpu_custom_call.1} parent=1 // pred_region
      %6448 = dma.done [#allocation9], 128
    $region49: #{tpu_custom_call.1} parent=1 // pred_fallthru
      _
    // Predicated region
    $region50: #{tpu_custom_call.1} parent=1 // pred_check
      _
    $region51: #{tpu_custom_call.1} parent=1 // pred_check_branch
      %6450 = sbr.rel (0) target = $region53
    $region52: #{tpu_custom_call.1} parent=1 // pred_region
      %6451 = dma.done [#allocation17], 1024
    $region53: #{tpu_custom_call.1} parent=1 // pred_fallthru
      _
    %6452 = vsyncpa [#allocation8], 1
    %6453 = vsyncpa [#allocation11], 1
    %6454 = vsyncpa [#allocation14], 1
    %6455 = vsyncpa [#allocation9], 1
    %6456 = vsyncpa [#allocation17], 1

</llo_original>
